<compile_context>
chip_gen: v7x
topology: tpu7x:2x2x1
jax: 0.10.0
libtpu: 0.0.40
codegen_flags: <defaults>
</compile_context>

<pallas_src>
import math
from functools import partial

import jax
import jax.numpy as jnp
from jax.experimental import pallas as pl
from jax.experimental.pallas import tpu as pltpu


# ----------------------------------------------------------------------------
# Single fused kernel: encoder Linear + PE add + L transformer layers + decoder + tanh
# ----------------------------------------------------------------------------
def fused_forward_kernel(B, S, nhead, head_dim, num_layers, eps,
                         x_ref, peb_ref, ew_ref,
                         wqkv_ref, bqkv_ref, wo_ref, bo_ref,
                         ln1w_ref, ln1b_ref,
                         w1_ref, b1_ref, w2_ref, b2_ref,
                         ln2w_ref, ln2b_ref,
                         dwt_ref, db_ref,
                         o_ref, attn_sc):
    f32 = jnp.float32
    bf16 = jnp.bfloat16
    D = nhead * head_dim
    scale = 1.0 / math.sqrt(head_dim)

    def layernorm(y, w, b):                       # f32 throughout
        mu = jnp.mean(y, axis=-1, keepdims=True)
        var = jnp.mean((y - mu) ** 2, axis=-1, keepdims=True)
        return (y - mu) * jax.lax.rsqrt(var + eps) * w + b

    # --- board encoder Linear(8 -> D): bf16 MXU operands, f32 accumulate.
    #     (positional encoding + encoder bias were pre-added into peb in the wrapper)
    h = jnp.dot(x_ref[...].astype(bf16), ew_ref[...], preferred_element_type=f32)
    h = h + peb_ref[...]                                               # (B*S, D) f32

    # --- transformer encoder layers (post-norm, ReLU) ---
    for l in range(num_layers):                                        # static layer loop
        # fused QKV projection: one (B*S, D) @ (D, 3D) GEMM, lane-aligned q/k/v slices
        qkv = jnp.dot(h.astype(bf16), wqkv_ref[l], preferred_element_type=f32) + bqkv_ref[l]
        q = qkv[:, 0 * D:1 * D]
        k = qkv[:, 1 * D:2 * D]
        v = qkv[:, 2 * D:3 * D]

        # per-(batch, head) QK^T scores, stacked along sublanes into one slab
        blocks = []
        for b in range(B):                                             # static batch loop
            r0, r1 = b * S, (b + 1) * S
            for hh in range(nhead):                                    # static head loop
                c0, c1 = hh * head_dim, (hh + 1) * head_dim
                qh = q[r0:r1, c0:c1].astype(bf16)
                kh = k[r0:r1, c0:c1].astype(bf16)
                # q @ k^T without an explicit transpose (contract last dims of both)
                blocks.append(jax.lax.dot_general(qh, kh, (((1,), (1,)), ((), ())),
                                                  preferred_element_type=f32))
        scores = jnp.concatenate(blocks, axis=0) * scale               # (B*nhead*S, S) f32

        # batched softmax: one max / exp / sum / exact divide for all (batch, head) blocks
        scores = scores - jnp.max(scores, axis=-1, keepdims=True)
        p = jnp.exp(scores)
        p = p / jnp.sum(p, axis=-1, keepdims=True)

        # per-head PV matmuls, written into the (B*S, D) attention slab (no concat)
        for b in range(B):
            r0, r1 = b * S, (b + 1) * S
            for hh in range(nhead):
                c0, c1 = hh * head_dim, (hh + 1) * head_dim
                idx = b * nhead + hh
                ph = p[idx * S:(idx + 1) * S, :].astype(bf16)
                vh = v[r0:r1, c0:c1].astype(bf16)
                attn_sc[r0:r1, c0:c1] = jnp.dot(ph, vh, preferred_element_type=f32)

        # single full-slab output projection
        attn = jnp.dot(attn_sc[...].astype(bf16), wo_ref[l],
                       preferred_element_type=f32) + bo_ref[l]         # (B*S, D) f32

        y = layernorm(h + attn, ln1w_ref[l], ln1b_ref[l])              # residual + LN1
        ff = jnp.maximum(jnp.dot(y.astype(bf16), w1_ref[l],
                                 preferred_element_type=f32) + b1_ref[l], 0.0)
        ff = jnp.dot(ff.astype(bf16), w2_ref[l], preferred_element_type=f32) + b2_ref[l]
        h = layernorm(y + ff, ln2w_ref[l], ln2b_ref[l])                # residual + LN2

    # --- decoder Linear(D*S -> 1): full-slab multiply, lane reduce, per-batch sublane sum ---
    row = jnp.sum(h * dwt_ref[...], axis=-1, keepdims=True)            # (B*S, 1) f32
    outs = [jnp.sum(row[b * S:(b + 1) * S], axis=0, keepdims=True) for b in range(B)]
    o_ref[...] = jnp.tanh(jnp.concatenate(outs, axis=0) + db_ref[...])  # (B, 1)


# ----------------------------------------------------------------------------
# Parameter setup + forward glue (plain JAX)
# ----------------------------------------------------------------------------
def make_positional_encoding(d_model, max_len=64):
    position = jnp.arange(max_len, dtype=jnp.float32)[:, None]
    div_term = jnp.exp(jnp.arange(0, d_model, 2, dtype=jnp.float32)
                       * (-math.log(10000.0) / d_model))
    pe = jnp.zeros((max_len, d_model), jnp.float32)
    pe = pe.at[:, 0::2].set(jnp.sin(position * div_term))
    pe = pe.at[:, 1::2].set(jnp.cos(position * div_term))
    return pe                                                          # (max_len, d_model)


def init_params(key, num_layers, d_model, nhead, dim_ff, seq_len):
    def nrm(k, shape, scale=0.05):
        return (scale * jax.random.normal(k, shape)).astype(jnp.float32)

    L, D, F = num_layers, d_model, dim_ff
    ks = jax.random.split(key, 16)
    return {
        "d_model": D, "nhead": nhead, "num_layers": L,
        "enc_w": nrm(ks[0], (8, D)),
        "enc_b": nrm(ks[1], (1, D)),
        "pe": make_positional_encoding(D),
        "dec_w": nrm(ks[2], (1, D * seq_len)),
        "dec_b": nrm(ks[3], (1, 1)),
        # per-layer weights stacked along a leading layer axis
        "wq": nrm(ks[4], (L, D, D)), "wk": nrm(ks[5], (L, D, D)),
        "wv": nrm(ks[6], (L, D, D)), "wo": nrm(ks[7], (L, D, D)),
        "bq": nrm(ks[8], (L, 1, D)), "bk": nrm(ks[9], (L, 1, D)),
        "bv": nrm(ks[10], (L, 1, D)), "bo": nrm(ks[11], (L, 1, D)),
        "ln1w": jnp.ones((L, 1, D), jnp.float32), "ln1b": jnp.zeros((L, 1, D), jnp.float32),
        "w1": nrm(ks[12], (L, D, F)), "b1": nrm(ks[13], (L, 1, F)),
        "w2": nrm(ks[14], (L, F, D)), "b2": nrm(ks[15], (L, 1, D)),
        "ln2w": jnp.ones((L, 1, D), jnp.float32), "ln2b": jnp.zeros((L, 1, D), jnp.float32),
    }


def check_matrix_forward(x_nchw, params):
    B, C, H, W = x_nchw.shape
    S = H * W
    D = params["d_model"]
    nhead = params["nhead"]
    L = params["num_layers"]
    F = params["w1"].shape[-1]
    head_dim = D // nhead
    M = B * S
    bf16 = jnp.bfloat16

    # torch .view(B, H*W, C) is a row-major reinterpretation -> jnp.reshape matches it.
    x_flat = x_nchw.reshape(B, S, C).reshape(M, C).astype(jnp.float32)
    # pe[:batch_size] broadcast over the sequence axis (original module's batch_first quirk),
    # pre-added with the board-encoder bias so the kernel does a single f32 add.
    pe_flat = jnp.broadcast_to(params["pe"][:B][:, None, :], (B, S, D)).reshape(M, D)
    peb_flat = (pe_flat + params["enc_b"]).astype(jnp.float32)
    # row-major reshape of the (1, S*D) decoder weight matches x.view(B, -1) flattening;
    # tiled over the batch so the decoder is one full-slab multiply + reduce (kept f32).
    dec_w_tiled = jnp.tile(params["dec_w"].reshape(S, D), (B, 1))      # (M, D) f32

    # fused QKV weights/bias (one GEMM per layer); all MXU weight operands stored as bf16.
    wqkv = jnp.concatenate([params["wq"], params["wk"], params["wv"]], axis=-1).astype(bf16)
    bqkv = jnp.concatenate([params["bq"], params["bk"], params["bv"]], axis=-1)

    # TODO(synk): dropout layers are identity at inference; training-mode dropout not implemented.

    args = (x_flat, peb_flat, params["enc_w"].astype(bf16),
            wqkv, bqkv, params["wo"].astype(bf16), params["bo"],
            params["ln1w"], params["ln1b"],
            params["w1"].astype(bf16), params["b1"],
            params["w2"].astype(bf16), params["b2"],
            params["ln2w"], params["ln2b"],
            dec_w_tiled, params["dec_b"])

    kernel = partial(fused_forward_kernel, B, S, nhead, head_dim, L, 1e-5)

    def fullspec(shape):
        n = len(shape)
        return pl.BlockSpec(shape, lambda i, n=n: (0,) * n)

    # advisory cost hint so XLA can schedule surrounding ops around this latency-bound call
    flops = (2 * M * C * D                                             # board encoder
             + L * (2 * M * D * 3 * D                                  # fused QKV
                    + 4 * B * nhead * S * S * head_dim                 # QK^T + PV
                    + 2 * M * D * D                                    # out-proj
                    + 4 * M * D * F)                                   # FFN
             + 2 * M * D)                                              # decoder
    transcendentals = L * B * nhead * S * S + B                        # softmax exp + tanh
    bytes_accessed = sum(int(a.size) * a.dtype.itemsize for a in args) + B * 4

    return pl.pallas_call(
        kernel,
        out_shape=jax.ShapeDtypeStruct((B, 1), jnp.float32),
        grid=(1,),                                                     # single fused step
        in_specs=[fullspec(a.shape) for a in args],
        out_specs=pl.BlockSpec((B, 1), lambda i: (0, 0)),
        scratch_shapes=[pltpu.VMEM((M, D), jnp.float32)],              # attention-head slab
        compiler_params=pltpu.CompilerParams(dimension_semantics=("arbitrary",)),
        cost_estimate=pl.CostEstimate(flops=flops,
                                      transcendentals=transcendentals,
                                      bytes_accessed=bytes_accessed),
    )(*args)


if __name__ == "__main__":
    # Forward-consistent shapes: input must be (B, 8, 8, 8) so that H*W = 64 (decoder expects
    # d_model*64 inputs) and channels = 8 (board_encoder in-dim). Small model config.
    B, C, H, W = 2, 8, 8, 8
    num_layers, d_model, nhead, dim_ff = 2, 128, 4, 256

    key = jax.random.PRNGKey(0)
    kx, kp = jax.random.split(key)
    x = jax.random.normal(kx, (B, C, H, W), dtype=jnp.float32)
    params = init_params(kp, num_layers, d_model, nhead, dim_ff, seq_len=H * W)

    out = jax.block_until_ready(check_matrix_forward(x, params))
    assert out.shape == (B, 1), out.shape
    assert bool(jnp.all(jnp.isfinite(out)))
    print("KERNEL_OK")
</pallas_src>

<mosaic_0001>
module attributes {stable_mosaic.version = 11 : i64} {
  func.func @fused_forward_kernel(%arg0: i32, %arg1: memref<128x8xf32, #tpu.memory_space<vmem>>, %arg2: memref<128x128xf32, #tpu.memory_space<vmem>>, %arg3: memref<8x128xbf16, #tpu.memory_space<vmem>>, %arg4: memref<2x128x384xbf16, #tpu.memory_space<vmem>>, %arg5: memref<2x1x384xf32, #tpu.memory_space<vmem>>, %arg6: memref<2x128x128xbf16, #tpu.memory_space<vmem>>, %arg7: memref<2x1x128xf32, #tpu.memory_space<vmem>>, %arg8: memref<2x1x128xf32, #tpu.memory_space<vmem>>, %arg9: memref<2x1x128xf32, #tpu.memory_space<vmem>>, %arg10: memref<2x128x256xbf16, #tpu.memory_space<vmem>>, %arg11: memref<2x1x256xf32, #tpu.memory_space<vmem>>, %arg12: memref<2x256x128xbf16, #tpu.memory_space<vmem>>, %arg13: memref<2x1x128xf32, #tpu.memory_space<vmem>>, %arg14: memref<2x1x128xf32, #tpu.memory_space<vmem>>, %arg15: memref<2x1x128xf32, #tpu.memory_space<vmem>>, %arg16: memref<128x128xf32, #tpu.memory_space<vmem>>, %arg17: memref<1x1xf32, #tpu.memory_space<vmem>>, %arg18: memref<2x1xf32, #tpu.memory_space<vmem>>, %arg19: memref<128x128xf32, #tpu.memory_space<vmem>>) attributes {dimension_semantics = [#tpu.dimension_semantics<arbitrary>], iteration_bounds = array<i64: 1>, scalar_prefetch = 0 : i64, scratch_operands = 1 : i64, tpu.core_type = #tpu.core_type<tc>, window_params = [{pipeline_mode = #tpu.pipeline_mode<synchronous>, transform_indices = @transform_0, window_bounds = array<i64: 128, 8>}, {pipeline_mode = #tpu.pipeline_mode<synchronous>, transform_indices = @transform_1, window_bounds = array<i64: 128, 128>}, {pipeline_mode = #tpu.pipeline_mode<synchronous>, transform_indices = @transform_2, window_bounds = array<i64: 8, 128>}, {pipeline_mode = #tpu.pipeline_mode<synchronous>, transform_indices = @transform_3, window_bounds = array<i64: 2, 128, 384>}, {pipeline_mode = #tpu.pipeline_mode<synchronous>, transform_indices = @transform_4, window_bounds = array<i64: 2, 1, 384>}, {pipeline_mode = #tpu.pipeline_mode<synchronous>, transform_indices = @transform_5, window_bounds = array<i64: 2, 128, 128>}, {pipeline_mode = #tpu.pipeline_mode<synchronous>, transform_indices = @transform_6, window_bounds = array<i64: 2, 1, 128>}, {pipeline_mode = #tpu.pipeline_mode<synchronous>, transform_indices = @transform_7, window_bounds = array<i64: 2, 1, 128>}, {pipeline_mode = #tpu.pipeline_mode<synchronous>, transform_indices = @transform_8, window_bounds = array<i64: 2, 1, 128>}, {pipeline_mode = #tpu.pipeline_mode<synchronous>, transform_indices = @transform_9, window_bounds = array<i64: 2, 128, 256>}, {pipeline_mode = #tpu.pipeline_mode<synchronous>, transform_indices = @transform_10, window_bounds = array<i64: 2, 1, 256>}, {pipeline_mode = #tpu.pipeline_mode<synchronous>, transform_indices = @transform_11, window_bounds = array<i64: 2, 256, 128>}, {pipeline_mode = #tpu.pipeline_mode<synchronous>, transform_indices = @transform_12, window_bounds = array<i64: 2, 1, 128>}, {pipeline_mode = #tpu.pipeline_mode<synchronous>, transform_indices = @transform_13, window_bounds = array<i64: 2, 1, 128>}, {pipeline_mode = #tpu.pipeline_mode<synchronous>, transform_indices = @transform_14, window_bounds = array<i64: 2, 1, 128>}, {pipeline_mode = #tpu.pipeline_mode<synchronous>, transform_indices = @transform_15, window_bounds = array<i64: 128, 128>}, {pipeline_mode = #tpu.pipeline_mode<synchronous>, transform_indices = @transform_16, window_bounds = array<i64: 1, 1>}, {pipeline_mode = #tpu.pipeline_mode<synchronous>, transform_indices = @transform_17, window_bounds = array<i64: 2, 1>}]} {
    %c0 = arith.constant 0 : index
    %c0_0 = arith.constant 0 : index
    %0 = vector.load %arg1[%c0, %c0_0] : memref<128x8xf32, #tpu.memory_space<vmem>>, vector<128x8xf32>
    %1 = arith.truncf %0 : vector<128x8xf32> to vector<128x8xbf16>
    %c0_1 = arith.constant 0 : index
    %c0_2 = arith.constant 0 : index
    %2 = vector.load %arg3[%c0_1, %c0_2] : memref<8x128xbf16, #tpu.memory_space<vmem>>, vector<8x128xbf16>
    %cst = arith.constant dense<0.000000e+00> : vector<128x128xf32>
    %3 = tpu.matmul %1, %2, %cst {dimension_numbers = #tpu.dot_dimension_numbers<[1], [0], [0], [1], [0, 0, 1, 1], [], []>} : vector<128x8xbf16>, vector<8x128xbf16>, vector<128x128xf32> -> vector<128x128xf32>
    %c0_3 = arith.constant 0 : index
    %c0_4 = arith.constant 0 : index
    %4 = vector.load %arg2[%c0_3, %c0_4] : memref<128x128xf32, #tpu.memory_space<vmem>>, vector<128x128xf32>
    %5 = arith.addf %3, %4 : vector<128x128xf32>
    %6 = arith.truncf %5 : vector<128x128xf32> to vector<128x128xbf16>
    %c0_5 = arith.constant 0 : index
    %c0_6 = arith.constant 0 : index
    %c0_7 = arith.constant 0 : index
    %7 = vector.load %arg4[%c0_5, %c0_6, %c0_7] : memref<2x128x384xbf16, #tpu.memory_space<vmem>>, vector<1x128x384xbf16>
    %8 = vector.shape_cast %7 : vector<1x128x384xbf16> to vector<128x384xbf16>
    %cst_8 = arith.constant dense<0.000000e+00> : vector<128x384xf32>
    %9 = tpu.matmul %6, %8, %cst_8 {dimension_numbers = #tpu.dot_dimension_numbers<[1], [0], [0], [1], [0, 0, 1, 1], [], []>} : vector<128x128xbf16>, vector<128x384xbf16>, vector<128x384xf32> -> vector<128x384xf32>
    %c0_9 = arith.constant 0 : index
    %c0_10 = arith.constant 0 : index
    %c0_11 = arith.constant 0 : index
    %10 = vector.load %arg5[%c0_9, %c0_10, %c0_11] : memref<2x1x384xf32, #tpu.memory_space<vmem>>, vector<1x1x384xf32>
    %11 = vector.shape_cast %10 : vector<1x1x384xf32> to vector<1x384xf32>
    %12 = vector.broadcast %11 : vector<1x384xf32> to vector<128x384xf32>
    %13 = arith.addf %9, %12 : vector<128x384xf32>
    %14 = vector.extract_strided_slice %13 {offsets = [0, 0], sizes = [128, 128], strides = [1, 1]} : vector<128x384xf32> to vector<128x128xf32>
    %15 = vector.extract_strided_slice %13 {offsets = [0, 128], sizes = [128, 128], strides = [1, 1]} : vector<128x384xf32> to vector<128x128xf32>
    %16 = vector.extract_strided_slice %13 {offsets = [0, 256], sizes = [128, 128], strides = [1, 1]} : vector<128x384xf32> to vector<128x128xf32>
    %17 = vector.extract_strided_slice %14 {offsets = [0, 0], sizes = [64, 32], strides = [1, 1]} : vector<128x128xf32> to vector<64x32xf32>
    %18 = arith.truncf %17 : vector<64x32xf32> to vector<64x32xbf16>
    %19 = vector.extract_strided_slice %15 {offsets = [0, 0], sizes = [64, 32], strides = [1, 1]} : vector<128x128xf32> to vector<64x32xf32>
    %20 = arith.truncf %19 : vector<64x32xf32> to vector<64x32xbf16>
    %cst_12 = arith.constant dense<0.000000e+00> : vector<64x64xf32>
    %21 = tpu.matmul %18, %20, %cst_12 {dimension_numbers = #tpu.dot_dimension_numbers<[1], [1], [0], [0], [0, 0, 1, 0], [], []>} : vector<64x32xbf16>, vector<64x32xbf16>, vector<64x64xf32> -> vector<64x64xf32>
    %22 = vector.extract_strided_slice %14 {offsets = [0, 32], sizes = [64, 32], strides = [1, 1]} : vector<128x128xf32> to vector<64x32xf32>
    %23 = arith.truncf %22 : vector<64x32xf32> to vector<64x32xbf16>
    %24 = vector.extract_strided_slice %15 {offsets = [0, 32], sizes = [64, 32], strides = [1, 1]} : vector<128x128xf32> to vector<64x32xf32>
    %25 = arith.truncf %24 : vector<64x32xf32> to vector<64x32xbf16>
    %cst_13 = arith.constant dense<0.000000e+00> : vector<64x64xf32>
    %26 = tpu.matmul %23, %25, %cst_13 {dimension_numbers = #tpu.dot_dimension_numbers<[1], [1], [0], [0], [0, 0, 1, 0], [], []>} : vector<64x32xbf16>, vector<64x32xbf16>, vector<64x64xf32> -> vector<64x64xf32>
    %27 = vector.extract_strided_slice %14 {offsets = [0, 64], sizes = [64, 32], strides = [1, 1]} : vector<128x128xf32> to vector<64x32xf32>
    %28 = arith.truncf %27 : vector<64x32xf32> to vector<64x32xbf16>
    %29 = vector.extract_strided_slice %15 {offsets = [0, 64], sizes = [64, 32], strides = [1, 1]} : vector<128x128xf32> to vector<64x32xf32>
    %30 = arith.truncf %29 : vector<64x32xf32> to vector<64x32xbf16>
    %cst_14 = arith.constant dense<0.000000e+00> : vector<64x64xf32>
    %31 = tpu.matmul %28, %30, %cst_14 {dimension_numbers = #tpu.dot_dimension_numbers<[1], [1], [0], [0], [0, 0, 1, 0], [], []>} : vector<64x32xbf16>, vector<64x32xbf16>, vector<64x64xf32> -> vector<64x64xf32>
    %32 = vector.extract_strided_slice %14 {offsets = [0, 96], sizes = [64, 32], strides = [1, 1]} : vector<128x128xf32> to vector<64x32xf32>
    %33 = arith.truncf %32 : vector<64x32xf32> to vector<64x32xbf16>
    %34 = vector.extract_strided_slice %15 {offsets = [0, 96], sizes = [64, 32], strides = [1, 1]} : vector<128x128xf32> to vector<64x32xf32>
    %35 = arith.truncf %34 : vector<64x32xf32> to vector<64x32xbf16>
    %cst_15 = arith.constant dense<0.000000e+00> : vector<64x64xf32>
    %36 = tpu.matmul %33, %35, %cst_15 {dimension_numbers = #tpu.dot_dimension_numbers<[1], [1], [0], [0], [0, 0, 1, 0], [], []>} : vector<64x32xbf16>, vector<64x32xbf16>, vector<64x64xf32> -> vector<64x64xf32>
    %37 = vector.extract_strided_slice %14 {offsets = [64, 0], sizes = [64, 32], strides = [1, 1]} : vector<128x128xf32> to vector<64x32xf32>
    %38 = arith.truncf %37 : vector<64x32xf32> to vector<64x32xbf16>
    %39 = vector.extract_strided_slice %15 {offsets = [64, 0], sizes = [64, 32], strides = [1, 1]} : vector<128x128xf32> to vector<64x32xf32>
    %40 = arith.truncf %39 : vector<64x32xf32> to vector<64x32xbf16>
    %cst_16 = arith.constant dense<0.000000e+00> : vector<64x64xf32>
    %41 = tpu.matmul %38, %40, %cst_16 {dimension_numbers = #tpu.dot_dimension_numbers<[1], [1], [0], [0], [0, 0, 1, 0], [], []>} : vector<64x32xbf16>, vector<64x32xbf16>, vector<64x64xf32> -> vector<64x64xf32>
    %42 = vector.extract_strided_slice %14 {offsets = [64, 32], sizes = [64, 32], strides = [1, 1]} : vector<128x128xf32> to vector<64x32xf32>
    %43 = arith.truncf %42 : vector<64x32xf32> to vector<64x32xbf16>
    %44 = vector.extract_strided_slice %15 {offsets = [64, 32], sizes = [64, 32], strides = [1, 1]} : vector<128x128xf32> to vector<64x32xf32>
    %45 = arith.truncf %44 : vector<64x32xf32> to vector<64x32xbf16>
    %cst_17 = arith.constant dense<0.000000e+00> : vector<64x64xf32>
    %46 = tpu.matmul %43, %45, %cst_17 {dimension_numbers = #tpu.dot_dimension_numbers<[1], [1], [0], [0], [0, 0, 1, 0], [], []>} : vector<64x32xbf16>, vector<64x32xbf16>, vector<64x64xf32> -> vector<64x64xf32>
    %47 = vector.extract_strided_slice %14 {offsets = [64, 64], sizes = [64, 32], strides = [1, 1]} : vector<128x128xf32> to vector<64x32xf32>
    %48 = arith.truncf %47 : vector<64x32xf32> to vector<64x32xbf16>
    %49 = vector.extract_strided_slice %15 {offsets = [64, 64], sizes = [64, 32], strides = [1, 1]} : vector<128x128xf32> to vector<64x32xf32>
    %50 = arith.truncf %49 : vector<64x32xf32> to vector<64x32xbf16>
    %cst_18 = arith.constant dense<0.000000e+00> : vector<64x64xf32>
    %51 = tpu.matmul %48, %50, %cst_18 {dimension_numbers = #tpu.dot_dimension_numbers<[1], [1], [0], [0], [0, 0, 1, 0], [], []>} : vector<64x32xbf16>, vector<64x32xbf16>, vector<64x64xf32> -> vector<64x64xf32>
    %52 = vector.extract_strided_slice %14 {offsets = [64, 96], sizes = [64, 32], strides = [1, 1]} : vector<128x128xf32> to vector<64x32xf32>
    %53 = arith.truncf %52 : vector<64x32xf32> to vector<64x32xbf16>
    %54 = vector.extract_strided_slice %15 {offsets = [64, 96], sizes = [64, 32], strides = [1, 1]} : vector<128x128xf32> to vector<64x32xf32>
    %55 = arith.truncf %54 : vector<64x32xf32> to vector<64x32xbf16>
    %cst_19 = arith.constant dense<0.000000e+00> : vector<64x64xf32>
    %56 = tpu.matmul %53, %55, %cst_19 {dimension_numbers = #tpu.dot_dimension_numbers<[1], [1], [0], [0], [0, 0, 1, 0], [], []>} : vector<64x32xbf16>, vector<64x32xbf16>, vector<64x64xf32> -> vector<64x64xf32>
    %57 = tpu.concatenate %21, %26, %31, %36, %41, %46, %51, %56 in 0 : vector<64x64xf32>, vector<64x64xf32>, vector<64x64xf32>, vector<64x64xf32>, vector<64x64xf32>, vector<64x64xf32>, vector<64x64xf32>, vector<64x64xf32> -> vector<512x64xf32>
    %cst_20 = arith.constant 0.176776692 : f32
    %58 = vector.broadcast %cst_20 : f32 to vector<512x64xf32>
    %59 = arith.mulf %57, %58 : vector<512x64xf32>
    %cst_21 = arith.constant dense<0xFF800000> : vector<512xf32>
    %60 = vector.multi_reduction <maximumf>, %59, %cst_21 [1] : vector<512x64xf32> to vector<512xf32>
    %61 = vector.shape_cast %60 : vector<512xf32> to vector<512x1xf32>
    %62 = vector.broadcast %61 : vector<512x1xf32> to vector<512x64xf32>
    %63 = arith.subf %59, %62 : vector<512x64xf32>
    %64 = math.exp %63 : vector<512x64xf32>
    %cst_22 = arith.constant dense<0.000000e+00> : vector<512xf32>
    %65 = vector.multi_reduction <add>, %64, %cst_22 [1] : vector<512x64xf32> to vector<512xf32>
    %66 = vector.shape_cast %65 : vector<512xf32> to vector<512x1xf32>
    %67 = vector.broadcast %66 : vector<512x1xf32> to vector<512x64xf32>
    %68 = arith.divf %64, %67 : vector<512x64xf32>
    %69 = vector.extract_strided_slice %68 {offsets = [0, 0], sizes = [64, 64], strides = [1, 1]} : vector<512x64xf32> to vector<64x64xf32>
    %70 = arith.truncf %69 : vector<64x64xf32> to vector<64x64xbf16>
    %71 = vector.extract_strided_slice %16 {offsets = [0, 0], sizes = [64, 32], strides = [1, 1]} : vector<128x128xf32> to vector<64x32xf32>
    %72 = arith.truncf %71 : vector<64x32xf32> to vector<64x32xbf16>
    %cst_23 = arith.constant dense<0.000000e+00> : vector<64x32xf32>
    %73 = tpu.matmul %70, %72, %cst_23 {dimension_numbers = #tpu.dot_dimension_numbers<[1], [0], [0], [1], [0, 0, 1, 1], [], []>} : vector<64x64xbf16>, vector<64x32xbf16>, vector<64x32xf32> -> vector<64x32xf32>
    %c0_24 = arith.constant 0 : index
    %c0_25 = arith.constant 0 : index
    %74 = vector.load %arg19[%c0_24, %c0_25] : memref<128x128xf32, #tpu.memory_space<vmem>>, vector<64x32xf32>
    tpu.vector_store %arg19[%c0_24, %c0_25], %73 {strides = array<i32>} : memref<128x128xf32, #tpu.memory_space<vmem>>, vector<64x32xf32>,
    %75 = vector.extract_strided_slice %68 {offsets = [64, 0], sizes = [64, 64], strides = [1, 1]} : vector<512x64xf32> to vector<64x64xf32>
    %76 = arith.truncf %75 : vector<64x64xf32> to vector<64x64xbf16>
    %77 = vector.extract_strided_slice %16 {offsets = [0, 32], sizes = [64, 32], strides = [1, 1]} : vector<128x128xf32> to vector<64x32xf32>
    %78 = arith.truncf %77 : vector<64x32xf32> to vector<64x32xbf16>
    %cst_26 = arith.constant dense<0.000000e+00> : vector<64x32xf32>
    %79 = tpu.matmul %76, %78, %cst_26 {dimension_numbers = #tpu.dot_dimension_numbers<[1], [0], [0], [1], [0, 0, 1, 1], [], []>} : vector<64x64xbf16>, vector<64x32xbf16>, vector<64x32xf32> -> vector<64x32xf32>
    %c0_27 = arith.constant 0 : index
    %c32 = arith.constant 32 : index
    %80 = vector.load %arg19[%c0_27, %c32] : memref<128x128xf32, #tpu.memory_space<vmem>>, vector<64x32xf32>
    tpu.vector_store %arg19[%c0_27, %c32], %79 {strides = array<i32>} : memref<128x128xf32, #tpu.memory_space<vmem>>, vector<64x32xf32>,
    %81 = vector.extract_strided_slice %68 {offsets = [128, 0], sizes = [64, 64], strides = [1, 1]} : vector<512x64xf32> to vector<64x64xf32>
    %82 = arith.truncf %81 : vector<64x64xf32> to vector<64x64xbf16>
    %83 = vector.extract_strided_slice %16 {offsets = [0, 64], sizes = [64, 32], strides = [1, 1]} : vector<128x128xf32> to vector<64x32xf32>
    %84 = arith.truncf %83 : vector<64x32xf32> to vector<64x32xbf16>
    %cst_28 = arith.constant dense<0.000000e+00> : vector<64x32xf32>
    %85 = tpu.matmul %82, %84, %cst_28 {dimension_numbers = #tpu.dot_dimension_numbers<[1], [0], [0], [1], [0, 0, 1, 1], [], []>} : vector<64x64xbf16>, vector<64x32xbf16>, vector<64x32xf32> -> vector<64x32xf32>
    %c0_29 = arith.constant 0 : index
    %c64 = arith.constant 64 : index
    %86 = vector.load %arg19[%c0_29, %c64] : memref<128x128xf32, #tpu.memory_space<vmem>>, vector<64x32xf32>
    tpu.vector_store %arg19[%c0_29, %c64], %85 {strides = array<i32>} : memref<128x128xf32, #tpu.memory_space<vmem>>, vector<64x32xf32>,
    %87 = vector.extract_strided_slice %68 {offsets = [192, 0], sizes = [64, 64], strides = [1, 1]} : vector<512x64xf32> to vector<64x64xf32>
    %88 = arith.truncf %87 : vector<64x64xf32> to vector<64x64xbf16>
    %89 = vector.extract_strided_slice %16 {offsets = [0, 96], sizes = [64, 32], strides = [1, 1]} : vector<128x128xf32> to vector<64x32xf32>
    %90 = arith.truncf %89 : vector<64x32xf32> to vector<64x32xbf16>
    %cst_30 = arith.constant dense<0.000000e+00> : vector<64x32xf32>
    %91 = tpu.matmul %88, %90, %cst_30 {dimension_numbers = #tpu.dot_dimension_numbers<[1], [0], [0], [1], [0, 0, 1, 1], [], []>} : vector<64x64xbf16>, vector<64x32xbf16>, vector<64x32xf32> -> vector<64x32xf32>
    %c0_31 = arith.constant 0 : index
    %c96 = arith.constant 96 : index
    %92 = vector.load %arg19[%c0_31, %c96] : memref<128x128xf32, #tpu.memory_space<vmem>>, vector<64x32xf32>
    tpu.vector_store %arg19[%c0_31, %c96], %91 {strides = array<i32>} : memref<128x128xf32, #tpu.memory_space<vmem>>, vector<64x32xf32>,
    %93 = vector.extract_strided_slice %68 {offsets = [256, 0], sizes = [64, 64], strides = [1, 1]} : vector<512x64xf32> to vector<64x64xf32>
    %94 = arith.truncf %93 : vector<64x64xf32> to vector<64x64xbf16>
    %95 = vector.extract_strided_slice %16 {offsets = [64, 0], sizes = [64, 32], strides = [1, 1]} : vector<128x128xf32> to vector<64x32xf32>
    %96 = arith.truncf %95 : vector<64x32xf32> to vector<64x32xbf16>
    %cst_32 = arith.constant dense<0.000000e+00> : vector<64x32xf32>
    %97 = tpu.matmul %94, %96, %cst_32 {dimension_numbers = #tpu.dot_dimension_numbers<[1], [0], [0], [1], [0, 0, 1, 1], [], []>} : vector<64x64xbf16>, vector<64x32xbf16>, vector<64x32xf32> -> vector<64x32xf32>
    %c64_33 = arith.constant 64 : index
    %c0_34 = arith.constant 0 : index
    %98 = vector.load %arg19[%c64_33, %c0_34] : memref<128x128xf32, #tpu.memory_space<vmem>>, vector<64x32xf32>
    tpu.vector_store %arg19[%c64_33, %c0_34], %97 {strides = array<i32>} : memref<128x128xf32, #tpu.memory_space<vmem>>, vector<64x32xf32>,
    %99 = vector.extract_strided_slice %68 {offsets = [320, 0], sizes = [64, 64], strides = [1, 1]} : vector<512x64xf32> to vector<64x64xf32>
    %100 = arith.truncf %99 : vector<64x64xf32> to vector<64x64xbf16>
    %101 = vector.extract_strided_slice %16 {offsets = [64, 32], sizes = [64, 32], strides = [1, 1]} : vector<128x128xf32> to vector<64x32xf32>
    %102 = arith.truncf %101 : vector<64x32xf32> to vector<64x32xbf16>
    %cst_35 = arith.constant dense<0.000000e+00> : vector<64x32xf32>
    %103 = tpu.matmul %100, %102, %cst_35 {dimension_numbers = #tpu.dot_dimension_numbers<[1], [0], [0], [1], [0, 0, 1, 1], [], []>} : vector<64x64xbf16>, vector<64x32xbf16>, vector<64x32xf32> -> vector<64x32xf32>
    %c64_36 = arith.constant 64 : index
    %c32_37 = arith.constant 32 : index
    %104 = vector.load %arg19[%c64_36, %c32_37] : memref<128x128xf32, #tpu.memory_space<vmem>>, vector<64x32xf32>
    tpu.vector_store %arg19[%c64_36, %c32_37], %103 {strides = array<i32>} : memref<128x128xf32, #tpu.memory_space<vmem>>, vector<64x32xf32>,
    %105 = vector.extract_strided_slice %68 {offsets = [384, 0], sizes = [64, 64], strides = [1, 1]} : vector<512x64xf32> to vector<64x64xf32>
    %106 = arith.truncf %105 : vector<64x64xf32> to vector<64x64xbf16>
    %107 = vector.extract_strided_slice %16 {offsets = [64, 64], sizes = [64, 32], strides = [1, 1]} : vector<128x128xf32> to vector<64x32xf32>
    %108 = arith.truncf %107 : vector<64x32xf32> to vector<64x32xbf16>
    %cst_38 = arith.constant dense<0.000000e+00> : vector<64x32xf32>
    %109 = tpu.matmul %106, %108, %cst_38 {dimension_numbers = #tpu.dot_dimension_numbers<[1], [0], [0], [1], [0, 0, 1, 1], [], []>} : vector<64x64xbf16>, vector<64x32xbf16>, vector<64x32xf32> -> vector<64x32xf32>
    %c64_39 = arith.constant 64 : index
    %c64_40 = arith.constant 64 : index
    %110 = vector.load %arg19[%c64_39, %c64_40] : memref<128x128xf32, #tpu.memory_space<vmem>>, vector<64x32xf32>
    tpu.vector_store %arg19[%c64_39, %c64_40], %109 {strides = array<i32>} : memref<128x128xf32, #tpu.memory_space<vmem>>, vector<64x32xf32>,
    %111 = vector.extract_strided_slice %68 {offsets = [448, 0], sizes = [64, 64], strides = [1, 1]} : vector<512x64xf32> to vector<64x64xf32>
    %112 = arith.truncf %111 : vector<64x64xf32> to vector<64x64xbf16>
    %113 = vector.extract_strided_slice %16 {offsets = [64, 96], sizes = [64, 32], strides = [1, 1]} : vector<128x128xf32> to vector<64x32xf32>
    %114 = arith.truncf %113 : vector<64x32xf32> to vector<64x32xbf16>
    %cst_41 = arith.constant dense<0.000000e+00> : vector<64x32xf32>
    %115 = tpu.matmul %112, %114, %cst_41 {dimension_numbers = #tpu.dot_dimension_numbers<[1], [0], [0], [1], [0, 0, 1, 1], [], []>} : vector<64x64xbf16>, vector<64x32xbf16>, vector<64x32xf32> -> vector<64x32xf32>
    %c64_42 = arith.constant 64 : index
    %c96_43 = arith.constant 96 : index
    %116 = vector.load %arg19[%c64_42, %c96_43] : memref<128x128xf32, #tpu.memory_space<vmem>>, vector<64x32xf32>
    tpu.vector_store %arg19[%c64_42, %c96_43], %115 {strides = array<i32>} : memref<128x128xf32, #tpu.memory_space<vmem>>, vector<64x32xf32>,
    %c0_44 = arith.constant 0 : index
    %c0_45 = arith.constant 0 : index
    %117 = vector.load %arg19[%c0_44, %c0_45] : memref<128x128xf32, #tpu.memory_space<vmem>>, vector<128x128xf32>
    %118 = arith.truncf %117 : vector<128x128xf32> to vector<128x128xbf16>
    %c0_46 = arith.constant 0 : index
    %c0_47 = arith.constant 0 : index
    %c0_48 = arith.constant 0 : index
    %119 = vector.load %arg6[%c0_46, %c0_47, %c0_48] : memref<2x128x128xbf16, #tpu.memory_space<vmem>>, vector<1x128x128xbf16>
    %120 = vector.shape_cast %119 : vector<1x128x128xbf16> to vector<128x128xbf16>
    %cst_49 = arith.constant dense<0.000000e+00> : vector<128x128xf32>
    %121 = tpu.matmul %118, %120, %cst_49 {dimension_numbers = #tpu.dot_dimension_numbers<[1], [0], [0], [1], [0, 0, 1, 1], [], []>} : vector<128x128xbf16>, vector<128x128xbf16>, vector<128x128xf32> -> vector<128x128xf32>
    %c0_50 = arith.constant 0 : index
    %c0_51 = arith.constant 0 : index
    %c0_52 = arith.constant 0 : index
    %122 = vector.load %arg7[%c0_50, %c0_51, %c0_52] : memref<2x1x128xf32, #tpu.memory_space<vmem>>, vector<1x1x128xf32>
    %123 = vector.shape_cast %122 : vector<1x1x128xf32> to vector<1x128xf32>
    %124 = vector.broadcast %123 : vector<1x128xf32> to vector<128x128xf32>
    %125 = arith.addf %121, %124 : vector<128x128xf32>
    %126 = arith.addf %5, %125 : vector<128x128xf32>
    %c0_53 = arith.constant 0 : index
    %c0_54 = arith.constant 0 : index
    %c0_55 = arith.constant 0 : index
    %127 = vector.load %arg8[%c0_53, %c0_54, %c0_55] : memref<2x1x128xf32, #tpu.memory_space<vmem>>, vector<1x1x128xf32>
    %128 = vector.shape_cast %127 : vector<1x1x128xf32> to vector<1x128xf32>
    %c0_56 = arith.constant 0 : index
    %c0_57 = arith.constant 0 : index
    %c0_58 = arith.constant 0 : index
    %129 = vector.load %arg9[%c0_56, %c0_57, %c0_58] : memref<2x1x128xf32, #tpu.memory_space<vmem>>, vector<1x1x128xf32>
    %130 = vector.shape_cast %129 : vector<1x1x128xf32> to vector<1x128xf32>
    %cst_59 = arith.constant dense<0.000000e+00> : vector<128xf32>
    %131 = vector.multi_reduction <add>, %126, %cst_59 [1] : vector<128x128xf32> to vector<128xf32>
    %132 = vector.shape_cast %131 : vector<128xf32> to vector<128x1xf32>
    %cst_60 = arith.constant 1.280000e+02 : f32
    %133 = vector.broadcast %cst_60 : f32 to vector<128x1xf32>
    %134 = arith.divf %132, %133 : vector<128x1xf32>
    %135 = vector.broadcast %134 : vector<128x1xf32> to vector<128x128xf32>
    %136 = arith.subf %126, %135 : vector<128x128xf32>
    %137 = arith.mulf %136, %136 : vector<128x128xf32>
    %cst_61 = arith.constant dense<0.000000e+00> : vector<128xf32>
    %138 = vector.multi_reduction <add>, %137, %cst_61 [1] : vector<128x128xf32> to vector<128xf32>
    %139 = vector.shape_cast %138 : vector<128xf32> to vector<128x1xf32>
    %cst_62 = arith.constant 1.280000e+02 : f32
    %140 = vector.broadcast %cst_62 : f32 to vector<128x1xf32>
    %141 = arith.divf %139, %140 : vector<128x1xf32>
    %142 = vector.broadcast %134 : vector<128x1xf32> to vector<128x128xf32>
    %143 = arith.subf %126, %142 : vector<128x128xf32>
    %cst_63 = arith.constant 9.99999974E-6 : f32
    %144 = vector.broadcast %cst_63 : f32 to vector<128x1xf32>
    %145 = arith.addf %141, %144 : vector<128x1xf32>
    %146 = math.rsqrt %145 : vector<128x1xf32>
    %147 = vector.broadcast %146 : vector<128x1xf32> to vector<128x128xf32>
    %148 = arith.mulf %143, %147 : vector<128x128xf32>
    %149 = vector.broadcast %128 : vector<1x128xf32> to vector<128x128xf32>
    %150 = arith.mulf %148, %149 : vector<128x128xf32>
    %151 = vector.broadcast %130 : vector<1x128xf32> to vector<128x128xf32>
    %152 = arith.addf %150, %151 : vector<128x128xf32>
    %153 = arith.truncf %152 : vector<128x128xf32> to vector<128x128xbf16>
    %c0_64 = arith.constant 0 : index
    %c0_65 = arith.constant 0 : index
    %c0_66 = arith.constant 0 : index
    %154 = vector.load %arg10[%c0_64, %c0_65, %c0_66] : memref<2x128x256xbf16, #tpu.memory_space<vmem>>, vector<1x128x256xbf16>
    %155 = vector.shape_cast %154 : vector<1x128x256xbf16> to vector<128x256xbf16>
    %cst_67 = arith.constant dense<0.000000e+00> : vector<128x256xf32>
    %156 = tpu.matmul %153, %155, %cst_67 {dimension_numbers = #tpu.dot_dimension_numbers<[1], [0], [0], [1], [0, 0, 1, 1], [], []>} : vector<128x128xbf16>, vector<128x256xbf16>, vector<128x256xf32> -> vector<128x256xf32>
    %c0_68 = arith.constant 0 : index
    %c0_69 = arith.constant 0 : index
    %c0_70 = arith.constant 0 : index
    %157 = vector.load %arg11[%c0_68, %c0_69, %c0_70] : memref<2x1x256xf32, #tpu.memory_space<vmem>>, vector<1x1x256xf32>
    %158 = vector.shape_cast %157 : vector<1x1x256xf32> to vector<1x256xf32>
    %159 = vector.broadcast %158 : vector<1x256xf32> to vector<128x256xf32>
    %160 = arith.addf %156, %159 : vector<128x256xf32>
    %cst_71 = arith.constant 0.000000e+00 : f32
    %161 = vector.broadcast %cst_71 : f32 to vector<128x256xf32>
    %162 = arith.maximumf %160, %161 : vector<128x256xf32>
    %163 = arith.truncf %162 : vector<128x256xf32> to vector<128x256xbf16>
    %c0_72 = arith.constant 0 : index
    %c0_73 = arith.constant 0 : index
    %c0_74 = arith.constant 0 : index
    %164 = vector.load %arg12[%c0_72, %c0_73, %c0_74] : memref<2x256x128xbf16, #tpu.memory_space<vmem>>, vector<1x256x128xbf16>
    %165 = vector.shape_cast %164 : vector<1x256x128xbf16> to vector<256x128xbf16>
    %cst_75 = arith.constant dense<0.000000e+00> : vector<128x128xf32>
    %166 = tpu.matmul %163, %165, %cst_75 {dimension_numbers = #tpu.dot_dimension_numbers<[1], [0], [0], [1], [0, 0, 1, 1], [], []>} : vector<128x256xbf16>, vector<256x128xbf16>, vector<128x128xf32> -> vector<128x128xf32>
    %c0_76 = arith.constant 0 : index
    %c0_77 = arith.constant 0 : index
    %c0_78 = arith.constant 0 : index
    %167 = vector.load %arg13[%c0_76, %c0_77, %c0_78] : memref<2x1x128xf32, #tpu.memory_space<vmem>>, vector<1x1x128xf32>
    %168 = vector.shape_cast %167 : vector<1x1x128xf32> to vector<1x128xf32>
    %169 = vector.broadcast %168 : vector<1x128xf32> to vector<128x128xf32>
    %170 = arith.addf %166, %169 : vector<128x128xf32>
    %171 = arith.addf %152, %170 : vector<128x128xf32>
    %c0_79 = arith.constant 0 : index
    %c0_80 = arith.constant 0 : index
    %c0_81 = arith.constant 0 : index
    %172 = vector.load %arg14[%c0_79, %c0_80, %c0_81] : memref<2x1x128xf32, #tpu.memory_space<vmem>>, vector<1x1x128xf32>
    %173 = vector.shape_cast %172 : vector<1x1x128xf32> to vector<1x128xf32>
    %c0_82 = arith.constant 0 : index
    %c0_83 = arith.constant 0 : index
    %c0_84 = arith.constant 0 : index
    %174 = vector.load %arg15[%c0_82, %c0_83, %c0_84] : memref<2x1x128xf32, #tpu.memory_space<vmem>>, vector<1x1x128xf32>
    %175 = vector.shape_cast %174 : vector<1x1x128xf32> to vector<1x128xf32>
    %cst_85 = arith.constant dense<0.000000e+00> : vector<128xf32>
    %176 = vector.multi_reduction <add>, %171, %cst_85 [1] : vector<128x128xf32> to vector<128xf32>
    %177 = vector.shape_cast %176 : vector<128xf32> to vector<128x1xf32>
    %cst_86 = arith.constant 1.280000e+02 : f32
    %178 = vector.broadcast %cst_86 : f32 to vector<128x1xf32>
    %179 = arith.divf %177, %178 : vector<128x1xf32>
    %180 = vector.broadcast %179 : vector<128x1xf32> to vector<128x128xf32>
    %181 = arith.subf %171, %180 : vector<128x128xf32>
    %182 = arith.mulf %181, %181 : vector<128x128xf32>
    %cst_87 = arith.constant dense<0.000000e+00> : vector<128xf32>
    %183 = vector.multi_reduction <add>, %182, %cst_87 [1] : vector<128x128xf32> to vector<128xf32>
    %184 = vector.shape_cast %183 : vector<128xf32> to vector<128x1xf32>
    %cst_88 = arith.constant 1.280000e+02 : f32
    %185 = vector.broadcast %cst_88 : f32 to vector<128x1xf32>
    %186 = arith.divf %184, %185 : vector<128x1xf32>
    %187 = vector.broadcast %179 : vector<128x1xf32> to vector<128x128xf32>
    %188 = arith.subf %171, %187 : vector<128x128xf32>
    %cst_89 = arith.constant 9.99999974E-6 : f32
    %189 = vector.broadcast %cst_89 : f32 to vector<128x1xf32>
    %190 = arith.addf %186, %189 : vector<128x1xf32>
    %191 = math.rsqrt %190 : vector<128x1xf32>
    %192 = vector.broadcast %191 : vector<128x1xf32> to vector<128x128xf32>
    %193 = arith.mulf %188, %192 : vector<128x128xf32>
    %194 = vector.broadcast %173 : vector<1x128xf32> to vector<128x128xf32>
    %195 = arith.mulf %193, %194 : vector<128x128xf32>
    %196 = vector.broadcast %175 : vector<1x128xf32> to vector<128x128xf32>
    %197 = arith.addf %195, %196 : vector<128x128xf32>
    %198 = arith.truncf %197 : vector<128x128xf32> to vector<128x128xbf16>
    %c1 = arith.constant 1 : index
    %c0_90 = arith.constant 0 : index
    %c0_91 = arith.constant 0 : index
    %199 = vector.load %arg4[%c1, %c0_90, %c0_91] : memref<2x128x384xbf16, #tpu.memory_space<vmem>>, vector<1x128x384xbf16>
    %200 = vector.shape_cast %199 : vector<1x128x384xbf16> to vector<128x384xbf16>
    %cst_92 = arith.constant dense<0.000000e+00> : vector<128x384xf32>
    %201 = tpu.matmul %198, %200, %cst_92 {dimension_numbers = #tpu.dot_dimension_numbers<[1], [0], [0], [1], [0, 0, 1, 1], [], []>} : vector<128x128xbf16>, vector<128x384xbf16>, vector<128x384xf32> -> vector<128x384xf32>
    %c1_93 = arith.constant 1 : index
    %c0_94 = arith.constant 0 : index
    %c0_95 = arith.constant 0 : index
    %202 = vector.load %arg5[%c1_93, %c0_94, %c0_95] : memref<2x1x384xf32, #tpu.memory_space<vmem>>, vector<1x1x384xf32>
    %203 = vector.shape_cast %202 : vector<1x1x384xf32> to vector<1x384xf32>
    %204 = vector.broadcast %203 : vector<1x384xf32> to vector<128x384xf32>
    %205 = arith.addf %201, %204 : vector<128x384xf32>
    %206 = vector.extract_strided_slice %205 {offsets = [0, 0], sizes = [128, 128], strides = [1, 1]} : vector<128x384xf32> to vector<128x128xf32>
    %207 = vector.extract_strided_slice %205 {offsets = [0, 128], sizes = [128, 128], strides = [1, 1]} : vector<128x384xf32> to vector<128x128xf32>
    %208 = vector.extract_strided_slice %205 {offsets = [0, 256], sizes = [128, 128], strides = [1, 1]} : vector<128x384xf32> to vector<128x128xf32>
    %209 = vector.extract_strided_slice %206 {offsets = [0, 0], sizes = [64, 32], strides = [1, 1]} : vector<128x128xf32> to vector<64x32xf32>
    %210 = arith.truncf %209 : vector<64x32xf32> to vector<64x32xbf16>
    %211 = vector.extract_strided_slice %207 {offsets = [0, 0], sizes = [64, 32], strides = [1, 1]} : vector<128x128xf32> to vector<64x32xf32>
    %212 = arith.truncf %211 : vector<64x32xf32> to vector<64x32xbf16>
    %cst_96 = arith.constant dense<0.000000e+00> : vector<64x64xf32>
    %213 = tpu.matmul %210, %212, %cst_96 {dimension_numbers = #tpu.dot_dimension_numbers<[1], [1], [0], [0], [0, 0, 1, 0], [], []>} : vector<64x32xbf16>, vector<64x32xbf16>, vector<64x64xf32> -> vector<64x64xf32>
    %214 = vector.extract_strided_slice %206 {offsets = [0, 32], sizes = [64, 32], strides = [1, 1]} : vector<128x128xf32> to vector<64x32xf32>
    %215 = arith.truncf %214 : vector<64x32xf32> to vector<64x32xbf16>
    %216 = vector.extract_strided_slice %207 {offsets = [0, 32], sizes = [64, 32], strides = [1, 1]} : vector<128x128xf32> to vector<64x32xf32>
    %217 = arith.truncf %216 : vector<64x32xf32> to vector<64x32xbf16>
    %cst_97 = arith.constant dense<0.000000e+00> : vector<64x64xf32>
    %218 = tpu.matmul %215, %217, %cst_97 {dimension_numbers = #tpu.dot_dimension_numbers<[1], [1], [0], [0], [0, 0, 1, 0], [], []>} : vector<64x32xbf16>, vector<64x32xbf16>, vector<64x64xf32> -> vector<64x64xf32>
    %219 = vector.extract_strided_slice %206 {offsets = [0, 64], sizes = [64, 32], strides = [1, 1]} : vector<128x128xf32> to vector<64x32xf32>
    %220 = arith.truncf %219 : vector<64x32xf32> to vector<64x32xbf16>
    %221 = vector.extract_strided_slice %207 {offsets = [0, 64], sizes = [64, 32], strides = [1, 1]} : vector<128x128xf32> to vector<64x32xf32>
    %222 = arith.truncf %221 : vector<64x32xf32> to vector<64x32xbf16>
    %cst_98 = arith.constant dense<0.000000e+00> : vector<64x64xf32>
    %223 = tpu.matmul %220, %222, %cst_98 {dimension_numbers = #tpu.dot_dimension_numbers<[1], [1], [0], [0], [0, 0, 1, 0], [], []>} : vector<64x32xbf16>, vector<64x32xbf16>, vector<64x64xf32> -> vector<64x64xf32>
    %224 = vector.extract_strided_slice %206 {offsets = [0, 96], sizes = [64, 32], strides = [1, 1]} : vector<128x128xf32> to vector<64x32xf32>
    %225 = arith.truncf %224 : vector<64x32xf32> to vector<64x32xbf16>
    %226 = vector.extract_strided_slice %207 {offsets = [0, 96], sizes = [64, 32], strides = [1, 1]} : vector<128x128xf32> to vector<64x32xf32>
    %227 = arith.truncf %226 : vector<64x32xf32> to vector<64x32xbf16>
    %cst_99 = arith.constant dense<0.000000e+00> : vector<64x64xf32>
    %228 = tpu.matmul %225, %227, %cst_99 {dimension_numbers = #tpu.dot_dimension_numbers<[1], [1], [0], [0], [0, 0, 1, 0], [], []>} : vector<64x32xbf16>, vector<64x32xbf16>, vector<64x64xf32> -> vector<64x64xf32>
    %229 = vector.extract_strided_slice %206 {offsets = [64, 0], sizes = [64, 32], strides = [1, 1]} : vector<128x128xf32> to vector<64x32xf32>
    %230 = arith.truncf %229 : vector<64x32xf32> to vector<64x32xbf16>
    %231 = vector.extract_strided_slice %207 {offsets = [64, 0], sizes = [64, 32], strides = [1, 1]} : vector<128x128xf32> to vector<64x32xf32>
    %232 = arith.truncf %231 : vector<64x32xf32> to vector<64x32xbf16>
    %cst_100 = arith.constant dense<0.000000e+00> : vector<64x64xf32>
    %233 = tpu.matmul %230, %232, %cst_100 {dimension_numbers = #tpu.dot_dimension_numbers<[1], [1], [0], [0], [0, 0, 1, 0], [], []>} : vector<64x32xbf16>, vector<64x32xbf16>, vector<64x64xf32> -> vector<64x64xf32>
    %234 = vector.extract_strided_slice %206 {offsets = [64, 32], sizes = [64, 32], strides = [1, 1]} : vector<128x128xf32> to vector<64x32xf32>
    %235 = arith.truncf %234 : vector<64x32xf32> to vector<64x32xbf16>
    %236 = vector.extract_strided_slice %207 {offsets = [64, 32], sizes = [64, 32], strides = [1, 1]} : vector<128x128xf32> to vector<64x32xf32>
    %237 = arith.truncf %236 : vector<64x32xf32> to vector<64x32xbf16>
    %cst_101 = arith.constant dense<0.000000e+00> : vector<64x64xf32>
    %238 = tpu.matmul %235, %237, %cst_101 {dimension_numbers = #tpu.dot_dimension_numbers<[1], [1], [0], [0], [0, 0, 1, 0], [], []>} : vector<64x32xbf16>, vector<64x32xbf16>, vector<64x64xf32> -> vector<64x64xf32>
    %239 = vector.extract_strided_slice %206 {offsets = [64, 64], sizes = [64, 32], strides = [1, 1]} : vector<128x128xf32> to vector<64x32xf32>
    %240 = arith.truncf %239 : vector<64x32xf32> to vector<64x32xbf16>
    %241 = vector.extract_strided_slice %207 {offsets = [64, 64], sizes = [64, 32], strides = [1, 1]} : vector<128x128xf32> to vector<64x32xf32>
    %242 = arith.truncf %241 : vector<64x32xf32> to vector<64x32xbf16>
    %cst_102 = arith.constant dense<0.000000e+00> : vector<64x64xf32>
    %243 = tpu.matmul %240, %242, %cst_102 {dimension_numbers = #tpu.dot_dimension_numbers<[1], [1], [0], [0], [0, 0, 1, 0], [], []>} : vector<64x32xbf16>, vector<64x32xbf16>, vector<64x64xf32> -> vector<64x64xf32>
    %244 = vector.extract_strided_slice %206 {offsets = [64, 96], sizes = [64, 32], strides = [1, 1]} : vector<128x128xf32> to vector<64x32xf32>
    %245 = arith.truncf %244 : vector<64x32xf32> to vector<64x32xbf16>
    %246 = vector.extract_strided_slice %207 {offsets = [64, 96], sizes = [64, 32], strides = [1, 1]} : vector<128x128xf32> to vector<64x32xf32>
    %247 = arith.truncf %246 : vector<64x32xf32> to vector<64x32xbf16>
    %cst_103 = arith.constant dense<0.000000e+00> : vector<64x64xf32>
    %248 = tpu.matmul %245, %247, %cst_103 {dimension_numbers = #tpu.dot_dimension_numbers<[1], [1], [0], [0], [0, 0, 1, 0], [], []>} : vector<64x32xbf16>, vector<64x32xbf16>, vector<64x64xf32> -> vector<64x64xf32>
    %249 = tpu.concatenate %213, %218, %223, %228, %233, %238, %243, %248 in 0 : vector<64x64xf32>, vector<64x64xf32>, vector<64x64xf32>, vector<64x64xf32>, vector<64x64xf32>, vector<64x64xf32>, vector<64x64xf32>, vector<64x64xf32> -> vector<512x64xf32>
    %cst_104 = arith.constant 0.176776692 : f32
    %250 = vector.broadcast %cst_104 : f32 to vector<512x64xf32>
    %251 = arith.mulf %249, %250 : vector<512x64xf32>
    %cst_105 = arith.constant dense<0xFF800000> : vector<512xf32>
    %252 = vector.multi_reduction <maximumf>, %251, %cst_105 [1] : vector<512x64xf32> to vector<512xf32>
    %253 = vector.shape_cast %252 : vector<512xf32> to vector<512x1xf32>
    %254 = vector.broadcast %253 : vector<512x1xf32> to vector<512x64xf32>
    %255 = arith.subf %251, %254 : vector<512x64xf32>
    %256 = math.exp %255 : vector<512x64xf32>
    %cst_106 = arith.constant dense<0.000000e+00> : vector<512xf32>
    %257 = vector.multi_reduction <add>, %256, %cst_106 [1] : vector<512x64xf32> to vector<512xf32>
    %258 = vector.shape_cast %257 : vector<512xf32> to vector<512x1xf32>
    %259 = vector.broadcast %258 : vector<512x1xf32> to vector<512x64xf32>
    %260 = arith.divf %256, %259 : vector<512x64xf32>
    %261 = vector.extract_strided_slice %260 {offsets = [0, 0], sizes = [64, 64], strides = [1, 1]} : vector<512x64xf32> to vector<64x64xf32>
    %262 = arith.truncf %261 : vector<64x64xf32> to vector<64x64xbf16>
    %263 = vector.extract_strided_slice %208 {offsets = [0, 0], sizes = [64, 32], strides = [1, 1]} : vector<128x128xf32> to vector<64x32xf32>
    %264 = arith.truncf %263 : vector<64x32xf32> to vector<64x32xbf16>
    %cst_107 = arith.constant dense<0.000000e+00> : vector<64x32xf32>
    %265 = tpu.matmul %262, %264, %cst_107 {dimension_numbers = #tpu.dot_dimension_numbers<[1], [0], [0], [1], [0, 0, 1, 1], [], []>} : vector<64x64xbf16>, vector<64x32xbf16>, vector<64x32xf32> -> vector<64x32xf32>
    %c0_108 = arith.constant 0 : index
    %c0_109 = arith.constant 0 : index
    %266 = vector.load %arg19[%c0_108, %c0_109] : memref<128x128xf32, #tpu.memory_space<vmem>>, vector<64x32xf32>
    tpu.vector_store %arg19[%c0_108, %c0_109], %265 {strides = array<i32>} : memref<128x128xf32, #tpu.memory_space<vmem>>, vector<64x32xf32>,
    %267 = vector.extract_strided_slice %260 {offsets = [64, 0], sizes = [64, 64], strides = [1, 1]} : vector<512x64xf32> to vector<64x64xf32>
    %268 = arith.truncf %267 : vector<64x64xf32> to vector<64x64xbf16>
    %269 = vector.extract_strided_slice %208 {offsets = [0, 32], sizes = [64, 32], strides = [1, 1]} : vector<128x128xf32> to vector<64x32xf32>
    %270 = arith.truncf %269 : vector<64x32xf32> to vector<64x32xbf16>
    %cst_110 = arith.constant dense<0.000000e+00> : vector<64x32xf32>
    %271 = tpu.matmul %268, %270, %cst_110 {dimension_numbers = #tpu.dot_dimension_numbers<[1], [0], [0], [1], [0, 0, 1, 1], [], []>} : vector<64x64xbf16>, vector<64x32xbf16>, vector<64x32xf32> -> vector<64x32xf32>
    %c0_111 = arith.constant 0 : index
    %c32_112 = arith.constant 32 : index
    %272 = vector.load %arg19[%c0_111, %c32_112] : memref<128x128xf32, #tpu.memory_space<vmem>>, vector<64x32xf32>
    tpu.vector_store %arg19[%c0_111, %c32_112], %271 {strides = array<i32>} : memref<128x128xf32, #tpu.memory_space<vmem>>, vector<64x32xf32>,
    %273 = vector.extract_strided_slice %260 {offsets = [128, 0], sizes = [64, 64], strides = [1, 1]} : vector<512x64xf32> to vector<64x64xf32>
    %274 = arith.truncf %273 : vector<64x64xf32> to vector<64x64xbf16>
    %275 = vector.extract_strided_slice %208 {offsets = [0, 64], sizes = [64, 32], strides = [1, 1]} : vector<128x128xf32> to vector<64x32xf32>
    %276 = arith.truncf %275 : vector<64x32xf32> to vector<64x32xbf16>
    %cst_113 = arith.constant dense<0.000000e+00> : vector<64x32xf32>
    %277 = tpu.matmul %274, %276, %cst_113 {dimension_numbers = #tpu.dot_dimension_numbers<[1], [0], [0], [1], [0, 0, 1, 1], [], []>} : vector<64x64xbf16>, vector<64x32xbf16>, vector<64x32xf32> -> vector<64x32xf32>
    %c0_114 = arith.constant 0 : index
    %c64_115 = arith.constant 64 : index
    %278 = vector.load %arg19[%c0_114, %c64_115] : memref<128x128xf32, #tpu.memory_space<vmem>>, vector<64x32xf32>
    tpu.vector_store %arg19[%c0_114, %c64_115], %277 {strides = array<i32>} : memref<128x128xf32, #tpu.memory_space<vmem>>, vector<64x32xf32>,
    %279 = vector.extract_strided_slice %260 {offsets = [192, 0], sizes = [64, 64], strides = [1, 1]} : vector<512x64xf32> to vector<64x64xf32>
    %280 = arith.truncf %279 : vector<64x64xf32> to vector<64x64xbf16>
    %281 = vector.extract_strided_slice %208 {offsets = [0, 96], sizes = [64, 32], strides = [1, 1]} : vector<128x128xf32> to vector<64x32xf32>
    %282 = arith.truncf %281 : vector<64x32xf32> to vector<64x32xbf16>
    %cst_116 = arith.constant dense<0.000000e+00> : vector<64x32xf32>
    %283 = tpu.matmul %280, %282, %cst_116 {dimension_numbers = #tpu.dot_dimension_numbers<[1], [0], [0], [1], [0, 0, 1, 1], [], []>} : vector<64x64xbf16>, vector<64x32xbf16>, vector<64x32xf32> -> vector<64x32xf32>
    %c0_117 = arith.constant 0 : index
    %c96_118 = arith.constant 96 : index
    %284 = vector.load %arg19[%c0_117, %c96_118] : memref<128x128xf32, #tpu.memory_space<vmem>>, vector<64x32xf32>
    tpu.vector_store %arg19[%c0_117, %c96_118], %283 {strides = array<i32>} : memref<128x128xf32, #tpu.memory_space<vmem>>, vector<64x32xf32>,
    %285 = vector.extract_strided_slice %260 {offsets = [256, 0], sizes = [64, 64], strides = [1, 1]} : vector<512x64xf32> to vector<64x64xf32>
    %286 = arith.truncf %285 : vector<64x64xf32> to vector<64x64xbf16>
    %287 = vector.extract_strided_slice %208 {offsets = [64, 0], sizes = [64, 32], strides = [1, 1]} : vector<128x128xf32> to vector<64x32xf32>
    %288 = arith.truncf %287 : vector<64x32xf32> to vector<64x32xbf16>
    %cst_119 = arith.constant dense<0.000000e+00> : vector<64x32xf32>
    %289 = tpu.matmul %286, %288, %cst_119 {dimension_numbers = #tpu.dot_dimension_numbers<[1], [0], [0], [1], [0, 0, 1, 1], [], []>} : vector<64x64xbf16>, vector<64x32xbf16>, vector<64x32xf32> -> vector<64x32xf32>
    %c64_120 = arith.constant 64 : index
    %c0_121 = arith.constant 0 : index
    %290 = vector.load %arg19[%c64_120, %c0_121] : memref<128x128xf32, #tpu.memory_space<vmem>>, vector<64x32xf32>
    tpu.vector_store %arg19[%c64_120, %c0_121], %289 {strides = array<i32>} : memref<128x128xf32, #tpu.memory_space<vmem>>, vector<64x32xf32>,
    %291 = vector.extract_strided_slice %260 {offsets = [320, 0], sizes = [64, 64], strides = [1, 1]} : vector<512x64xf32> to vector<64x64xf32>
    %292 = arith.truncf %291 : vector<64x64xf32> to vector<64x64xbf16>
    %293 = vector.extract_strided_slice %208 {offsets = [64, 32], sizes = [64, 32], strides = [1, 1]} : vector<128x128xf32> to vector<64x32xf32>
    %294 = arith.truncf %293 : vector<64x32xf32> to vector<64x32xbf16>
    %cst_122 = arith.constant dense<0.000000e+00> : vector<64x32xf32>
    %295 = tpu.matmul %292, %294, %cst_122 {dimension_numbers = #tpu.dot_dimension_numbers<[1], [0], [0], [1], [0, 0, 1, 1], [], []>} : vector<64x64xbf16>, vector<64x32xbf16>, vector<64x32xf32> -> vector<64x32xf32>
    %c64_123 = arith.constant 64 : index
    %c32_124 = arith.constant 32 : index
    %296 = vector.load %arg19[%c64_123, %c32_124] : memref<128x128xf32, #tpu.memory_space<vmem>>, vector<64x32xf32>
    tpu.vector_store %arg19[%c64_123, %c32_124], %295 {strides = array<i32>} : memref<128x128xf32, #tpu.memory_space<vmem>>, vector<64x32xf32>,
    %297 = vector.extract_strided_slice %260 {offsets = [384, 0], sizes = [64, 64], strides = [1, 1]} : vector<512x64xf32> to vector<64x64xf32>
    %298 = arith.truncf %297 : vector<64x64xf32> to vector<64x64xbf16>
    %299 = vector.extract_strided_slice %208 {offsets = [64, 64], sizes = [64, 32], strides = [1, 1]} : vector<128x128xf32> to vector<64x32xf32>
    %300 = arith.truncf %299 : vector<64x32xf32> to vector<64x32xbf16>
    %cst_125 = arith.constant dense<0.000000e+00> : vector<64x32xf32>
    %301 = tpu.matmul %298, %300, %cst_125 {dimension_numbers = #tpu.dot_dimension_numbers<[1], [0], [0], [1], [0, 0, 1, 1], [], []>} : vector<64x64xbf16>, vector<64x32xbf16>, vector<64x32xf32> -> vector<64x32xf32>
    %c64_126 = arith.constant 64 : index
    %c64_127 = arith.constant 64 : index
    %302 = vector.load %arg19[%c64_126, %c64_127] : memref<128x128xf32, #tpu.memory_space<vmem>>, vector<64x32xf32>
    tpu.vector_store %arg19[%c64_126, %c64_127], %301 {strides = array<i32>} : memref<128x128xf32, #tpu.memory_space<vmem>>, vector<64x32xf32>,
    %303 = vector.extract_strided_slice %260 {offsets = [448, 0], sizes = [64, 64], strides = [1, 1]} : vector<512x64xf32> to vector<64x64xf32>
    %304 = arith.truncf %303 : vector<64x64xf32> to vector<64x64xbf16>
    %305 = vector.extract_strided_slice %208 {offsets = [64, 96], sizes = [64, 32], strides = [1, 1]} : vector<128x128xf32> to vector<64x32xf32>
    %306 = arith.truncf %305 : vector<64x32xf32> to vector<64x32xbf16>
    %cst_128 = arith.constant dense<0.000000e+00> : vector<64x32xf32>
    %307 = tpu.matmul %304, %306, %cst_128 {dimension_numbers = #tpu.dot_dimension_numbers<[1], [0], [0], [1], [0, 0, 1, 1], [], []>} : vector<64x64xbf16>, vector<64x32xbf16>, vector<64x32xf32> -> vector<64x32xf32>
    %c64_129 = arith.constant 64 : index
    %c96_130 = arith.constant 96 : index
    %308 = vector.load %arg19[%c64_129, %c96_130] : memref<128x128xf32, #tpu.memory_space<vmem>>, vector<64x32xf32>
    tpu.vector_store %arg19[%c64_129, %c96_130], %307 {strides = array<i32>} : memref<128x128xf32, #tpu.memory_space<vmem>>, vector<64x32xf32>,
    %c0_131 = arith.constant 0 : index
    %c0_132 = arith.constant 0 : index
    %309 = vector.load %arg19[%c0_131, %c0_132] : memref<128x128xf32, #tpu.memory_space<vmem>>, vector<128x128xf32>
    %310 = arith.truncf %309 : vector<128x128xf32> to vector<128x128xbf16>
    %c1_133 = arith.constant 1 : index
    %c0_134 = arith.constant 0 : index
    %c0_135 = arith.constant 0 : index
    %311 = vector.load %arg6[%c1_133, %c0_134, %c0_135] : memref<2x128x128xbf16, #tpu.memory_space<vmem>>, vector<1x128x128xbf16>
    %312 = vector.shape_cast %311 : vector<1x128x128xbf16> to vector<128x128xbf16>
    %cst_136 = arith.constant dense<0.000000e+00> : vector<128x128xf32>
    %313 = tpu.matmul %310, %312, %cst_136 {dimension_numbers = #tpu.dot_dimension_numbers<[1], [0], [0], [1], [0, 0, 1, 1], [], []>} : vector<128x128xbf16>, vector<128x128xbf16>, vector<128x128xf32> -> vector<128x128xf32>
    %c1_137 = arith.constant 1 : index
    %c0_138 = arith.constant 0 : index
    %c0_139 = arith.constant 0 : index
    %314 = vector.load %arg7[%c1_137, %c0_138, %c0_139] : memref<2x1x128xf32, #tpu.memory_space<vmem>>, vector<1x1x128xf32>
    %315 = vector.shape_cast %314 : vector<1x1x128xf32> to vector<1x128xf32>
    %316 = vector.broadcast %315 : vector<1x128xf32> to vector<128x128xf32>
    %317 = arith.addf %313, %316 : vector<128x128xf32>
    %318 = arith.addf %197, %317 : vector<128x128xf32>
    %c1_140 = arith.constant 1 : index
    %c0_141 = arith.constant 0 : index
    %c0_142 = arith.constant 0 : index
    %319 = vector.load %arg8[%c1_140, %c0_141, %c0_142] : memref<2x1x128xf32, #tpu.memory_space<vmem>>, vector<1x1x128xf32>
    %320 = vector.shape_cast %319 : vector<1x1x128xf32> to vector<1x128xf32>
    %c1_143 = arith.constant 1 : index
    %c0_144 = arith.constant 0 : index
    %c0_145 = arith.constant 0 : index
    %321 = vector.load %arg9[%c1_143, %c0_144, %c0_145] : memref<2x1x128xf32, #tpu.memory_space<vmem>>, vector<1x1x128xf32>
    %322 = vector.shape_cast %321 : vector<1x1x128xf32> to vector<1x128xf32>
    %cst_146 = arith.constant dense<0.000000e+00> : vector<128xf32>
    %323 = vector.multi_reduction <add>, %318, %cst_146 [1] : vector<128x128xf32> to vector<128xf32>
    %324 = vector.shape_cast %323 : vector<128xf32> to vector<128x1xf32>
    %cst_147 = arith.constant 1.280000e+02 : f32
    %325 = vector.broadcast %cst_147 : f32 to vector<128x1xf32>
    %326 = arith.divf %324, %325 : vector<128x1xf32>
    %327 = vector.broadcast %326 : vector<128x1xf32> to vector<128x128xf32>
    %328 = arith.subf %318, %327 : vector<128x128xf32>
    %329 = arith.mulf %328, %328 : vector<128x128xf32>
    %cst_148 = arith.constant dense<0.000000e+00> : vector<128xf32>
    %330 = vector.multi_reduction <add>, %329, %cst_148 [1] : vector<128x128xf32> to vector<128xf32>
    %331 = vector.shape_cast %330 : vector<128xf32> to vector<128x1xf32>
    %cst_149 = arith.constant 1.280000e+02 : f32
    %332 = vector.broadcast %cst_149 : f32 to vector<128x1xf32>
    %333 = arith.divf %331, %332 : vector<128x1xf32>
    %334 = vector.broadcast %326 : vector<128x1xf32> to vector<128x128xf32>
    %335 = arith.subf %318, %334 : vector<128x128xf32>
    %cst_150 = arith.constant 9.99999974E-6 : f32
    %336 = vector.broadcast %cst_150 : f32 to vector<128x1xf32>
    %337 = arith.addf %333, %336 : vector<128x1xf32>
    %338 = math.rsqrt %337 : vector<128x1xf32>
    %339 = vector.broadcast %338 : vector<128x1xf32> to vector<128x128xf32>
    %340 = arith.mulf %335, %339 : vector<128x128xf32>
    %341 = vector.broadcast %320 : vector<1x128xf32> to vector<128x128xf32>
    %342 = arith.mulf %340, %341 : vector<128x128xf32>
    %343 = vector.broadcast %322 : vector<1x128xf32> to vector<128x128xf32>
    %344 = arith.addf %342, %343 : vector<128x128xf32>
    %345 = arith.truncf %344 : vector<128x128xf32> to vector<128x128xbf16>
    %c1_151 = arith.constant 1 : index
    %c0_152 = arith.constant 0 : index
    %c0_153 = arith.constant 0 : index
    %346 = vector.load %arg10[%c1_151, %c0_152, %c0_153] : memref<2x128x256xbf16, #tpu.memory_space<vmem>>, vector<1x128x256xbf16>
    %347 = vector.shape_cast %346 : vector<1x128x256xbf16> to vector<128x256xbf16>
    %cst_154 = arith.constant dense<0.000000e+00> : vector<128x256xf32>
    %348 = tpu.matmul %345, %347, %cst_154 {dimension_numbers = #tpu.dot_dimension_numbers<[1], [0], [0], [1], [0, 0, 1, 1], [], []>} : vector<128x128xbf16>, vector<128x256xbf16>, vector<128x256xf32> -> vector<128x256xf32>
    %c1_155 = arith.constant 1 : index
    %c0_156 = arith.constant 0 : index
    %c0_157 = arith.constant 0 : index
    %349 = vector.load %arg11[%c1_155, %c0_156, %c0_157] : memref<2x1x256xf32, #tpu.memory_space<vmem>>, vector<1x1x256xf32>
    %350 = vector.shape_cast %349 : vector<1x1x256xf32> to vector<1x256xf32>
    %351 = vector.broadcast %350 : vector<1x256xf32> to vector<128x256xf32>
    %352 = arith.addf %348, %351 : vector<128x256xf32>
    %cst_158 = arith.constant 0.000000e+00 : f32
    %353 = vector.broadcast %cst_158 : f32 to vector<128x256xf32>
    %354 = arith.maximumf %352, %353 : vector<128x256xf32>
    %355 = arith.truncf %354 : vector<128x256xf32> to vector<128x256xbf16>
    %c1_159 = arith.constant 1 : index
    %c0_160 = arith.constant 0 : index
    %c0_161 = arith.constant 0 : index
    %356 = vector.load %arg12[%c1_159, %c0_160, %c0_161] : memref<2x256x128xbf16, #tpu.memory_space<vmem>>, vector<1x256x128xbf16>
    %357 = vector.shape_cast %356 : vector<1x256x128xbf16> to vector<256x128xbf16>
    %cst_162 = arith.constant dense<0.000000e+00> : vector<128x128xf32>
    %358 = tpu.matmul %355, %357, %cst_162 {dimension_numbers = #tpu.dot_dimension_numbers<[1], [0], [0], [1], [0, 0, 1, 1], [], []>} : vector<128x256xbf16>, vector<256x128xbf16>, vector<128x128xf32> -> vector<128x128xf32>
    %c1_163 = arith.constant 1 : index
    %c0_164 = arith.constant 0 : index
    %c0_165 = arith.constant 0 : index
    %359 = vector.load %arg13[%c1_163, %c0_164, %c0_165] : memref<2x1x128xf32, #tpu.memory_space<vmem>>, vector<1x1x128xf32>
    %360 = vector.shape_cast %359 : vector<1x1x128xf32> to vector<1x128xf32>
    %361 = vector.broadcast %360 : vector<1x128xf32> to vector<128x128xf32>
    %362 = arith.addf %358, %361 : vector<128x128xf32>
    %363 = arith.addf %344, %362 : vector<128x128xf32>
    %c1_166 = arith.constant 1 : index
    %c0_167 = arith.constant 0 : index
    %c0_168 = arith.constant 0 : index
    %364 = vector.load %arg14[%c1_166, %c0_167, %c0_168] : memref<2x1x128xf32, #tpu.memory_space<vmem>>, vector<1x1x128xf32>
    %365 = vector.shape_cast %364 : vector<1x1x128xf32> to vector<1x128xf32>
    %c1_169 = arith.constant 1 : index
    %c0_170 = arith.constant 0 : index
    %c0_171 = arith.constant 0 : index
    %366 = vector.load %arg15[%c1_169, %c0_170, %c0_171] : memref<2x1x128xf32, #tpu.memory_space<vmem>>, vector<1x1x128xf32>
    %367 = vector.shape_cast %366 : vector<1x1x128xf32> to vector<1x128xf32>
    %cst_172 = arith.constant dense<0.000000e+00> : vector<128xf32>
    %368 = vector.multi_reduction <add>, %363, %cst_172 [1] : vector<128x128xf32> to vector<128xf32>
    %369 = vector.shape_cast %368 : vector<128xf32> to vector<128x1xf32>
    %cst_173 = arith.constant 1.280000e+02 : f32
    %370 = vector.broadcast %cst_173 : f32 to vector<128x1xf32>
    %371 = arith.divf %369, %370 : vector<128x1xf32>
    %372 = vector.broadcast %371 : vector<128x1xf32> to vector<128x128xf32>
    %373 = arith.subf %363, %372 : vector<128x128xf32>
    %374 = arith.mulf %373, %373 : vector<128x128xf32>
    %cst_174 = arith.constant dense<0.000000e+00> : vector<128xf32>
    %375 = vector.multi_reduction <add>, %374, %cst_174 [1] : vector<128x128xf32> to vector<128xf32>
    %376 = vector.shape_cast %375 : vector<128xf32> to vector<128x1xf32>
    %cst_175 = arith.constant 1.280000e+02 : f32
    %377 = vector.broadcast %cst_175 : f32 to vector<128x1xf32>
    %378 = arith.divf %376, %377 : vector<128x1xf32>
    %379 = vector.broadcast %371 : vector<128x1xf32> to vector<128x128xf32>
    %380 = arith.subf %363, %379 : vector<128x128xf32>
    %cst_176 = arith.constant 9.99999974E-6 : f32
    %381 = vector.broadcast %cst_176 : f32 to vector<128x1xf32>
    %382 = arith.addf %378, %381 : vector<128x1xf32>
    %383 = math.rsqrt %382 : vector<128x1xf32>
    %384 = vector.broadcast %383 : vector<128x1xf32> to vector<128x128xf32>
    %385 = arith.mulf %380, %384 : vector<128x128xf32>
    %386 = vector.broadcast %365 : vector<1x128xf32> to vector<128x128xf32>
    %387 = arith.mulf %385, %386 : vector<128x128xf32>
    %388 = vector.broadcast %367 : vector<1x128xf32> to vector<128x128xf32>
    %389 = arith.addf %387, %388 : vector<128x128xf32>
    %c0_177 = arith.constant 0 : index
    %c0_178 = arith.constant 0 : index
    %390 = vector.load %arg16[%c0_177, %c0_178] : memref<128x128xf32, #tpu.memory_space<vmem>>, vector<128x128xf32>
    %391 = arith.mulf %389, %390 : vector<128x128xf32>
    %cst_179 = arith.constant dense<0.000000e+00> : vector<128xf32>
    %392 = vector.multi_reduction <add>, %391, %cst_179 [1] : vector<128x128xf32> to vector<128xf32>
    %393 = vector.shape_cast %392 : vector<128xf32> to vector<128x1xf32>
    %394 = vector.extract_strided_slice %393 {offsets = [0, 0], sizes = [64, 1], strides = [1, 1]} : vector<128x1xf32> to vector<64x1xf32>
    %cst_180 = arith.constant dense<0.000000e+00> : vector<1xf32>
    %395 = vector.multi_reduction <add>, %394, %cst_180 [0] : vector<64x1xf32> to vector<1xf32>
    %396 = vector.shape_cast %395 : vector<1xf32> to vector<1x1xf32>
    %397 = vector.extract_strided_slice %393 {offsets = [64, 0], sizes = [64, 1], strides = [1, 1]} : vector<128x1xf32> to vector<64x1xf32>
    %cst_181 = arith.constant dense<0.000000e+00> : vector<1xf32>
    %398 = vector.multi_reduction <add>, %397, %cst_181 [0] : vector<64x1xf32> to vector<1xf32>
    %399 = vector.shape_cast %398 : vector<1xf32> to vector<1x1xf32>
    %400 = tpu.concatenate %396, %399 in 0 : vector<1x1xf32>, vector<1x1xf32> -> vector<2x1xf32>
    %c0_182 = arith.constant 0 : index
    %c0_183 = arith.constant 0 : index
    %401 = vector.load %arg17[%c0_182, %c0_183] : memref<1x1xf32, #tpu.memory_space<vmem>>, vector<1x1xf32>
    %402 = vector.broadcast %401 : vector<1x1xf32> to vector<2x1xf32>
    %403 = arith.addf %400, %402 : vector<2x1xf32>
    %404 = math.tanh %403 : vector<2x1xf32>
    %c0_184 = arith.constant 0 : index
    %c0_185 = arith.constant 0 : index
    %405 = vector.load %arg18[%c0_184, %c0_185] : memref<2x1xf32, #tpu.memory_space<vmem>>, vector<2x1xf32>
    tpu.vector_store %arg18[%c0_184, %c0_185], %404 {strides = array<i32>} : memref<2x1xf32, #tpu.memory_space<vmem>>, vector<2x1xf32>,
    return
  }
  func.func @transform_0(%arg0: i32) -> (i32, i32) {
    %c0_i32 = arith.constant 0 : i32
    %c0_i32_0 = arith.constant 0 : i32
    %c0_i32_1 = arith.constant 0 : i32
    return %c0_i32, %c0_i32_0 : i32, i32
  }
  func.func @transform_1(%arg0: i32) -> (i32, i32) {
    %c0_i32 = arith.constant 0 : i32
    %c0_i32_0 = arith.constant 0 : i32
    %c0_i32_1 = arith.constant 0 : i32
    return %c0_i32, %c0_i32_0 : i32, i32
  }
  func.func @transform_2(%arg0: i32) -> (i32, i32) {
    %c0_i32 = arith.constant 0 : i32
    %c0_i32_0 = arith.constant 0 : i32
    %c0_i32_1 = arith.constant 0 : i32
    return %c0_i32, %c0_i32_0 : i32, i32
  }
  func.func @transform_3(%arg0: i32) -> (i32, i32, i32) {
    %c0_i32 = arith.constant 0 : i32
    %c0_i32_0 = arith.constant 0 : i32
    %c0_i32_1 = arith.constant 0 : i32
    %c0_i32_2 = arith.constant 0 : i32
    return %c0_i32, %c0_i32_0, %c0_i32_1 : i32, i32, i32
  }
  func.func @transform_4(%arg0: i32) -> (i32, i32, i32) {
    %c0_i32 = arith.constant 0 : i32
    %c0_i32_0 = arith.constant 0 : i32
    %c0_i32_1 = arith.constant 0 : i32
    %c0_i32_2 = arith.constant 0 : i32
    return %c0_i32, %c0_i32_0, %c0_i32_1 : i32, i32, i32
  }
  func.func @transform_5(%arg0: i32) -> (i32, i32, i32) {
    %c0_i32 = arith.constant 0 : i32
    %c0_i32_0 = arith.constant 0 : i32
    %c0_i32_1 = arith.constant 0 : i32
    %c0_i32_2 = arith.constant 0 : i32
    return %c0_i32, %c0_i32_0, %c0_i32_1 : i32, i32, i32
  }
  func.func @transform_6(%arg0: i32) -> (i32, i32, i32) {
    %c0_i32 = arith.constant 0 : i32
    %c0_i32_0 = arith.constant 0 : i32
    %c0_i32_1 = arith.constant 0 : i32
    %c0_i32_2 = arith.constant 0 : i32
    return %c0_i32, %c0_i32_0, %c0_i32_1 : i32, i32, i32
  }
  func.func @transform_7(%arg0: i32) -> (i32, i32, i32) {
    %c0_i32 = arith.constant 0 : i32
    %c0_i32_0 = arith.constant 0 : i32
    %c0_i32_1 = arith.constant 0 : i32
    %c0_i32_2 = arith.constant 0 : i32
    return %c0_i32, %c0_i32_0, %c0_i32_1 : i32, i32, i32
  }
  func.func @transform_8(%arg0: i32) -> (i32, i32, i32) {
    %c0_i32 = arith.constant 0 : i32
    %c0_i32_0 = arith.constant 0 : i32
    %c0_i32_1 = arith.constant 0 : i32
    %c0_i32_2 = arith.constant 0 : i32
    return %c0_i32, %c0_i32_0, %c0_i32_1 : i32, i32, i32
  }
  func.func @transform_9(%arg0: i32) -> (i32, i32, i32) {
    %c0_i32 = arith.constant 0 : i32
    %c0_i32_0 = arith.constant 0 : i32
    %c0_i32_1 = arith.constant 0 : i32
    %c0_i32_2 = arith.constant 0 : i32
    return %c0_i32, %c0_i32_0, %c0_i32_1 : i32, i32, i32
  }
  func.func @transform_10(%arg0: i32) -> (i32, i32, i32) {
    %c0_i32 = arith.constant 0 : i32
    %c0_i32_0 = arith.constant 0 : i32
    %c0_i32_1 = arith.constant 0 : i32
    %c0_i32_2 = arith.constant 0 : i32
    return %c0_i32, %c0_i32_0, %c0_i32_1 : i32, i32, i32
  }
  func.func @transform_11(%arg0: i32) -> (i32, i32, i32) {
    %c0_i32 = arith.constant 0 : i32
    %c0_i32_0 = arith.constant 0 : i32
    %c0_i32_1 = arith.constant 0 : i32
    %c0_i32_2 = arith.constant 0 : i32
    return %c0_i32, %c0_i32_0, %c0_i32_1 : i32, i32, i32
  }
  func.func @transform_12(%arg0: i32) -> (i32, i32, i32) {
    %c0_i32 = arith.constant 0 : i32
    %c0_i32_0 = arith.constant 0 : i32
    %c0_i32_1 = arith.constant 0 : i32
    %c0_i32_2 = arith.constant 0 : i32
    return %c0_i32, %c0_i32_0, %c0_i32_1 : i32, i32, i32
  }
  func.func @transform_13(%arg0: i32) -> (i32, i32, i32) {
    %c0_i32 = arith.constant 0 : i32
    %c0_i32_0 = arith.constant 0 : i32
    %c0_i32_1 = arith.constant 0 : i32
    %c0_i32_2 = arith.constant 0 : i32
    return %c0_i32, %c0_i32_0, %c0_i32_1 : i32, i32, i32
  }
  func.func @transform_14(%arg0: i32) -> (i32, i32, i32) {
    %c0_i32 = arith.constant 0 : i32
    %c0_i32_0 = arith.constant 0 : i32
    %c0_i32_1 = arith.constant 0 : i32
    %c0_i32_2 = arith.constant 0 : i32
    return %c0_i32, %c0_i32_0, %c0_i32_1 : i32, i32, i32
  }
  func.func @transform_15(%arg0: i32) -> (i32, i32) {
    %c0_i32 = arith.constant 0 : i32
    %c0_i32_0 = arith.constant 0 : i32
    %c0_i32_1 = arith.constant 0 : i32
    return %c0_i32, %c0_i32_0 : i32, i32
  }
  func.func @transform_16(%arg0: i32) -> (i32, i32) {
    %c0_i32 = arith.constant 0 : i32
    %c0_i32_0 = arith.constant 0 : i32
    %c0_i32_1 = arith.constant 0 : i32
    return %c0_i32, %c0_i32_0 : i32, i32
  }
  func.func @transform_17(%arg0: i32) -> (i32, i32) {
    %c0_i32 = arith.constant 0 : i32
    %c0_i32_0 = arith.constant 0 : i32
    %c0_i32_1 = arith.constant 0 : i32
    return %c0_i32, %c0_i32_0 : i32, i32
  }
}

</mosaic_0001>

<llo_original>
// kernel: tpu_custom_call.1
$region0: #{tpu_custom_call.1}
  #allocation0 [shape = 'u32[]', space=smem, size = 0x4, offset = 0x4, fixed_abs, tag = 'smem constant byte address 0x4 - core index']
  #allocation1 [shape = 'u32[144,128]{1,0:T(1,128)}', space=vmem, size = 0x12000, scoped, tag = 'internal scratch']
  #allocation2 [shape = 'f32[128,128]{1,0:T(8,128)}', space=vmem, size = 0x10000, scoped, tag = 'scratch operand']
  #allocation3 [shape = 'f32[1,1]{1,0:T(1,128)S(1)}', space=vmem, size = 0x200, scoped, tag = 'scoped memory for tpu_custom_call.1']
  %s0 = inlined_call_operand.vmem [shape: f32[128,8], index: 0, kind: input, shape index: {}]
  %s1 = inlined_call_operand.vmem [shape: f32[128,128], index: 1, kind: input, shape index: {}]
  %s2 = inlined_call_operand.vmem [shape: bf16[8,128], index: 2, kind: input, shape index: {}]
  %s3 = inlined_call_operand.hbm [shape: bf16[2,128,384], index: 3, kind: input, shape index: {}]
  %s4 = inlined_call_operand.vmem [shape: f32[2,1,384], index: 4, kind: input, shape index: {}]
  %s5 = inlined_call_operand.hbm [shape: bf16[2,128,128], index: 5, kind: input, shape index: {}]
  %s6 = inlined_call_operand.vmem [shape: f32[2,1,128], index: 6, kind: input, shape index: {}]
  %s7 = inlined_call_operand.vmem [shape: f32[2,1,128], index: 7, kind: input, shape index: {}]
  %s8 = inlined_call_operand.vmem [shape: f32[2,1,128], index: 8, kind: input, shape index: {}]
  %s9 = inlined_call_operand.hbm [shape: bf16[2,128,256], index: 9, kind: input, shape index: {}]
  %s10 = inlined_call_operand.vmem [shape: f32[2,1,256], index: 10, kind: input, shape index: {}]
  %s11 = inlined_call_operand.hbm [shape: bf16[2,256,128], index: 11, kind: input, shape index: {}]
  %s12 = inlined_call_operand.vmem [shape: f32[2,1,128], index: 12, kind: input, shape index: {}]
  %s13 = inlined_call_operand.vmem [shape: f32[2,1,128], index: 13, kind: input, shape index: {}]
  %s14 = inlined_call_operand.vmem [shape: f32[2,1,128], index: 14, kind: input, shape index: {}]
  %s15 = inlined_call_operand.hbm [shape: f32[128,128], index: 15, kind: input, shape index: {}]
  %s16 = inlined_call_operand.<no memory space> [shape: f32[1,1], index: 16, kind: input, shape index: {}]
  %s17 = inlined_call_operand.vmem [shape: f32[2,1], index: 17, kind: output, shape index: {}]
  %s18 = sld [smem:[#allocation0]]
  $region98: #{tpu_custom_call.1} parent=0
    _
  %s20 = ssub.s32 1, %s18
  %s21 = scalar_select 0, %s20, %s18
  %v22 = vstv %s16
  %23 = vst [vmem:[#allocation3] sm:$0x1] %v22
  $region1: #{tpu_custom_call.1} parent=0
    #allocation4 [shape = 'u8[196608]{0}', space=vmem, size = 0x30000, scoped, tag = 'input window, operand 3, single buffered']
    #allocation5 [shape = 's32[1]{0}', space=sflag, size = 0x4, scoped, tag = 'scoped memory for tpu_custom_call.1']
    #allocation6 [shape = 'u8[65536]{0}', space=vmem, size = 0x10000, scoped, tag = 'input window, operand 5, single buffered']
    #allocation7 [shape = 's32[1]{0}', space=sflag, size = 0x4, scoped, tag = 'scoped memory for tpu_custom_call.1']
    #allocation8 [shape = 'u8[131072]{0}', space=vmem, size = 0x20000, scoped, tag = 'input window, operand 9, single buffered']
    #allocation9 [shape = 'u8[131072]{0}', space=vmem, size = 0x20000, scoped, tag = 'input window, operand 11, single buffered']
    #allocation10 [shape = 's32[1]{0}', space=sflag, size = 0x4, scoped, tag = 'scoped memory for tpu_custom_call.1']
    #allocation11 [shape = 'u8[65536]{0}', space=vmem, size = 0x10000, scoped, tag = 'input window, operand 15, single buffered']
    %24 = vsyncpa [#allocation5], 0
    %25 = vsyncpa [#allocation7], 0
    %26 = vsyncpa [#allocation10], 0
    // Predicated region
    $region2: #{tpu_custom_call.1} parent=1 // pred_check
      _
    $region3: #{tpu_custom_call.1} parent=1 // pred_check_branch
      %28 = sbr.rel (0) target = $region5
    $region4: #{tpu_custom_call.1} parent=1 // pred_region
      _
    $region5: #{tpu_custom_call.1} parent=1 // pred_fallthru
      _
    // Predicated region
    $region6: #{tpu_custom_call.1} parent=1 // pred_check
      _
    $region7: #{tpu_custom_call.1} parent=1 // pred_check_branch
      %30 = sbr.rel (0) target = $region9
    $region8: #{tpu_custom_call.1} parent=1 // pred_region
      _
    $region9: #{tpu_custom_call.1} parent=1 // pred_fallthru
      _
    // Predicated region
    $region10: #{tpu_custom_call.1} parent=1 // pred_check
      _
    $region11: #{tpu_custom_call.1} parent=1 // pred_check_branch
      %32 = sbr.rel (0) target = $region13
    $region12: #{tpu_custom_call.1} parent=1 // pred_region
      _
    $region13: #{tpu_custom_call.1} parent=1 // pred_fallthru
      _
    // Predicated region
    $region14: #{tpu_custom_call.1} parent=1 // pred_check
      _
    $region15: #{tpu_custom_call.1} parent=1 // pred_check_branch
      %34 = sbr.rel (0) target = $region17
    $region16: #{tpu_custom_call.1} parent=1 // pred_region
      %s36 = ssub.s32 6144, 6144
      %37 = vsyncadd [#allocation5], %s36
      %s38 = sshll.u32 [#allocation4], 4
      %s39 = int_to_ptr.vmem [resolvable:$true] %s38
      %44 = dma.hbm_to_vmem [thread:$0]  %s3, 6144, %s39, [#allocation5], 192, 192, 12
    $region17: #{tpu_custom_call.1} parent=1 // pred_fallthru
      _
    // Predicated region
    $region18: #{tpu_custom_call.1} parent=1 // pred_check
      _
    $region19: #{tpu_custom_call.1} parent=1 // pred_check_branch
      %46 = sbr.rel (0) target = $region21
    $region20: #{tpu_custom_call.1} parent=1 // pred_region
      _
    $region21: #{tpu_custom_call.1} parent=1 // pred_fallthru
      _
    // Predicated region
    $region22: #{tpu_custom_call.1} parent=1 // pred_check
      _
    $region23: #{tpu_custom_call.1} parent=1 // pred_check_branch
      %48 = sbr.rel (0) target = $region25
    $region24: #{tpu_custom_call.1} parent=1 // pred_region
      %s50 = ssub.s32 2048, 2048
      %51 = vsyncadd [#allocation7], %s50
      %s52 = sshll.u32 [#allocation6], 4
      %s53 = int_to_ptr.vmem [resolvable:$true] %s52
      %58 = dma.hbm_to_vmem [thread:$0]  %s5, 2048, %s53, [#allocation7], 64, 64, 4
    $region25: #{tpu_custom_call.1} parent=1 // pred_fallthru
      _
    // Predicated region
    $region26: #{tpu_custom_call.1} parent=1 // pred_check
      _
    $region27: #{tpu_custom_call.1} parent=1 // pred_check_branch
      %60 = sbr.rel (0) target = $region29
    $region28: #{tpu_custom_call.1} parent=1 // pred_region
      _
    $region29: #{tpu_custom_call.1} parent=1 // pred_fallthru
      _
    // Predicated region
    $region30: #{tpu_custom_call.1} parent=1 // pred_check
      _
    $region31: #{tpu_custom_call.1} parent=1 // pred_check_branch
      %62 = sbr.rel (0) target = $region33
    $region32: #{tpu_custom_call.1} parent=1 // pred_region
      _
    $region33: #{tpu_custom_call.1} parent=1 // pred_fallthru
      _
    // Predicated region
    $region34: #{tpu_custom_call.1} parent=1 // pred_check
      _
    $region35: #{tpu_custom_call.1} parent=1 // pred_check_branch
      %64 = sbr.rel (0) target = $region37
    $region36: #{tpu_custom_call.1} parent=1 // pred_region
      _
    $region37: #{tpu_custom_call.1} parent=1 // pred_fallthru
      _
    // Predicated region
    $region38: #{tpu_custom_call.1} parent=1 // pred_check
      _
    $region39: #{tpu_custom_call.1} parent=1 // pred_check_branch
      %66 = sbr.rel (0) target = $region41
    $region40: #{tpu_custom_call.1} parent=1 // pred_region
      %s68 = ssub.s32 4096, 4096
      %69 = vsyncadd [#allocation7], %s68
      %s70 = sshll.u32 [#allocation8], 4
      %s71 = int_to_ptr.vmem [resolvable:$true] %s70
      %76 = dma.hbm_to_vmem [thread:$0]  %s9, 4096, %s71, [#allocation7], 128, 128, 8
    $region41: #{tpu_custom_call.1} parent=1 // pred_fallthru
      _
    // Predicated region
    $region42: #{tpu_custom_call.1} parent=1 // pred_check
      _
    $region43: #{tpu_custom_call.1} parent=1 // pred_check_branch
      %78 = sbr.rel (0) target = $region45
    $region44: #{tpu_custom_call.1} parent=1 // pred_region
      _
    $region45: #{tpu_custom_call.1} parent=1 // pred_fallthru
      _
    // Predicated region
    $region46: #{tpu_custom_call.1} parent=1 // pred_check
      _
    $region47: #{tpu_custom_call.1} parent=1 // pred_check_branch
      %80 = sbr.rel (0) target = $region49
    $region48: #{tpu_custom_call.1} parent=1 // pred_region
      %s82 = ssub.s32 4096, 4096
      %83 = vsyncadd [#allocation10], %s82
      %s84 = sshll.u32 [#allocation9], 4
      %s85 = int_to_ptr.vmem [resolvable:$true] %s84
      %90 = dma.hbm_to_vmem [thread:$0]  %s11, 4096, %s85, [#allocation10], 64, 64, 4
    $region49: #{tpu_custom_call.1} parent=1 // pred_fallthru
      _
    // Predicated region
    $region50: #{tpu_custom_call.1} parent=1 // pred_check
      _
    $region51: #{tpu_custom_call.1} parent=1 // pred_check_branch
      %92 = sbr.rel (0) target = $region53
    $region52: #{tpu_custom_call.1} parent=1 // pred_region
      _
    $region53: #{tpu_custom_call.1} parent=1 // pred_fallthru
      _
    // Predicated region
    $region54: #{tpu_custom_call.1} parent=1 // pred_check
      _
    $region55: #{tpu_custom_call.1} parent=1 // pred_check_branch
      %94 = sbr.rel (0) target = $region57
    $region56: #{tpu_custom_call.1} parent=1 // pred_region
      _
    $region57: #{tpu_custom_call.1} parent=1 // pred_fallthru
      _
    // Predicated region
    $region58: #{tpu_custom_call.1} parent=1 // pred_check
      _
    $region59: #{tpu_custom_call.1} parent=1 // pred_check_branch
      %96 = sbr.rel (0) target = $region61
    $region60: #{tpu_custom_call.1} parent=1 // pred_region
      _
    $region61: #{tpu_custom_call.1} parent=1 // pred_fallthru
      _
    // Predicated region
    $region62: #{tpu_custom_call.1} parent=1 // pred_check
      _
    $region63: #{tpu_custom_call.1} parent=1 // pred_check_branch
      %98 = sbr.rel (0) target = $region65
    $region64: #{tpu_custom_call.1} parent=1 // pred_region
      %s100 = ssub.s32 2048, 2048
      %101 = vsyncadd [#allocation10], %s100
      %s102 = sshll.u32 [#allocation11], 4
      %s103 = int_to_ptr.vmem [resolvable:$true] %s102
      %108 = dma.hbm_to_vmem [thread:$0]  %s15, 2048, %s103, [#allocation10], 128, 128, 8
    $region65: #{tpu_custom_call.1} parent=1 // pred_fallthru
      _
    // Predicated region
    $region66: #{tpu_custom_call.1} parent=1 // pred_check
      _
    $region67: #{tpu_custom_call.1} parent=1 // pred_check_branch
      %110 = sbr.rel (0) target = $region69
    $region68: #{tpu_custom_call.1} parent=1 // pred_region
      _
    $region69: #{tpu_custom_call.1} parent=1 // pred_fallthru
      _
    // Predicated region
    $region70: #{tpu_custom_call.1} parent=1 // pred_check
      _
    $region71: #{tpu_custom_call.1} parent=1 // pred_check_branch
      %112 = sbr.rel (0) target = $region73
    $region72: #{tpu_custom_call.1} parent=1 // pred_region
      %113 = dma.done [#allocation5], 6144
    $region73: #{tpu_custom_call.1} parent=1 // pred_fallthru
      _
    // Predicated region
    $region74: #{tpu_custom_call.1} parent=1 // pred_check
      _
    $region75: #{tpu_custom_call.1} parent=1 // pred_check_branch
      %115 = sbr.rel (0) target = $region77
    $region76: #{tpu_custom_call.1} parent=1 // pred_region
      %116 = dma.done [#allocation7], 2048
    $region77: #{tpu_custom_call.1} parent=1 // pred_fallthru
      _
    // Predicated region
    $region78: #{tpu_custom_call.1} parent=1 // pred_check
      _
    $region79: #{tpu_custom_call.1} parent=1 // pred_check_branch
      %118 = sbr.rel (0) target = $region81
    $region80: #{tpu_custom_call.1} parent=1 // pred_region
      %119 = dma.done [#allocation7], 4096
    $region81: #{tpu_custom_call.1} parent=1 // pred_fallthru
      _
    // Predicated region
    $region82: #{tpu_custom_call.1} parent=1 // pred_check
      _
    $region83: #{tpu_custom_call.1} parent=1 // pred_check_branch
      %121 = sbr.rel (0) target = $region85
    $region84: #{tpu_custom_call.1} parent=1 // pred_region
      %122 = dma.done [#allocation10], 4096
    $region85: #{tpu_custom_call.1} parent=1 // pred_fallthru
      _
    // Predicated region
    $region86: #{tpu_custom_call.1} parent=1 // pred_check
      _
    $region87: #{tpu_custom_call.1} parent=1 // pred_check_branch
      %124 = sbr.rel (0) target = $region89
    $region88: #{tpu_custom_call.1} parent=1 // pred_region
      %125 = dma.done [#allocation10], 2048
    $region89: #{tpu_custom_call.1} parent=1 // pred_fallthru
      _
    %v127 = vld [vmem:[%s0] sm:$0xff]
    %v128 = vld [vmem:[%s0 + $0x8] sm:$0xff]
    %v129 = vld [vmem:[%s0 + $0x10] sm:$0xff]
    %v130 = vld [vmem:[%s0 + $0x18] sm:$0xff]
    %v131 = vld [vmem:[%s0 + $0x20] sm:$0xff]
    %v132 = vld [vmem:[%s0 + $0x28] sm:$0xff]
    %v133 = vld [vmem:[%s0 + $0x30] sm:$0xff]
    %v134 = vld [vmem:[%s0 + $0x38] sm:$0xff]
    %v135 = vld [vmem:[%s0 + $0x40] sm:$0xff]
    %v136 = vld [vmem:[%s0 + $0x48] sm:$0xff]
    %v137 = vld [vmem:[%s0 + $0x50] sm:$0xff]
    %v138 = vld [vmem:[%s0 + $0x58] sm:$0xff]
    %v139 = vld [vmem:[%s0 + $0x60] sm:$0xff]
    %v140 = vld [vmem:[%s0 + $0x68] sm:$0xff]
    %v141 = vld [vmem:[%s0 + $0x70] sm:$0xff]
    %v142 = vld [vmem:[%s0 + $0x78] sm:$0xff]
    %v143 = vpack.c.bf16 %v128, %v127
    %v144 = vpack.c.bf16 %v130, %v129
    %v145 = vpack.c.bf16 %v132, %v131
    %v146 = vpack.c.bf16 %v134, %v133
    %v147 = vpack.c.bf16 %v136, %v135
    %v148 = vpack.c.bf16 %v138, %v137
    %v149 = vpack.c.bf16 %v140, %v139
    %v150 = vpack.c.bf16 %v142, %v141
    %v151 = vld [vmem:[%s2] sm:$0xf]
    %v152 = vld [vmem:[%s1] sm:$0xff]
    %v153 = vld [vmem:[%s1 + $0x8] sm:$0xff]
    %v154 = vld [vmem:[%s1 + $0x10] sm:$0xff]
    %v155 = vld [vmem:[%s1 + $0x18] sm:$0xff]
    %v156 = vld [vmem:[%s1 + $0x20] sm:$0xff]
    %v157 = vld [vmem:[%s1 + $0x28] sm:$0xff]
    %v158 = vld [vmem:[%s1 + $0x30] sm:$0xff]
    %v159 = vld [vmem:[%s1 + $0x38] sm:$0xff]
    %v160 = vld [vmem:[%s1 + $0x40] sm:$0xff]
    %v161 = vld [vmem:[%s1 + $0x48] sm:$0xff]
    %v162 = vld [vmem:[%s1 + $0x50] sm:$0xff]
    %v163 = vld [vmem:[%s1 + $0x58] sm:$0xff]
    %v164 = vld [vmem:[%s1 + $0x60] sm:$0xff]
    %v165 = vld [vmem:[%s1 + $0x68] sm:$0xff]
    %v166 = vld [vmem:[%s1 + $0x70] sm:$0xff]
    %v167 = vld [vmem:[%s1 + $0x78] sm:$0xff]
    %vm168 = vcmask 64512
    %v170 = vsel %vm168, %v143, 0
    %v173 = vsel %vm168, %v144, 0
    %v176 = vsel %vm168, %v145, 0
    %v179 = vsel %vm168, %v146, 0
    %v182 = vsel %vm168, %v147, 0
    %v185 = vsel %vm168, %v148, 0
    %v188 = vsel %vm168, %v149, 0
    %v191 = vsel %vm168, %v150, 0
    %vm193 = vcmask 1043456
    %v195 = vsel %vm193, %v151, 0
    %197 = vmatprep.subr.bf16.mxu0 0
    %198 = vmatpush1.bf16.msra.mxu0 %v195
    %199 = vmatprep.subr.bf16.mxu0 0
    %200 = vmatpush1.bf16.msra.mxu0 0
    %201 = vmatprep.subr.bf16.mxu0 0
    %202 = vmatpush1.bf16.msra.mxu0 0
    %203 = vmatprep.subr.bf16.mxu0 0
    %204 = vmatpush1.bf16.msra.mxu0 0
    %205 = vmatprep.subr.bf16.mxu0 0
    %206 = vmatpush1.bf16.msra.mxu0 0
    %207 = vmatprep.subr.bf16.mxu0 0
    %208 = vmatpush1.bf16.msra.mxu0 0
    %209 = vmatprep.subr.bf16.mxu0 0
    %210 = vmatpush1.bf16.msra.mxu0 0
    %211 = vmatprep.subr.bf16.mxu0 0
    %212 = vmatpush1.bf16.msra.mxu0 0
    %213 = vmatprep.subr.bf16.mxu0 0
    %214 = vmatpush1.bf16.msra.mxu0 0
    %215 = vmatprep.subr.bf16.mxu0 0
    %216 = vmatpush1.bf16.msra.mxu0 0
    %217 = vmatprep.subr.bf16.mxu0 0
    %218 = vmatpush1.bf16.msra.mxu0 0
    %219 = vmatprep.subr.bf16.mxu0 0
    %220 = vmatpush1.bf16.msra.mxu0 0
    %221 = vmatprep.subr.bf16.mxu0 0
    %222 = vmatpush1.bf16.msra.mxu0 0
    %223 = vmatprep.subr.bf16.mxu0 0
    %224 = vmatpush1.bf16.msra.mxu0 0
    %225 = vmatprep.subr.bf16.mxu0 0
    %226 = vmatpush1.bf16.msra.mxu0 0
    %227 = vmatprep.subr.bf16.mxu0 0
    %228 = vmatpush1.bf16.msra.mxu0 0
    %229 = vmatprep.mubr.bf16.mxu0 0
    %230 = vmatmul.mubr.bf16.gmra.mrb[0].mxu0 %v170
    %v231 = vpop.f32.mrb[0].mxu0
    %v232 = vadd.f32 %v152, %v231
    %v233 = vpop.f32.mrb[0].mxu0
    %v234 = vpop.f32.mrb[0].mxu0
    %v235 = vadd.f32 %v153, %v234
    %v236 = vpop.f32.mrb[0].mxu0
    %237 = vmatprep.mubr.bf16.mxu0 0
    %238 = vmatmul.mubr.bf16.gmra.mrb[0].mxu0 %v173
    %v239 = vpop.f32.mrb[0].mxu0
    %v240 = vadd.f32 %v154, %v239
    %v241 = vpop.f32.mrb[0].mxu0
    %v242 = vpop.f32.mrb[0].mxu0
    %v243 = vadd.f32 %v155, %v242
    %v244 = vpop.f32.mrb[0].mxu0
    %245 = vmatprep.mubr.bf16.mxu0 0
    %246 = vmatmul.mubr.bf16.gmra.mrb[0].mxu0 %v176
    %v247 = vpop.f32.mrb[0].mxu0
    %v248 = vadd.f32 %v156, %v247
    %v249 = vpop.f32.mrb[0].mxu0
    %v250 = vpop.f32.mrb[0].mxu0
    %v251 = vadd.f32 %v157, %v250
    %v252 = vpop.f32.mrb[0].mxu0
    %253 = vmatprep.mubr.bf16.mxu0 0
    %254 = vmatmul.mubr.bf16.gmra.mrb[0].mxu0 %v179
    %v255 = vpop.f32.mrb[0].mxu0
    %v256 = vadd.f32 %v158, %v255
    %v257 = vpop.f32.mrb[0].mxu0
    %v258 = vpop.f32.mrb[0].mxu0
    %v259 = vadd.f32 %v159, %v258
    %v260 = vpop.f32.mrb[0].mxu0
    %261 = vmatprep.mubr.bf16.mxu0 0
    %262 = vmatmul.mubr.bf16.gmra.mrb[0].mxu0 %v182
    %v263 = vpop.f32.mrb[0].mxu0
    %v264 = vadd.f32 %v160, %v263
    %v265 = vpop.f32.mrb[0].mxu0
    %v266 = vpop.f32.mrb[0].mxu0
    %v267 = vadd.f32 %v161, %v266
    %v268 = vpop.f32.mrb[0].mxu0
    %269 = vmatprep.mubr.bf16.mxu0 0
    %270 = vmatmul.mubr.bf16.gmra.mrb[0].mxu0 %v185
    %v271 = vpop.f32.mrb[0].mxu0
    %v272 = vadd.f32 %v162, %v271
    %v273 = vpop.f32.mrb[0].mxu0
    %v274 = vpop.f32.mrb[0].mxu0
    %v275 = vadd.f32 %v163, %v274
    %v276 = vpop.f32.mrb[0].mxu0
    %277 = vmatprep.mubr.bf16.mxu0 0
    %278 = vmatmul.mubr.bf16.gmra.mrb[0].mxu0 %v188
    %v279 = vpop.f32.mrb[0].mxu0
    %v280 = vadd.f32 %v164, %v279
    %v281 = vpop.f32.mrb[0].mxu0
    %v282 = vpop.f32.mrb[0].mxu0
    %v283 = vadd.f32 %v165, %v282
    %v284 = vpop.f32.mrb[0].mxu0
    %285 = vmatprep.mubr.bf16.mxu0 0
    %286 = vmatmul.mubr.bf16.gmra.mrb[0].mxu0 %v191
    %v287 = vpop.f32.mrb[0].mxu0
    %v288 = vadd.f32 %v166, %v287
    %v289 = vpop.f32.mrb[0].mxu0
    %v290 = vpop.f32.mrb[0].mxu0
    %v291 = vadd.f32 %v167, %v290
    %v292 = vpop.f32.mrb[0].mxu0
    %293 = vdwg.mxu0
    %v294 = vpack.c.bf16 %v235, %v232
    %v295 = vpack.c.bf16 %v243, %v240
    %v296 = vpack.c.bf16 %v251, %v248
    %v297 = vpack.c.bf16 %v259, %v256
    %v298 = vpack.c.bf16 %v267, %v264
    %v299 = vpack.c.bf16 %v275, %v272
    %v300 = vpack.c.bf16 %v283, %v280
    %v301 = vpack.c.bf16 %v291, %v288
    %v302 = vld [vmem:[#allocation4] sm:$0xff]
    %v303 = vld [vmem:[#allocation4 + $0x8] sm:$0xf]
    %v304 = vld [vmem:[#allocation4 + $0xc] sm:$0xff]
    %v305 = vld [vmem:[#allocation4 + $0x14] sm:$0xf]
    %v306 = vld [vmem:[#allocation4 + $0x18] sm:$0xff]
    %v307 = vld [vmem:[#allocation4 + $0x20] sm:$0xf]
    %v308 = vld [vmem:[#allocation4 + $0x24] sm:$0xff]
    %v309 = vld [vmem:[#allocation4 + $0x2c] sm:$0xf]
    %v310 = vld [vmem:[#allocation4 + $0x30] sm:$0xff]
    %v311 = vld [vmem:[#allocation4 + $0x38] sm:$0xf]
    %v312 = vld [vmem:[#allocation4 + $0x3c] sm:$0xff]
    %v313 = vld [vmem:[#allocation4 + $0x44] sm:$0xf]
    %v314 = vld [vmem:[#allocation4 + $0x48] sm:$0xff]
    %v315 = vld [vmem:[#allocation4 + $0x50] sm:$0xf]
    %v316 = vld [vmem:[#allocation4 + $0x54] sm:$0xff]
    %v317 = vld [vmem:[#allocation4 + $0x5c] sm:$0xf]
    %v318 = vld [vmem:[#allocation4 + $0x60] sm:$0xff]
    %v319 = vld [vmem:[#allocation4 + $0x68] sm:$0xf]
    %v320 = vld [vmem:[#allocation4 + $0x6c] sm:$0xff]
    %v321 = vld [vmem:[#allocation4 + $0x74] sm:$0xf]
    %v322 = vld [vmem:[#allocation4 + $0x78] sm:$0xff]
    %v323 = vld [vmem:[#allocation4 + $0x80] sm:$0xf]
    %v324 = vld [vmem:[#allocation4 + $0x84] sm:$0xff]
    %v325 = vld [vmem:[#allocation4 + $0x8c] sm:$0xf]
    %v326 = vld [vmem:[#allocation4 + $0x90] sm:$0xff]
    %v327 = vld [vmem:[#allocation4 + $0x98] sm:$0xf]
    %v328 = vld [vmem:[#allocation4 + $0x9c] sm:$0xff]
    %v329 = vld [vmem:[#allocation4 + $0xa4] sm:$0xf]
    %v330 = vld [vmem:[#allocation4 + $0xa8] sm:$0xff]
    %v331 = vld [vmem:[#allocation4 + $0xb0] sm:$0xf]
    %v332 = vld [vmem:[#allocation4 + $0xb4] sm:$0xff]
    %v333 = vld [vmem:[#allocation4 + $0xbc] sm:$0xf]
    %v334 = vld [vmem:[%s4] sm:$0x7]
    %v336 = vlaneseq
    %v337 = vshrl.u32 %v336, 7
    %v338 = vsub.s32 0, %v337
    %v339 = vrot.slane %v334, %v338
    %v340 = vlaneseq
    %v341 = vshrl.u32 %v340, 7
    %v342 = vsub.s32 1, %v341
    %v343 = vrot.slane %v334, %v342
    %v344 = vlaneseq
    %v345 = vshrl.u32 %v344, 7
    %v346 = vsub.s32 2, %v345
    %v347 = vrot.slane %v334, %v346
    %v383 = vunpack.c.l.b16 %v302
    %v384 = vunpack.c.h.b16 %v302
    %v385 = vunpack.c.l.b16 %v303
    %v386 = vunpack.c.l.b16 %v304
    %v387 = vunpack.c.h.b16 %v304
    %v388 = vunpack.c.l.b16 %v305
    %v389 = vunpack.c.l.b16 %v306
    %v390 = vunpack.c.h.b16 %v306
    %v391 = vunpack.c.l.b16 %v307
    %v392 = vunpack.c.l.b16 %v308
    %v393 = vunpack.c.h.b16 %v308
    %v394 = vunpack.c.l.b16 %v309
    %v395 = vunpack.c.l.b16 %v310
    %v396 = vunpack.c.h.b16 %v310
    %v397 = vunpack.c.l.b16 %v311
    %v398 = vunpack.c.l.b16 %v312
    %v399 = vunpack.c.h.b16 %v312
    %v400 = vunpack.c.l.b16 %v313
    %v401 = vunpack.c.l.b16 %v314
    %v402 = vunpack.c.h.b16 %v314
    %v403 = vunpack.c.l.b16 %v315
    %v404 = vunpack.c.l.b16 %v316
    %v405 = vunpack.c.h.b16 %v316
    %v406 = vunpack.c.l.b16 %v317
    %v407 = vunpack.c.l.b16 %v318
    %v408 = vunpack.c.h.b16 %v318
    %v409 = vunpack.c.l.b16 %v319
    %v410 = vunpack.c.l.b16 %v320
    %v411 = vunpack.c.h.b16 %v320
    %v412 = vunpack.c.l.b16 %v321
    %v413 = vunpack.c.l.b16 %v322
    %v414 = vunpack.c.h.b16 %v322
    %v415 = vunpack.c.l.b16 %v323
    %v416 = vunpack.c.l.b16 %v324
    %v417 = vunpack.c.h.b16 %v324
    %v418 = vunpack.c.l.b16 %v325
    %v419 = vunpack.c.l.b16 %v326
    %v420 = vunpack.c.h.b16 %v326
    %v421 = vunpack.c.l.b16 %v327
    %v422 = vunpack.c.l.b16 %v328
    %v423 = vunpack.c.h.b16 %v328
    %v424 = vunpack.c.l.b16 %v329
    %v425 = vunpack.c.l.b16 %v330
    %v426 = vunpack.c.h.b16 %v330
    %v427 = vunpack.c.l.b16 %v331
    %v428 = vunpack.c.l.b16 %v332
    %v429 = vunpack.c.h.b16 %v332
    %v430 = vunpack.c.l.b16 %v333
    %v431 = vpack.c.b16 %v386, %v383
    %v432 = vpack.c.b16 %v387, %v384
    %v433 = vpack.c.b16 %v388, %v385
    %v434 = vpack.c.b16 %v392, %v389
    %v435 = vpack.c.b16 %v393, %v390
    %v436 = vpack.c.b16 %v394, %v391
    %v437 = vpack.c.b16 %v398, %v395
    %v438 = vpack.c.b16 %v399, %v396
    %v439 = vpack.c.b16 %v400, %v397
    %v440 = vpack.c.b16 %v404, %v401
    %v441 = vpack.c.b16 %v405, %v402
    %v442 = vpack.c.b16 %v406, %v403
    %v443 = vpack.c.b16 %v410, %v407
    %v444 = vpack.c.b16 %v411, %v408
    %v445 = vpack.c.b16 %v412, %v409
    %v446 = vpack.c.b16 %v416, %v413
    %v447 = vpack.c.b16 %v417, %v414
    %v448 = vpack.c.b16 %v418, %v415
    %v449 = vpack.c.b16 %v422, %v419
    %v450 = vpack.c.b16 %v423, %v420
    %v451 = vpack.c.b16 %v424, %v421
    %v452 = vpack.c.b16 %v428, %v425
    %v453 = vpack.c.b16 %v429, %v426
    %v454 = vpack.c.b16 %v430, %v427
    %479 = vmatprep.subr.bf16.mxu0 %v432
    %480 = vmatpush1.bf16.msra.mxu0 %v431
    %481 = vmatprep.subr.bf16.mxu0 %v435
    %482 = vmatpush1.bf16.msra.mxu0 %v434
    %483 = vmatprep.subr.bf16.mxu0 %v438
    %484 = vmatpush1.bf16.msra.mxu0 %v437
    %485 = vmatprep.subr.bf16.mxu0 %v441
    %486 = vmatpush1.bf16.msra.mxu0 %v440
    %487 = vmatprep.subr.bf16.mxu0 %v444
    %488 = vmatpush1.bf16.msra.mxu0 %v443
    %489 = vmatprep.subr.bf16.mxu0 %v447
    %490 = vmatpush1.bf16.msra.mxu0 %v446
    %491 = vmatprep.subr.bf16.mxu0 %v450
    %492 = vmatpush1.bf16.msra.mxu0 %v449
    %493 = vmatprep.subr.bf16.mxu0 %v453
    %494 = vmatpush1.bf16.msra.mxu0 %v452
    %495 = vmatprep.subr.bf16.mxu0 0
    %496 = vmatpush1.bf16.msra.mxu0 0
    %497 = vmatprep.subr.bf16.mxu0 0
    %498 = vmatpush1.bf16.msra.mxu0 0
    %499 = vmatprep.subr.bf16.mxu0 0
    %500 = vmatpush1.bf16.msra.mxu0 0
    %501 = vmatprep.subr.bf16.mxu0 0
    %502 = vmatpush1.bf16.msra.mxu0 0
    %503 = vmatprep.subr.bf16.mxu0 0
    %504 = vmatpush1.bf16.msra.mxu0 0
    %505 = vmatprep.subr.bf16.mxu0 0
    %506 = vmatpush1.bf16.msra.mxu0 0
    %507 = vmatprep.subr.bf16.mxu0 0
    %508 = vmatpush1.bf16.msra.mxu0 0
    %509 = vmatprep.subr.bf16.mxu0 0
    %510 = vmatpush1.bf16.msra.mxu0 0
    %511 = vmatprep.mubr.bf16.mxu0 0
    %512 = vmatmul.mubr.bf16.gmra.mrb[0].mxu0 %v294
    %v513 = vpop.f32.mrb[0].mxu0
    %v514 = vadd.f32 %v339, %v513
    %v515 = vpop.f32.mrb[0].mxu0
    %v516 = vadd.f32 %v343, %v515
    %v517 = vpop.f32.mrb[0].mxu0
    %v518 = vadd.f32 %v339, %v517
    %v519 = vpop.f32.mrb[0].mxu0
    %v520 = vadd.f32 %v343, %v519
    %521 = vmatprep.mubr.bf16.mxu0 0
    %522 = vmatmul.mubr.bf16.gmra.mrb[0].mxu0 %v295
    %v523 = vpop.f32.mrb[0].mxu0
    %v524 = vadd.f32 %v339, %v523
    %v525 = vpop.f32.mrb[0].mxu0
    %v526 = vadd.f32 %v343, %v525
    %v527 = vpop.f32.mrb[0].mxu0
    %v528 = vadd.f32 %v339, %v527
    %v529 = vpop.f32.mrb[0].mxu0
    %v530 = vadd.f32 %v343, %v529
    %531 = vmatprep.mubr.bf16.mxu0 0
    %532 = vmatmul.mubr.bf16.gmra.mrb[0].mxu0 %v296
    %v533 = vpop.f32.mrb[0].mxu0
    %v534 = vadd.f32 %v339, %v533
    %v535 = vpop.f32.mrb[0].mxu0
    %v536 = vadd.f32 %v343, %v535
    %v537 = vpop.f32.mrb[0].mxu0
    %v538 = vadd.f32 %v339, %v537
    %v539 = vpop.f32.mrb[0].mxu0
    %v540 = vadd.f32 %v343, %v539
    %541 = vmatprep.mubr.bf16.mxu0 0
    %542 = vmatmul.mubr.bf16.gmra.mrb[0].mxu0 %v297
    %v543 = vpop.f32.mrb[0].mxu0
    %v544 = vadd.f32 %v339, %v543
    %v545 = vpop.f32.mrb[0].mxu0
    %v546 = vadd.f32 %v343, %v545
    %v547 = vpop.f32.mrb[0].mxu0
    %v548 = vadd.f32 %v339, %v547
    %v549 = vpop.f32.mrb[0].mxu0
    %v550 = vadd.f32 %v343, %v549
    %551 = vmatprep.mubr.bf16.mxu0 0
    %552 = vmatmul.mubr.bf16.gmra.mrb[0].mxu0 %v298
    %v553 = vpop.f32.mrb[0].mxu0
    %v554 = vadd.f32 %v339, %v553
    %v555 = vpop.f32.mrb[0].mxu0
    %v556 = vadd.f32 %v343, %v555
    %v557 = vpop.f32.mrb[0].mxu0
    %v558 = vadd.f32 %v339, %v557
    %v559 = vpop.f32.mrb[0].mxu0
    %v560 = vadd.f32 %v343, %v559
    %561 = vmatprep.mubr.bf16.mxu0 0
    %562 = vmatmul.mubr.bf16.gmra.mrb[0].mxu0 %v299
    %v563 = vpop.f32.mrb[0].mxu0
    %v564 = vadd.f32 %v339, %v563
    %v565 = vpop.f32.mrb[0].mxu0
    %v566 = vadd.f32 %v343, %v565
    %v567 = vpop.f32.mrb[0].mxu0
    %v568 = vadd.f32 %v339, %v567
    %v569 = vpop.f32.mrb[0].mxu0
    %v570 = vadd.f32 %v343, %v569
    %571 = vmatprep.mubr.bf16.mxu0 0
    %572 = vmatmul.mubr.bf16.gmra.mrb[0].mxu0 %v300
    %v573 = vpop.f32.mrb[0].mxu0
    %v574 = vadd.f32 %v339, %v573
    %v575 = vpop.f32.mrb[0].mxu0
    %v576 = vadd.f32 %v343, %v575
    %v577 = vpop.f32.mrb[0].mxu0
    %v578 = vadd.f32 %v339, %v577
    %v579 = vpop.f32.mrb[0].mxu0
    %v580 = vadd.f32 %v343, %v579
    %581 = vmatprep.mubr.bf16.mxu0 0
    %582 = vmatmul.mubr.bf16.gmra.mrb[0].mxu0 %v301
    %v583 = vpop.f32.mrb[0].mxu0
    %v584 = vadd.f32 %v339, %v583
    %v585 = vpop.f32.mrb[0].mxu0
    %v586 = vadd.f32 %v343, %v585
    %v587 = vpop.f32.mrb[0].mxu0
    %v588 = vadd.f32 %v339, %v587
    %v589 = vpop.f32.mrb[0].mxu0
    %v590 = vadd.f32 %v343, %v589
    %591 = vdwg.mxu0
    %592 = vmatprep.subr.bf16.mxu0 0
    %593 = vmatpush1.bf16.msra.mxu0 %v433
    %594 = vmatprep.subr.bf16.mxu0 0
    %595 = vmatpush1.bf16.msra.mxu0 %v436
    %596 = vmatprep.subr.bf16.mxu0 0
    %597 = vmatpush1.bf16.msra.mxu0 %v439
    %598 = vmatprep.subr.bf16.mxu0 0
    %599 = vmatpush1.bf16.msra.mxu0 %v442
    %600 = vmatprep.subr.bf16.mxu0 0
    %601 = vmatpush1.bf16.msra.mxu0 %v445
    %602 = vmatprep.subr.bf16.mxu0 0
    %603 = vmatpush1.bf16.msra.mxu0 %v448
    %604 = vmatprep.subr.bf16.mxu0 0
    %605 = vmatpush1.bf16.msra.mxu0 %v451
    %606 = vmatprep.subr.bf16.mxu0 0
    %607 = vmatpush1.bf16.msra.mxu0 %v454
    %608 = vmatprep.subr.bf16.mxu0 0
    %609 = vmatpush1.bf16.msra.mxu0 0
    %610 = vmatprep.subr.bf16.mxu0 0
    %611 = vmatpush1.bf16.msra.mxu0 0
    %612 = vmatprep.subr.bf16.mxu0 0
    %613 = vmatpush1.bf16.msra.mxu0 0
    %614 = vmatprep.subr.bf16.mxu0 0
    %615 = vmatpush1.bf16.msra.mxu0 0
    %616 = vmatprep.subr.bf16.mxu0 0
    %617 = vmatpush1.bf16.msra.mxu0 0
    %618 = vmatprep.subr.bf16.mxu0 0
    %619 = vmatpush1.bf16.msra.mxu0 0
    %620 = vmatprep.subr.bf16.mxu0 0
    %621 = vmatpush1.bf16.msra.mxu0 0
    %622 = vmatprep.subr.bf16.mxu0 0
    %623 = vmatpush1.bf16.msra.mxu0 0
    %624 = vmatprep.mubr.bf16.mxu0 0
    %625 = vmatmul.mubr.bf16.gmra.mrb[0].mxu0 %v294
    %v626 = vpop.f32.mrb[0].mxu0
    %v627 = vadd.f32 %v347, %v626
    %v628 = vpop.f32.mrb[0].mxu0
    %v629 = vpop.f32.mrb[0].mxu0
    %v630 = vadd.f32 %v347, %v629
    %v631 = vpop.f32.mrb[0].mxu0
    %632 = vmatprep.mubr.bf16.mxu0 0
    %633 = vmatmul.mubr.bf16.gmra.mrb[0].mxu0 %v295
    %v634 = vpop.f32.mrb[0].mxu0
    %v635 = vadd.f32 %v347, %v634
    %v636 = vpop.f32.mrb[0].mxu0
    %v637 = vpop.f32.mrb[0].mxu0
    %v638 = vadd.f32 %v347, %v637
    %v639 = vpop.f32.mrb[0].mxu0
    %640 = vmatprep.mubr.bf16.mxu0 0
    %641 = vmatmul.mubr.bf16.gmra.mrb[0].mxu0 %v296
    %v642 = vpop.f32.mrb[0].mxu0
    %v643 = vadd.f32 %v347, %v642
    %v644 = vpop.f32.mrb[0].mxu0
    %v645 = vpop.f32.mrb[0].mxu0
    %v646 = vadd.f32 %v347, %v645
    %v647 = vpop.f32.mrb[0].mxu0
    %648 = vmatprep.mubr.bf16.mxu0 0
    %649 = vmatmul.mubr.bf16.gmra.mrb[0].mxu0 %v297
    %v650 = vpop.f32.mrb[0].mxu0
    %v651 = vadd.f32 %v347, %v650
    %v652 = vpop.f32.mrb[0].mxu0
    %v653 = vpop.f32.mrb[0].mxu0
    %v654 = vadd.f32 %v347, %v653
    %v655 = vpop.f32.mrb[0].mxu0
    %656 = vmatprep.mubr.bf16.mxu0 0
    %657 = vmatmul.mubr.bf16.gmra.mrb[0].mxu0 %v298
    %v658 = vpop.f32.mrb[0].mxu0
    %v659 = vadd.f32 %v347, %v658
    %v660 = vpop.f32.mrb[0].mxu0
    %v661 = vpop.f32.mrb[0].mxu0
    %v662 = vadd.f32 %v347, %v661
    %v663 = vpop.f32.mrb[0].mxu0
    %664 = vmatprep.mubr.bf16.mxu0 0
    %665 = vmatmul.mubr.bf16.gmra.mrb[0].mxu0 %v299
    %v666 = vpop.f32.mrb[0].mxu0
    %v667 = vadd.f32 %v347, %v666
    %v668 = vpop.f32.mrb[0].mxu0
    %v669 = vpop.f32.mrb[0].mxu0
    %v670 = vadd.f32 %v347, %v669
    %v671 = vpop.f32.mrb[0].mxu0
    %672 = vmatprep.mubr.bf16.mxu0 0
    %673 = vmatmul.mubr.bf16.gmra.mrb[0].mxu0 %v300
    %v674 = vpop.f32.mrb[0].mxu0
    %v675 = vadd.f32 %v347, %v674
    %v676 = vpop.f32.mrb[0].mxu0
    %v677 = vpop.f32.mrb[0].mxu0
    %v678 = vadd.f32 %v347, %v677
    %v679 = vpop.f32.mrb[0].mxu0
    %680 = vmatprep.mubr.bf16.mxu0 0
    %681 = vmatmul.mubr.bf16.gmra.mrb[0].mxu0 %v301
    %v682 = vpop.f32.mrb[0].mxu0
    %v683 = vadd.f32 %v347, %v682
    %v684 = vpop.f32.mrb[0].mxu0
    %v685 = vpop.f32.mrb[0].mxu0
    %v686 = vadd.f32 %v347, %v685
    %v687 = vpop.f32.mrb[0].mxu0
    %688 = vdwg.mxu0
    %v689 = vpack.c.bf16 %v518, %v514
    %v690 = vpack.c.bf16 %v528, %v524
    %v691 = vpack.c.bf16 %v538, %v534
    %v692 = vpack.c.bf16 %v548, %v544
    %v693 = vpack.c.bf16 %v520, %v516
    %v694 = vpack.c.bf16 %v530, %v526
    %v695 = vpack.c.bf16 %v540, %v536
    %v696 = vpack.c.bf16 %v550, %v546
    %vm697 = vcmask 261120
    %v699 = vsel %vm697, %v689, 0
    %v702 = vsel %vm697, %v690, 0
    %v705 = vsel %vm697, %v691, 0
    %v708 = vsel %vm697, %v692, 0
    %v711 = vsel %vm697, %v693, 0
    %v714 = vsel %vm697, %v694, 0
    %v717 = vsel %vm697, %v695, 0
    %v720 = vsel %vm697, %v696, 0
    %722 = vmatprep.subr.bf16.mxu0 0
    %723 = vmatpush1.bf16.xpose.msra.mxu0 %v711
    %724 = vmatprep.subr.bf16.mxu0 0
    %725 = vmatpush1.bf16.xpose.msra.mxu0 %v714
    %726 = vmatprep.subr.bf16.mxu0 0
    %727 = vmatpush1.bf16.xpose.msra.mxu0 %v717
    %728 = vmatprep.subr.bf16.mxu0 0
    %729 = vmatpush1.bf16.xpose.msra.mxu0 %v720
    %730 = vmatprep.subr.bf16.mxu0 0
    %731 = vmatpush1.bf16.xpose.msra.mxu0 0
    %732 = vmatprep.subr.bf16.mxu0 0
    %733 = vmatpush1.bf16.xpose.msra.mxu0 0
    %734 = vmatprep.subr.bf16.mxu0 0
    %735 = vmatpush1.bf16.xpose.msra.mxu0 0
    %736 = vmatprep.subr.bf16.mxu0 0
    %737 = vmatpush1.bf16.xpose.msra.mxu0 0
    %738 = vmatprep.subr.bf16.mxu0 0
    %739 = vmatpush1.bf16.xpose.msra.mxu0 0
    %740 = vmatprep.subr.bf16.mxu0 0
    %741 = vmatpush1.bf16.xpose.msra.mxu0 0
    %742 = vmatprep.subr.bf16.mxu0 0
    %743 = vmatpush1.bf16.xpose.msra.mxu0 0
    %744 = vmatprep.subr.bf16.mxu0 0
    %745 = vmatpush1.bf16.xpose.msra.mxu0 0
    %746 = vmatprep.subr.bf16.mxu0 0
    %747 = vmatpush1.bf16.xpose.msra.mxu0 0
    %748 = vmatprep.subr.bf16.mxu0 0
    %749 = vmatpush1.bf16.xpose.msra.mxu0 0
    %750 = vmatprep.subr.bf16.mxu0 0
    %751 = vmatpush1.bf16.xpose.msra.mxu0 0
    %752 = vmatprep.subr.bf16.mxu0 0
    %753 = vmatpush1.bf16.xpose.msra.mxu0 0
    %754 = vmatprep.mubr.bf16.mxu0 0
    %755 = vmatmul.mubr.bf16.gmra.mrb[0].mxu0 %v699
    %v756 = vpop.f32.mrb[0].mxu0
    %v757 = vadd.f32 0.0, %v756
    %v758 = vpop.f32.mrb[0].mxu0
    %v759 = vpop.f32.mrb[0].mxu0
    %v760 = vadd.f32 0.0, %v759
    %v761 = vpop.f32.mrb[0].mxu0
    %762 = vmatprep.mubr.bf16.mxu0 0
    %763 = vmatmul.mubr.bf16.gmra.mrb[0].mxu0 %v702
    %v764 = vpop.f32.mrb[0].mxu0
    %v765 = vadd.f32 0.0, %v764
    %v766 = vpop.f32.mrb[0].mxu0
    %v767 = vpop.f32.mrb[0].mxu0
    %v768 = vadd.f32 0.0, %v767
    %v769 = vpop.f32.mrb[0].mxu0
    %770 = vmatprep.mubr.bf16.mxu0 0
    %771 = vmatmul.mubr.bf16.gmra.mrb[0].mxu0 %v705
    %v772 = vpop.f32.mrb[0].mxu0
    %v773 = vadd.f32 0.0, %v772
    %v774 = vpop.f32.mrb[0].mxu0
    %v775 = vpop.f32.mrb[0].mxu0
    %v776 = vadd.f32 0.0, %v775
    %v777 = vpop.f32.mrb[0].mxu0
    %778 = vmatprep.mubr.bf16.mxu0 0
    %779 = vmatmul.mubr.bf16.gmra.mrb[0].mxu0 %v708
    %v780 = vpop.f32.mrb[0].mxu0
    %v781 = vadd.f32 0.0, %v780
    %v782 = vpop.f32.mrb[0].mxu0
    %v783 = vpop.f32.mrb[0].mxu0
    %v784 = vadd.f32 0.0, %v783
    %v785 = vpop.f32.mrb[0].mxu0
    %786 = vdwg.mxu0
    %791 = vrot.lane.b32.xlu0 %v689, 96
    %v792 = vpop.permute.xlu0 %791
    %793 = vrot.lane.b32.xlu0 %v690, 96
    %v794 = vpop.permute.xlu0 %793
    %795 = vrot.lane.b32.xlu0 %v691, 96
    %v796 = vpop.permute.xlu0 %795
    %797 = vrot.lane.b32.xlu0 %v692, 96
    %v798 = vpop.permute.xlu0 %797
    %803 = vrot.lane.b32.xlu0 %v693, 96
    %v804 = vpop.permute.xlu0 %803
    %805 = vrot.lane.b32.xlu0 %v694, 96
    %v806 = vpop.permute.xlu0 %805
    %807 = vrot.lane.b32.xlu0 %v695, 96
    %v808 = vpop.permute.xlu0 %807
    %809 = vrot.lane.b32.xlu0 %v696, 96
    %v810 = vpop.permute.xlu0 %809
    %v812 = vsel %vm697, %v792, 0
    %v815 = vsel %vm697, %v794, 0
    %v818 = vsel %vm697, %v796, 0
    %v821 = vsel %vm697, %v798, 0
    %v824 = vsel %vm697, %v804, 0
    %v827 = vsel %vm697, %v806, 0
    %v830 = vsel %vm697, %v808, 0
    %v833 = vsel %vm697, %v810, 0
    %835 = vmatprep.subr.bf16.mxu0 0
    %836 = vmatpush1.bf16.xpose.msra.mxu0 %v824
    %837 = vmatprep.subr.bf16.mxu0 0
    %838 = vmatpush1.bf16.xpose.msra.mxu0 %v827
    %839 = vmatprep.subr.bf16.mxu0 0
    %840 = vmatpush1.bf16.xpose.msra.mxu0 %v830
    %841 = vmatprep.subr.bf16.mxu0 0
    %842 = vmatpush1.bf16.xpose.msra.mxu0 %v833
    %843 = vmatprep.subr.bf16.mxu0 0
    %844 = vmatpush1.bf16.xpose.msra.mxu0 0
    %845 = vmatprep.subr.bf16.mxu0 0
    %846 = vmatpush1.bf16.xpose.msra.mxu0 0
    %847 = vmatprep.subr.bf16.mxu0 0
    %848 = vmatpush1.bf16.xpose.msra.mxu0 0
    %849 = vmatprep.subr.bf16.mxu0 0
    %850 = vmatpush1.bf16.xpose.msra.mxu0 0
    %851 = vmatprep.subr.bf16.mxu0 0
    %852 = vmatpush1.bf16.xpose.msra.mxu0 0
    %853 = vmatprep.subr.bf16.mxu0 0
    %854 = vmatpush1.bf16.xpose.msra.mxu0 0
    %855 = vmatprep.subr.bf16.mxu0 0
    %856 = vmatpush1.bf16.xpose.msra.mxu0 0
    %857 = vmatprep.subr.bf16.mxu0 0
    %858 = vmatpush1.bf16.xpose.msra.mxu0 0
    %859 = vmatprep.subr.bf16.mxu0 0
    %860 = vmatpush1.bf16.xpose.msra.mxu0 0
    %861 = vmatprep.subr.bf16.mxu0 0
    %862 = vmatpush1.bf16.xpose.msra.mxu0 0
    %863 = vmatprep.subr.bf16.mxu0 0
    %864 = vmatpush1.bf16.xpose.msra.mxu0 0
    %865 = vmatprep.subr.bf16.mxu0 0
    %866 = vmatpush1.bf16.xpose.msra.mxu0 0
    %867 = vmatprep.mubr.bf16.mxu0 0
    %868 = vmatmul.mubr.bf16.gmra.mrb[0].mxu0 %v812
    %v869 = vpop.f32.mrb[0].mxu0
    %v870 = vadd.f32 0.0, %v869
    %v871 = vpop.f32.mrb[0].mxu0
    %v872 = vpop.f32.mrb[0].mxu0
    %v873 = vadd.f32 0.0, %v872
    %v874 = vpop.f32.mrb[0].mxu0
    %875 = vmatprep.mubr.bf16.mxu0 0
    %876 = vmatmul.mubr.bf16.gmra.mrb[0].mxu0 %v815
    %v877 = vpop.f32.mrb[0].mxu0
    %v878 = vadd.f32 0.0, %v877
    %v879 = vpop.f32.mrb[0].mxu0
    %v880 = vpop.f32.mrb[0].mxu0
    %v881 = vadd.f32 0.0, %v880
    %v882 = vpop.f32.mrb[0].mxu0
    %883 = vmatprep.mubr.bf16.mxu0 0
    %884 = vmatmul.mubr.bf16.gmra.mrb[0].mxu0 %v818
    %v885 = vpop.f32.mrb[0].mxu0
    %v886 = vadd.f32 0.0, %v885
    %v887 = vpop.f32.mrb[0].mxu0
    %v888 = vpop.f32.mrb[0].mxu0
    %v889 = vadd.f32 0.0, %v888
    %v890 = vpop.f32.mrb[0].mxu0
    %891 = vmatprep.mubr.bf16.mxu0 0
    %892 = vmatmul.mubr.bf16.gmra.mrb[0].mxu0 %v821
    %v893 = vpop.f32.mrb[0].mxu0
    %v894 = vadd.f32 0.0, %v893
    %v895 = vpop.f32.mrb[0].mxu0
    %v896 = vpop.f32.mrb[0].mxu0
    %v897 = vadd.f32 0.0, %v896
    %v898 = vpop.f32.mrb[0].mxu0
    %899 = vdwg.mxu0
    %900 = vrot.lane.b32.xlu0 %v689, 64
    %v901 = vpop.permute.xlu0 %900
    %902 = vrot.lane.b32.xlu0 %v690, 64
    %v903 = vpop.permute.xlu0 %902
    %904 = vrot.lane.b32.xlu0 %v691, 64
    %v905 = vpop.permute.xlu0 %904
    %906 = vrot.lane.b32.xlu0 %v692, 64
    %v907 = vpop.permute.xlu0 %906
    %908 = vrot.lane.b32.xlu0 %v693, 64
    %v909 = vpop.permute.xlu0 %908
    %910 = vrot.lane.b32.xlu0 %v694, 64
    %v911 = vpop.permute.xlu0 %910
    %912 = vrot.lane.b32.xlu0 %v695, 64
    %v913 = vpop.permute.xlu0 %912
    %914 = vrot.lane.b32.xlu0 %v696, 64
    %v915 = vpop.permute.xlu0 %914
    %v917 = vsel %vm697, %v901, 0
    %v920 = vsel %vm697, %v903, 0
    %v923 = vsel %vm697, %v905, 0
    %v926 = vsel %vm697, %v907, 0
    %v929 = vsel %vm697, %v909, 0
    %v932 = vsel %vm697, %v911, 0
    %v935 = vsel %vm697, %v913, 0
    %v938 = vsel %vm697, %v915, 0
    %940 = vmatprep.subr.bf16.mxu0 0
    %941 = vmatpush1.bf16.xpose.msra.mxu0 %v929
    %942 = vmatprep.subr.bf16.mxu0 0
    %943 = vmatpush1.bf16.xpose.msra.mxu0 %v932
    %944 = vmatprep.subr.bf16.mxu0 0
    %945 = vmatpush1.bf16.xpose.msra.mxu0 %v935
    %946 = vmatprep.subr.bf16.mxu0 0
    %947 = vmatpush1.bf16.xpose.msra.mxu0 %v938
    %948 = vmatprep.subr.bf16.mxu0 0
    %949 = vmatpush1.bf16.xpose.msra.mxu0 0
    %950 = vmatprep.subr.bf16.mxu0 0
    %951 = vmatpush1.bf16.xpose.msra.mxu0 0
    %952 = vmatprep.subr.bf16.mxu0 0
    %953 = vmatpush1.bf16.xpose.msra.mxu0 0
    %954 = vmatprep.subr.bf16.mxu0 0
    %955 = vmatpush1.bf16.xpose.msra.mxu0 0
    %956 = vmatprep.subr.bf16.mxu0 0
    %957 = vmatpush1.bf16.xpose.msra.mxu0 0
    %958 = vmatprep.subr.bf16.mxu0 0
    %959 = vmatpush1.bf16.xpose.msra.mxu0 0
    %960 = vmatprep.subr.bf16.mxu0 0
    %961 = vmatpush1.bf16.xpose.msra.mxu0 0
    %962 = vmatprep.subr.bf16.mxu0 0
    %963 = vmatpush1.bf16.xpose.msra.mxu0 0
    %964 = vmatprep.subr.bf16.mxu0 0
    %965 = vmatpush1.bf16.xpose.msra.mxu0 0
    %966 = vmatprep.subr.bf16.mxu0 0
    %967 = vmatpush1.bf16.xpose.msra.mxu0 0
    %968 = vmatprep.subr.bf16.mxu0 0
    %969 = vmatpush1.bf16.xpose.msra.mxu0 0
    %970 = vmatprep.subr.bf16.mxu0 0
    %971 = vmatpush1.bf16.xpose.msra.mxu0 0
    %972 = vmatprep.mubr.bf16.mxu0 0
    %973 = vmatmul.mubr.bf16.gmra.mrb[0].mxu0 %v917
    %v974 = vpop.f32.mrb[0].mxu0
    %v975 = vadd.f32 0.0, %v974
    %v976 = vpop.f32.mrb[0].mxu0
    %v977 = vpop.f32.mrb[0].mxu0
    %v978 = vadd.f32 0.0, %v977
    %v979 = vpop.f32.mrb[0].mxu0
    %980 = vmatprep.mubr.bf16.mxu0 0
    %981 = vmatmul.mubr.bf16.gmra.mrb[0].mxu0 %v920
    %v982 = vpop.f32.mrb[0].mxu0
    %v983 = vadd.f32 0.0, %v982
    %v984 = vpop.f32.mrb[0].mxu0
    %v985 = vpop.f32.mrb[0].mxu0
    %v986 = vadd.f32 0.0, %v985
    %v987 = vpop.f32.mrb[0].mxu0
    %988 = vmatprep.mubr.bf16.mxu0 0
    %989 = vmatmul.mubr.bf16.gmra.mrb[0].mxu0 %v923
    %v990 = vpop.f32.mrb[0].mxu0
    %v991 = vadd.f32 0.0, %v990
    %v992 = vpop.f32.mrb[0].mxu0
    %v993 = vpop.f32.mrb[0].mxu0
    %v994 = vadd.f32 0.0, %v993
    %v995 = vpop.f32.mrb[0].mxu0
    %996 = vmatprep.mubr.bf16.mxu0 0
    %997 = vmatmul.mubr.bf16.gmra.mrb[0].mxu0 %v926
    %v998 = vpop.f32.mrb[0].mxu0
    %v999 = vadd.f32 0.0, %v998
    %v1000 = vpop.f32.mrb[0].mxu0
    %v1001 = vpop.f32.mrb[0].mxu0
    %v1002 = vadd.f32 0.0, %v1001
    %v1003 = vpop.f32.mrb[0].mxu0
    %1004 = vdwg.mxu0
    %1005 = vrot.lane.b32.xlu0 %v689, 32
    %v1006 = vpop.permute.xlu0 %1005
    %1007 = vrot.lane.b32.xlu0 %v690, 32
    %v1008 = vpop.permute.xlu0 %1007
    %1009 = vrot.lane.b32.xlu0 %v691, 32
    %v1010 = vpop.permute.xlu0 %1009
    %1011 = vrot.lane.b32.xlu0 %v692, 32
    %v1012 = vpop.permute.xlu0 %1011
    %1013 = vrot.lane.b32.xlu0 %v693, 32
    %v1014 = vpop.permute.xlu0 %1013
    %1015 = vrot.lane.b32.xlu0 %v694, 32
    %v1016 = vpop.permute.xlu0 %1015
    %1017 = vrot.lane.b32.xlu0 %v695, 32
    %v1018 = vpop.permute.xlu0 %1017
    %1019 = vrot.lane.b32.xlu0 %v696, 32
    %v1020 = vpop.permute.xlu0 %1019
    %v1022 = vsel %vm697, %v1006, 0
    %v1025 = vsel %vm697, %v1008, 0
    %v1028 = vsel %vm697, %v1010, 0
    %v1031 = vsel %vm697, %v1012, 0
    %v1034 = vsel %vm697, %v1014, 0
    %v1037 = vsel %vm697, %v1016, 0
    %v1040 = vsel %vm697, %v1018, 0
    %v1043 = vsel %vm697, %v1020, 0
    %1045 = vmatprep.subr.bf16.mxu0 0
    %1046 = vmatpush1.bf16.xpose.msra.mxu0 %v1034
    %1047 = vmatprep.subr.bf16.mxu0 0
    %1048 = vmatpush1.bf16.xpose.msra.mxu0 %v1037
    %1049 = vmatprep.subr.bf16.mxu0 0
    %1050 = vmatpush1.bf16.xpose.msra.mxu0 %v1040
    %1051 = vmatprep.subr.bf16.mxu0 0
    %1052 = vmatpush1.bf16.xpose.msra.mxu0 %v1043
    %1053 = vmatprep.subr.bf16.mxu0 0
    %1054 = vmatpush1.bf16.xpose.msra.mxu0 0
    %1055 = vmatprep.subr.bf16.mxu0 0
    %1056 = vmatpush1.bf16.xpose.msra.mxu0 0
    %1057 = vmatprep.subr.bf16.mxu0 0
    %1058 = vmatpush1.bf16.xpose.msra.mxu0 0
    %1059 = vmatprep.subr.bf16.mxu0 0
    %1060 = vmatpush1.bf16.xpose.msra.mxu0 0
    %1061 = vmatprep.subr.bf16.mxu0 0
    %1062 = vmatpush1.bf16.xpose.msra.mxu0 0
    %1063 = vmatprep.subr.bf16.mxu0 0
    %1064 = vmatpush1.bf16.xpose.msra.mxu0 0
    %1065 = vmatprep.subr.bf16.mxu0 0
    %1066 = vmatpush1.bf16.xpose.msra.mxu0 0
    %1067 = vmatprep.subr.bf16.mxu0 0
    %1068 = vmatpush1.bf16.xpose.msra.mxu0 0
    %1069 = vmatprep.subr.bf16.mxu0 0
    %1070 = vmatpush1.bf16.xpose.msra.mxu0 0
    %1071 = vmatprep.subr.bf16.mxu0 0
    %1072 = vmatpush1.bf16.xpose.msra.mxu0 0
    %1073 = vmatprep.subr.bf16.mxu0 0
    %1074 = vmatpush1.bf16.xpose.msra.mxu0 0
    %1075 = vmatprep.subr.bf16.mxu0 0
    %1076 = vmatpush1.bf16.xpose.msra.mxu0 0
    %1077 = vmatprep.mubr.bf16.mxu0 0
    %1078 = vmatmul.mubr.bf16.gmra.mrb[0].mxu0 %v1022
    %v1079 = vpop.f32.mrb[0].mxu0
    %v1080 = vadd.f32 0.0, %v1079
    %v1081 = vpop.f32.mrb[0].mxu0
    %v1082 = vpop.f32.mrb[0].mxu0
    %v1083 = vadd.f32 0.0, %v1082
    %v1084 = vpop.f32.mrb[0].mxu0
    %1085 = vmatprep.mubr.bf16.mxu0 0
    %1086 = vmatmul.mubr.bf16.gmra.mrb[0].mxu0 %v1025
    %v1087 = vpop.f32.mrb[0].mxu0
    %v1088 = vadd.f32 0.0, %v1087
    %v1089 = vpop.f32.mrb[0].mxu0
    %v1090 = vpop.f32.mrb[0].mxu0
    %v1091 = vadd.f32 0.0, %v1090
    %v1092 = vpop.f32.mrb[0].mxu0
    %1093 = vmatprep.mubr.bf16.mxu0 0
    %1094 = vmatmul.mubr.bf16.gmra.mrb[0].mxu0 %v1028
    %v1095 = vpop.f32.mrb[0].mxu0
    %v1096 = vadd.f32 0.0, %v1095
    %v1097 = vpop.f32.mrb[0].mxu0
    %v1098 = vpop.f32.mrb[0].mxu0
    %v1099 = vadd.f32 0.0, %v1098
    %v1100 = vpop.f32.mrb[0].mxu0
    %1101 = vmatprep.mubr.bf16.mxu0 0
    %1102 = vmatmul.mubr.bf16.gmra.mrb[0].mxu0 %v1031
    %v1103 = vpop.f32.mrb[0].mxu0
    %v1104 = vadd.f32 0.0, %v1103
    %v1105 = vpop.f32.mrb[0].mxu0
    %v1106 = vpop.f32.mrb[0].mxu0
    %v1107 = vadd.f32 0.0, %v1106
    %v1108 = vpop.f32.mrb[0].mxu0
    %1109 = vdwg.mxu0
    %v1110 = vpack.c.bf16 %v558, %v554
    %v1111 = vpack.c.bf16 %v568, %v564
    %v1112 = vpack.c.bf16 %v578, %v574
    %v1113 = vpack.c.bf16 %v588, %v584
    %v1114 = vpack.c.bf16 %v560, %v556
    %v1115 = vpack.c.bf16 %v570, %v566
    %v1116 = vpack.c.bf16 %v580, %v576
    %v1117 = vpack.c.bf16 %v590, %v586
    %v1119 = vsel %vm697, %v1110, 0
    %v1122 = vsel %vm697, %v1111, 0
    %v1125 = vsel %vm697, %v1112, 0
    %v1128 = vsel %vm697, %v1113, 0
    %v1131 = vsel %vm697, %v1114, 0
    %v1134 = vsel %vm697, %v1115, 0
    %v1137 = vsel %vm697, %v1116, 0
    %v1140 = vsel %vm697, %v1117, 0
    %1142 = vmatprep.subr.bf16.mxu0 0
    %1143 = vmatpush1.bf16.xpose.msra.mxu0 %v1131
    %1144 = vmatprep.subr.bf16.mxu0 0
    %1145 = vmatpush1.bf16.xpose.msra.mxu0 %v1134
    %1146 = vmatprep.subr.bf16.mxu0 0
    %1147 = vmatpush1.bf16.xpose.msra.mxu0 %v1137
    %1148 = vmatprep.subr.bf16.mxu0 0
    %1149 = vmatpush1.bf16.xpose.msra.mxu0 %v1140
    %1150 = vmatprep.subr.bf16.mxu0 0
    %1151 = vmatpush1.bf16.xpose.msra.mxu0 0
    %1152 = vmatprep.subr.bf16.mxu0 0
    %1153 = vmatpush1.bf16.xpose.msra.mxu0 0
    %1154 = vmatprep.subr.bf16.mxu0 0
    %1155 = vmatpush1.bf16.xpose.msra.mxu0 0
    %1156 = vmatprep.subr.bf16.mxu0 0
    %1157 = vmatpush1.bf16.xpose.msra.mxu0 0
    %1158 = vmatprep.subr.bf16.mxu0 0
    %1159 = vmatpush1.bf16.xpose.msra.mxu0 0
    %1160 = vmatprep.subr.bf16.mxu0 0
    %1161 = vmatpush1.bf16.xpose.msra.mxu0 0
    %1162 = vmatprep.subr.bf16.mxu0 0
    %1163 = vmatpush1.bf16.xpose.msra.mxu0 0
    %1164 = vmatprep.subr.bf16.mxu0 0
    %1165 = vmatpush1.bf16.xpose.msra.mxu0 0
    %1166 = vmatprep.subr.bf16.mxu0 0
    %1167 = vmatpush1.bf16.xpose.msra.mxu0 0
    %1168 = vmatprep.subr.bf16.mxu0 0
    %1169 = vmatpush1.bf16.xpose.msra.mxu0 0
    %1170 = vmatprep.subr.bf16.mxu0 0
    %1171 = vmatpush1.bf16.xpose.msra.mxu0 0
    %1172 = vmatprep.subr.bf16.mxu0 0
    %1173 = vmatpush1.bf16.xpose.msra.mxu0 0
    %1174 = vmatprep.mubr.bf16.mxu0 0
    %1175 = vmatmul.mubr.bf16.gmra.mrb[0].mxu0 %v1119
    %v1176 = vpop.f32.mrb[0].mxu0
    %v1177 = vadd.f32 0.0, %v1176
    %v1178 = vpop.f32.mrb[0].mxu0
    %v1179 = vpop.f32.mrb[0].mxu0
    %v1180 = vadd.f32 0.0, %v1179
    %v1181 = vpop.f32.mrb[0].mxu0
    %1182 = vmatprep.mubr.bf16.mxu0 0
    %1183 = vmatmul.mubr.bf16.gmra.mrb[0].mxu0 %v1122
    %v1184 = vpop.f32.mrb[0].mxu0
    %v1185 = vadd.f32 0.0, %v1184
    %v1186 = vpop.f32.mrb[0].mxu0
    %v1187 = vpop.f32.mrb[0].mxu0
    %v1188 = vadd.f32 0.0, %v1187
    %v1189 = vpop.f32.mrb[0].mxu0
    %1190 = vmatprep.mubr.bf16.mxu0 0
    %1191 = vmatmul.mubr.bf16.gmra.mrb[0].mxu0 %v1125
    %v1192 = vpop.f32.mrb[0].mxu0
    %v1193 = vadd.f32 0.0, %v1192
    %v1194 = vpop.f32.mrb[0].mxu0
    %v1195 = vpop.f32.mrb[0].mxu0
    %v1196 = vadd.f32 0.0, %v1195
    %v1197 = vpop.f32.mrb[0].mxu0
    %1198 = vmatprep.mubr.bf16.mxu0 0
    %1199 = vmatmul.mubr.bf16.gmra.mrb[0].mxu0 %v1128
    %v1200 = vpop.f32.mrb[0].mxu0
    %v1201 = vadd.f32 0.0, %v1200
    %v1202 = vpop.f32.mrb[0].mxu0
    %v1203 = vpop.f32.mrb[0].mxu0
    %v1204 = vadd.f32 0.0, %v1203
    %v1205 = vpop.f32.mrb[0].mxu0
    %1206 = vdwg.mxu0
    %1211 = vrot.lane.b32.xlu0 %v1110, 96
    %v1212 = vpop.permute.xlu0 %1211
    %1213 = vrot.lane.b32.xlu0 %v1111, 96
    %v1214 = vpop.permute.xlu0 %1213
    %1215 = vrot.lane.b32.xlu0 %v1112, 96
    %v1216 = vpop.permute.xlu0 %1215
    %1217 = vrot.lane.b32.xlu0 %v1113, 96
    %v1218 = vpop.permute.xlu0 %1217
    %1223 = vrot.lane.b32.xlu0 %v1114, 96
    %v1224 = vpop.permute.xlu0 %1223
    %1225 = vrot.lane.b32.xlu0 %v1115, 96
    %v1226 = vpop.permute.xlu0 %1225
    %1227 = vrot.lane.b32.xlu0 %v1116, 96
    %v1228 = vpop.permute.xlu0 %1227
    %1229 = vrot.lane.b32.xlu0 %v1117, 96
    %v1230 = vpop.permute.xlu0 %1229
    %v1232 = vsel %vm697, %v1212, 0
    %v1235 = vsel %vm697, %v1214, 0
    %v1238 = vsel %vm697, %v1216, 0
    %v1241 = vsel %vm697, %v1218, 0
    %v1244 = vsel %vm697, %v1224, 0
    %v1247 = vsel %vm697, %v1226, 0
    %v1250 = vsel %vm697, %v1228, 0
    %v1253 = vsel %vm697, %v1230, 0
    %1255 = vmatprep.subr.bf16.mxu0 0
    %1256 = vmatpush1.bf16.xpose.msra.mxu0 %v1244
    %1257 = vmatprep.subr.bf16.mxu0 0
    %1258 = vmatpush1.bf16.xpose.msra.mxu0 %v1247
    %1259 = vmatprep.subr.bf16.mxu0 0
    %1260 = vmatpush1.bf16.xpose.msra.mxu0 %v1250
    %1261 = vmatprep.subr.bf16.mxu0 0
    %1262 = vmatpush1.bf16.xpose.msra.mxu0 %v1253
    %1263 = vmatprep.subr.bf16.mxu0 0
    %1264 = vmatpush1.bf16.xpose.msra.mxu0 0
    %1265 = vmatprep.subr.bf16.mxu0 0
    %1266 = vmatpush1.bf16.xpose.msra.mxu0 0
    %1267 = vmatprep.subr.bf16.mxu0 0
    %1268 = vmatpush1.bf16.xpose.msra.mxu0 0
    %1269 = vmatprep.subr.bf16.mxu0 0
    %1270 = vmatpush1.bf16.xpose.msra.mxu0 0
    %1271 = vmatprep.subr.bf16.mxu0 0
    %1272 = vmatpush1.bf16.xpose.msra.mxu0 0
    %1273 = vmatprep.subr.bf16.mxu0 0
    %1274 = vmatpush1.bf16.xpose.msra.mxu0 0
    %1275 = vmatprep.subr.bf16.mxu0 0
    %1276 = vmatpush1.bf16.xpose.msra.mxu0 0
    %1277 = vmatprep.subr.bf16.mxu0 0
    %1278 = vmatpush1.bf16.xpose.msra.mxu0 0
    %1279 = vmatprep.subr.bf16.mxu0 0
    %1280 = vmatpush1.bf16.xpose.msra.mxu0 0
    %1281 = vmatprep.subr.bf16.mxu0 0
    %1282 = vmatpush1.bf16.xpose.msra.mxu0 0
    %1283 = vmatprep.subr.bf16.mxu0 0
    %1284 = vmatpush1.bf16.xpose.msra.mxu0 0
    %1285 = vmatprep.subr.bf16.mxu0 0
    %1286 = vmatpush1.bf16.xpose.msra.mxu0 0
    %1287 = vmatprep.mubr.bf16.mxu0 0
    %1288 = vmatmul.mubr.bf16.gmra.mrb[0].mxu0 %v1232
    %v1289 = vpop.f32.mrb[0].mxu0
    %v1290 = vadd.f32 0.0, %v1289
    %v1291 = vpop.f32.mrb[0].mxu0
    %v1292 = vpop.f32.mrb[0].mxu0
    %v1293 = vadd.f32 0.0, %v1292
    %v1294 = vpop.f32.mrb[0].mxu0
    %1295 = vmatprep.mubr.bf16.mxu0 0
    %1296 = vmatmul.mubr.bf16.gmra.mrb[0].mxu0 %v1235
    %v1297 = vpop.f32.mrb[0].mxu0
    %v1298 = vadd.f32 0.0, %v1297
    %v1299 = vpop.f32.mrb[0].mxu0
    %v1300 = vpop.f32.mrb[0].mxu0
    %v1301 = vadd.f32 0.0, %v1300
    %v1302 = vpop.f32.mrb[0].mxu0
    %1303 = vmatprep.mubr.bf16.mxu0 0
    %1304 = vmatmul.mubr.bf16.gmra.mrb[0].mxu0 %v1238
    %v1305 = vpop.f32.mrb[0].mxu0
    %v1306 = vadd.f32 0.0, %v1305
    %v1307 = vpop.f32.mrb[0].mxu0
    %v1308 = vpop.f32.mrb[0].mxu0
    %v1309 = vadd.f32 0.0, %v1308
    %v1310 = vpop.f32.mrb[0].mxu0
    %1311 = vmatprep.mubr.bf16.mxu0 0
    %1312 = vmatmul.mubr.bf16.gmra.mrb[0].mxu0 %v1241
    %v1313 = vpop.f32.mrb[0].mxu0
    %v1314 = vadd.f32 0.0, %v1313
    %v1315 = vpop.f32.mrb[0].mxu0
    %v1316 = vpop.f32.mrb[0].mxu0
    %v1317 = vadd.f32 0.0, %v1316
    %v1318 = vpop.f32.mrb[0].mxu0
    %1319 = vdwg.mxu0
    %1320 = vrot.lane.b32.xlu0 %v1110, 64
    %v1321 = vpop.permute.xlu0 %1320
    %1322 = vrot.lane.b32.xlu0 %v1111, 64
    %v1323 = vpop.permute.xlu0 %1322
    %1324 = vrot.lane.b32.xlu0 %v1112, 64
    %v1325 = vpop.permute.xlu0 %1324
    %1326 = vrot.lane.b32.xlu0 %v1113, 64
    %v1327 = vpop.permute.xlu0 %1326
    %1328 = vrot.lane.b32.xlu0 %v1114, 64
    %v1329 = vpop.permute.xlu0 %1328
    %1330 = vrot.lane.b32.xlu0 %v1115, 64
    %v1331 = vpop.permute.xlu0 %1330
    %1332 = vrot.lane.b32.xlu0 %v1116, 64
    %v1333 = vpop.permute.xlu0 %1332
    %1334 = vrot.lane.b32.xlu0 %v1117, 64
    %v1335 = vpop.permute.xlu0 %1334
    %v1337 = vsel %vm697, %v1321, 0
    %v1340 = vsel %vm697, %v1323, 0
    %v1343 = vsel %vm697, %v1325, 0
    %v1346 = vsel %vm697, %v1327, 0
    %v1349 = vsel %vm697, %v1329, 0
    %v1352 = vsel %vm697, %v1331, 0
    %v1355 = vsel %vm697, %v1333, 0
    %v1358 = vsel %vm697, %v1335, 0
    %1360 = vmatprep.subr.bf16.mxu0 0
    %1361 = vmatpush1.bf16.xpose.msra.mxu0 %v1349
    %1362 = vmatprep.subr.bf16.mxu0 0
    %1363 = vmatpush1.bf16.xpose.msra.mxu0 %v1352
    %1364 = vmatprep.subr.bf16.mxu0 0
    %1365 = vmatpush1.bf16.xpose.msra.mxu0 %v1355
    %1366 = vmatprep.subr.bf16.mxu0 0
    %1367 = vmatpush1.bf16.xpose.msra.mxu0 %v1358
    %1368 = vmatprep.subr.bf16.mxu0 0
    %1369 = vmatpush1.bf16.xpose.msra.mxu0 0
    %1370 = vmatprep.subr.bf16.mxu0 0
    %1371 = vmatpush1.bf16.xpose.msra.mxu0 0
    %1372 = vmatprep.subr.bf16.mxu0 0
    %1373 = vmatpush1.bf16.xpose.msra.mxu0 0
    %1374 = vmatprep.subr.bf16.mxu0 0
    %1375 = vmatpush1.bf16.xpose.msra.mxu0 0
    %1376 = vmatprep.subr.bf16.mxu0 0
    %1377 = vmatpush1.bf16.xpose.msra.mxu0 0
    %1378 = vmatprep.subr.bf16.mxu0 0
    %1379 = vmatpush1.bf16.xpose.msra.mxu0 0
    %1380 = vmatprep.subr.bf16.mxu0 0
    %1381 = vmatpush1.bf16.xpose.msra.mxu0 0
    %1382 = vmatprep.subr.bf16.mxu0 0
    %1383 = vmatpush1.bf16.xpose.msra.mxu0 0
    %1384 = vmatprep.subr.bf16.mxu0 0
    %1385 = vmatpush1.bf16.xpose.msra.mxu0 0
    %1386 = vmatprep.subr.bf16.mxu0 0
    %1387 = vmatpush1.bf16.xpose.msra.mxu0 0
    %1388 = vmatprep.subr.bf16.mxu0 0
    %1389 = vmatpush1.bf16.xpose.msra.mxu0 0
    %1390 = vmatprep.subr.bf16.mxu0 0
    %1391 = vmatpush1.bf16.xpose.msra.mxu0 0
    %1392 = vmatprep.mubr.bf16.mxu0 0
    %1393 = vmatmul.mubr.bf16.gmra.mrb[0].mxu0 %v1337
    %v1394 = vpop.f32.mrb[0].mxu0
    %v1395 = vadd.f32 0.0, %v1394
    %v1396 = vpop.f32.mrb[0].mxu0
    %v1397 = vpop.f32.mrb[0].mxu0
    %v1398 = vadd.f32 0.0, %v1397
    %v1399 = vpop.f32.mrb[0].mxu0
    %1400 = vmatprep.mubr.bf16.mxu0 0
    %1401 = vmatmul.mubr.bf16.gmra.mrb[0].mxu0 %v1340
    %v1402 = vpop.f32.mrb[0].mxu0
    %v1403 = vadd.f32 0.0, %v1402
    %v1404 = vpop.f32.mrb[0].mxu0
    %v1405 = vpop.f32.mrb[0].mxu0
    %v1406 = vadd.f32 0.0, %v1405
    %v1407 = vpop.f32.mrb[0].mxu0
    %1408 = vmatprep.mubr.bf16.mxu0 0
    %1409 = vmatmul.mubr.bf16.gmra.mrb[0].mxu0 %v1343
    %v1410 = vpop.f32.mrb[0].mxu0
    %v1411 = vadd.f32 0.0, %v1410
    %v1412 = vpop.f32.mrb[0].mxu0
    %v1413 = vpop.f32.mrb[0].mxu0
    %v1414 = vadd.f32 0.0, %v1413
    %v1415 = vpop.f32.mrb[0].mxu0
    %1416 = vmatprep.mubr.bf16.mxu0 0
    %1417 = vmatmul.mubr.bf16.gmra.mrb[0].mxu0 %v1346
    %v1418 = vpop.f32.mrb[0].mxu0
    %v1419 = vadd.f32 0.0, %v1418
    %v1420 = vpop.f32.mrb[0].mxu0
    %v1421 = vpop.f32.mrb[0].mxu0
    %v1422 = vadd.f32 0.0, %v1421
    %v1423 = vpop.f32.mrb[0].mxu0
    %1424 = vdwg.mxu0
    %1425 = vrot.lane.b32.xlu0 %v1110, 32
    %v1426 = vpop.permute.xlu0 %1425
    %1427 = vrot.lane.b32.xlu0 %v1111, 32
    %v1428 = vpop.permute.xlu0 %1427
    %1429 = vrot.lane.b32.xlu0 %v1112, 32
    %v1430 = vpop.permute.xlu0 %1429
    %1431 = vrot.lane.b32.xlu0 %v1113, 32
    %v1432 = vpop.permute.xlu0 %1431
    %1433 = vrot.lane.b32.xlu0 %v1114, 32
    %v1434 = vpop.permute.xlu0 %1433
    %1435 = vrot.lane.b32.xlu0 %v1115, 32
    %v1436 = vpop.permute.xlu0 %1435
    %1437 = vrot.lane.b32.xlu0 %v1116, 32
    %v1438 = vpop.permute.xlu0 %1437
    %1439 = vrot.lane.b32.xlu0 %v1117, 32
    %v1440 = vpop.permute.xlu0 %1439
    %v1442 = vsel %vm697, %v1426, 0
    %v1445 = vsel %vm697, %v1428, 0
    %v1448 = vsel %vm697, %v1430, 0
    %v1451 = vsel %vm697, %v1432, 0
    %v1454 = vsel %vm697, %v1434, 0
    %v1457 = vsel %vm697, %v1436, 0
    %v1460 = vsel %vm697, %v1438, 0
    %v1463 = vsel %vm697, %v1440, 0
    %1465 = vmatprep.subr.bf16.mxu0 0
    %1466 = vmatpush1.bf16.xpose.msra.mxu0 %v1454
    %1467 = vmatprep.subr.bf16.mxu0 0
    %1468 = vmatpush1.bf16.xpose.msra.mxu0 %v1457
    %1469 = vmatprep.subr.bf16.mxu0 0
    %1470 = vmatpush1.bf16.xpose.msra.mxu0 %v1460
    %1471 = vmatprep.subr.bf16.mxu0 0
    %1472 = vmatpush1.bf16.xpose.msra.mxu0 %v1463
    %1473 = vmatprep.subr.bf16.mxu0 0
    %1474 = vmatpush1.bf16.xpose.msra.mxu0 0
    %1475 = vmatprep.subr.bf16.mxu0 0
    %1476 = vmatpush1.bf16.xpose.msra.mxu0 0
    %1477 = vmatprep.subr.bf16.mxu0 0
    %1478 = vmatpush1.bf16.xpose.msra.mxu0 0
    %1479 = vmatprep.subr.bf16.mxu0 0
    %1480 = vmatpush1.bf16.xpose.msra.mxu0 0
    %1481 = vmatprep.subr.bf16.mxu0 0
    %1482 = vmatpush1.bf16.xpose.msra.mxu0 0
    %1483 = vmatprep.subr.bf16.mxu0 0
    %1484 = vmatpush1.bf16.xpose.msra.mxu0 0
    %1485 = vmatprep.subr.bf16.mxu0 0
    %1486 = vmatpush1.bf16.xpose.msra.mxu0 0
    %1487 = vmatprep.subr.bf16.mxu0 0
    %1488 = vmatpush1.bf16.xpose.msra.mxu0 0
    %1489 = vmatprep.subr.bf16.mxu0 0
    %1490 = vmatpush1.bf16.xpose.msra.mxu0 0
    %1491 = vmatprep.subr.bf16.mxu0 0
    %1492 = vmatpush1.bf16.xpose.msra.mxu0 0
    %1493 = vmatprep.subr.bf16.mxu0 0
    %1494 = vmatpush1.bf16.xpose.msra.mxu0 0
    %1495 = vmatprep.subr.bf16.mxu0 0
    %1496 = vmatpush1.bf16.xpose.msra.mxu0 0
    %1497 = vmatprep.mubr.bf16.mxu0 0
    %1498 = vmatmul.mubr.bf16.gmra.mrb[0].mxu0 %v1442
    %v1499 = vpop.f32.mrb[0].mxu0
    %v1500 = vadd.f32 0.0, %v1499
    %v1501 = vpop.f32.mrb[0].mxu0
    %v1502 = vpop.f32.mrb[0].mxu0
    %v1503 = vadd.f32 0.0, %v1502
    %v1504 = vpop.f32.mrb[0].mxu0
    %1505 = vmatprep.mubr.bf16.mxu0 0
    %1506 = vmatmul.mubr.bf16.gmra.mrb[0].mxu0 %v1445
    %v1507 = vpop.f32.mrb[0].mxu0
    %v1508 = vadd.f32 0.0, %v1507
    %v1509 = vpop.f32.mrb[0].mxu0
    %v1510 = vpop.f32.mrb[0].mxu0
    %v1511 = vadd.f32 0.0, %v1510
    %v1512 = vpop.f32.mrb[0].mxu0
    %1513 = vmatprep.mubr.bf16.mxu0 0
    %1514 = vmatmul.mubr.bf16.gmra.mrb[0].mxu0 %v1448
    %v1515 = vpop.f32.mrb[0].mxu0
    %v1516 = vadd.f32 0.0, %v1515
    %v1517 = vpop.f32.mrb[0].mxu0
    %v1518 = vpop.f32.mrb[0].mxu0
    %v1519 = vadd.f32 0.0, %v1518
    %v1520 = vpop.f32.mrb[0].mxu0
    %1521 = vmatprep.mubr.bf16.mxu0 0
    %1522 = vmatmul.mubr.bf16.gmra.mrb[0].mxu0 %v1451
    %v1523 = vpop.f32.mrb[0].mxu0
    %v1524 = vadd.f32 0.0, %v1523
    %v1525 = vpop.f32.mrb[0].mxu0
    %v1526 = vpop.f32.mrb[0].mxu0
    %v1527 = vadd.f32 0.0, %v1526
    %v1528 = vpop.f32.mrb[0].mxu0
    %1529 = vdwg.mxu0
    %v1530 = vmul.f32 %v757, 0.17677669
    %v1531 = vmul.f32 %v760, 0.17677669
    %v1532 = vmul.f32 %v765, 0.17677669
    %v1533 = vmul.f32 %v768, 0.17677669
    %v1534 = vmul.f32 %v773, 0.17677669
    %v1535 = vmul.f32 %v776, 0.17677669
    %v1536 = vmul.f32 %v781, 0.17677669
    %v1537 = vmul.f32 %v784, 0.17677669
    %v1538 = vmul.f32 %v870, 0.17677669
    %v1539 = vmul.f32 %v873, 0.17677669
    %v1540 = vmul.f32 %v878, 0.17677669
    %v1541 = vmul.f32 %v881, 0.17677669
    %v1542 = vmul.f32 %v886, 0.17677669
    %v1543 = vmul.f32 %v889, 0.17677669
    %v1544 = vmul.f32 %v894, 0.17677669
    %v1545 = vmul.f32 %v897, 0.17677669
    %v1546 = vmul.f32 %v975, 0.17677669
    %v1547 = vmul.f32 %v978, 0.17677669
    %v1548 = vmul.f32 %v983, 0.17677669
    %v1549 = vmul.f32 %v986, 0.17677669
    %v1550 = vmul.f32 %v991, 0.17677669
    %v1551 = vmul.f32 %v994, 0.17677669
    %v1552 = vmul.f32 %v999, 0.17677669
    %v1553 = vmul.f32 %v1002, 0.17677669
    %v1554 = vmul.f32 %v1080, 0.17677669
    %v1555 = vmul.f32 %v1083, 0.17677669
    %v1556 = vmul.f32 %v1088, 0.17677669
    %v1557 = vmul.f32 %v1091, 0.17677669
    %v1558 = vmul.f32 %v1096, 0.17677669
    %v1559 = vmul.f32 %v1099, 0.17677669
    %v1560 = vmul.f32 %v1104, 0.17677669
    %v1561 = vmul.f32 %v1107, 0.17677669
    %v1562 = vmul.f32 %v1177, 0.17677669
    %v1563 = vmul.f32 %v1180, 0.17677669
    %v1564 = vmul.f32 %v1185, 0.17677669
    %v1565 = vmul.f32 %v1188, 0.17677669
    %v1566 = vmul.f32 %v1193, 0.17677669
    %v1567 = vmul.f32 %v1196, 0.17677669
    %v1568 = vmul.f32 %v1201, 0.17677669
    %v1569 = vmul.f32 %v1204, 0.17677669
    %v1570 = vmul.f32 %v1290, 0.17677669
    %v1571 = vmul.f32 %v1293, 0.17677669
    %v1572 = vmul.f32 %v1298, 0.17677669
    %v1573 = vmul.f32 %v1301, 0.17677669
    %v1574 = vmul.f32 %v1306, 0.17677669
    %v1575 = vmul.f32 %v1309, 0.17677669
    %v1576 = vmul.f32 %v1314, 0.17677669
    %v1577 = vmul.f32 %v1317, 0.17677669
    %v1578 = vmul.f32 %v1395, 0.17677669
    %v1579 = vmul.f32 %v1398, 0.17677669
    %v1580 = vmul.f32 %v1403, 0.17677669
    %v1581 = vmul.f32 %v1406, 0.17677669
    %v1582 = vmul.f32 %v1411, 0.17677669
    %v1583 = vmul.f32 %v1414, 0.17677669
    %v1584 = vmul.f32 %v1419, 0.17677669
    %v1585 = vmul.f32 %v1422, 0.17677669
    %v1586 = vmul.f32 %v1500, 0.17677669
    %v1587 = vmul.f32 %v1503, 0.17677669
    %v1588 = vmul.f32 %v1508, 0.17677669
    %v1589 = vmul.f32 %v1511, 0.17677669
    %v1590 = vmul.f32 %v1516, 0.17677669
    %v1591 = vmul.f32 %v1519, 0.17677669
    %v1592 = vmul.f32 %v1524, 0.17677669
    %v1593 = vmul.f32 %v1527, 0.17677669
    %vm1594 = vcmask 523264
    %v1595 = vsel %vm1594, %v1530, -inf
    %1596 = vmax.xlane.f32.xlu0 %v1595
    %v1597 = vpop.xlane.xlu0 %1596
    %v1598 = vsel %vm1594, %v1531, -inf
    %1599 = vmax.xlane.f32.xlu0 %v1598
    %v1600 = vpop.xlane.xlu0 %1599
    %v1601 = vsel %vm1594, %v1532, -inf
    %1602 = vmax.xlane.f32.xlu0 %v1601
    %v1603 = vpop.xlane.xlu0 %1602
    %v1604 = vsel %vm1594, %v1533, -inf
    %1605 = vmax.xlane.f32.xlu0 %v1604
    %v1606 = vpop.xlane.xlu0 %1605
    %v1607 = vsel %vm1594, %v1534, -inf
    %1608 = vmax.xlane.f32.xlu0 %v1607
    %v1609 = vpop.xlane.xlu0 %1608
    %v1610 = vsel %vm1594, %v1535, -inf
    %1611 = vmax.xlane.f32.xlu0 %v1610
    %v1612 = vpop.xlane.xlu0 %1611
    %v1613 = vsel %vm1594, %v1536, -inf
    %1614 = vmax.xlane.f32.xlu0 %v1613
    %v1615 = vpop.xlane.xlu0 %1614
    %v1616 = vsel %vm1594, %v1537, -inf
    %1617 = vmax.xlane.f32.xlu0 %v1616
    %v1618 = vpop.xlane.xlu0 %1617
    %v1619 = vsel %vm1594, %v1538, -inf
    %1620 = vmax.xlane.f32.xlu0 %v1619
    %v1621 = vpop.xlane.xlu0 %1620
    %v1622 = vsel %vm1594, %v1539, -inf
    %1623 = vmax.xlane.f32.xlu0 %v1622
    %v1624 = vpop.xlane.xlu0 %1623
    %v1625 = vsel %vm1594, %v1540, -inf
    %1626 = vmax.xlane.f32.xlu0 %v1625
    %v1627 = vpop.xlane.xlu0 %1626
    %v1628 = vsel %vm1594, %v1541, -inf
    %1629 = vmax.xlane.f32.xlu0 %v1628
    %v1630 = vpop.xlane.xlu0 %1629
    %v1631 = vsel %vm1594, %v1542, -inf
    %1632 = vmax.xlane.f32.xlu0 %v1631
    %v1633 = vpop.xlane.xlu0 %1632
    %v1634 = vsel %vm1594, %v1543, -inf
    %1635 = vmax.xlane.f32.xlu0 %v1634
    %v1636 = vpop.xlane.xlu0 %1635
    %v1637 = vsel %vm1594, %v1544, -inf
    %1638 = vmax.xlane.f32.xlu0 %v1637
    %v1639 = vpop.xlane.xlu0 %1638
    %v1640 = vsel %vm1594, %v1545, -inf
    %1641 = vmax.xlane.f32.xlu0 %v1640
    %v1642 = vpop.xlane.xlu0 %1641
    %v1643 = vsel %vm1594, %v1546, -inf
    %1644 = vmax.xlane.f32.xlu0 %v1643
    %v1645 = vpop.xlane.xlu0 %1644
    %v1646 = vsel %vm1594, %v1547, -inf
    %1647 = vmax.xlane.f32.xlu0 %v1646
    %v1648 = vpop.xlane.xlu0 %1647
    %v1649 = vsel %vm1594, %v1548, -inf
    %1650 = vmax.xlane.f32.xlu0 %v1649
    %v1651 = vpop.xlane.xlu0 %1650
    %v1652 = vsel %vm1594, %v1549, -inf
    %1653 = vmax.xlane.f32.xlu0 %v1652
    %v1654 = vpop.xlane.xlu0 %1653
    %v1655 = vsel %vm1594, %v1550, -inf
    %1656 = vmax.xlane.f32.xlu0 %v1655
    %v1657 = vpop.xlane.xlu0 %1656
    %v1658 = vsel %vm1594, %v1551, -inf
    %1659 = vmax.xlane.f32.xlu0 %v1658
    %v1660 = vpop.xlane.xlu0 %1659
    %v1661 = vsel %vm1594, %v1552, -inf
    %1662 = vmax.xlane.f32.xlu0 %v1661
    %v1663 = vpop.xlane.xlu0 %1662
    %v1664 = vsel %vm1594, %v1553, -inf
    %1665 = vmax.xlane.f32.xlu0 %v1664
    %v1666 = vpop.xlane.xlu0 %1665
    %v1667 = vsel %vm1594, %v1554, -inf
    %1668 = vmax.xlane.f32.xlu0 %v1667
    %v1669 = vpop.xlane.xlu0 %1668
    %v1670 = vsel %vm1594, %v1555, -inf
    %1671 = vmax.xlane.f32.xlu0 %v1670
    %v1672 = vpop.xlane.xlu0 %1671
    %v1673 = vsel %vm1594, %v1556, -inf
    %1674 = vmax.xlane.f32.xlu0 %v1673
    %v1675 = vpop.xlane.xlu0 %1674
    %v1676 = vsel %vm1594, %v1557, -inf
    %1677 = vmax.xlane.f32.xlu0 %v1676
    %v1678 = vpop.xlane.xlu0 %1677
    %v1679 = vsel %vm1594, %v1558, -inf
    %1680 = vmax.xlane.f32.xlu0 %v1679
    %v1681 = vpop.xlane.xlu0 %1680
    %v1682 = vsel %vm1594, %v1559, -inf
    %1683 = vmax.xlane.f32.xlu0 %v1682
    %v1684 = vpop.xlane.xlu0 %1683
    %v1685 = vsel %vm1594, %v1560, -inf
    %1686 = vmax.xlane.f32.xlu0 %v1685
    %v1687 = vpop.xlane.xlu0 %1686
    %v1688 = vsel %vm1594, %v1561, -inf
    %1689 = vmax.xlane.f32.xlu0 %v1688
    %v1690 = vpop.xlane.xlu0 %1689
    %v1691 = vsel %vm1594, %v1562, -inf
    %1692 = vmax.xlane.f32.xlu0 %v1691
    %v1693 = vpop.xlane.xlu0 %1692
    %v1694 = vsel %vm1594, %v1563, -inf
    %1695 = vmax.xlane.f32.xlu0 %v1694
    %v1696 = vpop.xlane.xlu0 %1695
    %v1697 = vsel %vm1594, %v1564, -inf
    %1698 = vmax.xlane.f32.xlu0 %v1697
    %v1699 = vpop.xlane.xlu0 %1698
    %v1700 = vsel %vm1594, %v1565, -inf
    %1701 = vmax.xlane.f32.xlu0 %v1700
    %v1702 = vpop.xlane.xlu0 %1701
    %v1703 = vsel %vm1594, %v1566, -inf
    %1704 = vmax.xlane.f32.xlu0 %v1703
    %v1705 = vpop.xlane.xlu0 %1704
    %v1706 = vsel %vm1594, %v1567, -inf
    %1707 = vmax.xlane.f32.xlu0 %v1706
    %v1708 = vpop.xlane.xlu0 %1707
    %v1709 = vsel %vm1594, %v1568, -inf
    %1710 = vmax.xlane.f32.xlu0 %v1709
    %v1711 = vpop.xlane.xlu0 %1710
    %v1712 = vsel %vm1594, %v1569, -inf
    %1713 = vmax.xlane.f32.xlu0 %v1712
    %v1714 = vpop.xlane.xlu0 %1713
    %v1715 = vsel %vm1594, %v1570, -inf
    %1716 = vmax.xlane.f32.xlu0 %v1715
    %v1717 = vpop.xlane.xlu0 %1716
    %v1718 = vsel %vm1594, %v1571, -inf
    %1719 = vmax.xlane.f32.xlu0 %v1718
    %v1720 = vpop.xlane.xlu0 %1719
    %v1721 = vsel %vm1594, %v1572, -inf
    %1722 = vmax.xlane.f32.xlu0 %v1721
    %v1723 = vpop.xlane.xlu0 %1722
    %v1724 = vsel %vm1594, %v1573, -inf
    %1725 = vmax.xlane.f32.xlu0 %v1724
    %v1726 = vpop.xlane.xlu0 %1725
    %v1727 = vsel %vm1594, %v1574, -inf
    %1728 = vmax.xlane.f32.xlu0 %v1727
    %v1729 = vpop.xlane.xlu0 %1728
    %v1730 = vsel %vm1594, %v1575, -inf
    %1731 = vmax.xlane.f32.xlu0 %v1730
    %v1732 = vpop.xlane.xlu0 %1731
    %v1733 = vsel %vm1594, %v1576, -inf
    %1734 = vmax.xlane.f32.xlu0 %v1733
    %v1735 = vpop.xlane.xlu0 %1734
    %v1736 = vsel %vm1594, %v1577, -inf
    %1737 = vmax.xlane.f32.xlu0 %v1736
    %v1738 = vpop.xlane.xlu0 %1737
    %v1739 = vsel %vm1594, %v1578, -inf
    %1740 = vmax.xlane.f32.xlu0 %v1739
    %v1741 = vpop.xlane.xlu0 %1740
    %v1742 = vsel %vm1594, %v1579, -inf
    %1743 = vmax.xlane.f32.xlu0 %v1742
    %v1744 = vpop.xlane.xlu0 %1743
    %v1745 = vsel %vm1594, %v1580, -inf
    %1746 = vmax.xlane.f32.xlu0 %v1745
    %v1747 = vpop.xlane.xlu0 %1746
    %v1748 = vsel %vm1594, %v1581, -inf
    %1749 = vmax.xlane.f32.xlu0 %v1748
    %v1750 = vpop.xlane.xlu0 %1749
    %v1751 = vsel %vm1594, %v1582, -inf
    %1752 = vmax.xlane.f32.xlu0 %v1751
    %v1753 = vpop.xlane.xlu0 %1752
    %v1754 = vsel %vm1594, %v1583, -inf
    %1755 = vmax.xlane.f32.xlu0 %v1754
    %v1756 = vpop.xlane.xlu0 %1755
    %v1757 = vsel %vm1594, %v1584, -inf
    %1758 = vmax.xlane.f32.xlu0 %v1757
    %v1759 = vpop.xlane.xlu0 %1758
    %v1760 = vsel %vm1594, %v1585, -inf
    %1761 = vmax.xlane.f32.xlu0 %v1760
    %v1762 = vpop.xlane.xlu0 %1761
    %v1763 = vsel %vm1594, %v1586, -inf
    %1764 = vmax.xlane.f32.xlu0 %v1763
    %v1765 = vpop.xlane.xlu0 %1764
    %v1766 = vsel %vm1594, %v1587, -inf
    %1767 = vmax.xlane.f32.xlu0 %v1766
    %v1768 = vpop.xlane.xlu0 %1767
    %v1769 = vsel %vm1594, %v1588, -inf
    %1770 = vmax.xlane.f32.xlu0 %v1769
    %v1771 = vpop.xlane.xlu0 %1770
    %v1772 = vsel %vm1594, %v1589, -inf
    %1773 = vmax.xlane.f32.xlu0 %v1772
    %v1774 = vpop.xlane.xlu0 %1773
    %v1775 = vsel %vm1594, %v1590, -inf
    %1776 = vmax.xlane.f32.xlu0 %v1775
    %v1777 = vpop.xlane.xlu0 %1776
    %v1778 = vsel %vm1594, %v1591, -inf
    %1779 = vmax.xlane.f32.xlu0 %v1778
    %v1780 = vpop.xlane.xlu0 %1779
    %v1781 = vsel %vm1594, %v1592, -inf
    %1782 = vmax.xlane.f32.xlu0 %v1781
    %v1783 = vpop.xlane.xlu0 %1782
    %v1784 = vsel %vm1594, %v1593, -inf
    %1785 = vmax.xlane.f32.xlu0 %v1784
    %v1786 = vpop.xlane.xlu0 %1785
    %v1787 = vsub.f32 %v1530, %v1597
    %v1788 = vsub.f32 %v1531, %v1600
    %v1789 = vsub.f32 %v1532, %v1603
    %v1790 = vsub.f32 %v1533, %v1606
    %v1791 = vsub.f32 %v1534, %v1609
    %v1792 = vsub.f32 %v1535, %v1612
    %v1793 = vsub.f32 %v1536, %v1615
    %v1794 = vsub.f32 %v1537, %v1618
    %v1795 = vsub.f32 %v1538, %v1621
    %v1796 = vsub.f32 %v1539, %v1624
    %v1797 = vsub.f32 %v1540, %v1627
    %v1798 = vsub.f32 %v1541, %v1630
    %v1799 = vsub.f32 %v1542, %v1633
    %v1800 = vsub.f32 %v1543, %v1636
    %v1801 = vsub.f32 %v1544, %v1639
    %v1802 = vsub.f32 %v1545, %v1642
    %v1803 = vsub.f32 %v1546, %v1645
    %v1804 = vsub.f32 %v1547, %v1648
    %v1805 = vsub.f32 %v1548, %v1651
    %v1806 = vsub.f32 %v1549, %v1654
    %v1807 = vsub.f32 %v1550, %v1657
    %v1808 = vsub.f32 %v1551, %v1660
    %v1809 = vsub.f32 %v1552, %v1663
    %v1810 = vsub.f32 %v1553, %v1666
    %v1811 = vsub.f32 %v1554, %v1669
    %v1812 = vsub.f32 %v1555, %v1672
    %v1813 = vsub.f32 %v1556, %v1675
    %v1814 = vsub.f32 %v1557, %v1678
    %v1815 = vsub.f32 %v1558, %v1681
    %v1816 = vsub.f32 %v1559, %v1684
    %v1817 = vsub.f32 %v1560, %v1687
    %v1818 = vsub.f32 %v1561, %v1690
    %v1819 = vsub.f32 %v1562, %v1693
    %v1820 = vsub.f32 %v1563, %v1696
    %v1821 = vsub.f32 %v1564, %v1699
    %v1822 = vsub.f32 %v1565, %v1702
    %v1823 = vsub.f32 %v1566, %v1705
    %v1824 = vsub.f32 %v1567, %v1708
    %v1825 = vsub.f32 %v1568, %v1711
    %v1826 = vsub.f32 %v1569, %v1714
    %v1827 = vsub.f32 %v1570, %v1717
    %v1828 = vsub.f32 %v1571, %v1720
    %v1829 = vsub.f32 %v1572, %v1723
    %v1830 = vsub.f32 %v1573, %v1726
    %v1831 = vsub.f32 %v1574, %v1729
    %v1832 = vsub.f32 %v1575, %v1732
    %v1833 = vsub.f32 %v1576, %v1735
    %v1834 = vsub.f32 %v1577, %v1738
    %v1835 = vsub.f32 %v1578, %v1741
    %v1836 = vsub.f32 %v1579, %v1744
    %v1837 = vsub.f32 %v1580, %v1747
    %v1838 = vsub.f32 %v1581, %v1750
    %v1839 = vsub.f32 %v1582, %v1753
    %v1840 = vsub.f32 %v1583, %v1756
    %v1841 = vsub.f32 %v1584, %v1759
    %v1842 = vsub.f32 %v1585, %v1762
    %v1843 = vsub.f32 %v1586, %v1765
    %v1844 = vsub.f32 %v1587, %v1768
    %v1845 = vsub.f32 %v1588, %v1771
    %v1846 = vsub.f32 %v1589, %v1774
    %v1847 = vsub.f32 %v1590, %v1777
    %v1848 = vsub.f32 %v1591, %v1780
    %v1849 = vsub.f32 %v1592, %v1783
    %v1850 = vsub.f32 %v1593, %v1786
    %v1851 = vmul.f32 %v1787, 1.442695
    %v1852 = vpow.pop %v1851
    %v1853 = vmul.f32 %v1788, 1.442695
    %v1854 = vpow.pop %v1853
    %v1855 = vmul.f32 %v1789, 1.442695
    %v1856 = vpow.pop %v1855
    %v1857 = vmul.f32 %v1790, 1.442695
    %v1858 = vpow.pop %v1857
    %v1859 = vmul.f32 %v1791, 1.442695
    %v1860 = vpow.pop %v1859
    %v1861 = vmul.f32 %v1792, 1.442695
    %v1862 = vpow.pop %v1861
    %v1863 = vmul.f32 %v1793, 1.442695
    %v1864 = vpow.pop %v1863
    %v1865 = vmul.f32 %v1794, 1.442695
    %v1866 = vpow.pop %v1865
    %v1867 = vmul.f32 %v1795, 1.442695
    %v1868 = vpow.pop %v1867
    %v1869 = vmul.f32 %v1796, 1.442695
    %v1870 = vpow.pop %v1869
    %v1871 = vmul.f32 %v1797, 1.442695
    %v1872 = vpow.pop %v1871
    %v1873 = vmul.f32 %v1798, 1.442695
    %v1874 = vpow.pop %v1873
    %v1875 = vmul.f32 %v1799, 1.442695
    %v1876 = vpow.pop %v1875
    %v1877 = vmul.f32 %v1800, 1.442695
    %v1878 = vpow.pop %v1877
    %v1879 = vmul.f32 %v1801, 1.442695
    %v1880 = vpow.pop %v1879
    %v1881 = vmul.f32 %v1802, 1.442695
    %v1882 = vpow.pop %v1881
    %v1883 = vmul.f32 %v1803, 1.442695
    %v1884 = vpow.pop %v1883
    %v1885 = vmul.f32 %v1804, 1.442695
    %v1886 = vpow.pop %v1885
    %v1887 = vmul.f32 %v1805, 1.442695
    %v1888 = vpow.pop %v1887
    %v1889 = vmul.f32 %v1806, 1.442695
    %v1890 = vpow.pop %v1889
    %v1891 = vmul.f32 %v1807, 1.442695
    %v1892 = vpow.pop %v1891
    %v1893 = vmul.f32 %v1808, 1.442695
    %v1894 = vpow.pop %v1893
    %v1895 = vmul.f32 %v1809, 1.442695
    %v1896 = vpow.pop %v1895
    %v1897 = vmul.f32 %v1810, 1.442695
    %v1898 = vpow.pop %v1897
    %v1899 = vmul.f32 %v1811, 1.442695
    %v1900 = vpow.pop %v1899
    %v1901 = vmul.f32 %v1812, 1.442695
    %v1902 = vpow.pop %v1901
    %v1903 = vmul.f32 %v1813, 1.442695
    %v1904 = vpow.pop %v1903
    %v1905 = vmul.f32 %v1814, 1.442695
    %v1906 = vpow.pop %v1905
    %v1907 = vmul.f32 %v1815, 1.442695
    %v1908 = vpow.pop %v1907
    %v1909 = vmul.f32 %v1816, 1.442695
    %v1910 = vpow.pop %v1909
    %v1911 = vmul.f32 %v1817, 1.442695
    %v1912 = vpow.pop %v1911
    %v1913 = vmul.f32 %v1818, 1.442695
    %v1914 = vpow.pop %v1913
    %v1915 = vmul.f32 %v1819, 1.442695
    %v1916 = vpow.pop %v1915
    %v1917 = vmul.f32 %v1820, 1.442695
    %v1918 = vpow.pop %v1917
    %v1919 = vmul.f32 %v1821, 1.442695
    %v1920 = vpow.pop %v1919
    %v1921 = vmul.f32 %v1822, 1.442695
    %v1922 = vpow.pop %v1921
    %v1923 = vmul.f32 %v1823, 1.442695
    %v1924 = vpow.pop %v1923
    %v1925 = vmul.f32 %v1824, 1.442695
    %v1926 = vpow.pop %v1925
    %v1927 = vmul.f32 %v1825, 1.442695
    %v1928 = vpow.pop %v1927
    %v1929 = vmul.f32 %v1826, 1.442695
    %v1930 = vpow.pop %v1929
    %v1931 = vmul.f32 %v1827, 1.442695
    %v1932 = vpow.pop %v1931
    %v1933 = vmul.f32 %v1828, 1.442695
    %v1934 = vpow.pop %v1933
    %v1935 = vmul.f32 %v1829, 1.442695
    %v1936 = vpow.pop %v1935
    %v1937 = vmul.f32 %v1830, 1.442695
    %v1938 = vpow.pop %v1937
    %v1939 = vmul.f32 %v1831, 1.442695
    %v1940 = vpow.pop %v1939
    %v1941 = vmul.f32 %v1832, 1.442695
    %v1942 = vpow.pop %v1941
    %v1943 = vmul.f32 %v1833, 1.442695
    %v1944 = vpow.pop %v1943
    %v1945 = vmul.f32 %v1834, 1.442695
    %v1946 = vpow.pop %v1945
    %v1947 = vmul.f32 %v1835, 1.442695
    %v1948 = vpow.pop %v1947
    %v1949 = vmul.f32 %v1836, 1.442695
    %v1950 = vpow.pop %v1949
    %v1951 = vmul.f32 %v1837, 1.442695
    %v1952 = vpow.pop %v1951
    %v1953 = vmul.f32 %v1838, 1.442695
    %v1954 = vpow.pop %v1953
    %v1955 = vmul.f32 %v1839, 1.442695
    %v1956 = vpow.pop %v1955
    %v1957 = vmul.f32 %v1840, 1.442695
    %v1958 = vpow.pop %v1957
    %v1959 = vmul.f32 %v1841, 1.442695
    %v1960 = vpow.pop %v1959
    %v1961 = vmul.f32 %v1842, 1.442695
    %v1962 = vpow.pop %v1961
    %v1963 = vmul.f32 %v1843, 1.442695
    %v1964 = vpow.pop %v1963
    %v1965 = vmul.f32 %v1844, 1.442695
    %v1966 = vpow.pop %v1965
    %v1967 = vmul.f32 %v1845, 1.442695
    %v1968 = vpow.pop %v1967
    %v1969 = vmul.f32 %v1846, 1.442695
    %v1970 = vpow.pop %v1969
    %v1971 = vmul.f32 %v1847, 1.442695
    %v1972 = vpow.pop %v1971
    %v1973 = vmul.f32 %v1848, 1.442695
    %v1974 = vpow.pop %v1973
    %v1975 = vmul.f32 %v1849, 1.442695
    %v1976 = vpow.pop %v1975
    %v1977 = vmul.f32 %v1850, 1.442695
    %v1978 = vpow.pop %v1977
    %v1979 = vsel %vm1594, %v1852, 0.0
    %1980 = vadd.xlane.f32.xlu0 %v1979
    %v1981 = vpop.xlane.xlu0 %1980
    %v1982 = vsel %vm1594, %v1854, 0.0
    %1983 = vadd.xlane.f32.xlu0 %v1982
    %v1984 = vpop.xlane.xlu0 %1983
    %v1985 = vsel %vm1594, %v1856, 0.0
    %1986 = vadd.xlane.f32.xlu0 %v1985
    %v1987 = vpop.xlane.xlu0 %1986
    %v1988 = vsel %vm1594, %v1858, 0.0
    %1989 = vadd.xlane.f32.xlu0 %v1988
    %v1990 = vpop.xlane.xlu0 %1989
    %v1991 = vsel %vm1594, %v1860, 0.0
    %1992 = vadd.xlane.f32.xlu0 %v1991
    %v1993 = vpop.xlane.xlu0 %1992
    %v1994 = vsel %vm1594, %v1862, 0.0
    %1995 = vadd.xlane.f32.xlu0 %v1994
    %v1996 = vpop.xlane.xlu0 %1995
    %v1997 = vsel %vm1594, %v1864, 0.0
    %1998 = vadd.xlane.f32.xlu0 %v1997
    %v1999 = vpop.xlane.xlu0 %1998
    %v2000 = vsel %vm1594, %v1866, 0.0
    %2001 = vadd.xlane.f32.xlu0 %v2000
    %v2002 = vpop.xlane.xlu0 %2001
    %v2003 = vsel %vm1594, %v1868, 0.0
    %2004 = vadd.xlane.f32.xlu0 %v2003
    %v2005 = vpop.xlane.xlu0 %2004
    %v2006 = vsel %vm1594, %v1870, 0.0
    %2007 = vadd.xlane.f32.xlu0 %v2006
    %v2008 = vpop.xlane.xlu0 %2007
    %v2009 = vsel %vm1594, %v1872, 0.0
    %2010 = vadd.xlane.f32.xlu0 %v2009
    %v2011 = vpop.xlane.xlu0 %2010
    %v2012 = vsel %vm1594, %v1874, 0.0
    %2013 = vadd.xlane.f32.xlu0 %v2012
    %v2014 = vpop.xlane.xlu0 %2013
    %v2015 = vsel %vm1594, %v1876, 0.0
    %2016 = vadd.xlane.f32.xlu0 %v2015
    %v2017 = vpop.xlane.xlu0 %2016
    %v2018 = vsel %vm1594, %v1878, 0.0
    %2019 = vadd.xlane.f32.xlu0 %v2018
    %v2020 = vpop.xlane.xlu0 %2019
    %v2021 = vsel %vm1594, %v1880, 0.0
    %2022 = vadd.xlane.f32.xlu0 %v2021
    %v2023 = vpop.xlane.xlu0 %2022
    %v2024 = vsel %vm1594, %v1882, 0.0
    %2025 = vadd.xlane.f32.xlu0 %v2024
    %v2026 = vpop.xlane.xlu0 %2025
    %v2027 = vsel %vm1594, %v1884, 0.0
    %2028 = vadd.xlane.f32.xlu0 %v2027
    %v2029 = vpop.xlane.xlu0 %2028
    %v2030 = vsel %vm1594, %v1886, 0.0
    %2031 = vadd.xlane.f32.xlu0 %v2030
    %v2032 = vpop.xlane.xlu0 %2031
    %v2033 = vsel %vm1594, %v1888, 0.0
    %2034 = vadd.xlane.f32.xlu0 %v2033
    %v2035 = vpop.xlane.xlu0 %2034
    %v2036 = vsel %vm1594, %v1890, 0.0
    %2037 = vadd.xlane.f32.xlu0 %v2036
    %v2038 = vpop.xlane.xlu0 %2037
    %v2039 = vsel %vm1594, %v1892, 0.0
    %2040 = vadd.xlane.f32.xlu0 %v2039
    %v2041 = vpop.xlane.xlu0 %2040
    %v2042 = vsel %vm1594, %v1894, 0.0
    %2043 = vadd.xlane.f32.xlu0 %v2042
    %v2044 = vpop.xlane.xlu0 %2043
    %v2045 = vsel %vm1594, %v1896, 0.0
    %2046 = vadd.xlane.f32.xlu0 %v2045
    %v2047 = vpop.xlane.xlu0 %2046
    %v2048 = vsel %vm1594, %v1898, 0.0
    %2049 = vadd.xlane.f32.xlu0 %v2048
    %v2050 = vpop.xlane.xlu0 %2049
    %v2051 = vsel %vm1594, %v1900, 0.0
    %2052 = vadd.xlane.f32.xlu0 %v2051
    %v2053 = vpop.xlane.xlu0 %2052
    %v2054 = vsel %vm1594, %v1902, 0.0
    %2055 = vadd.xlane.f32.xlu0 %v2054
    %v2056 = vpop.xlane.xlu0 %2055
    %v2057 = vsel %vm1594, %v1904, 0.0
    %2058 = vadd.xlane.f32.xlu0 %v2057
    %v2059 = vpop.xlane.xlu0 %2058
    %v2060 = vsel %vm1594, %v1906, 0.0
    %2061 = vadd.xlane.f32.xlu0 %v2060
    %v2062 = vpop.xlane.xlu0 %2061
    %v2063 = vsel %vm1594, %v1908, 0.0
    %2064 = vadd.xlane.f32.xlu0 %v2063
    %v2065 = vpop.xlane.xlu0 %2064
    %v2066 = vsel %vm1594, %v1910, 0.0
    %2067 = vadd.xlane.f32.xlu0 %v2066
    %v2068 = vpop.xlane.xlu0 %2067
    %v2069 = vsel %vm1594, %v1912, 0.0
    %2070 = vadd.xlane.f32.xlu0 %v2069
    %v2071 = vpop.xlane.xlu0 %2070
    %v2072 = vsel %vm1594, %v1914, 0.0
    %2073 = vadd.xlane.f32.xlu0 %v2072
    %v2074 = vpop.xlane.xlu0 %2073
    %v2075 = vsel %vm1594, %v1916, 0.0
    %2076 = vadd.xlane.f32.xlu0 %v2075
    %v2077 = vpop.xlane.xlu0 %2076
    %v2078 = vsel %vm1594, %v1918, 0.0
    %2079 = vadd.xlane.f32.xlu0 %v2078
    %v2080 = vpop.xlane.xlu0 %2079
    %v2081 = vsel %vm1594, %v1920, 0.0
    %2082 = vadd.xlane.f32.xlu0 %v2081
    %v2083 = vpop.xlane.xlu0 %2082
    %v2084 = vsel %vm1594, %v1922, 0.0
    %2085 = vadd.xlane.f32.xlu0 %v2084
    %v2086 = vpop.xlane.xlu0 %2085
    %v2087 = vsel %vm1594, %v1924, 0.0
    %2088 = vadd.xlane.f32.xlu0 %v2087
    %v2089 = vpop.xlane.xlu0 %2088
    %v2090 = vsel %vm1594, %v1926, 0.0
    %2091 = vadd.xlane.f32.xlu0 %v2090
    %v2092 = vpop.xlane.xlu0 %2091
    %v2093 = vsel %vm1594, %v1928, 0.0
    %2094 = vadd.xlane.f32.xlu0 %v2093
    %v2095 = vpop.xlane.xlu0 %2094
    %v2096 = vsel %vm1594, %v1930, 0.0
    %2097 = vadd.xlane.f32.xlu0 %v2096
    %v2098 = vpop.xlane.xlu0 %2097
    %v2099 = vsel %vm1594, %v1932, 0.0
    %2100 = vadd.xlane.f32.xlu0 %v2099
    %v2101 = vpop.xlane.xlu0 %2100
    %v2102 = vsel %vm1594, %v1934, 0.0
    %2103 = vadd.xlane.f32.xlu0 %v2102
    %v2104 = vpop.xlane.xlu0 %2103
    %v2105 = vsel %vm1594, %v1936, 0.0
    %2106 = vadd.xlane.f32.xlu0 %v2105
    %v2107 = vpop.xlane.xlu0 %2106
    %v2108 = vsel %vm1594, %v1938, 0.0
    %2109 = vadd.xlane.f32.xlu0 %v2108
    %v2110 = vpop.xlane.xlu0 %2109
    %v2111 = vsel %vm1594, %v1940, 0.0
    %2112 = vadd.xlane.f32.xlu0 %v2111
    %v2113 = vpop.xlane.xlu0 %2112
    %v2114 = vsel %vm1594, %v1942, 0.0
    %2115 = vadd.xlane.f32.xlu0 %v2114
    %v2116 = vpop.xlane.xlu0 %2115
    %v2117 = vsel %vm1594, %v1944, 0.0
    %2118 = vadd.xlane.f32.xlu0 %v2117
    %v2119 = vpop.xlane.xlu0 %2118
    %v2120 = vsel %vm1594, %v1946, 0.0
    %2121 = vadd.xlane.f32.xlu0 %v2120
    %v2122 = vpop.xlane.xlu0 %2121
    %v2123 = vsel %vm1594, %v1948, 0.0
    %2124 = vadd.xlane.f32.xlu0 %v2123
    %v2125 = vpop.xlane.xlu0 %2124
    %v2126 = vsel %vm1594, %v1950, 0.0
    %2127 = vadd.xlane.f32.xlu0 %v2126
    %v2128 = vpop.xlane.xlu0 %2127
    %v2129 = vsel %vm1594, %v1952, 0.0
    %2130 = vadd.xlane.f32.xlu0 %v2129
    %v2131 = vpop.xlane.xlu0 %2130
    %v2132 = vsel %vm1594, %v1954, 0.0
    %2133 = vadd.xlane.f32.xlu0 %v2132
    %v2134 = vpop.xlane.xlu0 %2133
    %v2135 = vsel %vm1594, %v1956, 0.0
    %2136 = vadd.xlane.f32.xlu0 %v2135
    %v2137 = vpop.xlane.xlu0 %2136
    %v2138 = vsel %vm1594, %v1958, 0.0
    %2139 = vadd.xlane.f32.xlu0 %v2138
    %v2140 = vpop.xlane.xlu0 %2139
    %v2141 = vsel %vm1594, %v1960, 0.0
    %2142 = vadd.xlane.f32.xlu0 %v2141
    %v2143 = vpop.xlane.xlu0 %2142
    %v2144 = vsel %vm1594, %v1962, 0.0
    %2145 = vadd.xlane.f32.xlu0 %v2144
    %v2146 = vpop.xlane.xlu0 %2145
    %v2147 = vsel %vm1594, %v1964, 0.0
    %2148 = vadd.xlane.f32.xlu0 %v2147
    %v2149 = vpop.xlane.xlu0 %2148
    %v2150 = vsel %vm1594, %v1966, 0.0
    %2151 = vadd.xlane.f32.xlu0 %v2150
    %v2152 = vpop.xlane.xlu0 %2151
    %v2153 = vsel %vm1594, %v1968, 0.0
    %2154 = vadd.xlane.f32.xlu0 %v2153
    %v2155 = vpop.xlane.xlu0 %2154
    %v2156 = vsel %vm1594, %v1970, 0.0
    %2157 = vadd.xlane.f32.xlu0 %v2156
    %v2158 = vpop.xlane.xlu0 %2157
    %v2159 = vsel %vm1594, %v1972, 0.0
    %2160 = vadd.xlane.f32.xlu0 %v2159
    %v2161 = vpop.xlane.xlu0 %2160
    %v2162 = vsel %vm1594, %v1974, 0.0
    %2163 = vadd.xlane.f32.xlu0 %v2162
    %v2164 = vpop.xlane.xlu0 %2163
    %v2165 = vsel %vm1594, %v1976, 0.0
    %2166 = vadd.xlane.f32.xlu0 %v2165
    %v2167 = vpop.xlane.xlu0 %2166
    %v2168 = vsel %vm1594, %v1978, 0.0
    %2169 = vadd.xlane.f32.xlu0 %v2168
    %v2170 = vpop.xlane.xlu0 %2169
    %v2171 = vrcp.pop %v1981
    %v2172 = vmul.f32 %v1852, %v2171
    %v2173 = vrcp.pop %v1984
    %v2174 = vmul.f32 %v1854, %v2173
    %v2175 = vrcp.pop %v1987
    %v2176 = vmul.f32 %v1856, %v2175
    %v2177 = vrcp.pop %v1990
    %v2178 = vmul.f32 %v1858, %v2177
    %v2179 = vrcp.pop %v1993
    %v2180 = vmul.f32 %v1860, %v2179
    %v2181 = vrcp.pop %v1996
    %v2182 = vmul.f32 %v1862, %v2181
    %v2183 = vrcp.pop %v1999
    %v2184 = vmul.f32 %v1864, %v2183
    %v2185 = vrcp.pop %v2002
    %v2186 = vmul.f32 %v1866, %v2185
    %v2187 = vrcp.pop %v2005
    %v2188 = vmul.f32 %v1868, %v2187
    %v2189 = vrcp.pop %v2008
    %v2190 = vmul.f32 %v1870, %v2189
    %v2191 = vrcp.pop %v2011
    %v2192 = vmul.f32 %v1872, %v2191
    %v2193 = vrcp.pop %v2014
    %v2194 = vmul.f32 %v1874, %v2193
    %v2195 = vrcp.pop %v2017
    %v2196 = vmul.f32 %v1876, %v2195
    %v2197 = vrcp.pop %v2020
    %v2198 = vmul.f32 %v1878, %v2197
    %v2199 = vrcp.pop %v2023
    %v2200 = vmul.f32 %v1880, %v2199
    %v2201 = vrcp.pop %v2026
    %v2202 = vmul.f32 %v1882, %v2201
    %v2203 = vrcp.pop %v2029
    %v2204 = vmul.f32 %v1884, %v2203
    %v2205 = vrcp.pop %v2032
    %v2206 = vmul.f32 %v1886, %v2205
    %v2207 = vrcp.pop %v2035
    %v2208 = vmul.f32 %v1888, %v2207
    %v2209 = vrcp.pop %v2038
    %v2210 = vmul.f32 %v1890, %v2209
    %v2211 = vrcp.pop %v2041
    %v2212 = vmul.f32 %v1892, %v2211
    %v2213 = vrcp.pop %v2044
    %v2214 = vmul.f32 %v1894, %v2213
    %v2215 = vrcp.pop %v2047
    %v2216 = vmul.f32 %v1896, %v2215
    %v2217 = vrcp.pop %v2050
    %v2218 = vmul.f32 %v1898, %v2217
    %v2219 = vrcp.pop %v2053
    %v2220 = vmul.f32 %v1900, %v2219
    %v2221 = vrcp.pop %v2056
    %v2222 = vmul.f32 %v1902, %v2221
    %v2223 = vrcp.pop %v2059
    %v2224 = vmul.f32 %v1904, %v2223
    %v2225 = vrcp.pop %v2062
    %v2226 = vmul.f32 %v1906, %v2225
    %v2227 = vrcp.pop %v2065
    %v2228 = vmul.f32 %v1908, %v2227
    %v2229 = vrcp.pop %v2068
    %v2230 = vmul.f32 %v1910, %v2229
    %v2231 = vrcp.pop %v2071
    %v2232 = vmul.f32 %v1912, %v2231
    %v2233 = vrcp.pop %v2074
    %v2234 = vmul.f32 %v1914, %v2233
    %v2235 = vrcp.pop %v2077
    %v2236 = vmul.f32 %v1916, %v2235
    %v2237 = vrcp.pop %v2080
    %v2238 = vmul.f32 %v1918, %v2237
    %v2239 = vrcp.pop %v2083
    %v2240 = vmul.f32 %v1920, %v2239
    %v2241 = vrcp.pop %v2086
    %v2242 = vmul.f32 %v1922, %v2241
    %v2243 = vrcp.pop %v2089
    %v2244 = vmul.f32 %v1924, %v2243
    %v2245 = vrcp.pop %v2092
    %v2246 = vmul.f32 %v1926, %v2245
    %v2247 = vrcp.pop %v2095
    %v2248 = vmul.f32 %v1928, %v2247
    %v2249 = vrcp.pop %v2098
    %v2250 = vmul.f32 %v1930, %v2249
    %v2251 = vrcp.pop %v2101
    %v2252 = vmul.f32 %v1932, %v2251
    %v2253 = vrcp.pop %v2104
    %v2254 = vmul.f32 %v1934, %v2253
    %v2255 = vrcp.pop %v2107
    %v2256 = vmul.f32 %v1936, %v2255
    %v2257 = vrcp.pop %v2110
    %v2258 = vmul.f32 %v1938, %v2257
    %v2259 = vrcp.pop %v2113
    %v2260 = vmul.f32 %v1940, %v2259
    %v2261 = vrcp.pop %v2116
    %v2262 = vmul.f32 %v1942, %v2261
    %v2263 = vrcp.pop %v2119
    %v2264 = vmul.f32 %v1944, %v2263
    %v2265 = vrcp.pop %v2122
    %v2266 = vmul.f32 %v1946, %v2265
    %v2267 = vrcp.pop %v2125
    %v2268 = vmul.f32 %v1948, %v2267
    %v2269 = vrcp.pop %v2128
    %v2270 = vmul.f32 %v1950, %v2269
    %v2271 = vrcp.pop %v2131
    %v2272 = vmul.f32 %v1952, %v2271
    %v2273 = vrcp.pop %v2134
    %v2274 = vmul.f32 %v1954, %v2273
    %v2275 = vrcp.pop %v2137
    %v2276 = vmul.f32 %v1956, %v2275
    %v2277 = vrcp.pop %v2140
    %v2278 = vmul.f32 %v1958, %v2277
    %v2279 = vrcp.pop %v2143
    %v2280 = vmul.f32 %v1960, %v2279
    %v2281 = vrcp.pop %v2146
    %v2282 = vmul.f32 %v1962, %v2281
    %v2283 = vrcp.pop %v2149
    %v2284 = vmul.f32 %v1964, %v2283
    %v2285 = vrcp.pop %v2152
    %v2286 = vmul.f32 %v1966, %v2285
    %v2287 = vrcp.pop %v2155
    %v2288 = vmul.f32 %v1968, %v2287
    %v2289 = vrcp.pop %v2158
    %v2290 = vmul.f32 %v1970, %v2289
    %v2291 = vrcp.pop %v2161
    %v2292 = vmul.f32 %v1972, %v2291
    %v2293 = vrcp.pop %v2164
    %v2294 = vmul.f32 %v1974, %v2293
    %v2295 = vrcp.pop %v2167
    %v2296 = vmul.f32 %v1976, %v2295
    %v2297 = vrcp.pop %v2170
    %v2298 = vmul.f32 %v1978, %v2297
    %v2299 = vpack.c.bf16 %v2174, %v2172
    %v2300 = vpack.c.bf16 %v2178, %v2176
    %v2301 = vpack.c.bf16 %v2182, %v2180
    %v2302 = vpack.c.bf16 %v2186, %v2184
    %v2303 = vpack.c.bf16 %v630, %v627
    %v2304 = vpack.c.bf16 %v638, %v635
    %v2305 = vpack.c.bf16 %v646, %v643
    %v2306 = vpack.c.bf16 %v654, %v651
    %v2308 = vsel %vm1594, %v2299, 0
    %v2311 = vsel %vm1594, %v2300, 0
    %v2314 = vsel %vm1594, %v2301, 0
    %v2317 = vsel %vm1594, %v2302, 0
    %2319 = vmatprep.subr.bf16.mxu0 0
    %2320 = vmatpush1.bf16.msra.mxu0 %v2303
    %2321 = vmatprep.subr.bf16.mxu0 0
    %2322 = vmatpush1.bf16.msra.mxu0 %v2304
    %2323 = vmatprep.subr.bf16.mxu0 0
    %2324 = vmatpush1.bf16.msra.mxu0 %v2305
    %2325 = vmatprep.subr.bf16.mxu0 0
    %2326 = vmatpush1.bf16.msra.mxu0 %v2306
    %2327 = vmatprep.subr.bf16.mxu0 0
    %2328 = vmatpush1.bf16.msra.mxu0 0
    %2329 = vmatprep.subr.bf16.mxu0 0
    %2330 = vmatpush1.bf16.msra.mxu0 0
    %2331 = vmatprep.subr.bf16.mxu0 0
    %2332 = vmatpush1.bf16.msra.mxu0 0
    %2333 = vmatprep.subr.bf16.mxu0 0
    %2334 = vmatpush1.bf16.msra.mxu0 0
    %2335 = vmatprep.subr.bf16.mxu0 0
    %2336 = vmatpush1.bf16.msra.mxu0 0
    %2337 = vmatprep.subr.bf16.mxu0 0
    %2338 = vmatpush1.bf16.msra.mxu0 0
    %2339 = vmatprep.subr.bf16.mxu0 0
    %2340 = vmatpush1.bf16.msra.mxu0 0
    %2341 = vmatprep.subr.bf16.mxu0 0
    %2342 = vmatpush1.bf16.msra.mxu0 0
    %2343 = vmatprep.subr.bf16.mxu0 0
    %2344 = vmatpush1.bf16.msra.mxu0 0
    %2345 = vmatprep.subr.bf16.mxu0 0
    %2346 = vmatpush1.bf16.msra.mxu0 0
    %2347 = vmatprep.subr.bf16.mxu0 0
    %2348 = vmatpush1.bf16.msra.mxu0 0
    %2349 = vmatprep.subr.bf16.mxu0 0
    %2350 = vmatpush1.bf16.msra.mxu0 0
    %2351 = vmatprep.mubr.bf16.mxu0 0
    %2352 = vmatmul.mubr.bf16.gmra.mrb[0].mxu0 %v2308
    %v2353 = vpop.f32.mrb[0].mxu0
    %v2354 = vadd.f32 0.0, %v2353
    %v2355 = vpop.f32.mrb[0].mxu0
    %v2356 = vpop.f32.mrb[0].mxu0
    %v2357 = vadd.f32 0.0, %v2356
    %v2358 = vpop.f32.mrb[0].mxu0
    %2359 = vmatprep.mubr.bf16.mxu0 0
    %2360 = vmatmul.mubr.bf16.gmra.mrb[0].mxu0 %v2311
    %v2361 = vpop.f32.mrb[0].mxu0
    %v2362 = vadd.f32 0.0, %v2361
    %v2363 = vpop.f32.mrb[0].mxu0
    %v2364 = vpop.f32.mrb[0].mxu0
    %v2365 = vadd.f32 0.0, %v2364
    %v2366 = vpop.f32.mrb[0].mxu0
    %2367 = vmatprep.mubr.bf16.mxu0 0
    %2368 = vmatmul.mubr.bf16.gmra.mrb[0].mxu0 %v2314
    %v2369 = vpop.f32.mrb[0].mxu0
    %v2370 = vadd.f32 0.0, %v2369
    %v2371 = vpop.f32.mrb[0].mxu0
    %v2372 = vpop.f32.mrb[0].mxu0
    %v2373 = vadd.f32 0.0, %v2372
    %v2374 = vpop.f32.mrb[0].mxu0
    %2375 = vmatprep.mubr.bf16.mxu0 0
    %2376 = vmatmul.mubr.bf16.gmra.mrb[0].mxu0 %v2317
    %v2377 = vpop.f32.mrb[0].mxu0
    %v2378 = vadd.f32 0.0, %v2377
    %v2379 = vpop.f32.mrb[0].mxu0
    %v2380 = vpop.f32.mrb[0].mxu0
    %v2381 = vadd.f32 0.0, %v2380
    %v2382 = vpop.f32.mrb[0].mxu0
    %2383 = vdwg.mxu0
    %2384 = vst.msk [vmem:[#allocation2] sm:$0xff] %vm697, %v2354
    %2385 = vst.msk [vmem:[#allocation2 + $0x8] sm:$0xff] %vm697, %v2357
    %2386 = vst.msk [vmem:[#allocation2 + $0x10] sm:$0xff] %vm697, %v2362
    %2387 = vst.msk [vmem:[#allocation2 + $0x18] sm:$0xff] %vm697, %v2365
    %2388 = vst.msk [vmem:[#allocation2 + $0x20] sm:$0xff] %vm697, %v2370
    %2389 = vst.msk [vmem:[#allocation2 + $0x28] sm:$0xff] %vm697, %v2373
    %2390 = vst.msk [vmem:[#allocation2 + $0x30] sm:$0xff] %vm697, %v2378
    %2391 = vst.msk [vmem:[#allocation2 + $0x38] sm:$0xff] %vm697, %v2381
    %v2392 = vpack.c.bf16 %v2190, %v2188
    %v2393 = vpack.c.bf16 %v2194, %v2192
    %v2394 = vpack.c.bf16 %v2198, %v2196
    %v2395 = vpack.c.bf16 %v2202, %v2200
    %2400 = vrot.lane.b32.xlu0 %v2303, 96
    %v2401 = vpop.permute.xlu0 %2400
    %2402 = vrot.lane.b32.xlu0 %v2304, 96
    %v2403 = vpop.permute.xlu0 %2402
    %2404 = vrot.lane.b32.xlu0 %v2305, 96
    %v2405 = vpop.permute.xlu0 %2404
    %2406 = vrot.lane.b32.xlu0 %v2306, 96
    %v2407 = vpop.permute.xlu0 %2406
    %v2413 = vsel %vm1594, %v2392, 0
    %v2416 = vsel %vm1594, %v2393, 0
    %v2419 = vsel %vm1594, %v2394, 0
    %v2422 = vsel %vm1594, %v2395, 0
    %2424 = vmatprep.subr.bf16.mxu0 0
    %2425 = vmatpush1.bf16.msra.mxu0 %v2401
    %2426 = vmatprep.subr.bf16.mxu0 0
    %2427 = vmatpush1.bf16.msra.mxu0 %v2403
    %2428 = vmatprep.subr.bf16.mxu0 0
    %2429 = vmatpush1.bf16.msra.mxu0 %v2405
    %2430 = vmatprep.subr.bf16.mxu0 0
    %2431 = vmatpush1.bf16.msra.mxu0 %v2407
    %2432 = vmatprep.subr.bf16.mxu0 0
    %2433 = vmatpush1.bf16.msra.mxu0 0
    %2434 = vmatprep.subr.bf16.mxu0 0
    %2435 = vmatpush1.bf16.msra.mxu0 0
    %2436 = vmatprep.subr.bf16.mxu0 0
    %2437 = vmatpush1.bf16.msra.mxu0 0
    %2438 = vmatprep.subr.bf16.mxu0 0
    %2439 = vmatpush1.bf16.msra.mxu0 0
    %2440 = vmatprep.subr.bf16.mxu0 0
    %2441 = vmatpush1.bf16.msra.mxu0 0
    %2442 = vmatprep.subr.bf16.mxu0 0
    %2443 = vmatpush1.bf16.msra.mxu0 0
    %2444 = vmatprep.subr.bf16.mxu0 0
    %2445 = vmatpush1.bf16.msra.mxu0 0
    %2446 = vmatprep.subr.bf16.mxu0 0
    %2447 = vmatpush1.bf16.msra.mxu0 0
    %2448 = vmatprep.subr.bf16.mxu0 0
    %2449 = vmatpush1.bf16.msra.mxu0 0
    %2450 = vmatprep.subr.bf16.mxu0 0
    %2451 = vmatpush1.bf16.msra.mxu0 0
    %2452 = vmatprep.subr.bf16.mxu0 0
    %2453 = vmatpush1.bf16.msra.mxu0 0
    %2454 = vmatprep.subr.bf16.mxu0 0
    %2455 = vmatpush1.bf16.msra.mxu0 0
    %2456 = vmatprep.mubr.bf16.mxu0 0
    %2457 = vmatmul.mubr.bf16.gmra.mrb[0].mxu0 %v2413
    %v2458 = vpop.f32.mrb[0].mxu0
    %v2459 = vadd.f32 0.0, %v2458
    %v2460 = vpop.f32.mrb[0].mxu0
    %v2461 = vpop.f32.mrb[0].mxu0
    %v2462 = vadd.f32 0.0, %v2461
    %v2463 = vpop.f32.mrb[0].mxu0
    %2464 = vmatprep.mubr.bf16.mxu0 0
    %2465 = vmatmul.mubr.bf16.gmra.mrb[0].mxu0 %v2416
    %v2466 = vpop.f32.mrb[0].mxu0
    %v2467 = vadd.f32 0.0, %v2466
    %v2468 = vpop.f32.mrb[0].mxu0
    %v2469 = vpop.f32.mrb[0].mxu0
    %v2470 = vadd.f32 0.0, %v2469
    %v2471 = vpop.f32.mrb[0].mxu0
    %2472 = vmatprep.mubr.bf16.mxu0 0
    %2473 = vmatmul.mubr.bf16.gmra.mrb[0].mxu0 %v2419
    %v2474 = vpop.f32.mrb[0].mxu0
    %v2475 = vadd.f32 0.0, %v2474
    %v2476 = vpop.f32.mrb[0].mxu0
    %v2477 = vpop.f32.mrb[0].mxu0
    %v2478 = vadd.f32 0.0, %v2477
    %v2479 = vpop.f32.mrb[0].mxu0
    %2480 = vmatprep.mubr.bf16.mxu0 0
    %2481 = vmatmul.mubr.bf16.gmra.mrb[0].mxu0 %v2422
    %v2482 = vpop.f32.mrb[0].mxu0
    %v2483 = vadd.f32 0.0, %v2482
    %v2484 = vpop.f32.mrb[0].mxu0
    %v2485 = vpop.f32.mrb[0].mxu0
    %v2486 = vadd.f32 0.0, %v2485
    %v2487 = vpop.f32.mrb[0].mxu0
    %2488 = vdwg.mxu0
    %2497 = vrot.lane.b32.xlu0 %v2459, 32
    %v2498 = vpop.permute.xlu0 %2497
    %2499 = vrot.lane.b32.xlu0 %v2462, 32
    %v2500 = vpop.permute.xlu0 %2499
    %2501 = vrot.lane.b32.xlu0 %v2467, 32
    %v2502 = vpop.permute.xlu0 %2501
    %2503 = vrot.lane.b32.xlu0 %v2470, 32
    %v2504 = vpop.permute.xlu0 %2503
    %2505 = vrot.lane.b32.xlu0 %v2475, 32
    %v2506 = vpop.permute.xlu0 %2505
    %2507 = vrot.lane.b32.xlu0 %v2478, 32
    %v2508 = vpop.permute.xlu0 %2507
    %2509 = vrot.lane.b32.xlu0 %v2483, 32
    %v2510 = vpop.permute.xlu0 %2509
    %2511 = vrot.lane.b32.xlu0 %v2486, 32
    %v2512 = vpop.permute.xlu0 %2511
    %vm2521 = vcmask 523520
    %2522 = vst.msk [vmem:[#allocation2] sm:$0xff] %vm2521, %v2498
    %2523 = vst.msk [vmem:[#allocation2 + $0x8] sm:$0xff] %vm2521, %v2500
    %2524 = vst.msk [vmem:[#allocation2 + $0x10] sm:$0xff] %vm2521, %v2502
    %2525 = vst.msk [vmem:[#allocation2 + $0x18] sm:$0xff] %vm2521, %v2504
    %2526 = vst.msk [vmem:[#allocation2 + $0x20] sm:$0xff] %vm2521, %v2506
    %2527 = vst.msk [vmem:[#allocation2 + $0x28] sm:$0xff] %vm2521, %v2508
    %2528 = vst.msk [vmem:[#allocation2 + $0x30] sm:$0xff] %vm2521, %v2510
    %2529 = vst.msk [vmem:[#allocation2 + $0x38] sm:$0xff] %vm2521, %v2512
    %v2530 = vpack.c.bf16 %v2206, %v2204
    %v2531 = vpack.c.bf16 %v2210, %v2208
    %v2532 = vpack.c.bf16 %v2214, %v2212
    %v2533 = vpack.c.bf16 %v2218, %v2216
    %2534 = vrot.lane.b32.xlu0 %v2303, 64
    %v2535 = vpop.permute.xlu0 %2534
    %2536 = vrot.lane.b32.xlu0 %v2304, 64
    %v2537 = vpop.permute.xlu0 %2536
    %2538 = vrot.lane.b32.xlu0 %v2305, 64
    %v2539 = vpop.permute.xlu0 %2538
    %2540 = vrot.lane.b32.xlu0 %v2306, 64
    %v2541 = vpop.permute.xlu0 %2540
    %v2547 = vsel %vm1594, %v2530, 0
    %v2550 = vsel %vm1594, %v2531, 0
    %v2553 = vsel %vm1594, %v2532, 0
    %v2556 = vsel %vm1594, %v2533, 0
    %2558 = vmatprep.subr.bf16.mxu0 0
    %2559 = vmatpush1.bf16.msra.mxu0 %v2535
    %2560 = vmatprep.subr.bf16.mxu0 0
    %2561 = vmatpush1.bf16.msra.mxu0 %v2537
    %2562 = vmatprep.subr.bf16.mxu0 0
    %2563 = vmatpush1.bf16.msra.mxu0 %v2539
    %2564 = vmatprep.subr.bf16.mxu0 0
    %2565 = vmatpush1.bf16.msra.mxu0 %v2541
    %2566 = vmatprep.subr.bf16.mxu0 0
    %2567 = vmatpush1.bf16.msra.mxu0 0
    %2568 = vmatprep.subr.bf16.mxu0 0
    %2569 = vmatpush1.bf16.msra.mxu0 0
    %2570 = vmatprep.subr.bf16.mxu0 0
    %2571 = vmatpush1.bf16.msra.mxu0 0
    %2572 = vmatprep.subr.bf16.mxu0 0
    %2573 = vmatpush1.bf16.msra.mxu0 0
    %2574 = vmatprep.subr.bf16.mxu0 0
    %2575 = vmatpush1.bf16.msra.mxu0 0
    %2576 = vmatprep.subr.bf16.mxu0 0
    %2577 = vmatpush1.bf16.msra.mxu0 0
    %2578 = vmatprep.subr.bf16.mxu0 0
    %2579 = vmatpush1.bf16.msra.mxu0 0
    %2580 = vmatprep.subr.bf16.mxu0 0
    %2581 = vmatpush1.bf16.msra.mxu0 0
    %2582 = vmatprep.subr.bf16.mxu0 0
    %2583 = vmatpush1.bf16.msra.mxu0 0
    %2584 = vmatprep.subr.bf16.mxu0 0
    %2585 = vmatpush1.bf16.msra.mxu0 0
    %2586 = vmatprep.subr.bf16.mxu0 0
    %2587 = vmatpush1.bf16.msra.mxu0 0
    %2588 = vmatprep.subr.bf16.mxu0 0
    %2589 = vmatpush1.bf16.msra.mxu0 0
    %2590 = vmatprep.mubr.bf16.mxu0 0
    %2591 = vmatmul.mubr.bf16.gmra.mrb[0].mxu0 %v2547
    %v2592 = vpop.f32.mrb[0].mxu0
    %v2593 = vadd.f32 0.0, %v2592
    %v2594 = vpop.f32.mrb[0].mxu0
    %v2595 = vpop.f32.mrb[0].mxu0
    %v2596 = vadd.f32 0.0, %v2595
    %v2597 = vpop.f32.mrb[0].mxu0
    %2598 = vmatprep.mubr.bf16.mxu0 0
    %2599 = vmatmul.mubr.bf16.gmra.mrb[0].mxu0 %v2550
    %v2600 = vpop.f32.mrb[0].mxu0
    %v2601 = vadd.f32 0.0, %v2600
    %v2602 = vpop.f32.mrb[0].mxu0
    %v2603 = vpop.f32.mrb[0].mxu0
    %v2604 = vadd.f32 0.0, %v2603
    %v2605 = vpop.f32.mrb[0].mxu0
    %2606 = vmatprep.mubr.bf16.mxu0 0
    %2607 = vmatmul.mubr.bf16.gmra.mrb[0].mxu0 %v2553
    %v2608 = vpop.f32.mrb[0].mxu0
    %v2609 = vadd.f32 0.0, %v2608
    %v2610 = vpop.f32.mrb[0].mxu0
    %v2611 = vpop.f32.mrb[0].mxu0
    %v2612 = vadd.f32 0.0, %v2611
    %v2613 = vpop.f32.mrb[0].mxu0
    %2614 = vmatprep.mubr.bf16.mxu0 0
    %2615 = vmatmul.mubr.bf16.gmra.mrb[0].mxu0 %v2556
    %v2616 = vpop.f32.mrb[0].mxu0
    %v2617 = vadd.f32 0.0, %v2616
    %v2618 = vpop.f32.mrb[0].mxu0
    %v2619 = vpop.f32.mrb[0].mxu0
    %v2620 = vadd.f32 0.0, %v2619
    %v2621 = vpop.f32.mrb[0].mxu0
    %2622 = vdwg.mxu0
    %2631 = vrot.lane.b32.xlu0 %v2593, 64
    %v2632 = vpop.permute.xlu0 %2631
    %2633 = vrot.lane.b32.xlu0 %v2596, 64
    %v2634 = vpop.permute.xlu0 %2633
    %2635 = vrot.lane.b32.xlu0 %v2601, 64
    %v2636 = vpop.permute.xlu0 %2635
    %2637 = vrot.lane.b32.xlu0 %v2604, 64
    %v2638 = vpop.permute.xlu0 %2637
    %2639 = vrot.lane.b32.xlu0 %v2609, 64
    %v2640 = vpop.permute.xlu0 %2639
    %2641 = vrot.lane.b32.xlu0 %v2612, 64
    %v2642 = vpop.permute.xlu0 %2641
    %2643 = vrot.lane.b32.xlu0 %v2617, 64
    %v2644 = vpop.permute.xlu0 %2643
    %2645 = vrot.lane.b32.xlu0 %v2620, 64
    %v2646 = vpop.permute.xlu0 %2645
    %vm2655 = vcmask 785920
    %2656 = vst.msk [vmem:[#allocation2] sm:$0xff] %vm2655, %v2632
    %2657 = vst.msk [vmem:[#allocation2 + $0x8] sm:$0xff] %vm2655, %v2634
    %2658 = vst.msk [vmem:[#allocation2 + $0x10] sm:$0xff] %vm2655, %v2636
    %2659 = vst.msk [vmem:[#allocation2 + $0x18] sm:$0xff] %vm2655, %v2638
    %2660 = vst.msk [vmem:[#allocation2 + $0x20] sm:$0xff] %vm2655, %v2640
    %2661 = vst.msk [vmem:[#allocation2 + $0x28] sm:$0xff] %vm2655, %v2642
    %2662 = vst.msk [vmem:[#allocation2 + $0x30] sm:$0xff] %vm2655, %v2644
    %2663 = vst.msk [vmem:[#allocation2 + $0x38] sm:$0xff] %vm2655, %v2646
    %v2664 = vpack.c.bf16 %v2222, %v2220
    %v2665 = vpack.c.bf16 %v2226, %v2224
    %v2666 = vpack.c.bf16 %v2230, %v2228
    %v2667 = vpack.c.bf16 %v2234, %v2232
    %2668 = vrot.lane.b32.xlu0 %v2303, 32
    %v2669 = vpop.permute.xlu0 %2668
    %2670 = vrot.lane.b32.xlu0 %v2304, 32
    %v2671 = vpop.permute.xlu0 %2670
    %2672 = vrot.lane.b32.xlu0 %v2305, 32
    %v2673 = vpop.permute.xlu0 %2672
    %2674 = vrot.lane.b32.xlu0 %v2306, 32
    %v2675 = vpop.permute.xlu0 %2674
    %v2681 = vsel %vm1594, %v2664, 0
    %v2684 = vsel %vm1594, %v2665, 0
    %v2687 = vsel %vm1594, %v2666, 0
    %v2690 = vsel %vm1594, %v2667, 0
    %2692 = vmatprep.subr.bf16.mxu0 0
    %2693 = vmatpush1.bf16.msra.mxu0 %v2669
    %2694 = vmatprep.subr.bf16.mxu0 0
    %2695 = vmatpush1.bf16.msra.mxu0 %v2671
    %2696 = vmatprep.subr.bf16.mxu0 0
    %2697 = vmatpush1.bf16.msra.mxu0 %v2673
    %2698 = vmatprep.subr.bf16.mxu0 0
    %2699 = vmatpush1.bf16.msra.mxu0 %v2675
    %2700 = vmatprep.subr.bf16.mxu0 0
    %2701 = vmatpush1.bf16.msra.mxu0 0
    %2702 = vmatprep.subr.bf16.mxu0 0
    %2703 = vmatpush1.bf16.msra.mxu0 0
    %2704 = vmatprep.subr.bf16.mxu0 0
    %2705 = vmatpush1.bf16.msra.mxu0 0
    %2706 = vmatprep.subr.bf16.mxu0 0
    %2707 = vmatpush1.bf16.msra.mxu0 0
    %2708 = vmatprep.subr.bf16.mxu0 0
    %2709 = vmatpush1.bf16.msra.mxu0 0
    %2710 = vmatprep.subr.bf16.mxu0 0
    %2711 = vmatpush1.bf16.msra.mxu0 0
    %2712 = vmatprep.subr.bf16.mxu0 0
    %2713 = vmatpush1.bf16.msra.mxu0 0
    %2714 = vmatprep.subr.bf16.mxu0 0
    %2715 = vmatpush1.bf16.msra.mxu0 0
    %2716 = vmatprep.subr.bf16.mxu0 0
    %2717 = vmatpush1.bf16.msra.mxu0 0
    %2718 = vmatprep.subr.bf16.mxu0 0
    %2719 = vmatpush1.bf16.msra.mxu0 0
    %2720 = vmatprep.subr.bf16.mxu0 0
    %2721 = vmatpush1.bf16.msra.mxu0 0
    %2722 = vmatprep.subr.bf16.mxu0 0
    %2723 = vmatpush1.bf16.msra.mxu0 0
    %2724 = vmatprep.mubr.bf16.mxu0 0
    %2725 = vmatmul.mubr.bf16.gmra.mrb[0].mxu0 %v2681
    %v2726 = vpop.f32.mrb[0].mxu0
    %v2727 = vadd.f32 0.0, %v2726
    %v2728 = vpop.f32.mrb[0].mxu0
    %v2729 = vpop.f32.mrb[0].mxu0
    %v2730 = vadd.f32 0.0, %v2729
    %v2731 = vpop.f32.mrb[0].mxu0
    %2732 = vmatprep.mubr.bf16.mxu0 0
    %2733 = vmatmul.mubr.bf16.gmra.mrb[0].mxu0 %v2684
    %v2734 = vpop.f32.mrb[0].mxu0
    %v2735 = vadd.f32 0.0, %v2734
    %v2736 = vpop.f32.mrb[0].mxu0
    %v2737 = vpop.f32.mrb[0].mxu0
    %v2738 = vadd.f32 0.0, %v2737
    %v2739 = vpop.f32.mrb[0].mxu0
    %2740 = vmatprep.mubr.bf16.mxu0 0
    %2741 = vmatmul.mubr.bf16.gmra.mrb[0].mxu0 %v2687
    %v2742 = vpop.f32.mrb[0].mxu0
    %v2743 = vadd.f32 0.0, %v2742
    %v2744 = vpop.f32.mrb[0].mxu0
    %v2745 = vpop.f32.mrb[0].mxu0
    %v2746 = vadd.f32 0.0, %v2745
    %v2747 = vpop.f32.mrb[0].mxu0
    %2748 = vmatprep.mubr.bf16.mxu0 0
    %2749 = vmatmul.mubr.bf16.gmra.mrb[0].mxu0 %v2690
    %v2750 = vpop.f32.mrb[0].mxu0
    %v2751 = vadd.f32 0.0, %v2750
    %v2752 = vpop.f32.mrb[0].mxu0
    %v2753 = vpop.f32.mrb[0].mxu0
    %v2754 = vadd.f32 0.0, %v2753
    %v2755 = vpop.f32.mrb[0].mxu0
    %2756 = vdwg.mxu0
    %2765 = vrot.lane.b32.xlu0 %v2727, 96
    %v2766 = vpop.permute.xlu0 %2765
    %2767 = vrot.lane.b32.xlu0 %v2730, 96
    %v2768 = vpop.permute.xlu0 %2767
    %2769 = vrot.lane.b32.xlu0 %v2735, 96
    %v2770 = vpop.permute.xlu0 %2769
    %2771 = vrot.lane.b32.xlu0 %v2738, 96
    %v2772 = vpop.permute.xlu0 %2771
    %2773 = vrot.lane.b32.xlu0 %v2743, 96
    %v2774 = vpop.permute.xlu0 %2773
    %2775 = vrot.lane.b32.xlu0 %v2746, 96
    %v2776 = vpop.permute.xlu0 %2775
    %2777 = vrot.lane.b32.xlu0 %v2751, 96
    %v2778 = vpop.permute.xlu0 %2777
    %2779 = vrot.lane.b32.xlu0 %v2754, 96
    %v2780 = vpop.permute.xlu0 %2779
    %vm2789 = vcmask 1048320
    %2790 = vst.msk [vmem:[#allocation2] sm:$0xff] %vm2789, %v2766
    %2791 = vst.msk [vmem:[#allocation2 + $0x8] sm:$0xff] %vm2789, %v2768
    %2792 = vst.msk [vmem:[#allocation2 + $0x10] sm:$0xff] %vm2789, %v2770
    %2793 = vst.msk [vmem:[#allocation2 + $0x18] sm:$0xff] %vm2789, %v2772
    %2794 = vst.msk [vmem:[#allocation2 + $0x20] sm:$0xff] %vm2789, %v2774
    %2795 = vst.msk [vmem:[#allocation2 + $0x28] sm:$0xff] %vm2789, %v2776
    %2796 = vst.msk [vmem:[#allocation2 + $0x30] sm:$0xff] %vm2789, %v2778
    %2797 = vst.msk [vmem:[#allocation2 + $0x38] sm:$0xff] %vm2789, %v2780
    %v2798 = vpack.c.bf16 %v2238, %v2236
    %v2799 = vpack.c.bf16 %v2242, %v2240
    %v2800 = vpack.c.bf16 %v2246, %v2244
    %v2801 = vpack.c.bf16 %v2250, %v2248
    %v2802 = vpack.c.bf16 %v662, %v659
    %v2803 = vpack.c.bf16 %v670, %v667
    %v2804 = vpack.c.bf16 %v678, %v675
    %v2805 = vpack.c.bf16 %v686, %v683
    %v2807 = vsel %vm1594, %v2798, 0
    %v2810 = vsel %vm1594, %v2799, 0
    %v2813 = vsel %vm1594, %v2800, 0
    %v2816 = vsel %vm1594, %v2801, 0
    %2818 = vmatprep.subr.bf16.mxu0 0
    %2819 = vmatpush1.bf16.msra.mxu0 %v2802
    %2820 = vmatprep.subr.bf16.mxu0 0
    %2821 = vmatpush1.bf16.msra.mxu0 %v2803
    %2822 = vmatprep.subr.bf16.mxu0 0
    %2823 = vmatpush1.bf16.msra.mxu0 %v2804
    %2824 = vmatprep.subr.bf16.mxu0 0
    %2825 = vmatpush1.bf16.msra.mxu0 %v2805
    %2826 = vmatprep.subr.bf16.mxu0 0
    %2827 = vmatpush1.bf16.msra.mxu0 0
    %2828 = vmatprep.subr.bf16.mxu0 0
    %2829 = vmatpush1.bf16.msra.mxu0 0
    %2830 = vmatprep.subr.bf16.mxu0 0
    %2831 = vmatpush1.bf16.msra.mxu0 0
    %2832 = vmatprep.subr.bf16.mxu0 0
    %2833 = vmatpush1.bf16.msra.mxu0 0
    %2834 = vmatprep.subr.bf16.mxu0 0
    %2835 = vmatpush1.bf16.msra.mxu0 0
    %2836 = vmatprep.subr.bf16.mxu0 0
    %2837 = vmatpush1.bf16.msra.mxu0 0
    %2838 = vmatprep.subr.bf16.mxu0 0
    %2839 = vmatpush1.bf16.msra.mxu0 0
    %2840 = vmatprep.subr.bf16.mxu0 0
    %2841 = vmatpush1.bf16.msra.mxu0 0
    %2842 = vmatprep.subr.bf16.mxu0 0
    %2843 = vmatpush1.bf16.msra.mxu0 0
    %2844 = vmatprep.subr.bf16.mxu0 0
    %2845 = vmatpush1.bf16.msra.mxu0 0
    %2846 = vmatprep.subr.bf16.mxu0 0
    %2847 = vmatpush1.bf16.msra.mxu0 0
    %2848 = vmatprep.subr.bf16.mxu0 0
    %2849 = vmatpush1.bf16.msra.mxu0 0
    %2850 = vmatprep.mubr.bf16.mxu0 0
    %2851 = vmatmul.mubr.bf16.gmra.mrb[0].mxu0 %v2807
    %v2852 = vpop.f32.mrb[0].mxu0
    %v2853 = vadd.f32 0.0, %v2852
    %v2854 = vpop.f32.mrb[0].mxu0
    %v2855 = vpop.f32.mrb[0].mxu0
    %v2856 = vadd.f32 0.0, %v2855
    %v2857 = vpop.f32.mrb[0].mxu0
    %2858 = vmatprep.mubr.bf16.mxu0 0
    %2859 = vmatmul.mubr.bf16.gmra.mrb[0].mxu0 %v2810
    %v2860 = vpop.f32.mrb[0].mxu0
    %v2861 = vadd.f32 0.0, %v2860
    %v2862 = vpop.f32.mrb[0].mxu0
    %v2863 = vpop.f32.mrb[0].mxu0
    %v2864 = vadd.f32 0.0, %v2863
    %v2865 = vpop.f32.mrb[0].mxu0
    %2866 = vmatprep.mubr.bf16.mxu0 0
    %2867 = vmatmul.mubr.bf16.gmra.mrb[0].mxu0 %v2813
    %v2868 = vpop.f32.mrb[0].mxu0
    %v2869 = vadd.f32 0.0, %v2868
    %v2870 = vpop.f32.mrb[0].mxu0
    %v2871 = vpop.f32.mrb[0].mxu0
    %v2872 = vadd.f32 0.0, %v2871
    %v2873 = vpop.f32.mrb[0].mxu0
    %2874 = vmatprep.mubr.bf16.mxu0 0
    %2875 = vmatmul.mubr.bf16.gmra.mrb[0].mxu0 %v2816
    %v2876 = vpop.f32.mrb[0].mxu0
    %v2877 = vadd.f32 0.0, %v2876
    %v2878 = vpop.f32.mrb[0].mxu0
    %v2879 = vpop.f32.mrb[0].mxu0
    %v2880 = vadd.f32 0.0, %v2879
    %v2881 = vpop.f32.mrb[0].mxu0
    %2882 = vdwg.mxu0
    %2883 = vst.msk [vmem:[#allocation2 + $0x40] sm:$0xff] %vm697, %v2853
    %2884 = vst.msk [vmem:[#allocation2 + $0x48] sm:$0xff] %vm697, %v2856
    %2885 = vst.msk [vmem:[#allocation2 + $0x50] sm:$0xff] %vm697, %v2861
    %2886 = vst.msk [vmem:[#allocation2 + $0x58] sm:$0xff] %vm697, %v2864
    %2887 = vst.msk [vmem:[#allocation2 + $0x60] sm:$0xff] %vm697, %v2869
    %2888 = vst.msk [vmem:[#allocation2 + $0x68] sm:$0xff] %vm697, %v2872
    %2889 = vst.msk [vmem:[#allocation2 + $0x70] sm:$0xff] %vm697, %v2877
    %2890 = vst.msk [vmem:[#allocation2 + $0x78] sm:$0xff] %vm697, %v2880
    %v2891 = vpack.c.bf16 %v2254, %v2252
    %v2892 = vpack.c.bf16 %v2258, %v2256
    %v2893 = vpack.c.bf16 %v2262, %v2260
    %v2894 = vpack.c.bf16 %v2266, %v2264
    %2899 = vrot.lane.b32.xlu0 %v2802, 96
    %v2900 = vpop.permute.xlu0 %2899
    %2901 = vrot.lane.b32.xlu0 %v2803, 96
    %v2902 = vpop.permute.xlu0 %2901
    %2903 = vrot.lane.b32.xlu0 %v2804, 96
    %v2904 = vpop.permute.xlu0 %2903
    %2905 = vrot.lane.b32.xlu0 %v2805, 96
    %v2906 = vpop.permute.xlu0 %2905
    %v2912 = vsel %vm1594, %v2891, 0
    %v2915 = vsel %vm1594, %v2892, 0
    %v2918 = vsel %vm1594, %v2893, 0
    %v2921 = vsel %vm1594, %v2894, 0
    %2923 = vmatprep.subr.bf16.mxu0 0
    %2924 = vmatpush1.bf16.msra.mxu0 %v2900
    %2925 = vmatprep.subr.bf16.mxu0 0
    %2926 = vmatpush1.bf16.msra.mxu0 %v2902
    %2927 = vmatprep.subr.bf16.mxu0 0
    %2928 = vmatpush1.bf16.msra.mxu0 %v2904
    %2929 = vmatprep.subr.bf16.mxu0 0
    %2930 = vmatpush1.bf16.msra.mxu0 %v2906
    %2931 = vmatprep.subr.bf16.mxu0 0
    %2932 = vmatpush1.bf16.msra.mxu0 0
    %2933 = vmatprep.subr.bf16.mxu0 0
    %2934 = vmatpush1.bf16.msra.mxu0 0
    %2935 = vmatprep.subr.bf16.mxu0 0
    %2936 = vmatpush1.bf16.msra.mxu0 0
    %2937 = vmatprep.subr.bf16.mxu0 0
    %2938 = vmatpush1.bf16.msra.mxu0 0
    %2939 = vmatprep.subr.bf16.mxu0 0
    %2940 = vmatpush1.bf16.msra.mxu0 0
    %2941 = vmatprep.subr.bf16.mxu0 0
    %2942 = vmatpush1.bf16.msra.mxu0 0
    %2943 = vmatprep.subr.bf16.mxu0 0
    %2944 = vmatpush1.bf16.msra.mxu0 0
    %2945 = vmatprep.subr.bf16.mxu0 0
    %2946 = vmatpush1.bf16.msra.mxu0 0
    %2947 = vmatprep.subr.bf16.mxu0 0
    %2948 = vmatpush1.bf16.msra.mxu0 0
    %2949 = vmatprep.subr.bf16.mxu0 0
    %2950 = vmatpush1.bf16.msra.mxu0 0
    %2951 = vmatprep.subr.bf16.mxu0 0
    %2952 = vmatpush1.bf16.msra.mxu0 0
    %2953 = vmatprep.subr.bf16.mxu0 0
    %2954 = vmatpush1.bf16.msra.mxu0 0
    %2955 = vmatprep.mubr.bf16.mxu0 0
    %2956 = vmatmul.mubr.bf16.gmra.mrb[0].mxu0 %v2912
    %v2957 = vpop.f32.mrb[0].mxu0
    %v2958 = vadd.f32 0.0, %v2957
    %v2959 = vpop.f32.mrb[0].mxu0
    %v2960 = vpop.f32.mrb[0].mxu0
    %v2961 = vadd.f32 0.0, %v2960
    %v2962 = vpop.f32.mrb[0].mxu0
    %2963 = vmatprep.mubr.bf16.mxu0 0
    %2964 = vmatmul.mubr.bf16.gmra.mrb[0].mxu0 %v2915
    %v2965 = vpop.f32.mrb[0].mxu0
    %v2966 = vadd.f32 0.0, %v2965
    %v2967 = vpop.f32.mrb[0].mxu0
    %v2968 = vpop.f32.mrb[0].mxu0
    %v2969 = vadd.f32 0.0, %v2968
    %v2970 = vpop.f32.mrb[0].mxu0
    %2971 = vmatprep.mubr.bf16.mxu0 0
    %2972 = vmatmul.mubr.bf16.gmra.mrb[0].mxu0 %v2918
    %v2973 = vpop.f32.mrb[0].mxu0
    %v2974 = vadd.f32 0.0, %v2973
    %v2975 = vpop.f32.mrb[0].mxu0
    %v2976 = vpop.f32.mrb[0].mxu0
    %v2977 = vadd.f32 0.0, %v2976
    %v2978 = vpop.f32.mrb[0].mxu0
    %2979 = vmatprep.mubr.bf16.mxu0 0
    %2980 = vmatmul.mubr.bf16.gmra.mrb[0].mxu0 %v2921
    %v2981 = vpop.f32.mrb[0].mxu0
    %v2982 = vadd.f32 0.0, %v2981
    %v2983 = vpop.f32.mrb[0].mxu0
    %v2984 = vpop.f32.mrb[0].mxu0
    %v2985 = vadd.f32 0.0, %v2984
    %v2986 = vpop.f32.mrb[0].mxu0
    %2987 = vdwg.mxu0
    %2996 = vrot.lane.b32.xlu0 %v2958, 32
    %v2997 = vpop.permute.xlu0 %2996
    %2998 = vrot.lane.b32.xlu0 %v2961, 32
    %v2999 = vpop.permute.xlu0 %2998
    %3000 = vrot.lane.b32.xlu0 %v2966, 32
    %v3001 = vpop.permute.xlu0 %3000
    %3002 = vrot.lane.b32.xlu0 %v2969, 32
    %v3003 = vpop.permute.xlu0 %3002
    %3004 = vrot.lane.b32.xlu0 %v2974, 32
    %v3005 = vpop.permute.xlu0 %3004
    %3006 = vrot.lane.b32.xlu0 %v2977, 32
    %v3007 = vpop.permute.xlu0 %3006
    %3008 = vrot.lane.b32.xlu0 %v2982, 32
    %v3009 = vpop.permute.xlu0 %3008
    %3010 = vrot.lane.b32.xlu0 %v2985, 32
    %v3011 = vpop.permute.xlu0 %3010
    %3020 = vst.msk [vmem:[#allocation2 + $0x40] sm:$0xff] %vm2521, %v2997
    %3021 = vst.msk [vmem:[#allocation2 + $0x48] sm:$0xff] %vm2521, %v2999
    %3022 = vst.msk [vmem:[#allocation2 + $0x50] sm:$0xff] %vm2521, %v3001
    %3023 = vst.msk [vmem:[#allocation2 + $0x58] sm:$0xff] %vm2521, %v3003
    %3024 = vst.msk [vmem:[#allocation2 + $0x60] sm:$0xff] %vm2521, %v3005
    %3025 = vst.msk [vmem:[#allocation2 + $0x68] sm:$0xff] %vm2521, %v3007
    %3026 = vst.msk [vmem:[#allocation2 + $0x70] sm:$0xff] %vm2521, %v3009
    %3027 = vst.msk [vmem:[#allocation2 + $0x78] sm:$0xff] %vm2521, %v3011
    %v3028 = vpack.c.bf16 %v2270, %v2268
    %v3029 = vpack.c.bf16 %v2274, %v2272
    %v3030 = vpack.c.bf16 %v2278, %v2276
    %v3031 = vpack.c.bf16 %v2282, %v2280
    %3032 = vrot.lane.b32.xlu0 %v2802, 64
    %v3033 = vpop.permute.xlu0 %3032
    %3034 = vrot.lane.b32.xlu0 %v2803, 64
    %v3035 = vpop.permute.xlu0 %3034
    %3036 = vrot.lane.b32.xlu0 %v2804, 64
    %v3037 = vpop.permute.xlu0 %3036
    %3038 = vrot.lane.b32.xlu0 %v2805, 64
    %v3039 = vpop.permute.xlu0 %3038
    %v3045 = vsel %vm1594, %v3028, 0
    %v3048 = vsel %vm1594, %v3029, 0
    %v3051 = vsel %vm1594, %v3030, 0
    %v3054 = vsel %vm1594, %v3031, 0
    %3056 = vmatprep.subr.bf16.mxu0 0
    %3057 = vmatpush1.bf16.msra.mxu0 %v3033
    %3058 = vmatprep.subr.bf16.mxu0 0
    %3059 = vmatpush1.bf16.msra.mxu0 %v3035
    %3060 = vmatprep.subr.bf16.mxu0 0
    %3061 = vmatpush1.bf16.msra.mxu0 %v3037
    %3062 = vmatprep.subr.bf16.mxu0 0
    %3063 = vmatpush1.bf16.msra.mxu0 %v3039
    %3064 = vmatprep.subr.bf16.mxu0 0
    %3065 = vmatpush1.bf16.msra.mxu0 0
    %3066 = vmatprep.subr.bf16.mxu0 0
    %3067 = vmatpush1.bf16.msra.mxu0 0
    %3068 = vmatprep.subr.bf16.mxu0 0
    %3069 = vmatpush1.bf16.msra.mxu0 0
    %3070 = vmatprep.subr.bf16.mxu0 0
    %3071 = vmatpush1.bf16.msra.mxu0 0
    %3072 = vmatprep.subr.bf16.mxu0 0
    %3073 = vmatpush1.bf16.msra.mxu0 0
    %3074 = vmatprep.subr.bf16.mxu0 0
    %3075 = vmatpush1.bf16.msra.mxu0 0
    %3076 = vmatprep.subr.bf16.mxu0 0
    %3077 = vmatpush1.bf16.msra.mxu0 0
    %3078 = vmatprep.subr.bf16.mxu0 0
    %3079 = vmatpush1.bf16.msra.mxu0 0
    %3080 = vmatprep.subr.bf16.mxu0 0
    %3081 = vmatpush1.bf16.msra.mxu0 0
    %3082 = vmatprep.subr.bf16.mxu0 0
    %3083 = vmatpush1.bf16.msra.mxu0 0
    %3084 = vmatprep.subr.bf16.mxu0 0
    %3085 = vmatpush1.bf16.msra.mxu0 0
    %3086 = vmatprep.subr.bf16.mxu0 0
    %3087 = vmatpush1.bf16.msra.mxu0 0
    %3088 = vmatprep.mubr.bf16.mxu0 0
    %3089 = vmatmul.mubr.bf16.gmra.mrb[0].mxu0 %v3045
    %v3090 = vpop.f32.mrb[0].mxu0
    %v3091 = vadd.f32 0.0, %v3090
    %v3092 = vpop.f32.mrb[0].mxu0
    %v3093 = vpop.f32.mrb[0].mxu0
    %v3094 = vadd.f32 0.0, %v3093
    %v3095 = vpop.f32.mrb[0].mxu0
    %3096 = vmatprep.mubr.bf16.mxu0 0
    %3097 = vmatmul.mubr.bf16.gmra.mrb[0].mxu0 %v3048
    %v3098 = vpop.f32.mrb[0].mxu0
    %v3099 = vadd.f32 0.0, %v3098
    %v3100 = vpop.f32.mrb[0].mxu0
    %v3101 = vpop.f32.mrb[0].mxu0
    %v3102 = vadd.f32 0.0, %v3101
    %v3103 = vpop.f32.mrb[0].mxu0
    %3104 = vmatprep.mubr.bf16.mxu0 0
    %3105 = vmatmul.mubr.bf16.gmra.mrb[0].mxu0 %v3051
    %v3106 = vpop.f32.mrb[0].mxu0
    %v3107 = vadd.f32 0.0, %v3106
    %v3108 = vpop.f32.mrb[0].mxu0
    %v3109 = vpop.f32.mrb[0].mxu0
    %v3110 = vadd.f32 0.0, %v3109
    %v3111 = vpop.f32.mrb[0].mxu0
    %3112 = vmatprep.mubr.bf16.mxu0 0
    %3113 = vmatmul.mubr.bf16.gmra.mrb[0].mxu0 %v3054
    %v3114 = vpop.f32.mrb[0].mxu0
    %v3115 = vadd.f32 0.0, %v3114
    %v3116 = vpop.f32.mrb[0].mxu0
    %v3117 = vpop.f32.mrb[0].mxu0
    %v3118 = vadd.f32 0.0, %v3117
    %v3119 = vpop.f32.mrb[0].mxu0
    %3120 = vdwg.mxu0
    %3129 = vrot.lane.b32.xlu0 %v3091, 64
    %v3130 = vpop.permute.xlu0 %3129
    %3131 = vrot.lane.b32.xlu0 %v3094, 64
    %v3132 = vpop.permute.xlu0 %3131
    %3133 = vrot.lane.b32.xlu0 %v3099, 64
    %v3134 = vpop.permute.xlu0 %3133
    %3135 = vrot.lane.b32.xlu0 %v3102, 64
    %v3136 = vpop.permute.xlu0 %3135
    %3137 = vrot.lane.b32.xlu0 %v3107, 64
    %v3138 = vpop.permute.xlu0 %3137
    %3139 = vrot.lane.b32.xlu0 %v3110, 64
    %v3140 = vpop.permute.xlu0 %3139
    %3141 = vrot.lane.b32.xlu0 %v3115, 64
    %v3142 = vpop.permute.xlu0 %3141
    %3143 = vrot.lane.b32.xlu0 %v3118, 64
    %v3144 = vpop.permute.xlu0 %3143
    %3153 = vst.msk [vmem:[#allocation2 + $0x40] sm:$0xff] %vm2655, %v3130
    %3154 = vst.msk [vmem:[#allocation2 + $0x48] sm:$0xff] %vm2655, %v3132
    %3155 = vst.msk [vmem:[#allocation2 + $0x50] sm:$0xff] %vm2655, %v3134
    %3156 = vst.msk [vmem:[#allocation2 + $0x58] sm:$0xff] %vm2655, %v3136
    %3157 = vst.msk [vmem:[#allocation2 + $0x60] sm:$0xff] %vm2655, %v3138
    %3158 = vst.msk [vmem:[#allocation2 + $0x68] sm:$0xff] %vm2655, %v3140
    %3159 = vst.msk [vmem:[#allocation2 + $0x70] sm:$0xff] %vm2655, %v3142
    %3160 = vst.msk [vmem:[#allocation2 + $0x78] sm:$0xff] %vm2655, %v3144
    %v3161 = vpack.c.bf16 %v2286, %v2284
    %v3162 = vpack.c.bf16 %v2290, %v2288
    %v3163 = vpack.c.bf16 %v2294, %v2292
    %v3164 = vpack.c.bf16 %v2298, %v2296
    %3165 = vrot.lane.b32.xlu0 %v2802, 32
    %v3166 = vpop.permute.xlu0 %3165
    %3167 = vrot.lane.b32.xlu0 %v2803, 32
    %v3168 = vpop.permute.xlu0 %3167
    %3169 = vrot.lane.b32.xlu0 %v2804, 32
    %v3170 = vpop.permute.xlu0 %3169
    %3171 = vrot.lane.b32.xlu0 %v2805, 32
    %v3172 = vpop.permute.xlu0 %3171
    %v3178 = vsel %vm1594, %v3161, 0
    %v3181 = vsel %vm1594, %v3162, 0
    %v3184 = vsel %vm1594, %v3163, 0
    %v3187 = vsel %vm1594, %v3164, 0
    %3189 = vmatprep.subr.bf16.mxu0 0
    %3190 = vmatpush1.bf16.msra.mxu0 %v3166
    %3191 = vmatprep.subr.bf16.mxu0 0
    %3192 = vmatpush1.bf16.msra.mxu0 %v3168
    %3193 = vmatprep.subr.bf16.mxu0 0
    %3194 = vmatpush1.bf16.msra.mxu0 %v3170
    %3195 = vmatprep.subr.bf16.mxu0 0
    %3196 = vmatpush1.bf16.msra.mxu0 %v3172
    %3197 = vmatprep.subr.bf16.mxu0 0
    %3198 = vmatpush1.bf16.msra.mxu0 0
    %3199 = vmatprep.subr.bf16.mxu0 0
    %3200 = vmatpush1.bf16.msra.mxu0 0
    %3201 = vmatprep.subr.bf16.mxu0 0
    %3202 = vmatpush1.bf16.msra.mxu0 0
    %3203 = vmatprep.subr.bf16.mxu0 0
    %3204 = vmatpush1.bf16.msra.mxu0 0
    %3205 = vmatprep.subr.bf16.mxu0 0
    %3206 = vmatpush1.bf16.msra.mxu0 0
    %3207 = vmatprep.subr.bf16.mxu0 0
    %3208 = vmatpush1.bf16.msra.mxu0 0
    %3209 = vmatprep.subr.bf16.mxu0 0
    %3210 = vmatpush1.bf16.msra.mxu0 0
    %3211 = vmatprep.subr.bf16.mxu0 0
    %3212 = vmatpush1.bf16.msra.mxu0 0
    %3213 = vmatprep.subr.bf16.mxu0 0
    %3214 = vmatpush1.bf16.msra.mxu0 0
    %3215 = vmatprep.subr.bf16.mxu0 0
    %3216 = vmatpush1.bf16.msra.mxu0 0
    %3217 = vmatprep.subr.bf16.mxu0 0
    %3218 = vmatpush1.bf16.msra.mxu0 0
    %3219 = vmatprep.subr.bf16.mxu0 0
    %3220 = vmatpush1.bf16.msra.mxu0 0
    %3221 = vmatprep.mubr.bf16.mxu0 0
    %3222 = vmatmul.mubr.bf16.gmra.mrb[0].mxu0 %v3178
    %v3223 = vpop.f32.mrb[0].mxu0
    %v3224 = vadd.f32 0.0, %v3223
    %v3225 = vpop.f32.mrb[0].mxu0
    %v3226 = vpop.f32.mrb[0].mxu0
    %v3227 = vadd.f32 0.0, %v3226
    %v3228 = vpop.f32.mrb[0].mxu0
    %3229 = vmatprep.mubr.bf16.mxu0 0
    %3230 = vmatmul.mubr.bf16.gmra.mrb[0].mxu0 %v3181
    %v3231 = vpop.f32.mrb[0].mxu0
    %v3232 = vadd.f32 0.0, %v3231
    %v3233 = vpop.f32.mrb[0].mxu0
    %v3234 = vpop.f32.mrb[0].mxu0
    %v3235 = vadd.f32 0.0, %v3234
    %v3236 = vpop.f32.mrb[0].mxu0
    %3237 = vmatprep.mubr.bf16.mxu0 0
    %3238 = vmatmul.mubr.bf16.gmra.mrb[0].mxu0 %v3184
    %v3239 = vpop.f32.mrb[0].mxu0
    %v3240 = vadd.f32 0.0, %v3239
    %v3241 = vpop.f32.mrb[0].mxu0
    %v3242 = vpop.f32.mrb[0].mxu0
    %v3243 = vadd.f32 0.0, %v3242
    %v3244 = vpop.f32.mrb[0].mxu0
    %3245 = vmatprep.mubr.bf16.mxu0 0
    %3246 = vmatmul.mubr.bf16.gmra.mrb[0].mxu0 %v3187
    %v3247 = vpop.f32.mrb[0].mxu0
    %v3248 = vadd.f32 0.0, %v3247
    %v3249 = vpop.f32.mrb[0].mxu0
    %v3250 = vpop.f32.mrb[0].mxu0
    %v3251 = vadd.f32 0.0, %v3250
    %v3252 = vpop.f32.mrb[0].mxu0
    %3253 = vdwg.mxu0
    %3262 = vrot.lane.b32.xlu0 %v3224, 96
    %v3263 = vpop.permute.xlu0 %3262
    %3264 = vrot.lane.b32.xlu0 %v3227, 96
    %v3265 = vpop.permute.xlu0 %3264
    %3266 = vrot.lane.b32.xlu0 %v3232, 96
    %v3267 = vpop.permute.xlu0 %3266
    %3268 = vrot.lane.b32.xlu0 %v3235, 96
    %v3269 = vpop.permute.xlu0 %3268
    %3270 = vrot.lane.b32.xlu0 %v3240, 96
    %v3271 = vpop.permute.xlu0 %3270
    %3272 = vrot.lane.b32.xlu0 %v3243, 96
    %v3273 = vpop.permute.xlu0 %3272
    %3274 = vrot.lane.b32.xlu0 %v3248, 96
    %v3275 = vpop.permute.xlu0 %3274
    %3276 = vrot.lane.b32.xlu0 %v3251, 96
    %v3277 = vpop.permute.xlu0 %3276
    %3286 = vst.msk [vmem:[#allocation2 + $0x40] sm:$0xff] %vm2789, %v3263
    %3287 = vst.msk [vmem:[#allocation2 + $0x48] sm:$0xff] %vm2789, %v3265
    %3288 = vst.msk [vmem:[#allocation2 + $0x50] sm:$0xff] %vm2789, %v3267
    %3289 = vst.msk [vmem:[#allocation2 + $0x58] sm:$0xff] %vm2789, %v3269
    %3290 = vst.msk [vmem:[#allocation2 + $0x60] sm:$0xff] %vm2789, %v3271
    %3291 = vst.msk [vmem:[#allocation2 + $0x68] sm:$0xff] %vm2789, %v3273
    %3292 = vst.msk [vmem:[#allocation2 + $0x70] sm:$0xff] %vm2789, %v3275
    %3293 = vst.msk [vmem:[#allocation2 + $0x78] sm:$0xff] %vm2789, %v3277
    %v3294 = vld [vmem:[#allocation2] sm:$0xff]
    %v3295 = vld [vmem:[#allocation2 + $0x8] sm:$0xff]
    %v3296 = vld [vmem:[#allocation2 + $0x10] sm:$0xff]
    %v3297 = vld [vmem:[#allocation2 + $0x18] sm:$0xff]
    %v3298 = vld [vmem:[#allocation2 + $0x20] sm:$0xff]
    %v3299 = vld [vmem:[#allocation2 + $0x28] sm:$0xff]
    %v3300 = vld [vmem:[#allocation2 + $0x30] sm:$0xff]
    %v3301 = vld [vmem:[#allocation2 + $0x38] sm:$0xff]
    %v3302 = vld [vmem:[#allocation2 + $0x40] sm:$0xff]
    %v3303 = vld [vmem:[#allocation2 + $0x48] sm:$0xff]
    %v3304 = vld [vmem:[#allocation2 + $0x50] sm:$0xff]
    %v3305 = vld [vmem:[#allocation2 + $0x58] sm:$0xff]
    %v3306 = vld [vmem:[#allocation2 + $0x60] sm:$0xff]
    %v3307 = vld [vmem:[#allocation2 + $0x68] sm:$0xff]
    %v3308 = vld [vmem:[#allocation2 + $0x70] sm:$0xff]
    %v3309 = vld [vmem:[#allocation2 + $0x78] sm:$0xff]
    %v3310 = vpack.c.bf16 %v3295, %v3294
    %v3311 = vpack.c.bf16 %v3297, %v3296
    %v3312 = vpack.c.bf16 %v3299, %v3298
    %v3313 = vpack.c.bf16 %v3301, %v3300
    %v3314 = vpack.c.bf16 %v3303, %v3302
    %v3315 = vpack.c.bf16 %v3305, %v3304
    %v3316 = vpack.c.bf16 %v3307, %v3306
    %v3317 = vpack.c.bf16 %v3309, %v3308
    %v3318 = vld [vmem:[#allocation6] sm:$0xf]
    %v3319 = vld [vmem:[#allocation6 + $0x4] sm:$0xf]
    %v3320 = vld [vmem:[#allocation6 + $0x8] sm:$0xf]
    %v3321 = vld [vmem:[#allocation6 + $0xc] sm:$0xf]
    %v3322 = vld [vmem:[#allocation6 + $0x10] sm:$0xf]
    %v3323 = vld [vmem:[#allocation6 + $0x14] sm:$0xf]
    %v3324 = vld [vmem:[#allocation6 + $0x18] sm:$0xf]
    %v3325 = vld [vmem:[#allocation6 + $0x1c] sm:$0xf]
    %v3326 = vld [vmem:[#allocation6 + $0x20] sm:$0xf]
    %v3327 = vld [vmem:[#allocation6 + $0x24] sm:$0xf]
    %v3328 = vld [vmem:[#allocation6 + $0x28] sm:$0xf]
    %v3329 = vld [vmem:[#allocation6 + $0x2c] sm:$0xf]
    %v3330 = vld [vmem:[#allocation6 + $0x30] sm:$0xf]
    %v3331 = vld [vmem:[#allocation6 + $0x34] sm:$0xf]
    %v3332 = vld [vmem:[#allocation6 + $0x38] sm:$0xf]
    %v3333 = vld [vmem:[#allocation6 + $0x3c] sm:$0xf]
    %v3334 = vld [vmem:[%s6] sm:$0x1]
    %v3336 = vlaneseq
    %v3337 = vshrl.u32 %v3336, 7
    %v3338 = vsub.s32 0, %v3337
    %v3339 = vrot.slane %v3334, %v3338
    %v3357 = vunpack.c.l.b16 %v3318
    %v3358 = vunpack.c.l.b16 %v3319
    %v3359 = vunpack.c.l.b16 %v3320
    %v3360 = vunpack.c.l.b16 %v3321
    %v3361 = vunpack.c.l.b16 %v3322
    %v3362 = vunpack.c.l.b16 %v3323
    %v3363 = vunpack.c.l.b16 %v3324
    %v3364 = vunpack.c.l.b16 %v3325
    %v3365 = vunpack.c.l.b16 %v3326
    %v3366 = vunpack.c.l.b16 %v3327
    %v3367 = vunpack.c.l.b16 %v3328
    %v3368 = vunpack.c.l.b16 %v3329
    %v3369 = vunpack.c.l.b16 %v3330
    %v3370 = vunpack.c.l.b16 %v3331
    %v3371 = vunpack.c.l.b16 %v3332
    %v3372 = vunpack.c.l.b16 %v3333
    %v3373 = vpack.c.b16 %v3358, %v3357
    %v3374 = vpack.c.b16 %v3360, %v3359
    %v3375 = vpack.c.b16 %v3362, %v3361
    %v3376 = vpack.c.b16 %v3364, %v3363
    %v3377 = vpack.c.b16 %v3366, %v3365
    %v3378 = vpack.c.b16 %v3368, %v3367
    %v3379 = vpack.c.b16 %v3370, %v3369
    %v3380 = vpack.c.b16 %v3372, %v3371
    %3389 = vmatprep.subr.bf16.mxu0 0
    %3390 = vmatpush1.bf16.msra.mxu0 %v3373
    %3391 = vmatprep.subr.bf16.mxu0 0
    %3392 = vmatpush1.bf16.msra.mxu0 %v3374
    %3393 = vmatprep.subr.bf16.mxu0 0
    %3394 = vmatpush1.bf16.msra.mxu0 %v3375
    %3395 = vmatprep.subr.bf16.mxu0 0
    %3396 = vmatpush1.bf16.msra.mxu0 %v3376
    %3397 = vmatprep.subr.bf16.mxu0 0
    %3398 = vmatpush1.bf16.msra.mxu0 %v3377
    %3399 = vmatprep.subr.bf16.mxu0 0
    %3400 = vmatpush1.bf16.msra.mxu0 %v3378
    %3401 = vmatprep.subr.bf16.mxu0 0
    %3402 = vmatpush1.bf16.msra.mxu0 %v3379
    %3403 = vmatprep.subr.bf16.mxu0 0
    %3404 = vmatpush1.bf16.msra.mxu0 %v3380
    %3405 = vmatprep.subr.bf16.mxu0 0
    %3406 = vmatpush1.bf16.msra.mxu0 0
    %3407 = vmatprep.subr.bf16.mxu0 0
    %3408 = vmatpush1.bf16.msra.mxu0 0
    %3409 = vmatprep.subr.bf16.mxu0 0
    %3410 = vmatpush1.bf16.msra.mxu0 0
    %3411 = vmatprep.subr.bf16.mxu0 0
    %3412 = vmatpush1.bf16.msra.mxu0 0
    %3413 = vmatprep.subr.bf16.mxu0 0
    %3414 = vmatpush1.bf16.msra.mxu0 0
    %3415 = vmatprep.subr.bf16.mxu0 0
    %3416 = vmatpush1.bf16.msra.mxu0 0
    %3417 = vmatprep.subr.bf16.mxu0 0
    %3418 = vmatpush1.bf16.msra.mxu0 0
    %3419 = vmatprep.subr.bf16.mxu0 0
    %3420 = vmatpush1.bf16.msra.mxu0 0
    %3421 = vmatprep.mubr.bf16.mxu0 0
    %3422 = vmatmul.mubr.bf16.gmra.mrb[0].mxu0 %v3310
    %v3423 = vpop.f32.mrb[0].mxu0
    %v3424 = vadd.f32 %v3339, %v3423
    %v3425 = vpop.f32.mrb[0].mxu0
    %v3426 = vpop.f32.mrb[0].mxu0
    %v3427 = vadd.f32 %v3339, %v3426
    %v3428 = vpop.f32.mrb[0].mxu0
    %3429 = vmatprep.mubr.bf16.mxu0 0
    %3430 = vmatmul.mubr.bf16.gmra.mrb[0].mxu0 %v3311
    %v3431 = vpop.f32.mrb[0].mxu0
    %v3432 = vadd.f32 %v3339, %v3431
    %v3433 = vpop.f32.mrb[0].mxu0
    %v3434 = vpop.f32.mrb[0].mxu0
    %v3435 = vadd.f32 %v3339, %v3434
    %v3436 = vpop.f32.mrb[0].mxu0
    %3437 = vmatprep.mubr.bf16.mxu0 0
    %3438 = vmatmul.mubr.bf16.gmra.mrb[0].mxu0 %v3312
    %v3439 = vpop.f32.mrb[0].mxu0
    %v3440 = vadd.f32 %v3339, %v3439
    %v3441 = vpop.f32.mrb[0].mxu0
    %v3442 = vpop.f32.mrb[0].mxu0
    %v3443 = vadd.f32 %v3339, %v3442
    %v3444 = vpop.f32.mrb[0].mxu0
    %3445 = vmatprep.mubr.bf16.mxu0 0
    %3446 = vmatmul.mubr.bf16.gmra.mrb[0].mxu0 %v3313
    %v3447 = vpop.f32.mrb[0].mxu0
    %v3448 = vadd.f32 %v3339, %v3447
    %v3449 = vpop.f32.mrb[0].mxu0
    %v3450 = vpop.f32.mrb[0].mxu0
    %v3451 = vadd.f32 %v3339, %v3450
    %v3452 = vpop.f32.mrb[0].mxu0
    %3453 = vmatprep.mubr.bf16.mxu0 0
    %3454 = vmatmul.mubr.bf16.gmra.mrb[0].mxu0 %v3314
    %v3455 = vpop.f32.mrb[0].mxu0
    %v3456 = vadd.f32 %v3339, %v3455
    %v3457 = vpop.f32.mrb[0].mxu0
    %v3458 = vpop.f32.mrb[0].mxu0
    %v3459 = vadd.f32 %v3339, %v3458
    %v3460 = vpop.f32.mrb[0].mxu0
    %3461 = vmatprep.mubr.bf16.mxu0 0
    %3462 = vmatmul.mubr.bf16.gmra.mrb[0].mxu0 %v3315
    %v3463 = vpop.f32.mrb[0].mxu0
    %v3464 = vadd.f32 %v3339, %v3463
    %v3465 = vpop.f32.mrb[0].mxu0
    %v3466 = vpop.f32.mrb[0].mxu0
    %v3467 = vadd.f32 %v3339, %v3466
    %v3468 = vpop.f32.mrb[0].mxu0
    %3469 = vmatprep.mubr.bf16.mxu0 0
    %3470 = vmatmul.mubr.bf16.gmra.mrb[0].mxu0 %v3316
    %v3471 = vpop.f32.mrb[0].mxu0
    %v3472 = vadd.f32 %v3339, %v3471
    %v3473 = vpop.f32.mrb[0].mxu0
    %v3474 = vpop.f32.mrb[0].mxu0
    %v3475 = vadd.f32 %v3339, %v3474
    %v3476 = vpop.f32.mrb[0].mxu0
    %3477 = vmatprep.mubr.bf16.mxu0 0
    %3478 = vmatmul.mubr.bf16.gmra.mrb[0].mxu0 %v3317
    %v3479 = vpop.f32.mrb[0].mxu0
    %v3480 = vadd.f32 %v3339, %v3479
    %v3481 = vpop.f32.mrb[0].mxu0
    %v3482 = vpop.f32.mrb[0].mxu0
    %v3483 = vadd.f32 %v3339, %v3482
    %v3484 = vpop.f32.mrb[0].mxu0
    %3485 = vdwg.mxu0
    %v3486 = vadd.f32 %v232, %v3424
    %v3487 = vadd.f32 %v235, %v3427
    %v3488 = vadd.f32 %v240, %v3432
    %v3489 = vadd.f32 %v243, %v3435
    %v3490 = vadd.f32 %v248, %v3440
    %v3491 = vadd.f32 %v251, %v3443
    %v3492 = vadd.f32 %v256, %v3448
    %v3493 = vadd.f32 %v259, %v3451
    %v3494 = vadd.f32 %v264, %v3456
    %v3495 = vadd.f32 %v267, %v3459
    %v3496 = vadd.f32 %v272, %v3464
    %v3497 = vadd.f32 %v275, %v3467
    %v3498 = vadd.f32 %v280, %v3472
    %v3499 = vadd.f32 %v283, %v3475
    %v3500 = vadd.f32 %v288, %v3480
    %v3501 = vadd.f32 %v291, %v3483
    %v3502 = vld [vmem:[%s7] sm:$0x1]
    %v3503 = vld [vmem:[%s8] sm:$0x1]
    %3504 = vadd.xlane.f32.xlu0 %v3486
    %v3505 = vpop.xlane.xlu0 %3504
    %3506 = vadd.xlane.f32.xlu0 %v3487
    %v3507 = vpop.xlane.xlu0 %3506
    %3508 = vadd.xlane.f32.xlu0 %v3488
    %v3509 = vpop.xlane.xlu0 %3508
    %3510 = vadd.xlane.f32.xlu0 %v3489
    %v3511 = vpop.xlane.xlu0 %3510
    %3512 = vadd.xlane.f32.xlu0 %v3490
    %v3513 = vpop.xlane.xlu0 %3512
    %3514 = vadd.xlane.f32.xlu0 %v3491
    %v3515 = vpop.xlane.xlu0 %3514
    %3516 = vadd.xlane.f32.xlu0 %v3492
    %v3517 = vpop.xlane.xlu0 %3516
    %3518 = vadd.xlane.f32.xlu0 %v3493
    %v3519 = vpop.xlane.xlu0 %3518
    %3520 = vadd.xlane.f32.xlu0 %v3494
    %v3521 = vpop.xlane.xlu0 %3520
    %3522 = vadd.xlane.f32.xlu0 %v3495
    %v3523 = vpop.xlane.xlu0 %3522
    %3524 = vadd.xlane.f32.xlu0 %v3496
    %v3525 = vpop.xlane.xlu0 %3524
    %3526 = vadd.xlane.f32.xlu0 %v3497
    %v3527 = vpop.xlane.xlu0 %3526
    %3528 = vadd.xlane.f32.xlu0 %v3498
    %v3529 = vpop.xlane.xlu0 %3528
    %3530 = vadd.xlane.f32.xlu0 %v3499
    %v3531 = vpop.xlane.xlu0 %3530
    %3532 = vadd.xlane.f32.xlu0 %v3500
    %v3533 = vpop.xlane.xlu0 %3532
    %3534 = vadd.xlane.f32.xlu0 %v3501
    %v3535 = vpop.xlane.xlu0 %3534
    %v3536 = vrcp.pop 128.0
    %v3537 = vmul.f32 %v3505, %v3536
    %v3538 = vmul.f32 %v3507, %v3536
    %v3539 = vmul.f32 %v3509, %v3536
    %v3540 = vmul.f32 %v3511, %v3536
    %v3541 = vmul.f32 %v3513, %v3536
    %v3542 = vmul.f32 %v3515, %v3536
    %v3543 = vmul.f32 %v3517, %v3536
    %v3544 = vmul.f32 %v3519, %v3536
    %v3545 = vmul.f32 %v3521, %v3536
    %v3546 = vmul.f32 %v3523, %v3536
    %v3547 = vmul.f32 %v3525, %v3536
    %v3548 = vmul.f32 %v3527, %v3536
    %v3549 = vmul.f32 %v3529, %v3536
    %v3550 = vmul.f32 %v3531, %v3536
    %v3551 = vmul.f32 %v3533, %v3536
    %v3552 = vmul.f32 %v3535, %v3536
    %v3553 = vsub.f32 %v3486, %v3537
    %v3554 = vsub.f32 %v3487, %v3538
    %v3555 = vsub.f32 %v3488, %v3539
    %v3556 = vsub.f32 %v3489, %v3540
    %v3557 = vsub.f32 %v3490, %v3541
    %v3558 = vsub.f32 %v3491, %v3542
    %v3559 = vsub.f32 %v3492, %v3543
    %v3560 = vsub.f32 %v3493, %v3544
    %v3561 = vsub.f32 %v3494, %v3545
    %v3562 = vsub.f32 %v3495, %v3546
    %v3563 = vsub.f32 %v3496, %v3547
    %v3564 = vsub.f32 %v3497, %v3548
    %v3565 = vsub.f32 %v3498, %v3549
    %v3566 = vsub.f32 %v3499, %v3550
    %v3567 = vsub.f32 %v3500, %v3551
    %v3568 = vsub.f32 %v3501, %v3552
    %v3569 = vmul.f32 %v3553, %v3553
    %v3570 = vmul.f32 %v3554, %v3554
    %v3571 = vmul.f32 %v3555, %v3555
    %v3572 = vmul.f32 %v3556, %v3556
    %v3573 = vmul.f32 %v3557, %v3557
    %v3574 = vmul.f32 %v3558, %v3558
    %v3575 = vmul.f32 %v3559, %v3559
    %v3576 = vmul.f32 %v3560, %v3560
    %v3577 = vmul.f32 %v3561, %v3561
    %v3578 = vmul.f32 %v3562, %v3562
    %v3579 = vmul.f32 %v3563, %v3563
    %v3580 = vmul.f32 %v3564, %v3564
    %v3581 = vmul.f32 %v3565, %v3565
    %v3582 = vmul.f32 %v3566, %v3566
    %v3583 = vmul.f32 %v3567, %v3567
    %v3584 = vmul.f32 %v3568, %v3568
    %3585 = vadd.xlane.f32.xlu0 %v3569
    %v3586 = vpop.xlane.xlu0 %3585
    %3587 = vadd.xlane.f32.xlu0 %v3570
    %v3588 = vpop.xlane.xlu0 %3587
    %3589 = vadd.xlane.f32.xlu0 %v3571
    %v3590 = vpop.xlane.xlu0 %3589
    %3591 = vadd.xlane.f32.xlu0 %v3572
    %v3592 = vpop.xlane.xlu0 %3591
    %3593 = vadd.xlane.f32.xlu0 %v3573
    %v3594 = vpop.xlane.xlu0 %3593
    %3595 = vadd.xlane.f32.xlu0 %v3574
    %v3596 = vpop.xlane.xlu0 %3595
    %3597 = vadd.xlane.f32.xlu0 %v3575
    %v3598 = vpop.xlane.xlu0 %3597
    %3599 = vadd.xlane.f32.xlu0 %v3576
    %v3600 = vpop.xlane.xlu0 %3599
    %3601 = vadd.xlane.f32.xlu0 %v3577
    %v3602 = vpop.xlane.xlu0 %3601
    %3603 = vadd.xlane.f32.xlu0 %v3578
    %v3604 = vpop.xlane.xlu0 %3603
    %3605 = vadd.xlane.f32.xlu0 %v3579
    %v3606 = vpop.xlane.xlu0 %3605
    %3607 = vadd.xlane.f32.xlu0 %v3580
    %v3608 = vpop.xlane.xlu0 %3607
    %3609 = vadd.xlane.f32.xlu0 %v3581
    %v3610 = vpop.xlane.xlu0 %3609
    %3611 = vadd.xlane.f32.xlu0 %v3582
    %v3612 = vpop.xlane.xlu0 %3611
    %3613 = vadd.xlane.f32.xlu0 %v3583
    %v3614 = vpop.xlane.xlu0 %3613
    %3615 = vadd.xlane.f32.xlu0 %v3584
    %v3616 = vpop.xlane.xlu0 %3615
    %v3617 = vmul.f32 %v3586, %v3536
    %v3618 = vmul.f32 %v3588, %v3536
    %v3619 = vmul.f32 %v3590, %v3536
    %v3620 = vmul.f32 %v3592, %v3536
    %v3621 = vmul.f32 %v3594, %v3536
    %v3622 = vmul.f32 %v3596, %v3536
    %v3623 = vmul.f32 %v3598, %v3536
    %v3624 = vmul.f32 %v3600, %v3536
    %v3625 = vmul.f32 %v3602, %v3536
    %v3626 = vmul.f32 %v3604, %v3536
    %v3627 = vmul.f32 %v3606, %v3536
    %v3628 = vmul.f32 %v3608, %v3536
    %v3629 = vmul.f32 %v3610, %v3536
    %v3630 = vmul.f32 %v3612, %v3536
    %v3631 = vmul.f32 %v3614, %v3536
    %v3632 = vmul.f32 %v3616, %v3536
    %v3633 = vadd.f32 %v3617, 1e-05
    %v3634 = vadd.f32 %v3618, 1e-05
    %v3635 = vadd.f32 %v3619, 1e-05
    %v3636 = vadd.f32 %v3620, 1e-05
    %v3637 = vadd.f32 %v3621, 1e-05
    %v3638 = vadd.f32 %v3622, 1e-05
    %v3639 = vadd.f32 %v3623, 1e-05
    %v3640 = vadd.f32 %v3624, 1e-05
    %v3641 = vadd.f32 %v3625, 1e-05
    %v3642 = vadd.f32 %v3626, 1e-05
    %v3643 = vadd.f32 %v3627, 1e-05
    %v3644 = vadd.f32 %v3628, 1e-05
    %v3645 = vadd.f32 %v3629, 1e-05
    %v3646 = vadd.f32 %v3630, 1e-05
    %v3647 = vadd.f32 %v3631, 1e-05
    %v3648 = vadd.f32 %v3632, 1e-05
    %v3649 = vrsqrt.pop %v3633
    %v3650 = vrsqrt.pop %v3634
    %v3651 = vrsqrt.pop %v3635
    %v3652 = vrsqrt.pop %v3636
    %v3653 = vrsqrt.pop %v3637
    %v3654 = vrsqrt.pop %v3638
    %v3655 = vrsqrt.pop %v3639
    %v3656 = vrsqrt.pop %v3640
    %v3657 = vrsqrt.pop %v3641
    %v3658 = vrsqrt.pop %v3642
    %v3659 = vrsqrt.pop %v3643
    %v3660 = vrsqrt.pop %v3644
    %v3661 = vrsqrt.pop %v3645
    %v3662 = vrsqrt.pop %v3646
    %v3663 = vrsqrt.pop %v3647
    %v3664 = vrsqrt.pop %v3648
    %v3665 = vmul.f32 %v3553, %v3649
    %v3666 = vmul.f32 %v3554, %v3650
    %v3667 = vmul.f32 %v3555, %v3651
    %v3668 = vmul.f32 %v3556, %v3652
    %v3669 = vmul.f32 %v3557, %v3653
    %v3670 = vmul.f32 %v3558, %v3654
    %v3671 = vmul.f32 %v3559, %v3655
    %v3672 = vmul.f32 %v3560, %v3656
    %v3673 = vmul.f32 %v3561, %v3657
    %v3674 = vmul.f32 %v3562, %v3658
    %v3675 = vmul.f32 %v3563, %v3659
    %v3676 = vmul.f32 %v3564, %v3660
    %v3677 = vmul.f32 %v3565, %v3661
    %v3678 = vmul.f32 %v3566, %v3662
    %v3679 = vmul.f32 %v3567, %v3663
    %v3680 = vmul.f32 %v3568, %v3664
    %v3682 = vlaneseq
    %v3683 = vshrl.u32 %v3682, 7
    %v3684 = vsub.s32 0, %v3683
    %v3685 = vrot.slane %v3502, %v3684
    %v3687 = vmul.f32 %v3665, %v3685
    %v3688 = vmul.f32 %v3666, %v3685
    %v3689 = vmul.f32 %v3667, %v3685
    %v3690 = vmul.f32 %v3668, %v3685
    %v3691 = vmul.f32 %v3669, %v3685
    %v3692 = vmul.f32 %v3670, %v3685
    %v3693 = vmul.f32 %v3671, %v3685
    %v3694 = vmul.f32 %v3672, %v3685
    %v3695 = vmul.f32 %v3673, %v3685
    %v3696 = vmul.f32 %v3674, %v3685
    %v3697 = vmul.f32 %v3675, %v3685
    %v3698 = vmul.f32 %v3676, %v3685
    %v3699 = vmul.f32 %v3677, %v3685
    %v3700 = vmul.f32 %v3678, %v3685
    %v3701 = vmul.f32 %v3679, %v3685
    %v3702 = vmul.f32 %v3680, %v3685
    %v3704 = vlaneseq
    %v3705 = vshrl.u32 %v3704, 7
    %v3706 = vsub.s32 0, %v3705
    %v3707 = vrot.slane %v3503, %v3706
    %v3709 = vadd.f32 %v3687, %v3707
    %v3710 = vadd.f32 %v3688, %v3707
    %v3711 = vadd.f32 %v3689, %v3707
    %v3712 = vadd.f32 %v3690, %v3707
    %v3713 = vadd.f32 %v3691, %v3707
    %v3714 = vadd.f32 %v3692, %v3707
    %v3715 = vadd.f32 %v3693, %v3707
    %v3716 = vadd.f32 %v3694, %v3707
    %v3717 = vadd.f32 %v3695, %v3707
    %v3718 = vadd.f32 %v3696, %v3707
    %v3719 = vadd.f32 %v3697, %v3707
    %v3720 = vadd.f32 %v3698, %v3707
    %v3721 = vadd.f32 %v3699, %v3707
    %v3722 = vadd.f32 %v3700, %v3707
    %v3723 = vadd.f32 %v3701, %v3707
    %v3724 = vadd.f32 %v3702, %v3707
    %v3725 = vpack.c.bf16 %v3710, %v3709
    %v3726 = vpack.c.bf16 %v3712, %v3711
    %v3727 = vpack.c.bf16 %v3714, %v3713
    %v3728 = vpack.c.bf16 %v3716, %v3715
    %v3729 = vpack.c.bf16 %v3718, %v3717
    %v3730 = vpack.c.bf16 %v3720, %v3719
    %v3731 = vpack.c.bf16 %v3722, %v3721
    %v3732 = vpack.c.bf16 %v3724, %v3723
    %v3733 = vld [vmem:[#allocation8] sm:$0xff]
    %v3734 = vld [vmem:[#allocation8 + $0x8] sm:$0xff]
    %v3735 = vld [vmem:[#allocation8 + $0x10] sm:$0xff]
    %v3736 = vld [vmem:[#allocation8 + $0x18] sm:$0xff]
    %v3737 = vld [vmem:[#allocation8 + $0x20] sm:$0xff]
    %v3738 = vld [vmem:[#allocation8 + $0x28] sm:$0xff]
    %v3739 = vld [vmem:[#allocation8 + $0x30] sm:$0xff]
    %v3740 = vld [vmem:[#allocation8 + $0x38] sm:$0xff]
    %v3741 = vld [vmem:[#allocation8 + $0x40] sm:$0xff]
    %v3742 = vld [vmem:[#allocation8 + $0x48] sm:$0xff]
    %v3743 = vld [vmem:[#allocation8 + $0x50] sm:$0xff]
    %v3744 = vld [vmem:[#allocation8 + $0x58] sm:$0xff]
    %v3745 = vld [vmem:[#allocation8 + $0x60] sm:$0xff]
    %v3746 = vld [vmem:[#allocation8 + $0x68] sm:$0xff]
    %v3747 = vld [vmem:[#allocation8 + $0x70] sm:$0xff]
    %v3748 = vld [vmem:[#allocation8 + $0x78] sm:$0xff]
    %v3749 = vld [vmem:[%s10] sm:$0x3]
    %v3751 = vlaneseq
    %v3752 = vshrl.u32 %v3751, 7
    %v3753 = vsub.s32 0, %v3752
    %v3754 = vrot.slane %v3749, %v3753
    %v3755 = vlaneseq
    %v3756 = vshrl.u32 %v3755, 7
    %v3757 = vsub.s32 1, %v3756
    %v3758 = vrot.slane %v3749, %v3757
    %v3777 = vunpack.c.l.b16 %v3733
    %v3778 = vunpack.c.h.b16 %v3733
    %v3779 = vunpack.c.l.b16 %v3734
    %v3780 = vunpack.c.h.b16 %v3734
    %v3781 = vunpack.c.l.b16 %v3735
    %v3782 = vunpack.c.h.b16 %v3735
    %v3783 = vunpack.c.l.b16 %v3736
    %v3784 = vunpack.c.h.b16 %v3736
    %v3785 = vunpack.c.l.b16 %v3737
    %v3786 = vunpack.c.h.b16 %v3737
    %v3787 = vunpack.c.l.b16 %v3738
    %v3788 = vunpack.c.h.b16 %v3738
    %v3789 = vunpack.c.l.b16 %v3739
    %v3790 = vunpack.c.h.b16 %v3739
    %v3791 = vunpack.c.l.b16 %v3740
    %v3792 = vunpack.c.h.b16 %v3740
    %v3793 = vunpack.c.l.b16 %v3741
    %v3794 = vunpack.c.h.b16 %v3741
    %v3795 = vunpack.c.l.b16 %v3742
    %v3796 = vunpack.c.h.b16 %v3742
    %v3797 = vunpack.c.l.b16 %v3743
    %v3798 = vunpack.c.h.b16 %v3743
    %v3799 = vunpack.c.l.b16 %v3744
    %v3800 = vunpack.c.h.b16 %v3744
    %v3801 = vunpack.c.l.b16 %v3745
    %v3802 = vunpack.c.h.b16 %v3745
    %v3803 = vunpack.c.l.b16 %v3746
    %v3804 = vunpack.c.h.b16 %v3746
    %v3805 = vunpack.c.l.b16 %v3747
    %v3806 = vunpack.c.h.b16 %v3747
    %v3807 = vunpack.c.l.b16 %v3748
    %v3808 = vunpack.c.h.b16 %v3748
    %v3809 = vpack.c.b16 %v3779, %v3777
    %v3810 = vpack.c.b16 %v3780, %v3778
    %v3811 = vpack.c.b16 %v3783, %v3781
    %v3812 = vpack.c.b16 %v3784, %v3782
    %v3813 = vpack.c.b16 %v3787, %v3785
    %v3814 = vpack.c.b16 %v3788, %v3786
    %v3815 = vpack.c.b16 %v3791, %v3789
    %v3816 = vpack.c.b16 %v3792, %v3790
    %v3817 = vpack.c.b16 %v3795, %v3793
    %v3818 = vpack.c.b16 %v3796, %v3794
    %v3819 = vpack.c.b16 %v3799, %v3797
    %v3820 = vpack.c.b16 %v3800, %v3798
    %v3821 = vpack.c.b16 %v3803, %v3801
    %v3822 = vpack.c.b16 %v3804, %v3802
    %v3823 = vpack.c.b16 %v3807, %v3805
    %v3824 = vpack.c.b16 %v3808, %v3806
    %3841 = vmatprep.subr.bf16.mxu0 %v3810
    %3842 = vmatpush1.bf16.msra.mxu0 %v3809
    %3843 = vmatprep.subr.bf16.mxu0 %v3812
    %3844 = vmatpush1.bf16.msra.mxu0 %v3811
    %3845 = vmatprep.subr.bf16.mxu0 %v3814
    %3846 = vmatpush1.bf16.msra.mxu0 %v3813
    %3847 = vmatprep.subr.bf16.mxu0 %v3816
    %3848 = vmatpush1.bf16.msra.mxu0 %v3815
    %3849 = vmatprep.subr.bf16.mxu0 %v3818
    %3850 = vmatpush1.bf16.msra.mxu0 %v3817
    %3851 = vmatprep.subr.bf16.mxu0 %v3820
    %3852 = vmatpush1.bf16.msra.mxu0 %v3819
    %3853 = vmatprep.subr.bf16.mxu0 %v3822
    %3854 = vmatpush1.bf16.msra.mxu0 %v3821
    %3855 = vmatprep.subr.bf16.mxu0 %v3824
    %3856 = vmatpush1.bf16.msra.mxu0 %v3823
    %3857 = vmatprep.subr.bf16.mxu0 0
    %3858 = vmatpush1.bf16.msra.mxu0 0
    %3859 = vmatprep.subr.bf16.mxu0 0
    %3860 = vmatpush1.bf16.msra.mxu0 0
    %3861 = vmatprep.subr.bf16.mxu0 0
    %3862 = vmatpush1.bf16.msra.mxu0 0
    %3863 = vmatprep.subr.bf16.mxu0 0
    %3864 = vmatpush1.bf16.msra.mxu0 0
    %3865 = vmatprep.subr.bf16.mxu0 0
    %3866 = vmatpush1.bf16.msra.mxu0 0
    %3867 = vmatprep.subr.bf16.mxu0 0
    %3868 = vmatpush1.bf16.msra.mxu0 0
    %3869 = vmatprep.subr.bf16.mxu0 0
    %3870 = vmatpush1.bf16.msra.mxu0 0
    %3871 = vmatprep.subr.bf16.mxu0 0
    %3872 = vmatpush1.bf16.msra.mxu0 0
    %3873 = vmatprep.mubr.bf16.mxu0 0
    %3874 = vmatmul.mubr.bf16.gmra.mrb[0].mxu0 %v3725
    %v3875 = vpop.f32.mrb[0].mxu0
    %v3876 = vadd.f32 %v3754, %v3875
    %v3877 = vpop.f32.mrb[0].mxu0
    %v3878 = vadd.f32 %v3758, %v3877
    %v3879 = vpop.f32.mrb[0].mxu0
    %v3880 = vadd.f32 %v3754, %v3879
    %v3881 = vpop.f32.mrb[0].mxu0
    %v3882 = vadd.f32 %v3758, %v3881
    %3883 = vmatprep.mubr.bf16.mxu0 0
    %3884 = vmatmul.mubr.bf16.gmra.mrb[0].mxu0 %v3726
    %v3885 = vpop.f32.mrb[0].mxu0
    %v3886 = vadd.f32 %v3754, %v3885
    %v3887 = vpop.f32.mrb[0].mxu0
    %v3888 = vadd.f32 %v3758, %v3887
    %v3889 = vpop.f32.mrb[0].mxu0
    %v3890 = vadd.f32 %v3754, %v3889
    %v3891 = vpop.f32.mrb[0].mxu0
    %v3892 = vadd.f32 %v3758, %v3891
    %3893 = vmatprep.mubr.bf16.mxu0 0
    %3894 = vmatmul.mubr.bf16.gmra.mrb[0].mxu0 %v3727
    %v3895 = vpop.f32.mrb[0].mxu0
    %v3896 = vadd.f32 %v3754, %v3895
    %v3897 = vpop.f32.mrb[0].mxu0
    %v3898 = vadd.f32 %v3758, %v3897
    %v3899 = vpop.f32.mrb[0].mxu0
    %v3900 = vadd.f32 %v3754, %v3899
    %v3901 = vpop.f32.mrb[0].mxu0
    %v3902 = vadd.f32 %v3758, %v3901
    %3903 = vmatprep.mubr.bf16.mxu0 0
    %3904 = vmatmul.mubr.bf16.gmra.mrb[0].mxu0 %v3728
    %v3905 = vpop.f32.mrb[0].mxu0
    %v3906 = vadd.f32 %v3754, %v3905
    %v3907 = vpop.f32.mrb[0].mxu0
    %v3908 = vadd.f32 %v3758, %v3907
    %v3909 = vpop.f32.mrb[0].mxu0
    %v3910 = vadd.f32 %v3754, %v3909
    %v3911 = vpop.f32.mrb[0].mxu0
    %v3912 = vadd.f32 %v3758, %v3911
    %3913 = vmatprep.mubr.bf16.mxu0 0
    %3914 = vmatmul.mubr.bf16.gmra.mrb[0].mxu0 %v3729
    %v3915 = vpop.f32.mrb[0].mxu0
    %v3916 = vadd.f32 %v3754, %v3915
    %v3917 = vpop.f32.mrb[0].mxu0
    %v3918 = vadd.f32 %v3758, %v3917
    %v3919 = vpop.f32.mrb[0].mxu0
    %v3920 = vadd.f32 %v3754, %v3919
    %v3921 = vpop.f32.mrb[0].mxu0
    %v3922 = vadd.f32 %v3758, %v3921
    %3923 = vmatprep.mubr.bf16.mxu0 0
    %3924 = vmatmul.mubr.bf16.gmra.mrb[0].mxu0 %v3730
    %v3925 = vpop.f32.mrb[0].mxu0
    %v3926 = vadd.f32 %v3754, %v3925
    %v3927 = vpop.f32.mrb[0].mxu0
    %v3928 = vadd.f32 %v3758, %v3927
    %v3929 = vpop.f32.mrb[0].mxu0
    %v3930 = vadd.f32 %v3754, %v3929
    %v3931 = vpop.f32.mrb[0].mxu0
    %v3932 = vadd.f32 %v3758, %v3931
    %3933 = vmatprep.mubr.bf16.mxu0 0
    %3934 = vmatmul.mubr.bf16.gmra.mrb[0].mxu0 %v3731
    %v3935 = vpop.f32.mrb[0].mxu0
    %v3936 = vadd.f32 %v3754, %v3935
    %v3937 = vpop.f32.mrb[0].mxu0
    %v3938 = vadd.f32 %v3758, %v3937
    %v3939 = vpop.f32.mrb[0].mxu0
    %v3940 = vadd.f32 %v3754, %v3939
    %v3941 = vpop.f32.mrb[0].mxu0
    %v3942 = vadd.f32 %v3758, %v3941
    %3943 = vmatprep.mubr.bf16.mxu0 0
    %3944 = vmatmul.mubr.bf16.gmra.mrb[0].mxu0 %v3732
    %v3945 = vpop.f32.mrb[0].mxu0
    %v3946 = vadd.f32 %v3754, %v3945
    %v3947 = vpop.f32.mrb[0].mxu0
    %v3948 = vadd.f32 %v3758, %v3947
    %v3949 = vpop.f32.mrb[0].mxu0
    %v3950 = vadd.f32 %v3754, %v3949
    %v3951 = vpop.f32.mrb[0].mxu0
    %v3952 = vadd.f32 %v3758, %v3951
    %3953 = vdwg.mxu0
    %v3954 = vmax.f32 %v3876, 0.0
    %v3955 = vmax.f32 %v3878, 0.0
    %v3956 = vmax.f32 %v3880, 0.0
    %v3957 = vmax.f32 %v3882, 0.0
    %v3958 = vmax.f32 %v3886, 0.0
    %v3959 = vmax.f32 %v3888, 0.0
    %v3960 = vmax.f32 %v3890, 0.0
    %v3961 = vmax.f32 %v3892, 0.0
    %v3962 = vmax.f32 %v3896, 0.0
    %v3963 = vmax.f32 %v3898, 0.0
    %v3964 = vmax.f32 %v3900, 0.0
    %v3965 = vmax.f32 %v3902, 0.0
    %v3966 = vmax.f32 %v3906, 0.0
    %v3967 = vmax.f32 %v3908, 0.0
    %v3968 = vmax.f32 %v3910, 0.0
    %v3969 = vmax.f32 %v3912, 0.0
    %v3970 = vmax.f32 %v3916, 0.0
    %v3971 = vmax.f32 %v3918, 0.0
    %v3972 = vmax.f32 %v3920, 0.0
    %v3973 = vmax.f32 %v3922, 0.0
    %v3974 = vmax.f32 %v3926, 0.0
    %v3975 = vmax.f32 %v3928, 0.0
    %v3976 = vmax.f32 %v3930, 0.0
    %v3977 = vmax.f32 %v3932, 0.0
    %v3978 = vmax.f32 %v3936, 0.0
    %v3979 = vmax.f32 %v3938, 0.0
    %v3980 = vmax.f32 %v3940, 0.0
    %v3981 = vmax.f32 %v3942, 0.0
    %v3982 = vmax.f32 %v3946, 0.0
    %v3983 = vmax.f32 %v3948, 0.0
    %v3984 = vmax.f32 %v3950, 0.0
    %v3985 = vmax.f32 %v3952, 0.0
    %v3986 = vpack.c.bf16 %v3956, %v3954
    %v3987 = vpack.c.bf16 %v3957, %v3955
    %v3988 = vpack.c.bf16 %v3960, %v3958
    %v3989 = vpack.c.bf16 %v3961, %v3959
    %v3990 = vpack.c.bf16 %v3964, %v3962
    %v3991 = vpack.c.bf16 %v3965, %v3963
    %v3992 = vpack.c.bf16 %v3968, %v3966
    %v3993 = vpack.c.bf16 %v3969, %v3967
    %v3994 = vpack.c.bf16 %v3972, %v3970
    %v3995 = vpack.c.bf16 %v3973, %v3971
    %v3996 = vpack.c.bf16 %v3976, %v3974
    %v3997 = vpack.c.bf16 %v3977, %v3975
    %v3998 = vpack.c.bf16 %v3980, %v3978
    %v3999 = vpack.c.bf16 %v3981, %v3979
    %v4000 = vpack.c.bf16 %v3984, %v3982
    %v4001 = vpack.c.bf16 %v3985, %v3983
    %v4002 = vld [vmem:[#allocation9] sm:$0xf]
    %v4003 = vld [vmem:[#allocation9 + $0x4] sm:$0xf]
    %v4004 = vld [vmem:[#allocation9 + $0x8] sm:$0xf]
    %v4005 = vld [vmem:[#allocation9 + $0xc] sm:$0xf]
    %v4006 = vld [vmem:[#allocation9 + $0x10] sm:$0xf]
    %v4007 = vld [vmem:[#allocation9 + $0x14] sm:$0xf]
    %v4008 = vld [vmem:[#allocation9 + $0x18] sm:$0xf]
    %v4009 = vld [vmem:[#allocation9 + $0x1c] sm:$0xf]
    %v4010 = vld [vmem:[#allocation9 + $0x20] sm:$0xf]
    %v4011 = vld [vmem:[#allocation9 + $0x24] sm:$0xf]
    %v4012 = vld [vmem:[#allocation9 + $0x28] sm:$0xf]
    %v4013 = vld [vmem:[#allocation9 + $0x2c] sm:$0xf]
    %v4014 = vld [vmem:[#allocation9 + $0x30] sm:$0xf]
    %v4015 = vld [vmem:[#allocation9 + $0x34] sm:$0xf]
    %v4016 = vld [vmem:[#allocation9 + $0x38] sm:$0xf]
    %v4017 = vld [vmem:[#allocation9 + $0x3c] sm:$0xf]
    %v4018 = vld [vmem:[#allocation9 + $0x40] sm:$0xf]
    %v4019 = vld [vmem:[#allocation9 + $0x44] sm:$0xf]
    %v4020 = vld [vmem:[#allocation9 + $0x48] sm:$0xf]
    %v4021 = vld [vmem:[#allocation9 + $0x4c] sm:$0xf]
    %v4022 = vld [vmem:[#allocation9 + $0x50] sm:$0xf]
    %v4023 = vld [vmem:[#allocation9 + $0x54] sm:$0xf]
    %v4024 = vld [vmem:[#allocation9 + $0x58] sm:$0xf]
    %v4025 = vld [vmem:[#allocation9 + $0x5c] sm:$0xf]
    %v4026 = vld [vmem:[#allocation9 + $0x60] sm:$0xf]
    %v4027 = vld [vmem:[#allocation9 + $0x64] sm:$0xf]
    %v4028 = vld [vmem:[#allocation9 + $0x68] sm:$0xf]
    %v4029 = vld [vmem:[#allocation9 + $0x6c] sm:$0xf]
    %v4030 = vld [vmem:[#allocation9 + $0x70] sm:$0xf]
    %v4031 = vld [vmem:[#allocation9 + $0x74] sm:$0xf]
    %v4032 = vld [vmem:[#allocation9 + $0x78] sm:$0xf]
    %v4033 = vld [vmem:[#allocation9 + $0x7c] sm:$0xf]
    %v4034 = vld [vmem:[%s12] sm:$0x1]
    %v4036 = vlaneseq
    %v4037 = vshrl.u32 %v4036, 7
    %v4038 = vsub.s32 0, %v4037
    %v4039 = vrot.slane %v4034, %v4038
    %v4073 = vunpack.c.l.b16 %v4002
    %v4074 = vunpack.c.l.b16 %v4003
    %v4075 = vunpack.c.l.b16 %v4004
    %v4076 = vunpack.c.l.b16 %v4005
    %v4077 = vunpack.c.l.b16 %v4006
    %v4078 = vunpack.c.l.b16 %v4007
    %v4079 = vunpack.c.l.b16 %v4008
    %v4080 = vunpack.c.l.b16 %v4009
    %v4081 = vunpack.c.l.b16 %v4010
    %v4082 = vunpack.c.l.b16 %v4011
    %v4083 = vunpack.c.l.b16 %v4012
    %v4084 = vunpack.c.l.b16 %v4013
    %v4085 = vunpack.c.l.b16 %v4014
    %v4086 = vunpack.c.l.b16 %v4015
    %v4087 = vunpack.c.l.b16 %v4016
    %v4088 = vunpack.c.l.b16 %v4017
    %v4089 = vunpack.c.l.b16 %v4018
    %v4090 = vunpack.c.l.b16 %v4019
    %v4091 = vunpack.c.l.b16 %v4020
    %v4092 = vunpack.c.l.b16 %v4021
    %v4093 = vunpack.c.l.b16 %v4022
    %v4094 = vunpack.c.l.b16 %v4023
    %v4095 = vunpack.c.l.b16 %v4024
    %v4096 = vunpack.c.l.b16 %v4025
    %v4097 = vunpack.c.l.b16 %v4026
    %v4098 = vunpack.c.l.b16 %v4027
    %v4099 = vunpack.c.l.b16 %v4028
    %v4100 = vunpack.c.l.b16 %v4029
    %v4101 = vunpack.c.l.b16 %v4030
    %v4102 = vunpack.c.l.b16 %v4031
    %v4103 = vunpack.c.l.b16 %v4032
    %v4104 = vunpack.c.l.b16 %v4033
    %v4105 = vpack.c.b16 %v4074, %v4073
    %v4106 = vpack.c.b16 %v4076, %v4075
    %v4107 = vpack.c.b16 %v4078, %v4077
    %v4108 = vpack.c.b16 %v4080, %v4079
    %v4109 = vpack.c.b16 %v4082, %v4081
    %v4110 = vpack.c.b16 %v4084, %v4083
    %v4111 = vpack.c.b16 %v4086, %v4085
    %v4112 = vpack.c.b16 %v4088, %v4087
    %v4113 = vpack.c.b16 %v4090, %v4089
    %v4114 = vpack.c.b16 %v4092, %v4091
    %v4115 = vpack.c.b16 %v4094, %v4093
    %v4116 = vpack.c.b16 %v4096, %v4095
    %v4117 = vpack.c.b16 %v4098, %v4097
    %v4118 = vpack.c.b16 %v4100, %v4099
    %v4119 = vpack.c.b16 %v4102, %v4101
    %v4120 = vpack.c.b16 %v4104, %v4103
    %4137 = vmatprep.subr.bf16.mxu0 0
    %4138 = vmatpush1.bf16.msra.mxu0 %v4105
    %4139 = vmatprep.subr.bf16.mxu0 0
    %4140 = vmatpush1.bf16.msra.mxu0 %v4106
    %4141 = vmatprep.subr.bf16.mxu0 0
    %4142 = vmatpush1.bf16.msra.mxu0 %v4107
    %4143 = vmatprep.subr.bf16.mxu0 0
    %4144 = vmatpush1.bf16.msra.mxu0 %v4108
    %4145 = vmatprep.subr.bf16.mxu0 0
    %4146 = vmatpush1.bf16.msra.mxu0 %v4109
    %4147 = vmatprep.subr.bf16.mxu0 0
    %4148 = vmatpush1.bf16.msra.mxu0 %v4110
    %4149 = vmatprep.subr.bf16.mxu0 0
    %4150 = vmatpush1.bf16.msra.mxu0 %v4111
    %4151 = vmatprep.subr.bf16.mxu0 0
    %4152 = vmatpush1.bf16.msra.mxu0 %v4112
    %4153 = vmatprep.subr.bf16.mxu0 0
    %4154 = vmatpush1.bf16.msra.mxu0 %v4113
    %4155 = vmatprep.subr.bf16.mxu0 0
    %4156 = vmatpush1.bf16.msra.mxu0 %v4114
    %4157 = vmatprep.subr.bf16.mxu0 0
    %4158 = vmatpush1.bf16.msra.mxu0 %v4115
    %4159 = vmatprep.subr.bf16.mxu0 0
    %4160 = vmatpush1.bf16.msra.mxu0 %v4116
    %4161 = vmatprep.subr.bf16.mxu0 0
    %4162 = vmatpush1.bf16.msra.mxu0 %v4117
    %4163 = vmatprep.subr.bf16.mxu0 0
    %4164 = vmatpush1.bf16.msra.mxu0 %v4118
    %4165 = vmatprep.subr.bf16.mxu0 0
    %4166 = vmatpush1.bf16.msra.mxu0 %v4119
    %4167 = vmatprep.subr.bf16.mxu0 0
    %4168 = vmatpush1.bf16.msra.mxu0 %v4120
    %4169 = vmatprep.mubr.bf16.mxu0 %v3987
    %4170 = vmatmul.mubr.bf16.gmra.mrb[0].mxu0 %v3986
    %v4171 = vpop.f32.mrb[0].mxu0
    %v4172 = vadd.f32 %v4039, %v4171
    %v4173 = vpop.f32.mrb[0].mxu0
    %v4174 = vpop.f32.mrb[0].mxu0
    %v4175 = vadd.f32 %v4039, %v4174
    %v4176 = vpop.f32.mrb[0].mxu0
    %4177 = vmatprep.mubr.bf16.mxu0 %v3989
    %4178 = vmatmul.mubr.bf16.gmra.mrb[0].mxu0 %v3988
    %v4179 = vpop.f32.mrb[0].mxu0
    %v4180 = vadd.f32 %v4039, %v4179
    %v4181 = vpop.f32.mrb[0].mxu0
    %v4182 = vpop.f32.mrb[0].mxu0
    %v4183 = vadd.f32 %v4039, %v4182
    %v4184 = vpop.f32.mrb[0].mxu0
    %4185 = vmatprep.mubr.bf16.mxu0 %v3991
    %4186 = vmatmul.mubr.bf16.gmra.mrb[0].mxu0 %v3990
    %v4187 = vpop.f32.mrb[0].mxu0
    %v4188 = vadd.f32 %v4039, %v4187
    %v4189 = vpop.f32.mrb[0].mxu0
    %v4190 = vpop.f32.mrb[0].mxu0
    %v4191 = vadd.f32 %v4039, %v4190
    %v4192 = vpop.f32.mrb[0].mxu0
    %4193 = vmatprep.mubr.bf16.mxu0 %v3993
    %4194 = vmatmul.mubr.bf16.gmra.mrb[0].mxu0 %v3992
    %v4195 = vpop.f32.mrb[0].mxu0
    %v4196 = vadd.f32 %v4039, %v4195
    %v4197 = vpop.f32.mrb[0].mxu0
    %v4198 = vpop.f32.mrb[0].mxu0
    %v4199 = vadd.f32 %v4039, %v4198
    %v4200 = vpop.f32.mrb[0].mxu0
    %4201 = vmatprep.mubr.bf16.mxu0 %v3995
    %4202 = vmatmul.mubr.bf16.gmra.mrb[0].mxu0 %v3994
    %v4203 = vpop.f32.mrb[0].mxu0
    %v4204 = vadd.f32 %v4039, %v4203
    %v4205 = vpop.f32.mrb[0].mxu0
    %v4206 = vpop.f32.mrb[0].mxu0
    %v4207 = vadd.f32 %v4039, %v4206
    %v4208 = vpop.f32.mrb[0].mxu0
    %4209 = vmatprep.mubr.bf16.mxu0 %v3997
    %4210 = vmatmul.mubr.bf16.gmra.mrb[0].mxu0 %v3996
    %v4211 = vpop.f32.mrb[0].mxu0
    %v4212 = vadd.f32 %v4039, %v4211
    %v4213 = vpop.f32.mrb[0].mxu0
    %v4214 = vpop.f32.mrb[0].mxu0
    %v4215 = vadd.f32 %v4039, %v4214
    %v4216 = vpop.f32.mrb[0].mxu0
    %4217 = vmatprep.mubr.bf16.mxu0 %v3999
    %4218 = vmatmul.mubr.bf16.gmra.mrb[0].mxu0 %v3998
    %v4219 = vpop.f32.mrb[0].mxu0
    %v4220 = vadd.f32 %v4039, %v4219
    %v4221 = vpop.f32.mrb[0].mxu0
    %v4222 = vpop.f32.mrb[0].mxu0
    %v4223 = vadd.f32 %v4039, %v4222
    %v4224 = vpop.f32.mrb[0].mxu0
    %4225 = vmatprep.mubr.bf16.mxu0 %v4001
    %4226 = vmatmul.mubr.bf16.gmra.mrb[0].mxu0 %v4000
    %v4227 = vpop.f32.mrb[0].mxu0
    %v4228 = vadd.f32 %v4039, %v4227
    %v4229 = vpop.f32.mrb[0].mxu0
    %v4230 = vpop.f32.mrb[0].mxu0
    %v4231 = vadd.f32 %v4039, %v4230
    %v4232 = vpop.f32.mrb[0].mxu0
    %4233 = vdwg.mxu0
    %v4234 = vadd.f32 %v3709, %v4172
    %v4235 = vadd.f32 %v3710, %v4175
    %v4236 = vadd.f32 %v3711, %v4180
    %v4237 = vadd.f32 %v3712, %v4183
    %v4238 = vadd.f32 %v3713, %v4188
    %v4239 = vadd.f32 %v3714, %v4191
    %v4240 = vadd.f32 %v3715, %v4196
    %v4241 = vadd.f32 %v3716, %v4199
    %v4242 = vadd.f32 %v3717, %v4204
    %v4243 = vadd.f32 %v3718, %v4207
    %v4244 = vadd.f32 %v3719, %v4212
    %v4245 = vadd.f32 %v3720, %v4215
    %v4246 = vadd.f32 %v3721, %v4220
    %v4247 = vadd.f32 %v3722, %v4223
    %v4248 = vadd.f32 %v3723, %v4228
    %v4249 = vadd.f32 %v3724, %v4231
    %v4250 = vld [vmem:[%s13] sm:$0x1]
    %v4251 = vld [vmem:[%s14] sm:$0x1]
    %4252 = vadd.xlane.f32.xlu0 %v4234
    %v4253 = vpop.xlane.xlu0 %4252
    %4254 = vadd.xlane.f32.xlu0 %v4235
    %v4255 = vpop.xlane.xlu0 %4254
    %4256 = vadd.xlane.f32.xlu0 %v4236
    %v4257 = vpop.xlane.xlu0 %4256
    %4258 = vadd.xlane.f32.xlu0 %v4237
    %v4259 = vpop.xlane.xlu0 %4258
    %4260 = vadd.xlane.f32.xlu0 %v4238
    %v4261 = vpop.xlane.xlu0 %4260
    %4262 = vadd.xlane.f32.xlu0 %v4239
    %v4263 = vpop.xlane.xlu0 %4262
    %4264 = vadd.xlane.f32.xlu0 %v4240
    %v4265 = vpop.xlane.xlu0 %4264
    %4266 = vadd.xlane.f32.xlu0 %v4241
    %v4267 = vpop.xlane.xlu0 %4266
    %4268 = vadd.xlane.f32.xlu0 %v4242
    %v4269 = vpop.xlane.xlu0 %4268
    %4270 = vadd.xlane.f32.xlu0 %v4243
    %v4271 = vpop.xlane.xlu0 %4270
    %4272 = vadd.xlane.f32.xlu0 %v4244
    %v4273 = vpop.xlane.xlu0 %4272
    %4274 = vadd.xlane.f32.xlu0 %v4245
    %v4275 = vpop.xlane.xlu0 %4274
    %4276 = vadd.xlane.f32.xlu0 %v4246
    %v4277 = vpop.xlane.xlu0 %4276
    %4278 = vadd.xlane.f32.xlu0 %v4247
    %v4279 = vpop.xlane.xlu0 %4278
    %4280 = vadd.xlane.f32.xlu0 %v4248
    %v4281 = vpop.xlane.xlu0 %4280
    %4282 = vadd.xlane.f32.xlu0 %v4249
    %v4283 = vpop.xlane.xlu0 %4282
    %v4284 = vmul.f32 %v4253, %v3536
    %v4285 = vmul.f32 %v4255, %v3536
    %v4286 = vmul.f32 %v4257, %v3536
    %v4287 = vmul.f32 %v4259, %v3536
    %v4288 = vmul.f32 %v4261, %v3536
    %v4289 = vmul.f32 %v4263, %v3536
    %v4290 = vmul.f32 %v4265, %v3536
    %v4291 = vmul.f32 %v4267, %v3536
    %v4292 = vmul.f32 %v4269, %v3536
    %v4293 = vmul.f32 %v4271, %v3536
    %v4294 = vmul.f32 %v4273, %v3536
    %v4295 = vmul.f32 %v4275, %v3536
    %v4296 = vmul.f32 %v4277, %v3536
    %v4297 = vmul.f32 %v4279, %v3536
    %v4298 = vmul.f32 %v4281, %v3536
    %v4299 = vmul.f32 %v4283, %v3536
    %v4300 = vsub.f32 %v4234, %v4284
    %v4301 = vsub.f32 %v4235, %v4285
    %v4302 = vsub.f32 %v4236, %v4286
    %v4303 = vsub.f32 %v4237, %v4287
    %v4304 = vsub.f32 %v4238, %v4288
    %v4305 = vsub.f32 %v4239, %v4289
    %v4306 = vsub.f32 %v4240, %v4290
    %v4307 = vsub.f32 %v4241, %v4291
    %v4308 = vsub.f32 %v4242, %v4292
    %v4309 = vsub.f32 %v4243, %v4293
    %v4310 = vsub.f32 %v4244, %v4294
    %v4311 = vsub.f32 %v4245, %v4295
    %v4312 = vsub.f32 %v4246, %v4296
    %v4313 = vsub.f32 %v4247, %v4297
    %v4314 = vsub.f32 %v4248, %v4298
    %v4315 = vsub.f32 %v4249, %v4299
    %v4316 = vmul.f32 %v4300, %v4300
    %v4317 = vmul.f32 %v4301, %v4301
    %v4318 = vmul.f32 %v4302, %v4302
    %v4319 = vmul.f32 %v4303, %v4303
    %v4320 = vmul.f32 %v4304, %v4304
    %v4321 = vmul.f32 %v4305, %v4305
    %v4322 = vmul.f32 %v4306, %v4306
    %v4323 = vmul.f32 %v4307, %v4307
    %v4324 = vmul.f32 %v4308, %v4308
    %v4325 = vmul.f32 %v4309, %v4309
    %v4326 = vmul.f32 %v4310, %v4310
    %v4327 = vmul.f32 %v4311, %v4311
    %v4328 = vmul.f32 %v4312, %v4312
    %v4329 = vmul.f32 %v4313, %v4313
    %v4330 = vmul.f32 %v4314, %v4314
    %v4331 = vmul.f32 %v4315, %v4315
    %4332 = vadd.xlane.f32.xlu0 %v4316
    %v4333 = vpop.xlane.xlu0 %4332
    %4334 = vadd.xlane.f32.xlu0 %v4317
    %v4335 = vpop.xlane.xlu0 %4334
    %4336 = vadd.xlane.f32.xlu0 %v4318
    %v4337 = vpop.xlane.xlu0 %4336
    %4338 = vadd.xlane.f32.xlu0 %v4319
    %v4339 = vpop.xlane.xlu0 %4338
    %4340 = vadd.xlane.f32.xlu0 %v4320
    %v4341 = vpop.xlane.xlu0 %4340
    %4342 = vadd.xlane.f32.xlu0 %v4321
    %v4343 = vpop.xlane.xlu0 %4342
    %4344 = vadd.xlane.f32.xlu0 %v4322
    %v4345 = vpop.xlane.xlu0 %4344
    %4346 = vadd.xlane.f32.xlu0 %v4323
    %v4347 = vpop.xlane.xlu0 %4346
    %4348 = vadd.xlane.f32.xlu0 %v4324
    %v4349 = vpop.xlane.xlu0 %4348
    %4350 = vadd.xlane.f32.xlu0 %v4325
    %v4351 = vpop.xlane.xlu0 %4350
    %4352 = vadd.xlane.f32.xlu0 %v4326
    %v4353 = vpop.xlane.xlu0 %4352
    %4354 = vadd.xlane.f32.xlu0 %v4327
    %v4355 = vpop.xlane.xlu0 %4354
    %4356 = vadd.xlane.f32.xlu0 %v4328
    %v4357 = vpop.xlane.xlu0 %4356
    %4358 = vadd.xlane.f32.xlu0 %v4329
    %v4359 = vpop.xlane.xlu0 %4358
    %4360 = vadd.xlane.f32.xlu0 %v4330
    %v4361 = vpop.xlane.xlu0 %4360
    %4362 = vadd.xlane.f32.xlu0 %v4331
    %v4363 = vpop.xlane.xlu0 %4362
    %v4364 = vmul.f32 %v4333, %v3536
    %v4365 = vmul.f32 %v4335, %v3536
    %v4366 = vmul.f32 %v4337, %v3536
    %v4367 = vmul.f32 %v4339, %v3536
    %v4368 = vmul.f32 %v4341, %v3536
    %v4369 = vmul.f32 %v4343, %v3536
    %v4370 = vmul.f32 %v4345, %v3536
    %v4371 = vmul.f32 %v4347, %v3536
    %v4372 = vmul.f32 %v4349, %v3536
    %v4373 = vmul.f32 %v4351, %v3536
    %v4374 = vmul.f32 %v4353, %v3536
    %v4375 = vmul.f32 %v4355, %v3536
    %v4376 = vmul.f32 %v4357, %v3536
    %v4377 = vmul.f32 %v4359, %v3536
    %v4378 = vmul.f32 %v4361, %v3536
    %v4379 = vmul.f32 %v4363, %v3536
    %v4380 = vadd.f32 %v4364, 1e-05
    %v4381 = vadd.f32 %v4365, 1e-05
    %v4382 = vadd.f32 %v4366, 1e-05
    %v4383 = vadd.f32 %v4367, 1e-05
    %v4384 = vadd.f32 %v4368, 1e-05
    %v4385 = vadd.f32 %v4369, 1e-05
    %v4386 = vadd.f32 %v4370, 1e-05
    %v4387 = vadd.f32 %v4371, 1e-05
    %v4388 = vadd.f32 %v4372, 1e-05
    %v4389 = vadd.f32 %v4373, 1e-05
    %v4390 = vadd.f32 %v4374, 1e-05
    %v4391 = vadd.f32 %v4375, 1e-05
    %v4392 = vadd.f32 %v4376, 1e-05
    %v4393 = vadd.f32 %v4377, 1e-05
    %v4394 = vadd.f32 %v4378, 1e-05
    %v4395 = vadd.f32 %v4379, 1e-05
    %v4396 = vrsqrt.pop %v4380
    %v4397 = vrsqrt.pop %v4381
    %v4398 = vrsqrt.pop %v4382
    %v4399 = vrsqrt.pop %v4383
    %v4400 = vrsqrt.pop %v4384
    %v4401 = vrsqrt.pop %v4385
    %v4402 = vrsqrt.pop %v4386
    %v4403 = vrsqrt.pop %v4387
    %v4404 = vrsqrt.pop %v4388
    %v4405 = vrsqrt.pop %v4389
    %v4406 = vrsqrt.pop %v4390
    %v4407 = vrsqrt.pop %v4391
    %v4408 = vrsqrt.pop %v4392
    %v4409 = vrsqrt.pop %v4393
    %v4410 = vrsqrt.pop %v4394
    %v4411 = vrsqrt.pop %v4395
    %v4412 = vmul.f32 %v4300, %v4396
    %v4413 = vmul.f32 %v4301, %v4397
    %v4414 = vmul.f32 %v4302, %v4398
    %v4415 = vmul.f32 %v4303, %v4399
    %v4416 = vmul.f32 %v4304, %v4400
    %v4417 = vmul.f32 %v4305, %v4401
    %v4418 = vmul.f32 %v4306, %v4402
    %v4419 = vmul.f32 %v4307, %v4403
    %v4420 = vmul.f32 %v4308, %v4404
    %v4421 = vmul.f32 %v4309, %v4405
    %v4422 = vmul.f32 %v4310, %v4406
    %v4423 = vmul.f32 %v4311, %v4407
    %v4424 = vmul.f32 %v4312, %v4408
    %v4425 = vmul.f32 %v4313, %v4409
    %v4426 = vmul.f32 %v4314, %v4410
    %v4427 = vmul.f32 %v4315, %v4411
    %v4429 = vlaneseq
    %v4430 = vshrl.u32 %v4429, 7
    %v4431 = vsub.s32 0, %v4430
    %v4432 = vrot.slane %v4250, %v4431
    %v4434 = vmul.f32 %v4412, %v4432
    %v4435 = vmul.f32 %v4413, %v4432
    %v4436 = vmul.f32 %v4414, %v4432
    %v4437 = vmul.f32 %v4415, %v4432
    %v4438 = vmul.f32 %v4416, %v4432
    %v4439 = vmul.f32 %v4417, %v4432
    %v4440 = vmul.f32 %v4418, %v4432
    %v4441 = vmul.f32 %v4419, %v4432
    %v4442 = vmul.f32 %v4420, %v4432
    %v4443 = vmul.f32 %v4421, %v4432
    %v4444 = vmul.f32 %v4422, %v4432
    %v4445 = vmul.f32 %v4423, %v4432
    %v4446 = vmul.f32 %v4424, %v4432
    %v4447 = vmul.f32 %v4425, %v4432
    %v4448 = vmul.f32 %v4426, %v4432
    %v4449 = vmul.f32 %v4427, %v4432
    %v4451 = vlaneseq
    %v4452 = vshrl.u32 %v4451, 7
    %v4453 = vsub.s32 0, %v4452
    %v4454 = vrot.slane %v4251, %v4453
    %v4456 = vadd.f32 %v4434, %v4454
    %v4457 = vadd.f32 %v4435, %v4454
    %v4458 = vadd.f32 %v4436, %v4454
    %v4459 = vadd.f32 %v4437, %v4454
    %v4460 = vadd.f32 %v4438, %v4454
    %v4461 = vadd.f32 %v4439, %v4454
    %v4462 = vadd.f32 %v4440, %v4454
    %v4463 = vadd.f32 %v4441, %v4454
    %v4464 = vadd.f32 %v4442, %v4454
    %v4465 = vadd.f32 %v4443, %v4454
    %v4466 = vadd.f32 %v4444, %v4454
    %v4467 = vadd.f32 %v4445, %v4454
    %v4468 = vadd.f32 %v4446, %v4454
    %v4469 = vadd.f32 %v4447, %v4454
    %v4470 = vadd.f32 %v4448, %v4454
    %v4471 = vadd.f32 %v4449, %v4454
    %v4472 = vpack.c.bf16 %v4457, %v4456
    %v4473 = vpack.c.bf16 %v4459, %v4458
    %v4474 = vpack.c.bf16 %v4461, %v4460
    %v4475 = vpack.c.bf16 %v4463, %v4462
    %v4476 = vpack.c.bf16 %v4465, %v4464
    %v4477 = vpack.c.bf16 %v4467, %v4466
    %v4478 = vpack.c.bf16 %v4469, %v4468
    %v4479 = vpack.c.bf16 %v4471, %v4470
    %s4480 = scalar_lea.vmem [#allocation4], 192
    %v4481 = vld [vmem:[%s4480] sm:$0xff]
    %v4482 = vld [vmem:[%s4480 + $0x8] sm:$0xf]
    %v4483 = vld [vmem:[%s4480 + $0xc] sm:$0xff]
    %v4484 = vld [vmem:[%s4480 + $0x14] sm:$0xf]
    %v4485 = vld [vmem:[%s4480 + $0x18] sm:$0xff]
    %v4486 = vld [vmem:[%s4480 + $0x20] sm:$0xf]
    %v4487 = vld [vmem:[%s4480 + $0x24] sm:$0xff]
    %v4488 = vld [vmem:[%s4480 + $0x2c] sm:$0xf]
    %v4489 = vld [vmem:[%s4480 + $0x30] sm:$0xff]
    %v4490 = vld [vmem:[%s4480 + $0x38] sm:$0xf]
    %v4491 = vld [vmem:[%s4480 + $0x3c] sm:$0xff]
    %v4492 = vld [vmem:[%s4480 + $0x44] sm:$0xf]
    %v4493 = vld [vmem:[%s4480 + $0x48] sm:$0xff]
    %v4494 = vld [vmem:[%s4480 + $0x50] sm:$0xf]
    %v4495 = vld [vmem:[%s4480 + $0x54] sm:$0xff]
    %v4496 = vld [vmem:[%s4480 + $0x5c] sm:$0xf]
    %v4497 = vld [vmem:[%s4480 + $0x60] sm:$0xff]
    %v4498 = vld [vmem:[%s4480 + $0x68] sm:$0xf]
    %v4499 = vld [vmem:[%s4480 + $0x6c] sm:$0xff]
    %v4500 = vld [vmem:[%s4480 + $0x74] sm:$0xf]
    %v4501 = vld [vmem:[%s4480 + $0x78] sm:$0xff]
    %v4502 = vld [vmem:[%s4480 + $0x80] sm:$0xf]
    %v4503 = vld [vmem:[%s4480 + $0x84] sm:$0xff]
    %v4504 = vld [vmem:[%s4480 + $0x8c] sm:$0xf]
    %v4505 = vld [vmem:[%s4480 + $0x90] sm:$0xff]
    %v4506 = vld [vmem:[%s4480 + $0x98] sm:$0xf]
    %v4507 = vld [vmem:[%s4480 + $0x9c] sm:$0xff]
    %v4508 = vld [vmem:[%s4480 + $0xa4] sm:$0xf]
    %v4509 = vld [vmem:[%s4480 + $0xa8] sm:$0xff]
    %v4510 = vld [vmem:[%s4480 + $0xb0] sm:$0xf]
    %v4511 = vld [vmem:[%s4480 + $0xb4] sm:$0xff]
    %v4512 = vld [vmem:[%s4480 + $0xbc] sm:$0xf]
    %s4513 = scalar_lea.vmem %s4, 3
    %v4514 = vld [vmem:[%s4513] sm:$0x7]
    %v4516 = vlaneseq
    %v4517 = vshrl.u32 %v4516, 7
    %v4518 = vsub.s32 0, %v4517
    %v4519 = vrot.slane %v4514, %v4518
    %v4520 = vlaneseq
    %v4521 = vshrl.u32 %v4520, 7
    %v4522 = vsub.s32 1, %v4521
    %v4523 = vrot.slane %v4514, %v4522
    %v4524 = vlaneseq
    %v4525 = vshrl.u32 %v4524, 7
    %v4526 = vsub.s32 2, %v4525
    %v4527 = vrot.slane %v4514, %v4526
    %v4563 = vunpack.c.l.b16 %v4481
    %v4564 = vunpack.c.h.b16 %v4481
    %v4565 = vunpack.c.l.b16 %v4482
    %v4566 = vunpack.c.l.b16 %v4483
    %v4567 = vunpack.c.h.b16 %v4483
    %v4568 = vunpack.c.l.b16 %v4484
    %v4569 = vunpack.c.l.b16 %v4485
    %v4570 = vunpack.c.h.b16 %v4485
    %v4571 = vunpack.c.l.b16 %v4486
    %v4572 = vunpack.c.l.b16 %v4487
    %v4573 = vunpack.c.h.b16 %v4487
    %v4574 = vunpack.c.l.b16 %v4488
    %v4575 = vunpack.c.l.b16 %v4489
    %v4576 = vunpack.c.h.b16 %v4489
    %v4577 = vunpack.c.l.b16 %v4490
    %v4578 = vunpack.c.l.b16 %v4491
    %v4579 = vunpack.c.h.b16 %v4491
    %v4580 = vunpack.c.l.b16 %v4492
    %v4581 = vunpack.c.l.b16 %v4493
    %v4582 = vunpack.c.h.b16 %v4493
    %v4583 = vunpack.c.l.b16 %v4494
    %v4584 = vunpack.c.l.b16 %v4495
    %v4585 = vunpack.c.h.b16 %v4495
    %v4586 = vunpack.c.l.b16 %v4496
    %v4587 = vunpack.c.l.b16 %v4497
    %v4588 = vunpack.c.h.b16 %v4497
    %v4589 = vunpack.c.l.b16 %v4498
    %v4590 = vunpack.c.l.b16 %v4499
    %v4591 = vunpack.c.h.b16 %v4499
    %v4592 = vunpack.c.l.b16 %v4500
    %v4593 = vunpack.c.l.b16 %v4501
    %v4594 = vunpack.c.h.b16 %v4501
    %v4595 = vunpack.c.l.b16 %v4502
    %v4596 = vunpack.c.l.b16 %v4503
    %v4597 = vunpack.c.h.b16 %v4503
    %v4598 = vunpack.c.l.b16 %v4504
    %v4599 = vunpack.c.l.b16 %v4505
    %v4600 = vunpack.c.h.b16 %v4505
    %v4601 = vunpack.c.l.b16 %v4506
    %v4602 = vunpack.c.l.b16 %v4507
    %v4603 = vunpack.c.h.b16 %v4507
    %v4604 = vunpack.c.l.b16 %v4508
    %v4605 = vunpack.c.l.b16 %v4509
    %v4606 = vunpack.c.h.b16 %v4509
    %v4607 = vunpack.c.l.b16 %v4510
    %v4608 = vunpack.c.l.b16 %v4511
    %v4609 = vunpack.c.h.b16 %v4511
    %v4610 = vunpack.c.l.b16 %v4512
    %v4611 = vpack.c.b16 %v4566, %v4563
    %v4612 = vpack.c.b16 %v4567, %v4564
    %v4613 = vpack.c.b16 %v4568, %v4565
    %v4614 = vpack.c.b16 %v4572, %v4569
    %v4615 = vpack.c.b16 %v4573, %v4570
    %v4616 = vpack.c.b16 %v4574, %v4571
    %v4617 = vpack.c.b16 %v4578, %v4575
    %v4618 = vpack.c.b16 %v4579, %v4576
    %v4619 = vpack.c.b16 %v4580, %v4577
    %v4620 = vpack.c.b16 %v4584, %v4581
    %v4621 = vpack.c.b16 %v4585, %v4582
    %v4622 = vpack.c.b16 %v4586, %v4583
    %v4623 = vpack.c.b16 %v4590, %v4587
    %v4624 = vpack.c.b16 %v4591, %v4588
    %v4625 = vpack.c.b16 %v4592, %v4589
    %v4626 = vpack.c.b16 %v4596, %v4593
    %v4627 = vpack.c.b16 %v4597, %v4594
    %v4628 = vpack.c.b16 %v4598, %v4595
    %v4629 = vpack.c.b16 %v4602, %v4599
    %v4630 = vpack.c.b16 %v4603, %v4600
    %v4631 = vpack.c.b16 %v4604, %v4601
    %v4632 = vpack.c.b16 %v4608, %v4605
    %v4633 = vpack.c.b16 %v4609, %v4606
    %v4634 = vpack.c.b16 %v4610, %v4607
    %4659 = vmatprep.subr.bf16.mxu0 %v4612
    %4660 = vmatpush1.bf16.msra.mxu0 %v4611
    %4661 = vmatprep.subr.bf16.mxu0 %v4615
    %4662 = vmatpush1.bf16.msra.mxu0 %v4614
    %4663 = vmatprep.subr.bf16.mxu0 %v4618
    %4664 = vmatpush1.bf16.msra.mxu0 %v4617
    %4665 = vmatprep.subr.bf16.mxu0 %v4621
    %4666 = vmatpush1.bf16.msra.mxu0 %v4620
    %4667 = vmatprep.subr.bf16.mxu0 %v4624
    %4668 = vmatpush1.bf16.msra.mxu0 %v4623
    %4669 = vmatprep.subr.bf16.mxu0 %v4627
    %4670 = vmatpush1.bf16.msra.mxu0 %v4626
    %4671 = vmatprep.subr.bf16.mxu0 %v4630
    %4672 = vmatpush1.bf16.msra.mxu0 %v4629
    %4673 = vmatprep.subr.bf16.mxu0 %v4633
    %4674 = vmatpush1.bf16.msra.mxu0 %v4632
    %4675 = vmatprep.subr.bf16.mxu0 0
    %4676 = vmatpush1.bf16.msra.mxu0 0
    %4677 = vmatprep.subr.bf16.mxu0 0
    %4678 = vmatpush1.bf16.msra.mxu0 0
    %4679 = vmatprep.subr.bf16.mxu0 0
    %4680 = vmatpush1.bf16.msra.mxu0 0
    %4681 = vmatprep.subr.bf16.mxu0 0
    %4682 = vmatpush1.bf16.msra.mxu0 0
    %4683 = vmatprep.subr.bf16.mxu0 0
    %4684 = vmatpush1.bf16.msra.mxu0 0
    %4685 = vmatprep.subr.bf16.mxu0 0
    %4686 = vmatpush1.bf16.msra.mxu0 0
    %4687 = vmatprep.subr.bf16.mxu0 0
    %4688 = vmatpush1.bf16.msra.mxu0 0
    %4689 = vmatprep.subr.bf16.mxu0 0
    %4690 = vmatpush1.bf16.msra.mxu0 0
    %4691 = vmatprep.mubr.bf16.mxu0 0
    %4692 = vmatmul.mubr.bf16.gmra.mrb[0].mxu0 %v4472
    %v4693 = vpop.f32.mrb[0].mxu0
    %v4694 = vadd.f32 %v4519, %v4693
    %v4695 = vpop.f32.mrb[0].mxu0
    %v4696 = vadd.f32 %v4523, %v4695
    %v4697 = vpop.f32.mrb[0].mxu0
    %v4698 = vadd.f32 %v4519, %v4697
    %v4699 = vpop.f32.mrb[0].mxu0
    %v4700 = vadd.f32 %v4523, %v4699
    %4701 = vmatprep.mubr.bf16.mxu0 0
    %4702 = vmatmul.mubr.bf16.gmra.mrb[0].mxu0 %v4473
    %v4703 = vpop.f32.mrb[0].mxu0
    %v4704 = vadd.f32 %v4519, %v4703
    %v4705 = vpop.f32.mrb[0].mxu0
    %v4706 = vadd.f32 %v4523, %v4705
    %v4707 = vpop.f32.mrb[0].mxu0
    %v4708 = vadd.f32 %v4519, %v4707
    %v4709 = vpop.f32.mrb[0].mxu0
    %v4710 = vadd.f32 %v4523, %v4709
    %4711 = vmatprep.mubr.bf16.mxu0 0
    %4712 = vmatmul.mubr.bf16.gmra.mrb[0].mxu0 %v4474
    %v4713 = vpop.f32.mrb[0].mxu0
    %v4714 = vadd.f32 %v4519, %v4713
    %v4715 = vpop.f32.mrb[0].mxu0
    %v4716 = vadd.f32 %v4523, %v4715
    %v4717 = vpop.f32.mrb[0].mxu0
    %v4718 = vadd.f32 %v4519, %v4717
    %v4719 = vpop.f32.mrb[0].mxu0
    %v4720 = vadd.f32 %v4523, %v4719
    %4721 = vmatprep.mubr.bf16.mxu0 0
    %4722 = vmatmul.mubr.bf16.gmra.mrb[0].mxu0 %v4475
    %v4723 = vpop.f32.mrb[0].mxu0
    %v4724 = vadd.f32 %v4519, %v4723
    %v4725 = vpop.f32.mrb[0].mxu0
    %v4726 = vadd.f32 %v4523, %v4725
    %v4727 = vpop.f32.mrb[0].mxu0
    %v4728 = vadd.f32 %v4519, %v4727
    %v4729 = vpop.f32.mrb[0].mxu0
    %v4730 = vadd.f32 %v4523, %v4729
    %4731 = vmatprep.mubr.bf16.mxu0 0
    %4732 = vmatmul.mubr.bf16.gmra.mrb[0].mxu0 %v4476
    %v4733 = vpop.f32.mrb[0].mxu0
    %v4734 = vadd.f32 %v4519, %v4733
    %v4735 = vpop.f32.mrb[0].mxu0
    %v4736 = vadd.f32 %v4523, %v4735
    %v4737 = vpop.f32.mrb[0].mxu0
    %v4738 = vadd.f32 %v4519, %v4737
    %v4739 = vpop.f32.mrb[0].mxu0
    %v4740 = vadd.f32 %v4523, %v4739
    %4741 = vmatprep.mubr.bf16.mxu0 0
    %4742 = vmatmul.mubr.bf16.gmra.mrb[0].mxu0 %v4477
    %v4743 = vpop.f32.mrb[0].mxu0
    %v4744 = vadd.f32 %v4519, %v4743
    %v4745 = vpop.f32.mrb[0].mxu0
    %v4746 = vadd.f32 %v4523, %v4745
    %v4747 = vpop.f32.mrb[0].mxu0
    %v4748 = vadd.f32 %v4519, %v4747
    %v4749 = vpop.f32.mrb[0].mxu0
    %v4750 = vadd.f32 %v4523, %v4749
    %4751 = vmatprep.mubr.bf16.mxu0 0
    %4752 = vmatmul.mubr.bf16.gmra.mrb[0].mxu0 %v4478
    %v4753 = vpop.f32.mrb[0].mxu0
    %v4754 = vadd.f32 %v4519, %v4753
    %v4755 = vpop.f32.mrb[0].mxu0
    %v4756 = vadd.f32 %v4523, %v4755
    %v4757 = vpop.f32.mrb[0].mxu0
    %v4758 = vadd.f32 %v4519, %v4757
    %v4759 = vpop.f32.mrb[0].mxu0
    %v4760 = vadd.f32 %v4523, %v4759
    %4761 = vmatprep.mubr.bf16.mxu0 0
    %4762 = vmatmul.mubr.bf16.gmra.mrb[0].mxu0 %v4479
    %v4763 = vpop.f32.mrb[0].mxu0
    %v4764 = vadd.f32 %v4519, %v4763
    %v4765 = vpop.f32.mrb[0].mxu0
    %v4766 = vadd.f32 %v4523, %v4765
    %v4767 = vpop.f32.mrb[0].mxu0
    %v4768 = vadd.f32 %v4519, %v4767
    %v4769 = vpop.f32.mrb[0].mxu0
    %v4770 = vadd.f32 %v4523, %v4769
    %4771 = vdwg.mxu0
    %4772 = vmatprep.subr.bf16.mxu0 0
    %4773 = vmatpush1.bf16.msra.mxu0 %v4613
    %4774 = vmatprep.subr.bf16.mxu0 0
    %4775 = vmatpush1.bf16.msra.mxu0 %v4616
    %4776 = vmatprep.subr.bf16.mxu0 0
    %4777 = vmatpush1.bf16.msra.mxu0 %v4619
    %4778 = vmatprep.subr.bf16.mxu0 0
    %4779 = vmatpush1.bf16.msra.mxu0 %v4622
    %4780 = vmatprep.subr.bf16.mxu0 0
    %4781 = vmatpush1.bf16.msra.mxu0 %v4625
    %4782 = vmatprep.subr.bf16.mxu0 0
    %4783 = vmatpush1.bf16.msra.mxu0 %v4628
    %4784 = vmatprep.subr.bf16.mxu0 0
    %4785 = vmatpush1.bf16.msra.mxu0 %v4631
    %4786 = vmatprep.subr.bf16.mxu0 0
    %4787 = vmatpush1.bf16.msra.mxu0 %v4634
    %4788 = vmatprep.subr.bf16.mxu0 0
    %4789 = vmatpush1.bf16.msra.mxu0 0
    %4790 = vmatprep.subr.bf16.mxu0 0
    %4791 = vmatpush1.bf16.msra.mxu0 0
    %4792 = vmatprep.subr.bf16.mxu0 0
    %4793 = vmatpush1.bf16.msra.mxu0 0
    %4794 = vmatprep.subr.bf16.mxu0 0
    %4795 = vmatpush1.bf16.msra.mxu0 0
    %4796 = vmatprep.subr.bf16.mxu0 0
    %4797 = vmatpush1.bf16.msra.mxu0 0
    %4798 = vmatprep.subr.bf16.mxu0 0
    %4799 = vmatpush1.bf16.msra.mxu0 0
    %4800 = vmatprep.subr.bf16.mxu0 0
    %4801 = vmatpush1.bf16.msra.mxu0 0
    %4802 = vmatprep.subr.bf16.mxu0 0
    %4803 = vmatpush1.bf16.msra.mxu0 0
    %4804 = vmatprep.mubr.bf16.mxu0 0
    %4805 = vmatmul.mubr.bf16.gmra.mrb[0].mxu0 %v4472
    %v4806 = vpop.f32.mrb[0].mxu0
    %v4807 = vadd.f32 %v4527, %v4806
    %v4808 = vpop.f32.mrb[0].mxu0
    %v4809 = vpop.f32.mrb[0].mxu0
    %v4810 = vadd.f32 %v4527, %v4809
    %v4811 = vpop.f32.mrb[0].mxu0
    %4812 = vmatprep.mubr.bf16.mxu0 0
    %4813 = vmatmul.mubr.bf16.gmra.mrb[0].mxu0 %v4473
    %v4814 = vpop.f32.mrb[0].mxu0
    %v4815 = vadd.f32 %v4527, %v4814
    %v4816 = vpop.f32.mrb[0].mxu0
    %v4817 = vpop.f32.mrb[0].mxu0
    %v4818 = vadd.f32 %v4527, %v4817
    %v4819 = vpop.f32.mrb[0].mxu0
    %4820 = vmatprep.mubr.bf16.mxu0 0
    %4821 = vmatmul.mubr.bf16.gmra.mrb[0].mxu0 %v4474
    %v4822 = vpop.f32.mrb[0].mxu0
    %v4823 = vadd.f32 %v4527, %v4822
    %v4824 = vpop.f32.mrb[0].mxu0
    %v4825 = vpop.f32.mrb[0].mxu0
    %v4826 = vadd.f32 %v4527, %v4825
    %v4827 = vpop.f32.mrb[0].mxu0
    %4828 = vmatprep.mubr.bf16.mxu0 0
    %4829 = vmatmul.mubr.bf16.gmra.mrb[0].mxu0 %v4475
    %v4830 = vpop.f32.mrb[0].mxu0
    %v4831 = vadd.f32 %v4527, %v4830
    %v4832 = vpop.f32.mrb[0].mxu0
    %v4833 = vpop.f32.mrb[0].mxu0
    %v4834 = vadd.f32 %v4527, %v4833
    %v4835 = vpop.f32.mrb[0].mxu0
    %4836 = vmatprep.mubr.bf16.mxu0 0
    %4837 = vmatmul.mubr.bf16.gmra.mrb[0].mxu0 %v4476
    %v4838 = vpop.f32.mrb[0].mxu0
    %v4839 = vadd.f32 %v4527, %v4838
    %v4840 = vpop.f32.mrb[0].mxu0
    %v4841 = vpop.f32.mrb[0].mxu0
    %v4842 = vadd.f32 %v4527, %v4841
    %v4843 = vpop.f32.mrb[0].mxu0
    %4844 = vmatprep.mubr.bf16.mxu0 0
    %4845 = vmatmul.mubr.bf16.gmra.mrb[0].mxu0 %v4477
    %v4846 = vpop.f32.mrb[0].mxu0
    %v4847 = vadd.f32 %v4527, %v4846
    %v4848 = vpop.f32.mrb[0].mxu0
    %v4849 = vpop.f32.mrb[0].mxu0
    %v4850 = vadd.f32 %v4527, %v4849
    %v4851 = vpop.f32.mrb[0].mxu0
    %4852 = vmatprep.mubr.bf16.mxu0 0
    %4853 = vmatmul.mubr.bf16.gmra.mrb[0].mxu0 %v4478
    %v4854 = vpop.f32.mrb[0].mxu0
    %v4855 = vadd.f32 %v4527, %v4854
    %v4856 = vpop.f32.mrb[0].mxu0
    %v4857 = vpop.f32.mrb[0].mxu0
    %v4858 = vadd.f32 %v4527, %v4857
    %v4859 = vpop.f32.mrb[0].mxu0
    %4860 = vmatprep.mubr.bf16.mxu0 0
    %4861 = vmatmul.mubr.bf16.gmra.mrb[0].mxu0 %v4479
    %v4862 = vpop.f32.mrb[0].mxu0
    %v4863 = vadd.f32 %v4527, %v4862
    %v4864 = vpop.f32.mrb[0].mxu0
    %v4865 = vpop.f32.mrb[0].mxu0
    %v4866 = vadd.f32 %v4527, %v4865
    %v4867 = vpop.f32.mrb[0].mxu0
    %4868 = vdwg.mxu0
    %v4869 = vpack.c.bf16 %v4698, %v4694
    %v4870 = vpack.c.bf16 %v4708, %v4704
    %v4871 = vpack.c.bf16 %v4718, %v4714
    %v4872 = vpack.c.bf16 %v4728, %v4724
    %v4873 = vpack.c.bf16 %v4700, %v4696
    %v4874 = vpack.c.bf16 %v4710, %v4706
    %v4875 = vpack.c.bf16 %v4720, %v4716
    %v4876 = vpack.c.bf16 %v4730, %v4726
    %v4878 = vsel %vm697, %v4869, 0
    %v4881 = vsel %vm697, %v4870, 0
    %v4884 = vsel %vm697, %v4871, 0
    %v4887 = vsel %vm697, %v4872, 0
    %v4890 = vsel %vm697, %v4873, 0
    %v4893 = vsel %vm697, %v4874, 0
    %v4896 = vsel %vm697, %v4875, 0
    %v4899 = vsel %vm697, %v4876, 0
    %4901 = vmatprep.subr.bf16.mxu0 0
    %4902 = vmatpush1.bf16.xpose.msra.mxu0 %v4890
    %4903 = vmatprep.subr.bf16.mxu0 0
    %4904 = vmatpush1.bf16.xpose.msra.mxu0 %v4893
    %4905 = vmatprep.subr.bf16.mxu0 0
    %4906 = vmatpush1.bf16.xpose.msra.mxu0 %v4896
    %4907 = vmatprep.subr.bf16.mxu0 0
    %4908 = vmatpush1.bf16.xpose.msra.mxu0 %v4899
    %4909 = vmatprep.subr.bf16.mxu0 0
    %4910 = vmatpush1.bf16.xpose.msra.mxu0 0
    %4911 = vmatprep.subr.bf16.mxu0 0
    %4912 = vmatpush1.bf16.xpose.msra.mxu0 0
    %4913 = vmatprep.subr.bf16.mxu0 0
    %4914 = vmatpush1.bf16.xpose.msra.mxu0 0
    %4915 = vmatprep.subr.bf16.mxu0 0
    %4916 = vmatpush1.bf16.xpose.msra.mxu0 0
    %4917 = vmatprep.subr.bf16.mxu0 0
    %4918 = vmatpush1.bf16.xpose.msra.mxu0 0
    %4919 = vmatprep.subr.bf16.mxu0 0
    %4920 = vmatpush1.bf16.xpose.msra.mxu0 0
    %4921 = vmatprep.subr.bf16.mxu0 0
    %4922 = vmatpush1.bf16.xpose.msra.mxu0 0
    %4923 = vmatprep.subr.bf16.mxu0 0
    %4924 = vmatpush1.bf16.xpose.msra.mxu0 0
    %4925 = vmatprep.subr.bf16.mxu0 0
    %4926 = vmatpush1.bf16.xpose.msra.mxu0 0
    %4927 = vmatprep.subr.bf16.mxu0 0
    %4928 = vmatpush1.bf16.xpose.msra.mxu0 0
    %4929 = vmatprep.subr.bf16.mxu0 0
    %4930 = vmatpush1.bf16.xpose.msra.mxu0 0
    %4931 = vmatprep.subr.bf16.mxu0 0
    %4932 = vmatpush1.bf16.xpose.msra.mxu0 0
    %4933 = vmatprep.mubr.bf16.mxu0 0
    %4934 = vmatmul.mubr.bf16.gmra.mrb[0].mxu0 %v4878
    %v4935 = vpop.f32.mrb[0].mxu0
    %v4936 = vadd.f32 0.0, %v4935
    %v4937 = vpop.f32.mrb[0].mxu0
    %v4938 = vpop.f32.mrb[0].mxu0
    %v4939 = vadd.f32 0.0, %v4938
    %v4940 = vpop.f32.mrb[0].mxu0
    %4941 = vmatprep.mubr.bf16.mxu0 0
    %4942 = vmatmul.mubr.bf16.gmra.mrb[0].mxu0 %v4881
    %v4943 = vpop.f32.mrb[0].mxu0
    %v4944 = vadd.f32 0.0, %v4943
    %v4945 = vpop.f32.mrb[0].mxu0
    %v4946 = vpop.f32.mrb[0].mxu0
    %v4947 = vadd.f32 0.0, %v4946
    %v4948 = vpop.f32.mrb[0].mxu0
    %4949 = vmatprep.mubr.bf16.mxu0 0
    %4950 = vmatmul.mubr.bf16.gmra.mrb[0].mxu0 %v4884
    %v4951 = vpop.f32.mrb[0].mxu0
    %v4952 = vadd.f32 0.0, %v4951
    %v4953 = vpop.f32.mrb[0].mxu0
    %v4954 = vpop.f32.mrb[0].mxu0
    %v4955 = vadd.f32 0.0, %v4954
    %v4956 = vpop.f32.mrb[0].mxu0
    %4957 = vmatprep.mubr.bf16.mxu0 0
    %4958 = vmatmul.mubr.bf16.gmra.mrb[0].mxu0 %v4887
    %v4959 = vpop.f32.mrb[0].mxu0
    %v4960 = vadd.f32 0.0, %v4959
    %v4961 = vpop.f32.mrb[0].mxu0
    %v4962 = vpop.f32.mrb[0].mxu0
    %v4963 = vadd.f32 0.0, %v4962
    %v4964 = vpop.f32.mrb[0].mxu0
    %4965 = vdwg.mxu0
    %4970 = vrot.lane.b32.xlu0 %v4869, 96
    %v4971 = vpop.permute.xlu0 %4970
    %4972 = vrot.lane.b32.xlu0 %v4870, 96
    %v4973 = vpop.permute.xlu0 %4972
    %4974 = vrot.lane.b32.xlu0 %v4871, 96
    %v4975 = vpop.permute.xlu0 %4974
    %4976 = vrot.lane.b32.xlu0 %v4872, 96
    %v4977 = vpop.permute.xlu0 %4976
    %4982 = vrot.lane.b32.xlu0 %v4873, 96
    %v4983 = vpop.permute.xlu0 %4982
    %4984 = vrot.lane.b32.xlu0 %v4874, 96
    %v4985 = vpop.permute.xlu0 %4984
    %4986 = vrot.lane.b32.xlu0 %v4875, 96
    %v4987 = vpop.permute.xlu0 %4986
    %4988 = vrot.lane.b32.xlu0 %v4876, 96
    %v4989 = vpop.permute.xlu0 %4988
    %v4991 = vsel %vm697, %v4971, 0
    %v4994 = vsel %vm697, %v4973, 0
    %v4997 = vsel %vm697, %v4975, 0
    %v5000 = vsel %vm697, %v4977, 0
    %v5003 = vsel %vm697, %v4983, 0
    %v5006 = vsel %vm697, %v4985, 0
    %v5009 = vsel %vm697, %v4987, 0
    %v5012 = vsel %vm697, %v4989, 0
    %5014 = vmatprep.subr.bf16.mxu0 0
    %5015 = vmatpush1.bf16.xpose.msra.mxu0 %v5003
    %5016 = vmatprep.subr.bf16.mxu0 0
    %5017 = vmatpush1.bf16.xpose.msra.mxu0 %v5006
    %5018 = vmatprep.subr.bf16.mxu0 0
    %5019 = vmatpush1.bf16.xpose.msra.mxu0 %v5009
    %5020 = vmatprep.subr.bf16.mxu0 0
    %5021 = vmatpush1.bf16.xpose.msra.mxu0 %v5012
    %5022 = vmatprep.subr.bf16.mxu0 0
    %5023 = vmatpush1.bf16.xpose.msra.mxu0 0
    %5024 = vmatprep.subr.bf16.mxu0 0
    %5025 = vmatpush1.bf16.xpose.msra.mxu0 0
    %5026 = vmatprep.subr.bf16.mxu0 0
    %5027 = vmatpush1.bf16.xpose.msra.mxu0 0
    %5028 = vmatprep.subr.bf16.mxu0 0
    %5029 = vmatpush1.bf16.xpose.msra.mxu0 0
    %5030 = vmatprep.subr.bf16.mxu0 0
    %5031 = vmatpush1.bf16.xpose.msra.mxu0 0
    %5032 = vmatprep.subr.bf16.mxu0 0
    %5033 = vmatpush1.bf16.xpose.msra.mxu0 0
    %5034 = vmatprep.subr.bf16.mxu0 0
    %5035 = vmatpush1.bf16.xpose.msra.mxu0 0
    %5036 = vmatprep.subr.bf16.mxu0 0
    %5037 = vmatpush1.bf16.xpose.msra.mxu0 0
    %5038 = vmatprep.subr.bf16.mxu0 0
    %5039 = vmatpush1.bf16.xpose.msra.mxu0 0
    %5040 = vmatprep.subr.bf16.mxu0 0
    %5041 = vmatpush1.bf16.xpose.msra.mxu0 0
    %5042 = vmatprep.subr.bf16.mxu0 0
    %5043 = vmatpush1.bf16.xpose.msra.mxu0 0
    %5044 = vmatprep.subr.bf16.mxu0 0
    %5045 = vmatpush1.bf16.xpose.msra.mxu0 0
    %5046 = vmatprep.mubr.bf16.mxu0 0
    %5047 = vmatmul.mubr.bf16.gmra.mrb[0].mxu0 %v4991
    %v5048 = vpop.f32.mrb[0].mxu0
    %v5049 = vadd.f32 0.0, %v5048
    %v5050 = vpop.f32.mrb[0].mxu0
    %v5051 = vpop.f32.mrb[0].mxu0
    %v5052 = vadd.f32 0.0, %v5051
    %v5053 = vpop.f32.mrb[0].mxu0
    %5054 = vmatprep.mubr.bf16.mxu0 0
    %5055 = vmatmul.mubr.bf16.gmra.mrb[0].mxu0 %v4994
    %v5056 = vpop.f32.mrb[0].mxu0
    %v5057 = vadd.f32 0.0, %v5056
    %v5058 = vpop.f32.mrb[0].mxu0
    %v5059 = vpop.f32.mrb[0].mxu0
    %v5060 = vadd.f32 0.0, %v5059
    %v5061 = vpop.f32.mrb[0].mxu0
    %5062 = vmatprep.mubr.bf16.mxu0 0
    %5063 = vmatmul.mubr.bf16.gmra.mrb[0].mxu0 %v4997
    %v5064 = vpop.f32.mrb[0].mxu0
    %v5065 = vadd.f32 0.0, %v5064
    %v5066 = vpop.f32.mrb[0].mxu0
    %v5067 = vpop.f32.mrb[0].mxu0
    %v5068 = vadd.f32 0.0, %v5067
    %v5069 = vpop.f32.mrb[0].mxu0
    %5070 = vmatprep.mubr.bf16.mxu0 0
    %5071 = vmatmul.mubr.bf16.gmra.mrb[0].mxu0 %v5000
    %v5072 = vpop.f32.mrb[0].mxu0
    %v5073 = vadd.f32 0.0, %v5072
    %v5074 = vpop.f32.mrb[0].mxu0
    %v5075 = vpop.f32.mrb[0].mxu0
    %v5076 = vadd.f32 0.0, %v5075
    %v5077 = vpop.f32.mrb[0].mxu0
    %5078 = vdwg.mxu0
    %5079 = vrot.lane.b32.xlu0 %v4869, 64
    %v5080 = vpop.permute.xlu0 %5079
    %5081 = vrot.lane.b32.xlu0 %v4870, 64
    %v5082 = vpop.permute.xlu0 %5081
    %5083 = vrot.lane.b32.xlu0 %v4871, 64
    %v5084 = vpop.permute.xlu0 %5083
    %5085 = vrot.lane.b32.xlu0 %v4872, 64
    %v5086 = vpop.permute.xlu0 %5085
    %5087 = vrot.lane.b32.xlu0 %v4873, 64
    %v5088 = vpop.permute.xlu0 %5087
    %5089 = vrot.lane.b32.xlu0 %v4874, 64
    %v5090 = vpop.permute.xlu0 %5089
    %5091 = vrot.lane.b32.xlu0 %v4875, 64
    %v5092 = vpop.permute.xlu0 %5091
    %5093 = vrot.lane.b32.xlu0 %v4876, 64
    %v5094 = vpop.permute.xlu0 %5093
    %v5096 = vsel %vm697, %v5080, 0
    %v5099 = vsel %vm697, %v5082, 0
    %v5102 = vsel %vm697, %v5084, 0
    %v5105 = vsel %vm697, %v5086, 0
    %v5108 = vsel %vm697, %v5088, 0
    %v5111 = vsel %vm697, %v5090, 0
    %v5114 = vsel %vm697, %v5092, 0
    %v5117 = vsel %vm697, %v5094, 0
    %5119 = vmatprep.subr.bf16.mxu0 0
    %5120 = vmatpush1.bf16.xpose.msra.mxu0 %v5108
    %5121 = vmatprep.subr.bf16.mxu0 0
    %5122 = vmatpush1.bf16.xpose.msra.mxu0 %v5111
    %5123 = vmatprep.subr.bf16.mxu0 0
    %5124 = vmatpush1.bf16.xpose.msra.mxu0 %v5114
    %5125 = vmatprep.subr.bf16.mxu0 0
    %5126 = vmatpush1.bf16.xpose.msra.mxu0 %v5117
    %5127 = vmatprep.subr.bf16.mxu0 0
    %5128 = vmatpush1.bf16.xpose.msra.mxu0 0
    %5129 = vmatprep.subr.bf16.mxu0 0
    %5130 = vmatpush1.bf16.xpose.msra.mxu0 0
    %5131 = vmatprep.subr.bf16.mxu0 0
    %5132 = vmatpush1.bf16.xpose.msra.mxu0 0
    %5133 = vmatprep.subr.bf16.mxu0 0
    %5134 = vmatpush1.bf16.xpose.msra.mxu0 0
    %5135 = vmatprep.subr.bf16.mxu0 0
    %5136 = vmatpush1.bf16.xpose.msra.mxu0 0
    %5137 = vmatprep.subr.bf16.mxu0 0
    %5138 = vmatpush1.bf16.xpose.msra.mxu0 0
    %5139 = vmatprep.subr.bf16.mxu0 0
    %5140 = vmatpush1.bf16.xpose.msra.mxu0 0
    %5141 = vmatprep.subr.bf16.mxu0 0
    %5142 = vmatpush1.bf16.xpose.msra.mxu0 0
    %5143 = vmatprep.subr.bf16.mxu0 0
    %5144 = vmatpush1.bf16.xpose.msra.mxu0 0
    %5145 = vmatprep.subr.bf16.mxu0 0
    %5146 = vmatpush1.bf16.xpose.msra.mxu0 0
    %5147 = vmatprep.subr.bf16.mxu0 0
    %5148 = vmatpush1.bf16.xpose.msra.mxu0 0
    %5149 = vmatprep.subr.bf16.mxu0 0
    %5150 = vmatpush1.bf16.xpose.msra.mxu0 0
    %5151 = vmatprep.mubr.bf16.mxu0 0
    %5152 = vmatmul.mubr.bf16.gmra.mrb[0].mxu0 %v5096
    %v5153 = vpop.f32.mrb[0].mxu0
    %v5154 = vadd.f32 0.0, %v5153
    %v5155 = vpop.f32.mrb[0].mxu0
    %v5156 = vpop.f32.mrb[0].mxu0
    %v5157 = vadd.f32 0.0, %v5156
    %v5158 = vpop.f32.mrb[0].mxu0
    %5159 = vmatprep.mubr.bf16.mxu0 0
    %5160 = vmatmul.mubr.bf16.gmra.mrb[0].mxu0 %v5099
    %v5161 = vpop.f32.mrb[0].mxu0
    %v5162 = vadd.f32 0.0, %v5161
    %v5163 = vpop.f32.mrb[0].mxu0
    %v5164 = vpop.f32.mrb[0].mxu0
    %v5165 = vadd.f32 0.0, %v5164
    %v5166 = vpop.f32.mrb[0].mxu0
    %5167 = vmatprep.mubr.bf16.mxu0 0
    %5168 = vmatmul.mubr.bf16.gmra.mrb[0].mxu0 %v5102
    %v5169 = vpop.f32.mrb[0].mxu0
    %v5170 = vadd.f32 0.0, %v5169
    %v5171 = vpop.f32.mrb[0].mxu0
    %v5172 = vpop.f32.mrb[0].mxu0
    %v5173 = vadd.f32 0.0, %v5172
    %v5174 = vpop.f32.mrb[0].mxu0
    %5175 = vmatprep.mubr.bf16.mxu0 0
    %5176 = vmatmul.mubr.bf16.gmra.mrb[0].mxu0 %v5105
    %v5177 = vpop.f32.mrb[0].mxu0
    %v5178 = vadd.f32 0.0, %v5177
    %v5179 = vpop.f32.mrb[0].mxu0
    %v5180 = vpop.f32.mrb[0].mxu0
    %v5181 = vadd.f32 0.0, %v5180
    %v5182 = vpop.f32.mrb[0].mxu0
    %5183 = vdwg.mxu0
    %5184 = vrot.lane.b32.xlu0 %v4869, 32
    %v5185 = vpop.permute.xlu0 %5184
    %5186 = vrot.lane.b32.xlu0 %v4870, 32
    %v5187 = vpop.permute.xlu0 %5186
    %5188 = vrot.lane.b32.xlu0 %v4871, 32
    %v5189 = vpop.permute.xlu0 %5188
    %5190 = vrot.lane.b32.xlu0 %v4872, 32
    %v5191 = vpop.permute.xlu0 %5190
    %5192 = vrot.lane.b32.xlu0 %v4873, 32
    %v5193 = vpop.permute.xlu0 %5192
    %5194 = vrot.lane.b32.xlu0 %v4874, 32
    %v5195 = vpop.permute.xlu0 %5194
    %5196 = vrot.lane.b32.xlu0 %v4875, 32
    %v5197 = vpop.permute.xlu0 %5196
    %5198 = vrot.lane.b32.xlu0 %v4876, 32
    %v5199 = vpop.permute.xlu0 %5198
    %v5201 = vsel %vm697, %v5185, 0
    %v5204 = vsel %vm697, %v5187, 0
    %v5207 = vsel %vm697, %v5189, 0
    %v5210 = vsel %vm697, %v5191, 0
    %v5213 = vsel %vm697, %v5193, 0
    %v5216 = vsel %vm697, %v5195, 0
    %v5219 = vsel %vm697, %v5197, 0
    %v5222 = vsel %vm697, %v5199, 0
    %5224 = vmatprep.subr.bf16.mxu0 0
    %5225 = vmatpush1.bf16.xpose.msra.mxu0 %v5213
    %5226 = vmatprep.subr.bf16.mxu0 0
    %5227 = vmatpush1.bf16.xpose.msra.mxu0 %v5216
    %5228 = vmatprep.subr.bf16.mxu0 0
    %5229 = vmatpush1.bf16.xpose.msra.mxu0 %v5219
    %5230 = vmatprep.subr.bf16.mxu0 0
    %5231 = vmatpush1.bf16.xpose.msra.mxu0 %v5222
    %5232 = vmatprep.subr.bf16.mxu0 0
    %5233 = vmatpush1.bf16.xpose.msra.mxu0 0
    %5234 = vmatprep.subr.bf16.mxu0 0
    %5235 = vmatpush1.bf16.xpose.msra.mxu0 0
    %5236 = vmatprep.subr.bf16.mxu0 0
    %5237 = vmatpush1.bf16.xpose.msra.mxu0 0
    %5238 = vmatprep.subr.bf16.mxu0 0
    %5239 = vmatpush1.bf16.xpose.msra.mxu0 0
    %5240 = vmatprep.subr.bf16.mxu0 0
    %5241 = vmatpush1.bf16.xpose.msra.mxu0 0
    %5242 = vmatprep.subr.bf16.mxu0 0
    %5243 = vmatpush1.bf16.xpose.msra.mxu0 0
    %5244 = vmatprep.subr.bf16.mxu0 0
    %5245 = vmatpush1.bf16.xpose.msra.mxu0 0
    %5246 = vmatprep.subr.bf16.mxu0 0
    %5247 = vmatpush1.bf16.xpose.msra.mxu0 0
    %5248 = vmatprep.subr.bf16.mxu0 0
    %5249 = vmatpush1.bf16.xpose.msra.mxu0 0
    %5250 = vmatprep.subr.bf16.mxu0 0
    %5251 = vmatpush1.bf16.xpose.msra.mxu0 0
    %5252 = vmatprep.subr.bf16.mxu0 0
    %5253 = vmatpush1.bf16.xpose.msra.mxu0 0
    %5254 = vmatprep.subr.bf16.mxu0 0
    %5255 = vmatpush1.bf16.xpose.msra.mxu0 0
    %5256 = vmatprep.mubr.bf16.mxu0 0
    %5257 = vmatmul.mubr.bf16.gmra.mrb[0].mxu0 %v5201
    %v5258 = vpop.f32.mrb[0].mxu0
    %v5259 = vadd.f32 0.0, %v5258
    %v5260 = vpop.f32.mrb[0].mxu0
    %v5261 = vpop.f32.mrb[0].mxu0
    %v5262 = vadd.f32 0.0, %v5261
    %v5263 = vpop.f32.mrb[0].mxu0
    %5264 = vmatprep.mubr.bf16.mxu0 0
    %5265 = vmatmul.mubr.bf16.gmra.mrb[0].mxu0 %v5204
    %v5266 = vpop.f32.mrb[0].mxu0
    %v5267 = vadd.f32 0.0, %v5266
    %v5268 = vpop.f32.mrb[0].mxu0
    %v5269 = vpop.f32.mrb[0].mxu0
    %v5270 = vadd.f32 0.0, %v5269
    %v5271 = vpop.f32.mrb[0].mxu0
    %5272 = vmatprep.mubr.bf16.mxu0 0
    %5273 = vmatmul.mubr.bf16.gmra.mrb[0].mxu0 %v5207
    %v5274 = vpop.f32.mrb[0].mxu0
    %v5275 = vadd.f32 0.0, %v5274
    %v5276 = vpop.f32.mrb[0].mxu0
    %v5277 = vpop.f32.mrb[0].mxu0
    %v5278 = vadd.f32 0.0, %v5277
    %v5279 = vpop.f32.mrb[0].mxu0
    %5280 = vmatprep.mubr.bf16.mxu0 0
    %5281 = vmatmul.mubr.bf16.gmra.mrb[0].mxu0 %v5210
    %v5282 = vpop.f32.mrb[0].mxu0
    %v5283 = vadd.f32 0.0, %v5282
    %v5284 = vpop.f32.mrb[0].mxu0
    %v5285 = vpop.f32.mrb[0].mxu0
    %v5286 = vadd.f32 0.0, %v5285
    %v5287 = vpop.f32.mrb[0].mxu0
    %5288 = vdwg.mxu0
    %v5289 = vpack.c.bf16 %v4738, %v4734
    %v5290 = vpack.c.bf16 %v4748, %v4744
    %v5291 = vpack.c.bf16 %v4758, %v4754
    %v5292 = vpack.c.bf16 %v4768, %v4764
    %v5293 = vpack.c.bf16 %v4740, %v4736
    %v5294 = vpack.c.bf16 %v4750, %v4746
    %v5295 = vpack.c.bf16 %v4760, %v4756
    %v5296 = vpack.c.bf16 %v4770, %v4766
    %v5298 = vsel %vm697, %v5289, 0
    %v5301 = vsel %vm697, %v5290, 0
    %v5304 = vsel %vm697, %v5291, 0
    %v5307 = vsel %vm697, %v5292, 0
    %v5310 = vsel %vm697, %v5293, 0
    %v5313 = vsel %vm697, %v5294, 0
    %v5316 = vsel %vm697, %v5295, 0
    %v5319 = vsel %vm697, %v5296, 0
    %5321 = vmatprep.subr.bf16.mxu0 0
    %5322 = vmatpush1.bf16.xpose.msra.mxu0 %v5310
    %5323 = vmatprep.subr.bf16.mxu0 0
    %5324 = vmatpush1.bf16.xpose.msra.mxu0 %v5313
    %5325 = vmatprep.subr.bf16.mxu0 0
    %5326 = vmatpush1.bf16.xpose.msra.mxu0 %v5316
    %5327 = vmatprep.subr.bf16.mxu0 0
    %5328 = vmatpush1.bf16.xpose.msra.mxu0 %v5319
    %5329 = vmatprep.subr.bf16.mxu0 0
    %5330 = vmatpush1.bf16.xpose.msra.mxu0 0
    %5331 = vmatprep.subr.bf16.mxu0 0
    %5332 = vmatpush1.bf16.xpose.msra.mxu0 0
    %5333 = vmatprep.subr.bf16.mxu0 0
    %5334 = vmatpush1.bf16.xpose.msra.mxu0 0
    %5335 = vmatprep.subr.bf16.mxu0 0
    %5336 = vmatpush1.bf16.xpose.msra.mxu0 0
    %5337 = vmatprep.subr.bf16.mxu0 0
    %5338 = vmatpush1.bf16.xpose.msra.mxu0 0
    %5339 = vmatprep.subr.bf16.mxu0 0
    %5340 = vmatpush1.bf16.xpose.msra.mxu0 0
    %5341 = vmatprep.subr.bf16.mxu0 0
    %5342 = vmatpush1.bf16.xpose.msra.mxu0 0
    %5343 = vmatprep.subr.bf16.mxu0 0
    %5344 = vmatpush1.bf16.xpose.msra.mxu0 0
    %5345 = vmatprep.subr.bf16.mxu0 0
    %5346 = vmatpush1.bf16.xpose.msra.mxu0 0
    %5347 = vmatprep.subr.bf16.mxu0 0
    %5348 = vmatpush1.bf16.xpose.msra.mxu0 0
    %5349 = vmatprep.subr.bf16.mxu0 0
    %5350 = vmatpush1.bf16.xpose.msra.mxu0 0
    %5351 = vmatprep.subr.bf16.mxu0 0
    %5352 = vmatpush1.bf16.xpose.msra.mxu0 0
    %5353 = vmatprep.mubr.bf16.mxu0 0
    %5354 = vmatmul.mubr.bf16.gmra.mrb[0].mxu0 %v5298
    %v5355 = vpop.f32.mrb[0].mxu0
    %v5356 = vadd.f32 0.0, %v5355
    %v5357 = vpop.f32.mrb[0].mxu0
    %v5358 = vpop.f32.mrb[0].mxu0
    %v5359 = vadd.f32 0.0, %v5358
    %v5360 = vpop.f32.mrb[0].mxu0
    %5361 = vmatprep.mubr.bf16.mxu0 0
    %5362 = vmatmul.mubr.bf16.gmra.mrb[0].mxu0 %v5301
    %v5363 = vpop.f32.mrb[0].mxu0
    %v5364 = vadd.f32 0.0, %v5363
    %v5365 = vpop.f32.mrb[0].mxu0
    %v5366 = vpop.f32.mrb[0].mxu0
    %v5367 = vadd.f32 0.0, %v5366
    %v5368 = vpop.f32.mrb[0].mxu0
    %5369 = vmatprep.mubr.bf16.mxu0 0
    %5370 = vmatmul.mubr.bf16.gmra.mrb[0].mxu0 %v5304
    %v5371 = vpop.f32.mrb[0].mxu0
    %v5372 = vadd.f32 0.0, %v5371
    %v5373 = vpop.f32.mrb[0].mxu0
    %v5374 = vpop.f32.mrb[0].mxu0
    %v5375 = vadd.f32 0.0, %v5374
    %v5376 = vpop.f32.mrb[0].mxu0
    %5377 = vmatprep.mubr.bf16.mxu0 0
    %5378 = vmatmul.mubr.bf16.gmra.mrb[0].mxu0 %v5307
    %v5379 = vpop.f32.mrb[0].mxu0
    %v5380 = vadd.f32 0.0, %v5379
    %v5381 = vpop.f32.mrb[0].mxu0
    %v5382 = vpop.f32.mrb[0].mxu0
    %v5383 = vadd.f32 0.0, %v5382
    %v5384 = vpop.f32.mrb[0].mxu0
    %5385 = vdwg.mxu0
    %5390 = vrot.lane.b32.xlu0 %v5289, 96
    %v5391 = vpop.permute.xlu0 %5390
    %5392 = vrot.lane.b32.xlu0 %v5290, 96
    %v5393 = vpop.permute.xlu0 %5392
    %5394 = vrot.lane.b32.xlu0 %v5291, 96
    %v5395 = vpop.permute.xlu0 %5394
    %5396 = vrot.lane.b32.xlu0 %v5292, 96
    %v5397 = vpop.permute.xlu0 %5396
    %5402 = vrot.lane.b32.xlu0 %v5293, 96
    %v5403 = vpop.permute.xlu0 %5402
    %5404 = vrot.lane.b32.xlu0 %v5294, 96
    %v5405 = vpop.permute.xlu0 %5404
    %5406 = vrot.lane.b32.xlu0 %v5295, 96
    %v5407 = vpop.permute.xlu0 %5406
    %5408 = vrot.lane.b32.xlu0 %v5296, 96
    %v5409 = vpop.permute.xlu0 %5408
    %v5411 = vsel %vm697, %v5391, 0
    %v5414 = vsel %vm697, %v5393, 0
    %v5417 = vsel %vm697, %v5395, 0
    %v5420 = vsel %vm697, %v5397, 0
    %v5423 = vsel %vm697, %v5403, 0
    %v5426 = vsel %vm697, %v5405, 0
    %v5429 = vsel %vm697, %v5407, 0
    %v5432 = vsel %vm697, %v5409, 0
    %5434 = vmatprep.subr.bf16.mxu0 0
    %5435 = vmatpush1.bf16.xpose.msra.mxu0 %v5423
    %5436 = vmatprep.subr.bf16.mxu0 0
    %5437 = vmatpush1.bf16.xpose.msra.mxu0 %v5426
    %5438 = vmatprep.subr.bf16.mxu0 0
    %5439 = vmatpush1.bf16.xpose.msra.mxu0 %v5429
    %5440 = vmatprep.subr.bf16.mxu0 0
    %5441 = vmatpush1.bf16.xpose.msra.mxu0 %v5432
    %5442 = vmatprep.subr.bf16.mxu0 0
    %5443 = vmatpush1.bf16.xpose.msra.mxu0 0
    %5444 = vmatprep.subr.bf16.mxu0 0
    %5445 = vmatpush1.bf16.xpose.msra.mxu0 0
    %5446 = vmatprep.subr.bf16.mxu0 0
    %5447 = vmatpush1.bf16.xpose.msra.mxu0 0
    %5448 = vmatprep.subr.bf16.mxu0 0
    %5449 = vmatpush1.bf16.xpose.msra.mxu0 0
    %5450 = vmatprep.subr.bf16.mxu0 0
    %5451 = vmatpush1.bf16.xpose.msra.mxu0 0
    %5452 = vmatprep.subr.bf16.mxu0 0
    %5453 = vmatpush1.bf16.xpose.msra.mxu0 0
    %5454 = vmatprep.subr.bf16.mxu0 0
    %5455 = vmatpush1.bf16.xpose.msra.mxu0 0
    %5456 = vmatprep.subr.bf16.mxu0 0
    %5457 = vmatpush1.bf16.xpose.msra.mxu0 0
    %5458 = vmatprep.subr.bf16.mxu0 0
    %5459 = vmatpush1.bf16.xpose.msra.mxu0 0
    %5460 = vmatprep.subr.bf16.mxu0 0
    %5461 = vmatpush1.bf16.xpose.msra.mxu0 0
    %5462 = vmatprep.subr.bf16.mxu0 0
    %5463 = vmatpush1.bf16.xpose.msra.mxu0 0
    %5464 = vmatprep.subr.bf16.mxu0 0
    %5465 = vmatpush1.bf16.xpose.msra.mxu0 0
    %5466 = vmatprep.mubr.bf16.mxu0 0
    %5467 = vmatmul.mubr.bf16.gmra.mrb[0].mxu0 %v5411
    %v5468 = vpop.f32.mrb[0].mxu0
    %v5469 = vadd.f32 0.0, %v5468
    %v5470 = vpop.f32.mrb[0].mxu0
    %v5471 = vpop.f32.mrb[0].mxu0
    %v5472 = vadd.f32 0.0, %v5471
    %v5473 = vpop.f32.mrb[0].mxu0
    %5474 = vmatprep.mubr.bf16.mxu0 0
    %5475 = vmatmul.mubr.bf16.gmra.mrb[0].mxu0 %v5414
    %v5476 = vpop.f32.mrb[0].mxu0
    %v5477 = vadd.f32 0.0, %v5476
    %v5478 = vpop.f32.mrb[0].mxu0
    %v5479 = vpop.f32.mrb[0].mxu0
    %v5480 = vadd.f32 0.0, %v5479
    %v5481 = vpop.f32.mrb[0].mxu0
    %5482 = vmatprep.mubr.bf16.mxu0 0
    %5483 = vmatmul.mubr.bf16.gmra.mrb[0].mxu0 %v5417
    %v5484 = vpop.f32.mrb[0].mxu0
    %v5485 = vadd.f32 0.0, %v5484
    %v5486 = vpop.f32.mrb[0].mxu0
    %v5487 = vpop.f32.mrb[0].mxu0
    %v5488 = vadd.f32 0.0, %v5487
    %v5489 = vpop.f32.mrb[0].mxu0
    %5490 = vmatprep.mubr.bf16.mxu0 0
    %5491 = vmatmul.mubr.bf16.gmra.mrb[0].mxu0 %v5420
    %v5492 = vpop.f32.mrb[0].mxu0
    %v5493 = vadd.f32 0.0, %v5492
    %v5494 = vpop.f32.mrb[0].mxu0
    %v5495 = vpop.f32.mrb[0].mxu0
    %v5496 = vadd.f32 0.0, %v5495
    %v5497 = vpop.f32.mrb[0].mxu0
    %5498 = vdwg.mxu0
    %5499 = vrot.lane.b32.xlu0 %v5289, 64
    %v5500 = vpop.permute.xlu0 %5499
    %5501 = vrot.lane.b32.xlu0 %v5290, 64
    %v5502 = vpop.permute.xlu0 %5501
    %5503 = vrot.lane.b32.xlu0 %v5291, 64
    %v5504 = vpop.permute.xlu0 %5503
    %5505 = vrot.lane.b32.xlu0 %v5292, 64
    %v5506 = vpop.permute.xlu0 %5505
    %5507 = vrot.lane.b32.xlu0 %v5293, 64
    %v5508 = vpop.permute.xlu0 %5507
    %5509 = vrot.lane.b32.xlu0 %v5294, 64
    %v5510 = vpop.permute.xlu0 %5509
    %5511 = vrot.lane.b32.xlu0 %v5295, 64
    %v5512 = vpop.permute.xlu0 %5511
    %5513 = vrot.lane.b32.xlu0 %v5296, 64
    %v5514 = vpop.permute.xlu0 %5513
    %v5516 = vsel %vm697, %v5500, 0
    %v5519 = vsel %vm697, %v5502, 0
    %v5522 = vsel %vm697, %v5504, 0
    %v5525 = vsel %vm697, %v5506, 0
    %v5528 = vsel %vm697, %v5508, 0
    %v5531 = vsel %vm697, %v5510, 0
    %v5534 = vsel %vm697, %v5512, 0
    %v5537 = vsel %vm697, %v5514, 0
    %5539 = vmatprep.subr.bf16.mxu0 0
    %5540 = vmatpush1.bf16.xpose.msra.mxu0 %v5528
    %5541 = vmatprep.subr.bf16.mxu0 0
    %5542 = vmatpush1.bf16.xpose.msra.mxu0 %v5531
    %5543 = vmatprep.subr.bf16.mxu0 0
    %5544 = vmatpush1.bf16.xpose.msra.mxu0 %v5534
    %5545 = vmatprep.subr.bf16.mxu0 0
    %5546 = vmatpush1.bf16.xpose.msra.mxu0 %v5537
    %5547 = vmatprep.subr.bf16.mxu0 0
    %5548 = vmatpush1.bf16.xpose.msra.mxu0 0
    %5549 = vmatprep.subr.bf16.mxu0 0
    %5550 = vmatpush1.bf16.xpose.msra.mxu0 0
    %5551 = vmatprep.subr.bf16.mxu0 0
    %5552 = vmatpush1.bf16.xpose.msra.mxu0 0
    %5553 = vmatprep.subr.bf16.mxu0 0
    %5554 = vmatpush1.bf16.xpose.msra.mxu0 0
    %5555 = vmatprep.subr.bf16.mxu0 0
    %5556 = vmatpush1.bf16.xpose.msra.mxu0 0
    %5557 = vmatprep.subr.bf16.mxu0 0
    %5558 = vmatpush1.bf16.xpose.msra.mxu0 0
    %5559 = vmatprep.subr.bf16.mxu0 0
    %5560 = vmatpush1.bf16.xpose.msra.mxu0 0
    %5561 = vmatprep.subr.bf16.mxu0 0
    %5562 = vmatpush1.bf16.xpose.msra.mxu0 0
    %5563 = vmatprep.subr.bf16.mxu0 0
    %5564 = vmatpush1.bf16.xpose.msra.mxu0 0
    %5565 = vmatprep.subr.bf16.mxu0 0
    %5566 = vmatpush1.bf16.xpose.msra.mxu0 0
    %5567 = vmatprep.subr.bf16.mxu0 0
    %5568 = vmatpush1.bf16.xpose.msra.mxu0 0
    %5569 = vmatprep.subr.bf16.mxu0 0
    %5570 = vmatpush1.bf16.xpose.msra.mxu0 0
    %5571 = vmatprep.mubr.bf16.mxu0 0
    %5572 = vmatmul.mubr.bf16.gmra.mrb[0].mxu0 %v5516
    %v5573 = vpop.f32.mrb[0].mxu0
    %v5574 = vadd.f32 0.0, %v5573
    %v5575 = vpop.f32.mrb[0].mxu0
    %v5576 = vpop.f32.mrb[0].mxu0
    %v5577 = vadd.f32 0.0, %v5576
    %v5578 = vpop.f32.mrb[0].mxu0
    %5579 = vmatprep.mubr.bf16.mxu0 0
    %5580 = vmatmul.mubr.bf16.gmra.mrb[0].mxu0 %v5519
    %v5581 = vpop.f32.mrb[0].mxu0
    %v5582 = vadd.f32 0.0, %v5581
    %v5583 = vpop.f32.mrb[0].mxu0
    %v5584 = vpop.f32.mrb[0].mxu0
    %v5585 = vadd.f32 0.0, %v5584
    %v5586 = vpop.f32.mrb[0].mxu0
    %5587 = vmatprep.mubr.bf16.mxu0 0
    %5588 = vmatmul.mubr.bf16.gmra.mrb[0].mxu0 %v5522
    %v5589 = vpop.f32.mrb[0].mxu0
    %v5590 = vadd.f32 0.0, %v5589
    %v5591 = vpop.f32.mrb[0].mxu0
    %v5592 = vpop.f32.mrb[0].mxu0
    %v5593 = vadd.f32 0.0, %v5592
    %v5594 = vpop.f32.mrb[0].mxu0
    %5595 = vmatprep.mubr.bf16.mxu0 0
    %5596 = vmatmul.mubr.bf16.gmra.mrb[0].mxu0 %v5525
    %v5597 = vpop.f32.mrb[0].mxu0
    %v5598 = vadd.f32 0.0, %v5597
    %v5599 = vpop.f32.mrb[0].mxu0
    %v5600 = vpop.f32.mrb[0].mxu0
    %v5601 = vadd.f32 0.0, %v5600
    %v5602 = vpop.f32.mrb[0].mxu0
    %5603 = vdwg.mxu0
    %5604 = vrot.lane.b32.xlu0 %v5289, 32
    %v5605 = vpop.permute.xlu0 %5604
    %5606 = vrot.lane.b32.xlu0 %v5290, 32
    %v5607 = vpop.permute.xlu0 %5606
    %5608 = vrot.lane.b32.xlu0 %v5291, 32
    %v5609 = vpop.permute.xlu0 %5608
    %5610 = vrot.lane.b32.xlu0 %v5292, 32
    %v5611 = vpop.permute.xlu0 %5610
    %5612 = vrot.lane.b32.xlu0 %v5293, 32
    %v5613 = vpop.permute.xlu0 %5612
    %5614 = vrot.lane.b32.xlu0 %v5294, 32
    %v5615 = vpop.permute.xlu0 %5614
    %5616 = vrot.lane.b32.xlu0 %v5295, 32
    %v5617 = vpop.permute.xlu0 %5616
    %5618 = vrot.lane.b32.xlu0 %v5296, 32
    %v5619 = vpop.permute.xlu0 %5618
    %v5621 = vsel %vm697, %v5605, 0
    %v5624 = vsel %vm697, %v5607, 0
    %v5627 = vsel %vm697, %v5609, 0
    %v5630 = vsel %vm697, %v5611, 0
    %v5633 = vsel %vm697, %v5613, 0
    %v5636 = vsel %vm697, %v5615, 0
    %v5639 = vsel %vm697, %v5617, 0
    %v5642 = vsel %vm697, %v5619, 0
    %5644 = vmatprep.subr.bf16.mxu0 0
    %5645 = vmatpush1.bf16.xpose.msra.mxu0 %v5633
    %5646 = vmatprep.subr.bf16.mxu0 0
    %5647 = vmatpush1.bf16.xpose.msra.mxu0 %v5636
    %5648 = vmatprep.subr.bf16.mxu0 0
    %5649 = vmatpush1.bf16.xpose.msra.mxu0 %v5639
    %5650 = vmatprep.subr.bf16.mxu0 0
    %5651 = vmatpush1.bf16.xpose.msra.mxu0 %v5642
    %5652 = vmatprep.subr.bf16.mxu0 0
    %5653 = vmatpush1.bf16.xpose.msra.mxu0 0
    %5654 = vmatprep.subr.bf16.mxu0 0
    %5655 = vmatpush1.bf16.xpose.msra.mxu0 0
    %5656 = vmatprep.subr.bf16.mxu0 0
    %5657 = vmatpush1.bf16.xpose.msra.mxu0 0
    %5658 = vmatprep.subr.bf16.mxu0 0
    %5659 = vmatpush1.bf16.xpose.msra.mxu0 0
    %5660 = vmatprep.subr.bf16.mxu0 0
    %5661 = vmatpush1.bf16.xpose.msra.mxu0 0
    %5662 = vmatprep.subr.bf16.mxu0 0
    %5663 = vmatpush1.bf16.xpose.msra.mxu0 0
    %5664 = vmatprep.subr.bf16.mxu0 0
    %5665 = vmatpush1.bf16.xpose.msra.mxu0 0
    %5666 = vmatprep.subr.bf16.mxu0 0
    %5667 = vmatpush1.bf16.xpose.msra.mxu0 0
    %5668 = vmatprep.subr.bf16.mxu0 0
    %5669 = vmatpush1.bf16.xpose.msra.mxu0 0
    %5670 = vmatprep.subr.bf16.mxu0 0
    %5671 = vmatpush1.bf16.xpose.msra.mxu0 0
    %5672 = vmatprep.subr.bf16.mxu0 0
    %5673 = vmatpush1.bf16.xpose.msra.mxu0 0
    %5674 = vmatprep.subr.bf16.mxu0 0
    %5675 = vmatpush1.bf16.xpose.msra.mxu0 0
    %5676 = vmatprep.mubr.bf16.mxu0 0
    %5677 = vmatmul.mubr.bf16.gmra.mrb[0].mxu0 %v5621
    %v5678 = vpop.f32.mrb[0].mxu0
    %v5679 = vadd.f32 0.0, %v5678
    %v5680 = vpop.f32.mrb[0].mxu0
    %v5681 = vpop.f32.mrb[0].mxu0
    %v5682 = vadd.f32 0.0, %v5681
    %v5683 = vpop.f32.mrb[0].mxu0
    %5684 = vmatprep.mubr.bf16.mxu0 0
    %5685 = vmatmul.mubr.bf16.gmra.mrb[0].mxu0 %v5624
    %v5686 = vpop.f32.mrb[0].mxu0
    %v5687 = vadd.f32 0.0, %v5686
    %v5688 = vpop.f32.mrb[0].mxu0
    %v5689 = vpop.f32.mrb[0].mxu0
    %v5690 = vadd.f32 0.0, %v5689
    %v5691 = vpop.f32.mrb[0].mxu0
    %5692 = vmatprep.mubr.bf16.mxu0 0
    %5693 = vmatmul.mubr.bf16.gmra.mrb[0].mxu0 %v5627
    %v5694 = vpop.f32.mrb[0].mxu0
    %v5695 = vadd.f32 0.0, %v5694
    %v5696 = vpop.f32.mrb[0].mxu0
    %v5697 = vpop.f32.mrb[0].mxu0
    %v5698 = vadd.f32 0.0, %v5697
    %v5699 = vpop.f32.mrb[0].mxu0
    %5700 = vmatprep.mubr.bf16.mxu0 0
    %5701 = vmatmul.mubr.bf16.gmra.mrb[0].mxu0 %v5630
    %v5702 = vpop.f32.mrb[0].mxu0
    %v5703 = vadd.f32 0.0, %v5702
    %v5704 = vpop.f32.mrb[0].mxu0
    %v5705 = vpop.f32.mrb[0].mxu0
    %v5706 = vadd.f32 0.0, %v5705
    %v5707 = vpop.f32.mrb[0].mxu0
    %5708 = vdwg.mxu0
    %v5709 = vmul.f32 %v4936, 0.17677669
    %v5710 = vmul.f32 %v4939, 0.17677669
    %v5711 = vmul.f32 %v4944, 0.17677669
    %v5712 = vmul.f32 %v4947, 0.17677669
    %v5713 = vmul.f32 %v4952, 0.17677669
    %v5714 = vmul.f32 %v4955, 0.17677669
    %v5715 = vmul.f32 %v4960, 0.17677669
    %v5716 = vmul.f32 %v4963, 0.17677669
    %v5717 = vmul.f32 %v5049, 0.17677669
    %v5718 = vmul.f32 %v5052, 0.17677669
    %v5719 = vmul.f32 %v5057, 0.17677669
    %v5720 = vmul.f32 %v5060, 0.17677669
    %v5721 = vmul.f32 %v5065, 0.17677669
    %v5722 = vmul.f32 %v5068, 0.17677669
    %v5723 = vmul.f32 %v5073, 0.17677669
    %v5724 = vmul.f32 %v5076, 0.17677669
    %v5725 = vmul.f32 %v5154, 0.17677669
    %v5726 = vmul.f32 %v5157, 0.17677669
    %v5727 = vmul.f32 %v5162, 0.17677669
    %v5728 = vmul.f32 %v5165, 0.17677669
    %v5729 = vmul.f32 %v5170, 0.17677669
    %v5730 = vmul.f32 %v5173, 0.17677669
    %v5731 = vmul.f32 %v5178, 0.17677669
    %v5732 = vmul.f32 %v5181, 0.17677669
    %v5733 = vmul.f32 %v5259, 0.17677669
    %v5734 = vmul.f32 %v5262, 0.17677669
    %v5735 = vmul.f32 %v5267, 0.17677669
    %v5736 = vmul.f32 %v5270, 0.17677669
    %v5737 = vmul.f32 %v5275, 0.17677669
    %v5738 = vmul.f32 %v5278, 0.17677669
    %v5739 = vmul.f32 %v5283, 0.17677669
    %v5740 = vmul.f32 %v5286, 0.17677669
    %v5741 = vmul.f32 %v5356, 0.17677669
    %v5742 = vmul.f32 %v5359, 0.17677669
    %v5743 = vmul.f32 %v5364, 0.17677669
    %v5744 = vmul.f32 %v5367, 0.17677669
    %v5745 = vmul.f32 %v5372, 0.17677669
    %v5746 = vmul.f32 %v5375, 0.17677669
    %v5747 = vmul.f32 %v5380, 0.17677669
    %v5748 = vmul.f32 %v5383, 0.17677669
    %v5749 = vmul.f32 %v5469, 0.17677669
    %v5750 = vmul.f32 %v5472, 0.17677669
    %v5751 = vmul.f32 %v5477, 0.17677669
    %v5752 = vmul.f32 %v5480, 0.17677669
    %v5753 = vmul.f32 %v5485, 0.17677669
    %v5754 = vmul.f32 %v5488, 0.17677669
    %v5755 = vmul.f32 %v5493, 0.17677669
    %v5756 = vmul.f32 %v5496, 0.17677669
    %v5757 = vmul.f32 %v5574, 0.17677669
    %v5758 = vmul.f32 %v5577, 0.17677669
    %v5759 = vmul.f32 %v5582, 0.17677669
    %v5760 = vmul.f32 %v5585, 0.17677669
    %v5761 = vmul.f32 %v5590, 0.17677669
    %v5762 = vmul.f32 %v5593, 0.17677669
    %v5763 = vmul.f32 %v5598, 0.17677669
    %v5764 = vmul.f32 %v5601, 0.17677669
    %v5765 = vmul.f32 %v5679, 0.17677669
    %v5766 = vmul.f32 %v5682, 0.17677669
    %v5767 = vmul.f32 %v5687, 0.17677669
    %v5768 = vmul.f32 %v5690, 0.17677669
    %v5769 = vmul.f32 %v5695, 0.17677669
    %v5770 = vmul.f32 %v5698, 0.17677669
    %v5771 = vmul.f32 %v5703, 0.17677669
    %v5772 = vmul.f32 %v5706, 0.17677669
    %v5773 = vsel %vm1594, %v5709, -inf
    %5774 = vmax.xlane.f32.xlu0 %v5773
    %v5775 = vpop.xlane.xlu0 %5774
    %v5776 = vsel %vm1594, %v5710, -inf
    %5777 = vmax.xlane.f32.xlu0 %v5776
    %v5778 = vpop.xlane.xlu0 %5777
    %v5779 = vsel %vm1594, %v5711, -inf
    %5780 = vmax.xlane.f32.xlu0 %v5779
    %v5781 = vpop.xlane.xlu0 %5780
    %v5782 = vsel %vm1594, %v5712, -inf
    %5783 = vmax.xlane.f32.xlu0 %v5782
    %v5784 = vpop.xlane.xlu0 %5783
    %v5785 = vsel %vm1594, %v5713, -inf
    %5786 = vmax.xlane.f32.xlu0 %v5785
    %v5787 = vpop.xlane.xlu0 %5786
    %v5788 = vsel %vm1594, %v5714, -inf
    %5789 = vmax.xlane.f32.xlu0 %v5788
    %v5790 = vpop.xlane.xlu0 %5789
    %v5791 = vsel %vm1594, %v5715, -inf
    %5792 = vmax.xlane.f32.xlu0 %v5791
    %v5793 = vpop.xlane.xlu0 %5792
    %v5794 = vsel %vm1594, %v5716, -inf
    %5795 = vmax.xlane.f32.xlu0 %v5794
    %v5796 = vpop.xlane.xlu0 %5795
    %v5797 = vsel %vm1594, %v5717, -inf
    %5798 = vmax.xlane.f32.xlu0 %v5797
    %v5799 = vpop.xlane.xlu0 %5798
    %v5800 = vsel %vm1594, %v5718, -inf
    %5801 = vmax.xlane.f32.xlu0 %v5800
    %v5802 = vpop.xlane.xlu0 %5801
    %v5803 = vsel %vm1594, %v5719, -inf
    %5804 = vmax.xlane.f32.xlu0 %v5803
    %v5805 = vpop.xlane.xlu0 %5804
    %v5806 = vsel %vm1594, %v5720, -inf
    %5807 = vmax.xlane.f32.xlu0 %v5806
    %v5808 = vpop.xlane.xlu0 %5807
    %v5809 = vsel %vm1594, %v5721, -inf
    %5810 = vmax.xlane.f32.xlu0 %v5809
    %v5811 = vpop.xlane.xlu0 %5810
    %v5812 = vsel %vm1594, %v5722, -inf
    %5813 = vmax.xlane.f32.xlu0 %v5812
    %v5814 = vpop.xlane.xlu0 %5813
    %v5815 = vsel %vm1594, %v5723, -inf
    %5816 = vmax.xlane.f32.xlu0 %v5815
    %v5817 = vpop.xlane.xlu0 %5816
    %v5818 = vsel %vm1594, %v5724, -inf
    %5819 = vmax.xlane.f32.xlu0 %v5818
    %v5820 = vpop.xlane.xlu0 %5819
    %v5821 = vsel %vm1594, %v5725, -inf
    %5822 = vmax.xlane.f32.xlu0 %v5821
    %v5823 = vpop.xlane.xlu0 %5822
    %v5824 = vsel %vm1594, %v5726, -inf
    %5825 = vmax.xlane.f32.xlu0 %v5824
    %v5826 = vpop.xlane.xlu0 %5825
    %v5827 = vsel %vm1594, %v5727, -inf
    %5828 = vmax.xlane.f32.xlu0 %v5827
    %v5829 = vpop.xlane.xlu0 %5828
    %v5830 = vsel %vm1594, %v5728, -inf
    %5831 = vmax.xlane.f32.xlu0 %v5830
    %v5832 = vpop.xlane.xlu0 %5831
    %v5833 = vsel %vm1594, %v5729, -inf
    %5834 = vmax.xlane.f32.xlu0 %v5833
    %v5835 = vpop.xlane.xlu0 %5834
    %v5836 = vsel %vm1594, %v5730, -inf
    %5837 = vmax.xlane.f32.xlu0 %v5836
    %v5838 = vpop.xlane.xlu0 %5837
    %v5839 = vsel %vm1594, %v5731, -inf
    %5840 = vmax.xlane.f32.xlu0 %v5839
    %v5841 = vpop.xlane.xlu0 %5840
    %v5842 = vsel %vm1594, %v5732, -inf
    %5843 = vmax.xlane.f32.xlu0 %v5842
    %v5844 = vpop.xlane.xlu0 %5843
    %v5845 = vsel %vm1594, %v5733, -inf
    %5846 = vmax.xlane.f32.xlu0 %v5845
    %v5847 = vpop.xlane.xlu0 %5846
    %v5848 = vsel %vm1594, %v5734, -inf
    %5849 = vmax.xlane.f32.xlu0 %v5848
    %v5850 = vpop.xlane.xlu0 %5849
    %v5851 = vsel %vm1594, %v5735, -inf
    %5852 = vmax.xlane.f32.xlu0 %v5851
    %v5853 = vpop.xlane.xlu0 %5852
    %v5854 = vsel %vm1594, %v5736, -inf
    %5855 = vmax.xlane.f32.xlu0 %v5854
    %v5856 = vpop.xlane.xlu0 %5855
    %v5857 = vsel %vm1594, %v5737, -inf
    %5858 = vmax.xlane.f32.xlu0 %v5857
    %v5859 = vpop.xlane.xlu0 %5858
    %v5860 = vsel %vm1594, %v5738, -inf
    %5861 = vmax.xlane.f32.xlu0 %v5860
    %v5862 = vpop.xlane.xlu0 %5861
    %v5863 = vsel %vm1594, %v5739, -inf
    %5864 = vmax.xlane.f32.xlu0 %v5863
    %v5865 = vpop.xlane.xlu0 %5864
    %v5866 = vsel %vm1594, %v5740, -inf
    %5867 = vmax.xlane.f32.xlu0 %v5866
    %v5868 = vpop.xlane.xlu0 %5867
    %v5869 = vsel %vm1594, %v5741, -inf
    %5870 = vmax.xlane.f32.xlu0 %v5869
    %v5871 = vpop.xlane.xlu0 %5870
    %v5872 = vsel %vm1594, %v5742, -inf
    %5873 = vmax.xlane.f32.xlu0 %v5872
    %v5874 = vpop.xlane.xlu0 %5873
    %v5875 = vsel %vm1594, %v5743, -inf
    %5876 = vmax.xlane.f32.xlu0 %v5875
    %v5877 = vpop.xlane.xlu0 %5876
    %v5878 = vsel %vm1594, %v5744, -inf
    %5879 = vmax.xlane.f32.xlu0 %v5878
    %v5880 = vpop.xlane.xlu0 %5879
    %v5881 = vsel %vm1594, %v5745, -inf
    %5882 = vmax.xlane.f32.xlu0 %v5881
    %v5883 = vpop.xlane.xlu0 %5882
    %v5884 = vsel %vm1594, %v5746, -inf
    %5885 = vmax.xlane.f32.xlu0 %v5884
    %v5886 = vpop.xlane.xlu0 %5885
    %v5887 = vsel %vm1594, %v5747, -inf
    %5888 = vmax.xlane.f32.xlu0 %v5887
    %v5889 = vpop.xlane.xlu0 %5888
    %v5890 = vsel %vm1594, %v5748, -inf
    %5891 = vmax.xlane.f32.xlu0 %v5890
    %v5892 = vpop.xlane.xlu0 %5891
    %v5893 = vsel %vm1594, %v5749, -inf
    %5894 = vmax.xlane.f32.xlu0 %v5893
    %v5895 = vpop.xlane.xlu0 %5894
    %v5896 = vsel %vm1594, %v5750, -inf
    %5897 = vmax.xlane.f32.xlu0 %v5896
    %v5898 = vpop.xlane.xlu0 %5897
    %v5899 = vsel %vm1594, %v5751, -inf
    %5900 = vmax.xlane.f32.xlu0 %v5899
    %v5901 = vpop.xlane.xlu0 %5900
    %v5902 = vsel %vm1594, %v5752, -inf
    %5903 = vmax.xlane.f32.xlu0 %v5902
    %v5904 = vpop.xlane.xlu0 %5903
    %v5905 = vsel %vm1594, %v5753, -inf
    %5906 = vmax.xlane.f32.xlu0 %v5905
    %v5907 = vpop.xlane.xlu0 %5906
    %v5908 = vsel %vm1594, %v5754, -inf
    %5909 = vmax.xlane.f32.xlu0 %v5908
    %v5910 = vpop.xlane.xlu0 %5909
    %v5911 = vsel %vm1594, %v5755, -inf
    %5912 = vmax.xlane.f32.xlu0 %v5911
    %v5913 = vpop.xlane.xlu0 %5912
    %v5914 = vsel %vm1594, %v5756, -inf
    %5915 = vmax.xlane.f32.xlu0 %v5914
    %v5916 = vpop.xlane.xlu0 %5915
    %v5917 = vsel %vm1594, %v5757, -inf
    %5918 = vmax.xlane.f32.xlu0 %v5917
    %v5919 = vpop.xlane.xlu0 %5918
    %v5920 = vsel %vm1594, %v5758, -inf
    %5921 = vmax.xlane.f32.xlu0 %v5920
    %v5922 = vpop.xlane.xlu0 %5921
    %v5923 = vsel %vm1594, %v5759, -inf
    %5924 = vmax.xlane.f32.xlu0 %v5923
    %v5925 = vpop.xlane.xlu0 %5924
    %v5926 = vsel %vm1594, %v5760, -inf
    %5927 = vmax.xlane.f32.xlu0 %v5926
    %v5928 = vpop.xlane.xlu0 %5927
    %v5929 = vsel %vm1594, %v5761, -inf
    %5930 = vmax.xlane.f32.xlu0 %v5929
    %v5931 = vpop.xlane.xlu0 %5930
    %v5932 = vsel %vm1594, %v5762, -inf
    %5933 = vmax.xlane.f32.xlu0 %v5932
    %v5934 = vpop.xlane.xlu0 %5933
    %v5935 = vsel %vm1594, %v5763, -inf
    %5936 = vmax.xlane.f32.xlu0 %v5935
    %v5937 = vpop.xlane.xlu0 %5936
    %v5938 = vsel %vm1594, %v5764, -inf
    %5939 = vmax.xlane.f32.xlu0 %v5938
    %v5940 = vpop.xlane.xlu0 %5939
    %v5941 = vsel %vm1594, %v5765, -inf
    %5942 = vmax.xlane.f32.xlu0 %v5941
    %v5943 = vpop.xlane.xlu0 %5942
    %v5944 = vsel %vm1594, %v5766, -inf
    %5945 = vmax.xlane.f32.xlu0 %v5944
    %v5946 = vpop.xlane.xlu0 %5945
    %v5947 = vsel %vm1594, %v5767, -inf
    %5948 = vmax.xlane.f32.xlu0 %v5947
    %v5949 = vpop.xlane.xlu0 %5948
    %v5950 = vsel %vm1594, %v5768, -inf
    %5951 = vmax.xlane.f32.xlu0 %v5950
    %v5952 = vpop.xlane.xlu0 %5951
    %v5953 = vsel %vm1594, %v5769, -inf
    %5954 = vmax.xlane.f32.xlu0 %v5953
    %v5955 = vpop.xlane.xlu0 %5954
    %v5956 = vsel %vm1594, %v5770, -inf
    %5957 = vmax.xlane.f32.xlu0 %v5956
    %v5958 = vpop.xlane.xlu0 %5957
    %v5959 = vsel %vm1594, %v5771, -inf
    %5960 = vmax.xlane.f32.xlu0 %v5959
    %v5961 = vpop.xlane.xlu0 %5960
    %v5962 = vsel %vm1594, %v5772, -inf
    %5963 = vmax.xlane.f32.xlu0 %v5962
    %v5964 = vpop.xlane.xlu0 %5963
    %v5965 = vsub.f32 %v5709, %v5775
    %v5966 = vsub.f32 %v5710, %v5778
    %v5967 = vsub.f32 %v5711, %v5781
    %v5968 = vsub.f32 %v5712, %v5784
    %v5969 = vsub.f32 %v5713, %v5787
    %v5970 = vsub.f32 %v5714, %v5790
    %v5971 = vsub.f32 %v5715, %v5793
    %v5972 = vsub.f32 %v5716, %v5796
    %v5973 = vsub.f32 %v5717, %v5799
    %v5974 = vsub.f32 %v5718, %v5802
    %v5975 = vsub.f32 %v5719, %v5805
    %v5976 = vsub.f32 %v5720, %v5808
    %v5977 = vsub.f32 %v5721, %v5811
    %v5978 = vsub.f32 %v5722, %v5814
    %v5979 = vsub.f32 %v5723, %v5817
    %v5980 = vsub.f32 %v5724, %v5820
    %v5981 = vsub.f32 %v5725, %v5823
    %v5982 = vsub.f32 %v5726, %v5826
    %v5983 = vsub.f32 %v5727, %v5829
    %v5984 = vsub.f32 %v5728, %v5832
    %v5985 = vsub.f32 %v5729, %v5835
    %v5986 = vsub.f32 %v5730, %v5838
    %v5987 = vsub.f32 %v5731, %v5841
    %v5988 = vsub.f32 %v5732, %v5844
    %v5989 = vsub.f32 %v5733, %v5847
    %v5990 = vsub.f32 %v5734, %v5850
    %v5991 = vsub.f32 %v5735, %v5853
    %v5992 = vsub.f32 %v5736, %v5856
    %v5993 = vsub.f32 %v5737, %v5859
    %v5994 = vsub.f32 %v5738, %v5862
    %v5995 = vsub.f32 %v5739, %v5865
    %v5996 = vsub.f32 %v5740, %v5868
    %v5997 = vsub.f32 %v5741, %v5871
    %v5998 = vsub.f32 %v5742, %v5874
    %v5999 = vsub.f32 %v5743, %v5877
    %v6000 = vsub.f32 %v5744, %v5880
    %v6001 = vsub.f32 %v5745, %v5883
    %v6002 = vsub.f32 %v5746, %v5886
    %v6003 = vsub.f32 %v5747, %v5889
    %v6004 = vsub.f32 %v5748, %v5892
    %v6005 = vsub.f32 %v5749, %v5895
    %v6006 = vsub.f32 %v5750, %v5898
    %v6007 = vsub.f32 %v5751, %v5901
    %v6008 = vsub.f32 %v5752, %v5904
    %v6009 = vsub.f32 %v5753, %v5907
    %v6010 = vsub.f32 %v5754, %v5910
    %v6011 = vsub.f32 %v5755, %v5913
    %v6012 = vsub.f32 %v5756, %v5916
    %v6013 = vsub.f32 %v5757, %v5919
    %v6014 = vsub.f32 %v5758, %v5922
    %v6015 = vsub.f32 %v5759, %v5925
    %v6016 = vsub.f32 %v5760, %v5928
    %v6017 = vsub.f32 %v5761, %v5931
    %v6018 = vsub.f32 %v5762, %v5934
    %v6019 = vsub.f32 %v5763, %v5937
    %v6020 = vsub.f32 %v5764, %v5940
    %v6021 = vsub.f32 %v5765, %v5943
    %v6022 = vsub.f32 %v5766, %v5946
    %v6023 = vsub.f32 %v5767, %v5949
    %v6024 = vsub.f32 %v5768, %v5952
    %v6025 = vsub.f32 %v5769, %v5955
    %v6026 = vsub.f32 %v5770, %v5958
    %v6027 = vsub.f32 %v5771, %v5961
    %v6028 = vsub.f32 %v5772, %v5964
    %v6029 = vmul.f32 %v5965, 1.442695
    %v6030 = vpow.pop %v6029
    %v6031 = vmul.f32 %v5966, 1.442695
    %v6032 = vpow.pop %v6031
    %v6033 = vmul.f32 %v5967, 1.442695
    %v6034 = vpow.pop %v6033
    %v6035 = vmul.f32 %v5968, 1.442695
    %v6036 = vpow.pop %v6035
    %v6037 = vmul.f32 %v5969, 1.442695
    %v6038 = vpow.pop %v6037
    %v6039 = vmul.f32 %v5970, 1.442695
    %v6040 = vpow.pop %v6039
    %v6041 = vmul.f32 %v5971, 1.442695
    %v6042 = vpow.pop %v6041
    %v6043 = vmul.f32 %v5972, 1.442695
    %v6044 = vpow.pop %v6043
    %v6045 = vmul.f32 %v5973, 1.442695
    %v6046 = vpow.pop %v6045
    %v6047 = vmul.f32 %v5974, 1.442695
    %v6048 = vpow.pop %v6047
    %v6049 = vmul.f32 %v5975, 1.442695
    %v6050 = vpow.pop %v6049
    %v6051 = vmul.f32 %v5976, 1.442695
    %v6052 = vpow.pop %v6051
    %v6053 = vmul.f32 %v5977, 1.442695
    %v6054 = vpow.pop %v6053
    %v6055 = vmul.f32 %v5978, 1.442695
    %v6056 = vpow.pop %v6055
    %v6057 = vmul.f32 %v5979, 1.442695
    %v6058 = vpow.pop %v6057
    %v6059 = vmul.f32 %v5980, 1.442695
    %v6060 = vpow.pop %v6059
    %v6061 = vmul.f32 %v5981, 1.442695
    %v6062 = vpow.pop %v6061
    %v6063 = vmul.f32 %v5982, 1.442695
    %v6064 = vpow.pop %v6063
    %v6065 = vmul.f32 %v5983, 1.442695
    %v6066 = vpow.pop %v6065
    %v6067 = vmul.f32 %v5984, 1.442695
    %v6068 = vpow.pop %v6067
    %v6069 = vmul.f32 %v5985, 1.442695
    %v6070 = vpow.pop %v6069
    %v6071 = vmul.f32 %v5986, 1.442695
    %v6072 = vpow.pop %v6071
    %v6073 = vmul.f32 %v5987, 1.442695
    %v6074 = vpow.pop %v6073
    %v6075 = vmul.f32 %v5988, 1.442695
    %v6076 = vpow.pop %v6075
    %v6077 = vmul.f32 %v5989, 1.442695
    %v6078 = vpow.pop %v6077
    %v6079 = vmul.f32 %v5990, 1.442695
    %v6080 = vpow.pop %v6079
    %v6081 = vmul.f32 %v5991, 1.442695
    %v6082 = vpow.pop %v6081
    %v6083 = vmul.f32 %v5992, 1.442695
    %v6084 = vpow.pop %v6083
    %v6085 = vmul.f32 %v5993, 1.442695
    %v6086 = vpow.pop %v6085
    %v6087 = vmul.f32 %v5994, 1.442695
    %v6088 = vpow.pop %v6087
    %v6089 = vmul.f32 %v5995, 1.442695
    %v6090 = vpow.pop %v6089
    %v6091 = vmul.f32 %v5996, 1.442695
    %v6092 = vpow.pop %v6091
    %v6093 = vmul.f32 %v5997, 1.442695
    %v6094 = vpow.pop %v6093
    %v6095 = vmul.f32 %v5998, 1.442695
    %v6096 = vpow.pop %v6095
    %v6097 = vmul.f32 %v5999, 1.442695
    %v6098 = vpow.pop %v6097
    %v6099 = vmul.f32 %v6000, 1.442695
    %v6100 = vpow.pop %v6099
    %v6101 = vmul.f32 %v6001, 1.442695
    %v6102 = vpow.pop %v6101
    %v6103 = vmul.f32 %v6002, 1.442695
    %v6104 = vpow.pop %v6103
    %v6105 = vmul.f32 %v6003, 1.442695
    %v6106 = vpow.pop %v6105
    %v6107 = vmul.f32 %v6004, 1.442695
    %v6108 = vpow.pop %v6107
    %v6109 = vmul.f32 %v6005, 1.442695
    %v6110 = vpow.pop %v6109
    %v6111 = vmul.f32 %v6006, 1.442695
    %v6112 = vpow.pop %v6111
    %v6113 = vmul.f32 %v6007, 1.442695
    %v6114 = vpow.pop %v6113
    %v6115 = vmul.f32 %v6008, 1.442695
    %v6116 = vpow.pop %v6115
    %v6117 = vmul.f32 %v6009, 1.442695
    %v6118 = vpow.pop %v6117
    %v6119 = vmul.f32 %v6010, 1.442695
    %v6120 = vpow.pop %v6119
    %v6121 = vmul.f32 %v6011, 1.442695
    %v6122 = vpow.pop %v6121
    %v6123 = vmul.f32 %v6012, 1.442695
    %v6124 = vpow.pop %v6123
    %v6125 = vmul.f32 %v6013, 1.442695
    %v6126 = vpow.pop %v6125
    %v6127 = vmul.f32 %v6014, 1.442695
    %v6128 = vpow.pop %v6127
    %v6129 = vmul.f32 %v6015, 1.442695
    %v6130 = vpow.pop %v6129
    %v6131 = vmul.f32 %v6016, 1.442695
    %v6132 = vpow.pop %v6131
    %v6133 = vmul.f32 %v6017, 1.442695
    %v6134 = vpow.pop %v6133
    %v6135 = vmul.f32 %v6018, 1.442695
    %v6136 = vpow.pop %v6135
    %v6137 = vmul.f32 %v6019, 1.442695
    %v6138 = vpow.pop %v6137
    %v6139 = vmul.f32 %v6020, 1.442695
    %v6140 = vpow.pop %v6139
    %v6141 = vmul.f32 %v6021, 1.442695
    %v6142 = vpow.pop %v6141
    %v6143 = vmul.f32 %v6022, 1.442695
    %v6144 = vpow.pop %v6143
    %v6145 = vmul.f32 %v6023, 1.442695
    %v6146 = vpow.pop %v6145
    %v6147 = vmul.f32 %v6024, 1.442695
    %v6148 = vpow.pop %v6147
    %v6149 = vmul.f32 %v6025, 1.442695
    %v6150 = vpow.pop %v6149
    %v6151 = vmul.f32 %v6026, 1.442695
    %v6152 = vpow.pop %v6151
    %v6153 = vmul.f32 %v6027, 1.442695
    %v6154 = vpow.pop %v6153
    %v6155 = vmul.f32 %v6028, 1.442695
    %v6156 = vpow.pop %v6155
    %v6157 = vsel %vm1594, %v6030, 0.0
    %6158 = vadd.xlane.f32.xlu0 %v6157
    %v6159 = vpop.xlane.xlu0 %6158
    %v6160 = vsel %vm1594, %v6032, 0.0
    %6161 = vadd.xlane.f32.xlu0 %v6160
    %v6162 = vpop.xlane.xlu0 %6161
    %v6163 = vsel %vm1594, %v6034, 0.0
    %6164 = vadd.xlane.f32.xlu0 %v6163
    %v6165 = vpop.xlane.xlu0 %6164
    %v6166 = vsel %vm1594, %v6036, 0.0
    %6167 = vadd.xlane.f32.xlu0 %v6166
    %v6168 = vpop.xlane.xlu0 %6167
    %v6169 = vsel %vm1594, %v6038, 0.0
    %6170 = vadd.xlane.f32.xlu0 %v6169
    %v6171 = vpop.xlane.xlu0 %6170
    %v6172 = vsel %vm1594, %v6040, 0.0
    %6173 = vadd.xlane.f32.xlu0 %v6172
    %v6174 = vpop.xlane.xlu0 %6173
    %v6175 = vsel %vm1594, %v6042, 0.0
    %6176 = vadd.xlane.f32.xlu0 %v6175
    %v6177 = vpop.xlane.xlu0 %6176
    %v6178 = vsel %vm1594, %v6044, 0.0
    %6179 = vadd.xlane.f32.xlu0 %v6178
    %v6180 = vpop.xlane.xlu0 %6179
    %v6181 = vsel %vm1594, %v6046, 0.0
    %6182 = vadd.xlane.f32.xlu0 %v6181
    %v6183 = vpop.xlane.xlu0 %6182
    %v6184 = vsel %vm1594, %v6048, 0.0
    %6185 = vadd.xlane.f32.xlu0 %v6184
    %v6186 = vpop.xlane.xlu0 %6185
    %v6187 = vsel %vm1594, %v6050, 0.0
    %6188 = vadd.xlane.f32.xlu0 %v6187
    %v6189 = vpop.xlane.xlu0 %6188
    %v6190 = vsel %vm1594, %v6052, 0.0
    %6191 = vadd.xlane.f32.xlu0 %v6190
    %v6192 = vpop.xlane.xlu0 %6191
    %v6193 = vsel %vm1594, %v6054, 0.0
    %6194 = vadd.xlane.f32.xlu0 %v6193
    %v6195 = vpop.xlane.xlu0 %6194
    %v6196 = vsel %vm1594, %v6056, 0.0
    %6197 = vadd.xlane.f32.xlu0 %v6196
    %v6198 = vpop.xlane.xlu0 %6197
    %v6199 = vsel %vm1594, %v6058, 0.0
    %6200 = vadd.xlane.f32.xlu0 %v6199
    %v6201 = vpop.xlane.xlu0 %6200
    %v6202 = vsel %vm1594, %v6060, 0.0
    %6203 = vadd.xlane.f32.xlu0 %v6202
    %v6204 = vpop.xlane.xlu0 %6203
    %v6205 = vsel %vm1594, %v6062, 0.0
    %6206 = vadd.xlane.f32.xlu0 %v6205
    %v6207 = vpop.xlane.xlu0 %6206
    %v6208 = vsel %vm1594, %v6064, 0.0
    %6209 = vadd.xlane.f32.xlu0 %v6208
    %v6210 = vpop.xlane.xlu0 %6209
    %v6211 = vsel %vm1594, %v6066, 0.0
    %6212 = vadd.xlane.f32.xlu0 %v6211
    %v6213 = vpop.xlane.xlu0 %6212
    %v6214 = vsel %vm1594, %v6068, 0.0
    %6215 = vadd.xlane.f32.xlu0 %v6214
    %v6216 = vpop.xlane.xlu0 %6215
    %v6217 = vsel %vm1594, %v6070, 0.0
    %6218 = vadd.xlane.f32.xlu0 %v6217
    %v6219 = vpop.xlane.xlu0 %6218
    %v6220 = vsel %vm1594, %v6072, 0.0
    %6221 = vadd.xlane.f32.xlu0 %v6220
    %v6222 = vpop.xlane.xlu0 %6221
    %v6223 = vsel %vm1594, %v6074, 0.0
    %6224 = vadd.xlane.f32.xlu0 %v6223
    %v6225 = vpop.xlane.xlu0 %6224
    %v6226 = vsel %vm1594, %v6076, 0.0
    %6227 = vadd.xlane.f32.xlu0 %v6226
    %v6228 = vpop.xlane.xlu0 %6227
    %v6229 = vsel %vm1594, %v6078, 0.0
    %6230 = vadd.xlane.f32.xlu0 %v6229
    %v6231 = vpop.xlane.xlu0 %6230
    %v6232 = vsel %vm1594, %v6080, 0.0
    %6233 = vadd.xlane.f32.xlu0 %v6232
    %v6234 = vpop.xlane.xlu0 %6233
    %v6235 = vsel %vm1594, %v6082, 0.0
    %6236 = vadd.xlane.f32.xlu0 %v6235
    %v6237 = vpop.xlane.xlu0 %6236
    %v6238 = vsel %vm1594, %v6084, 0.0
    %6239 = vadd.xlane.f32.xlu0 %v6238
    %v6240 = vpop.xlane.xlu0 %6239
    %v6241 = vsel %vm1594, %v6086, 0.0
    %6242 = vadd.xlane.f32.xlu0 %v6241
    %v6243 = vpop.xlane.xlu0 %6242
    %v6244 = vsel %vm1594, %v6088, 0.0
    %6245 = vadd.xlane.f32.xlu0 %v6244
    %v6246 = vpop.xlane.xlu0 %6245
    %v6247 = vsel %vm1594, %v6090, 0.0
    %6248 = vadd.xlane.f32.xlu0 %v6247
    %v6249 = vpop.xlane.xlu0 %6248
    %v6250 = vsel %vm1594, %v6092, 0.0
    %6251 = vadd.xlane.f32.xlu0 %v6250
    %v6252 = vpop.xlane.xlu0 %6251
    %v6253 = vsel %vm1594, %v6094, 0.0
    %6254 = vadd.xlane.f32.xlu0 %v6253
    %v6255 = vpop.xlane.xlu0 %6254
    %v6256 = vsel %vm1594, %v6096, 0.0
    %6257 = vadd.xlane.f32.xlu0 %v6256
    %v6258 = vpop.xlane.xlu0 %6257
    %v6259 = vsel %vm1594, %v6098, 0.0
    %6260 = vadd.xlane.f32.xlu0 %v6259
    %v6261 = vpop.xlane.xlu0 %6260
    %v6262 = vsel %vm1594, %v6100, 0.0
    %6263 = vadd.xlane.f32.xlu0 %v6262
    %v6264 = vpop.xlane.xlu0 %6263
    %v6265 = vsel %vm1594, %v6102, 0.0
    %6266 = vadd.xlane.f32.xlu0 %v6265
    %v6267 = vpop.xlane.xlu0 %6266
    %v6268 = vsel %vm1594, %v6104, 0.0
    %6269 = vadd.xlane.f32.xlu0 %v6268
    %v6270 = vpop.xlane.xlu0 %6269
    %v6271 = vsel %vm1594, %v6106, 0.0
    %6272 = vadd.xlane.f32.xlu0 %v6271
    %v6273 = vpop.xlane.xlu0 %6272
    %v6274 = vsel %vm1594, %v6108, 0.0
    %6275 = vadd.xlane.f32.xlu0 %v6274
    %v6276 = vpop.xlane.xlu0 %6275
    %v6277 = vsel %vm1594, %v6110, 0.0
    %6278 = vadd.xlane.f32.xlu0 %v6277
    %v6279 = vpop.xlane.xlu0 %6278
    %v6280 = vsel %vm1594, %v6112, 0.0
    %6281 = vadd.xlane.f32.xlu0 %v6280
    %v6282 = vpop.xlane.xlu0 %6281
    %v6283 = vsel %vm1594, %v6114, 0.0
    %6284 = vadd.xlane.f32.xlu0 %v6283
    %v6285 = vpop.xlane.xlu0 %6284
    %v6286 = vsel %vm1594, %v6116, 0.0
    %6287 = vadd.xlane.f32.xlu0 %v6286
    %v6288 = vpop.xlane.xlu0 %6287
    %v6289 = vsel %vm1594, %v6118, 0.0
    %6290 = vadd.xlane.f32.xlu0 %v6289
    %v6291 = vpop.xlane.xlu0 %6290
    %v6292 = vsel %vm1594, %v6120, 0.0
    %6293 = vadd.xlane.f32.xlu0 %v6292
    %v6294 = vpop.xlane.xlu0 %6293
    %v6295 = vsel %vm1594, %v6122, 0.0
    %6296 = vadd.xlane.f32.xlu0 %v6295
    %v6297 = vpop.xlane.xlu0 %6296
    %v6298 = vsel %vm1594, %v6124, 0.0
    %6299 = vadd.xlane.f32.xlu0 %v6298
    %v6300 = vpop.xlane.xlu0 %6299
    %v6301 = vsel %vm1594, %v6126, 0.0
    %6302 = vadd.xlane.f32.xlu0 %v6301
    %v6303 = vpop.xlane.xlu0 %6302
    %v6304 = vsel %vm1594, %v6128, 0.0
    %6305 = vadd.xlane.f32.xlu0 %v6304
    %v6306 = vpop.xlane.xlu0 %6305
    %v6307 = vsel %vm1594, %v6130, 0.0
    %6308 = vadd.xlane.f32.xlu0 %v6307
    %v6309 = vpop.xlane.xlu0 %6308
    %v6310 = vsel %vm1594, %v6132, 0.0
    %6311 = vadd.xlane.f32.xlu0 %v6310
    %v6312 = vpop.xlane.xlu0 %6311
    %v6313 = vsel %vm1594, %v6134, 0.0
    %6314 = vadd.xlane.f32.xlu0 %v6313
    %v6315 = vpop.xlane.xlu0 %6314
    %v6316 = vsel %vm1594, %v6136, 0.0
    %6317 = vadd.xlane.f32.xlu0 %v6316
    %v6318 = vpop.xlane.xlu0 %6317
    %v6319 = vsel %vm1594, %v6138, 0.0
    %6320 = vadd.xlane.f32.xlu0 %v6319
    %v6321 = vpop.xlane.xlu0 %6320
    %v6322 = vsel %vm1594, %v6140, 0.0
    %6323 = vadd.xlane.f32.xlu0 %v6322
    %v6324 = vpop.xlane.xlu0 %6323
    %v6325 = vsel %vm1594, %v6142, 0.0
    %6326 = vadd.xlane.f32.xlu0 %v6325
    %v6327 = vpop.xlane.xlu0 %6326
    %v6328 = vsel %vm1594, %v6144, 0.0
    %6329 = vadd.xlane.f32.xlu0 %v6328
    %v6330 = vpop.xlane.xlu0 %6329
    %v6331 = vsel %vm1594, %v6146, 0.0
    %6332 = vadd.xlane.f32.xlu0 %v6331
    %v6333 = vpop.xlane.xlu0 %6332
    %v6334 = vsel %vm1594, %v6148, 0.0
    %6335 = vadd.xlane.f32.xlu0 %v6334
    %v6336 = vpop.xlane.xlu0 %6335
    %v6337 = vsel %vm1594, %v6150, 0.0
    %6338 = vadd.xlane.f32.xlu0 %v6337
    %v6339 = vpop.xlane.xlu0 %6338
    %v6340 = vsel %vm1594, %v6152, 0.0
    %6341 = vadd.xlane.f32.xlu0 %v6340
    %v6342 = vpop.xlane.xlu0 %6341
    %v6343 = vsel %vm1594, %v6154, 0.0
    %6344 = vadd.xlane.f32.xlu0 %v6343
    %v6345 = vpop.xlane.xlu0 %6344
    %v6346 = vsel %vm1594, %v6156, 0.0
    %6347 = vadd.xlane.f32.xlu0 %v6346
    %v6348 = vpop.xlane.xlu0 %6347
    %v6349 = vrcp.pop %v6159
    %v6350 = vmul.f32 %v6030, %v6349
    %v6351 = vrcp.pop %v6162
    %v6352 = vmul.f32 %v6032, %v6351
    %v6353 = vrcp.pop %v6165
    %v6354 = vmul.f32 %v6034, %v6353
    %v6355 = vrcp.pop %v6168
    %v6356 = vmul.f32 %v6036, %v6355
    %v6357 = vrcp.pop %v6171
    %v6358 = vmul.f32 %v6038, %v6357
    %v6359 = vrcp.pop %v6174
    %v6360 = vmul.f32 %v6040, %v6359
    %v6361 = vrcp.pop %v6177
    %v6362 = vmul.f32 %v6042, %v6361
    %v6363 = vrcp.pop %v6180
    %v6364 = vmul.f32 %v6044, %v6363
    %v6365 = vrcp.pop %v6183
    %v6366 = vmul.f32 %v6046, %v6365
    %v6367 = vrcp.pop %v6186
    %v6368 = vmul.f32 %v6048, %v6367
    %v6369 = vrcp.pop %v6189
    %v6370 = vmul.f32 %v6050, %v6369
    %v6371 = vrcp.pop %v6192
    %v6372 = vmul.f32 %v6052, %v6371
    %v6373 = vrcp.pop %v6195
    %v6374 = vmul.f32 %v6054, %v6373
    %v6375 = vrcp.pop %v6198
    %v6376 = vmul.f32 %v6056, %v6375
    %v6377 = vrcp.pop %v6201
    %v6378 = vmul.f32 %v6058, %v6377
    %v6379 = vrcp.pop %v6204
    %v6380 = vmul.f32 %v6060, %v6379
    %v6381 = vrcp.pop %v6207
    %v6382 = vmul.f32 %v6062, %v6381
    %v6383 = vrcp.pop %v6210
    %v6384 = vmul.f32 %v6064, %v6383
    %v6385 = vrcp.pop %v6213
    %v6386 = vmul.f32 %v6066, %v6385
    %v6387 = vrcp.pop %v6216
    %v6388 = vmul.f32 %v6068, %v6387
    %v6389 = vrcp.pop %v6219
    %v6390 = vmul.f32 %v6070, %v6389
    %v6391 = vrcp.pop %v6222
    %v6392 = vmul.f32 %v6072, %v6391
    %v6393 = vrcp.pop %v6225
    %v6394 = vmul.f32 %v6074, %v6393
    %v6395 = vrcp.pop %v6228
    %v6396 = vmul.f32 %v6076, %v6395
    %v6397 = vrcp.pop %v6231
    %v6398 = vmul.f32 %v6078, %v6397
    %v6399 = vrcp.pop %v6234
    %v6400 = vmul.f32 %v6080, %v6399
    %v6401 = vrcp.pop %v6237
    %v6402 = vmul.f32 %v6082, %v6401
    %v6403 = vrcp.pop %v6240
    %v6404 = vmul.f32 %v6084, %v6403
    %v6405 = vrcp.pop %v6243
    %v6406 = vmul.f32 %v6086, %v6405
    %v6407 = vrcp.pop %v6246
    %v6408 = vmul.f32 %v6088, %v6407
    %v6409 = vrcp.pop %v6249
    %v6410 = vmul.f32 %v6090, %v6409
    %v6411 = vrcp.pop %v6252
    %v6412 = vmul.f32 %v6092, %v6411
    %v6413 = vrcp.pop %v6255
    %v6414 = vmul.f32 %v6094, %v6413
    %v6415 = vrcp.pop %v6258
    %v6416 = vmul.f32 %v6096, %v6415
    %v6417 = vrcp.pop %v6261
    %v6418 = vmul.f32 %v6098, %v6417
    %v6419 = vrcp.pop %v6264
    %v6420 = vmul.f32 %v6100, %v6419
    %v6421 = vrcp.pop %v6267
    %v6422 = vmul.f32 %v6102, %v6421
    %v6423 = vrcp.pop %v6270
    %v6424 = vmul.f32 %v6104, %v6423
    %v6425 = vrcp.pop %v6273
    %v6426 = vmul.f32 %v6106, %v6425
    %v6427 = vrcp.pop %v6276
    %v6428 = vmul.f32 %v6108, %v6427
    %v6429 = vrcp.pop %v6279
    %v6430 = vmul.f32 %v6110, %v6429
    %v6431 = vrcp.pop %v6282
    %v6432 = vmul.f32 %v6112, %v6431
    %v6433 = vrcp.pop %v6285
    %v6434 = vmul.f32 %v6114, %v6433
    %v6435 = vrcp.pop %v6288
    %v6436 = vmul.f32 %v6116, %v6435
    %v6437 = vrcp.pop %v6291
    %v6438 = vmul.f32 %v6118, %v6437
    %v6439 = vrcp.pop %v6294
    %v6440 = vmul.f32 %v6120, %v6439
    %v6441 = vrcp.pop %v6297
    %v6442 = vmul.f32 %v6122, %v6441
    %v6443 = vrcp.pop %v6300
    %v6444 = vmul.f32 %v6124, %v6443
    %v6445 = vrcp.pop %v6303
    %v6446 = vmul.f32 %v6126, %v6445
    %v6447 = vrcp.pop %v6306
    %v6448 = vmul.f32 %v6128, %v6447
    %v6449 = vrcp.pop %v6309
    %v6450 = vmul.f32 %v6130, %v6449
    %v6451 = vrcp.pop %v6312
    %v6452 = vmul.f32 %v6132, %v6451
    %v6453 = vrcp.pop %v6315
    %v6454 = vmul.f32 %v6134, %v6453
    %v6455 = vrcp.pop %v6318
    %v6456 = vmul.f32 %v6136, %v6455
    %v6457 = vrcp.pop %v6321
    %v6458 = vmul.f32 %v6138, %v6457
    %v6459 = vrcp.pop %v6324
    %v6460 = vmul.f32 %v6140, %v6459
    %v6461 = vrcp.pop %v6327
    %v6462 = vmul.f32 %v6142, %v6461
    %v6463 = vrcp.pop %v6330
    %v6464 = vmul.f32 %v6144, %v6463
    %v6465 = vrcp.pop %v6333
    %v6466 = vmul.f32 %v6146, %v6465
    %v6467 = vrcp.pop %v6336
    %v6468 = vmul.f32 %v6148, %v6467
    %v6469 = vrcp.pop %v6339
    %v6470 = vmul.f32 %v6150, %v6469
    %v6471 = vrcp.pop %v6342
    %v6472 = vmul.f32 %v6152, %v6471
    %v6473 = vrcp.pop %v6345
    %v6474 = vmul.f32 %v6154, %v6473
    %v6475 = vrcp.pop %v6348
    %v6476 = vmul.f32 %v6156, %v6475
    %v6477 = vpack.c.bf16 %v6352, %v6350
    %v6478 = vpack.c.bf16 %v6356, %v6354
    %v6479 = vpack.c.bf16 %v6360, %v6358
    %v6480 = vpack.c.bf16 %v6364, %v6362
    %v6481 = vpack.c.bf16 %v4810, %v4807
    %v6482 = vpack.c.bf16 %v4818, %v4815
    %v6483 = vpack.c.bf16 %v4826, %v4823
    %v6484 = vpack.c.bf16 %v4834, %v4831
    %v6486 = vsel %vm1594, %v6477, 0
    %v6489 = vsel %vm1594, %v6478, 0
    %v6492 = vsel %vm1594, %v6479, 0
    %v6495 = vsel %vm1594, %v6480, 0
    %6497 = vmatprep.subr.bf16.mxu0 0
    %6498 = vmatpush1.bf16.msra.mxu0 %v6481
    %6499 = vmatprep.subr.bf16.mxu0 0
    %6500 = vmatpush1.bf16.msra.mxu0 %v6482
    %6501 = vmatprep.subr.bf16.mxu0 0
    %6502 = vmatpush1.bf16.msra.mxu0 %v6483
    %6503 = vmatprep.subr.bf16.mxu0 0
    %6504 = vmatpush1.bf16.msra.mxu0 %v6484
    %6505 = vmatprep.subr.bf16.mxu0 0
    %6506 = vmatpush1.bf16.msra.mxu0 0
    %6507 = vmatprep.subr.bf16.mxu0 0
    %6508 = vmatpush1.bf16.msra.mxu0 0
    %6509 = vmatprep.subr.bf16.mxu0 0
    %6510 = vmatpush1.bf16.msra.mxu0 0
    %6511 = vmatprep.subr.bf16.mxu0 0
    %6512 = vmatpush1.bf16.msra.mxu0 0
    %6513 = vmatprep.subr.bf16.mxu0 0
    %6514 = vmatpush1.bf16.msra.mxu0 0
    %6515 = vmatprep.subr.bf16.mxu0 0
    %6516 = vmatpush1.bf16.msra.mxu0 0
    %6517 = vmatprep.subr.bf16.mxu0 0
    %6518 = vmatpush1.bf16.msra.mxu0 0
    %6519 = vmatprep.subr.bf16.mxu0 0
    %6520 = vmatpush1.bf16.msra.mxu0 0
    %6521 = vmatprep.subr.bf16.mxu0 0
    %6522 = vmatpush1.bf16.msra.mxu0 0
    %6523 = vmatprep.subr.bf16.mxu0 0
    %6524 = vmatpush1.bf16.msra.mxu0 0
    %6525 = vmatprep.subr.bf16.mxu0 0
    %6526 = vmatpush1.bf16.msra.mxu0 0
    %6527 = vmatprep.subr.bf16.mxu0 0
    %6528 = vmatpush1.bf16.msra.mxu0 0
    %6529 = vmatprep.mubr.bf16.mxu0 0
    %6530 = vmatmul.mubr.bf16.gmra.mrb[0].mxu0 %v6486
    %v6531 = vpop.f32.mrb[0].mxu0
    %v6532 = vadd.f32 0.0, %v6531
    %v6533 = vpop.f32.mrb[0].mxu0
    %v6534 = vpop.f32.mrb[0].mxu0
    %v6535 = vadd.f32 0.0, %v6534
    %v6536 = vpop.f32.mrb[0].mxu0
    %6537 = vmatprep.mubr.bf16.mxu0 0
    %6538 = vmatmul.mubr.bf16.gmra.mrb[0].mxu0 %v6489
    %v6539 = vpop.f32.mrb[0].mxu0
    %v6540 = vadd.f32 0.0, %v6539
    %v6541 = vpop.f32.mrb[0].mxu0
    %v6542 = vpop.f32.mrb[0].mxu0
    %v6543 = vadd.f32 0.0, %v6542
    %v6544 = vpop.f32.mrb[0].mxu0
    %6545 = vmatprep.mubr.bf16.mxu0 0
    %6546 = vmatmul.mubr.bf16.gmra.mrb[0].mxu0 %v6492
    %v6547 = vpop.f32.mrb[0].mxu0
    %v6548 = vadd.f32 0.0, %v6547
    %v6549 = vpop.f32.mrb[0].mxu0
    %v6550 = vpop.f32.mrb[0].mxu0
    %v6551 = vadd.f32 0.0, %v6550
    %v6552 = vpop.f32.mrb[0].mxu0
    %6553 = vmatprep.mubr.bf16.mxu0 0
    %6554 = vmatmul.mubr.bf16.gmra.mrb[0].mxu0 %v6495
    %v6555 = vpop.f32.mrb[0].mxu0
    %v6556 = vadd.f32 0.0, %v6555
    %v6557 = vpop.f32.mrb[0].mxu0
    %v6558 = vpop.f32.mrb[0].mxu0
    %v6559 = vadd.f32 0.0, %v6558
    %v6560 = vpop.f32.mrb[0].mxu0
    %6561 = vdwg.mxu0
    %6562 = vst.msk [vmem:[#allocation2] sm:$0xff] %vm697, %v6532
    %6563 = vst.msk [vmem:[#allocation2 + $0x8] sm:$0xff] %vm697, %v6535
    %6564 = vst.msk [vmem:[#allocation2 + $0x10] sm:$0xff] %vm697, %v6540
    %6565 = vst.msk [vmem:[#allocation2 + $0x18] sm:$0xff] %vm697, %v6543
    %6566 = vst.msk [vmem:[#allocation2 + $0x20] sm:$0xff] %vm697, %v6548
    %6567 = vst.msk [vmem:[#allocation2 + $0x28] sm:$0xff] %vm697, %v6551
    %6568 = vst.msk [vmem:[#allocation2 + $0x30] sm:$0xff] %vm697, %v6556
    %6569 = vst.msk [vmem:[#allocation2 + $0x38] sm:$0xff] %vm697, %v6559
    %v6570 = vpack.c.bf16 %v6368, %v6366
    %v6571 = vpack.c.bf16 %v6372, %v6370
    %v6572 = vpack.c.bf16 %v6376, %v6374
    %v6573 = vpack.c.bf16 %v6380, %v6378
    %6578 = vrot.lane.b32.xlu0 %v6481, 96
    %v6579 = vpop.permute.xlu0 %6578
    %6580 = vrot.lane.b32.xlu0 %v6482, 96
    %v6581 = vpop.permute.xlu0 %6580
    %6582 = vrot.lane.b32.xlu0 %v6483, 96
    %v6583 = vpop.permute.xlu0 %6582
    %6584 = vrot.lane.b32.xlu0 %v6484, 96
    %v6585 = vpop.permute.xlu0 %6584
    %v6591 = vsel %vm1594, %v6570, 0
    %v6594 = vsel %vm1594, %v6571, 0
    %v6597 = vsel %vm1594, %v6572, 0
    %v6600 = vsel %vm1594, %v6573, 0
    %6602 = vmatprep.subr.bf16.mxu0 0
    %6603 = vmatpush1.bf16.msra.mxu0 %v6579
    %6604 = vmatprep.subr.bf16.mxu0 0
    %6605 = vmatpush1.bf16.msra.mxu0 %v6581
    %6606 = vmatprep.subr.bf16.mxu0 0
    %6607 = vmatpush1.bf16.msra.mxu0 %v6583
    %6608 = vmatprep.subr.bf16.mxu0 0
    %6609 = vmatpush1.bf16.msra.mxu0 %v6585
    %6610 = vmatprep.subr.bf16.mxu0 0
    %6611 = vmatpush1.bf16.msra.mxu0 0
    %6612 = vmatprep.subr.bf16.mxu0 0
    %6613 = vmatpush1.bf16.msra.mxu0 0
    %6614 = vmatprep.subr.bf16.mxu0 0
    %6615 = vmatpush1.bf16.msra.mxu0 0
    %6616 = vmatprep.subr.bf16.mxu0 0
    %6617 = vmatpush1.bf16.msra.mxu0 0
    %6618 = vmatprep.subr.bf16.mxu0 0
    %6619 = vmatpush1.bf16.msra.mxu0 0
    %6620 = vmatprep.subr.bf16.mxu0 0
    %6621 = vmatpush1.bf16.msra.mxu0 0
    %6622 = vmatprep.subr.bf16.mxu0 0
    %6623 = vmatpush1.bf16.msra.mxu0 0
    %6624 = vmatprep.subr.bf16.mxu0 0
    %6625 = vmatpush1.bf16.msra.mxu0 0
    %6626 = vmatprep.subr.bf16.mxu0 0
    %6627 = vmatpush1.bf16.msra.mxu0 0
    %6628 = vmatprep.subr.bf16.mxu0 0
    %6629 = vmatpush1.bf16.msra.mxu0 0
    %6630 = vmatprep.subr.bf16.mxu0 0
    %6631 = vmatpush1.bf16.msra.mxu0 0
    %6632 = vmatprep.subr.bf16.mxu0 0
    %6633 = vmatpush1.bf16.msra.mxu0 0
    %6634 = vmatprep.mubr.bf16.mxu0 0
    %6635 = vmatmul.mubr.bf16.gmra.mrb[0].mxu0 %v6591
    %v6636 = vpop.f32.mrb[0].mxu0
    %v6637 = vadd.f32 0.0, %v6636
    %v6638 = vpop.f32.mrb[0].mxu0
    %v6639 = vpop.f32.mrb[0].mxu0
    %v6640 = vadd.f32 0.0, %v6639
    %v6641 = vpop.f32.mrb[0].mxu0
    %6642 = vmatprep.mubr.bf16.mxu0 0
    %6643 = vmatmul.mubr.bf16.gmra.mrb[0].mxu0 %v6594
    %v6644 = vpop.f32.mrb[0].mxu0
    %v6645 = vadd.f32 0.0, %v6644
    %v6646 = vpop.f32.mrb[0].mxu0
    %v6647 = vpop.f32.mrb[0].mxu0
    %v6648 = vadd.f32 0.0, %v6647
    %v6649 = vpop.f32.mrb[0].mxu0
    %6650 = vmatprep.mubr.bf16.mxu0 0
    %6651 = vmatmul.mubr.bf16.gmra.mrb[0].mxu0 %v6597
    %v6652 = vpop.f32.mrb[0].mxu0
    %v6653 = vadd.f32 0.0, %v6652
    %v6654 = vpop.f32.mrb[0].mxu0
    %v6655 = vpop.f32.mrb[0].mxu0
    %v6656 = vadd.f32 0.0, %v6655
    %v6657 = vpop.f32.mrb[0].mxu0
    %6658 = vmatprep.mubr.bf16.mxu0 0
    %6659 = vmatmul.mubr.bf16.gmra.mrb[0].mxu0 %v6600
    %v6660 = vpop.f32.mrb[0].mxu0
    %v6661 = vadd.f32 0.0, %v6660
    %v6662 = vpop.f32.mrb[0].mxu0
    %v6663 = vpop.f32.mrb[0].mxu0
    %v6664 = vadd.f32 0.0, %v6663
    %v6665 = vpop.f32.mrb[0].mxu0
    %6666 = vdwg.mxu0
    %6675 = vrot.lane.b32.xlu0 %v6637, 32
    %v6676 = vpop.permute.xlu0 %6675
    %6677 = vrot.lane.b32.xlu0 %v6640, 32
    %v6678 = vpop.permute.xlu0 %6677
    %6679 = vrot.lane.b32.xlu0 %v6645, 32
    %v6680 = vpop.permute.xlu0 %6679
    %6681 = vrot.lane.b32.xlu0 %v6648, 32
    %v6682 = vpop.permute.xlu0 %6681
    %6683 = vrot.lane.b32.xlu0 %v6653, 32
    %v6684 = vpop.permute.xlu0 %6683
    %6685 = vrot.lane.b32.xlu0 %v6656, 32
    %v6686 = vpop.permute.xlu0 %6685
    %6687 = vrot.lane.b32.xlu0 %v6661, 32
    %v6688 = vpop.permute.xlu0 %6687
    %6689 = vrot.lane.b32.xlu0 %v6664, 32
    %v6690 = vpop.permute.xlu0 %6689
    %6699 = vst.msk [vmem:[#allocation2] sm:$0xff] %vm2521, %v6676
    %6700 = vst.msk [vmem:[#allocation2 + $0x8] sm:$0xff] %vm2521, %v6678
    %6701 = vst.msk [vmem:[#allocation2 + $0x10] sm:$0xff] %vm2521, %v6680
    %6702 = vst.msk [vmem:[#allocation2 + $0x18] sm:$0xff] %vm2521, %v6682
    %6703 = vst.msk [vmem:[#allocation2 + $0x20] sm:$0xff] %vm2521, %v6684
    %6704 = vst.msk [vmem:[#allocation2 + $0x28] sm:$0xff] %vm2521, %v6686
    %6705 = vst.msk [vmem:[#allocation2 + $0x30] sm:$0xff] %vm2521, %v6688
    %6706 = vst.msk [vmem:[#allocation2 + $0x38] sm:$0xff] %vm2521, %v6690
    %v6707 = vpack.c.bf16 %v6384, %v6382
    %v6708 = vpack.c.bf16 %v6388, %v6386
    %v6709 = vpack.c.bf16 %v6392, %v6390
    %v6710 = vpack.c.bf16 %v6396, %v6394
    %6711 = vrot.lane.b32.xlu0 %v6481, 64
    %v6712 = vpop.permute.xlu0 %6711
    %6713 = vrot.lane.b32.xlu0 %v6482, 64
    %v6714 = vpop.permute.xlu0 %6713
    %6715 = vrot.lane.b32.xlu0 %v6483, 64
    %v6716 = vpop.permute.xlu0 %6715
    %6717 = vrot.lane.b32.xlu0 %v6484, 64
    %v6718 = vpop.permute.xlu0 %6717
    %v6724 = vsel %vm1594, %v6707, 0
    %v6727 = vsel %vm1594, %v6708, 0
    %v6730 = vsel %vm1594, %v6709, 0
    %v6733 = vsel %vm1594, %v6710, 0
    %6735 = vmatprep.subr.bf16.mxu0 0
    %6736 = vmatpush1.bf16.msra.mxu0 %v6712
    %6737 = vmatprep.subr.bf16.mxu0 0
    %6738 = vmatpush1.bf16.msra.mxu0 %v6714
    %6739 = vmatprep.subr.bf16.mxu0 0
    %6740 = vmatpush1.bf16.msra.mxu0 %v6716
    %6741 = vmatprep.subr.bf16.mxu0 0
    %6742 = vmatpush1.bf16.msra.mxu0 %v6718
    %6743 = vmatprep.subr.bf16.mxu0 0
    %6744 = vmatpush1.bf16.msra.mxu0 0
    %6745 = vmatprep.subr.bf16.mxu0 0
    %6746 = vmatpush1.bf16.msra.mxu0 0
    %6747 = vmatprep.subr.bf16.mxu0 0
    %6748 = vmatpush1.bf16.msra.mxu0 0
    %6749 = vmatprep.subr.bf16.mxu0 0
    %6750 = vmatpush1.bf16.msra.mxu0 0
    %6751 = vmatprep.subr.bf16.mxu0 0
    %6752 = vmatpush1.bf16.msra.mxu0 0
    %6753 = vmatprep.subr.bf16.mxu0 0
    %6754 = vmatpush1.bf16.msra.mxu0 0
    %6755 = vmatprep.subr.bf16.mxu0 0
    %6756 = vmatpush1.bf16.msra.mxu0 0
    %6757 = vmatprep.subr.bf16.mxu0 0
    %6758 = vmatpush1.bf16.msra.mxu0 0
    %6759 = vmatprep.subr.bf16.mxu0 0
    %6760 = vmatpush1.bf16.msra.mxu0 0
    %6761 = vmatprep.subr.bf16.mxu0 0
    %6762 = vmatpush1.bf16.msra.mxu0 0
    %6763 = vmatprep.subr.bf16.mxu0 0
    %6764 = vmatpush1.bf16.msra.mxu0 0
    %6765 = vmatprep.subr.bf16.mxu0 0
    %6766 = vmatpush1.bf16.msra.mxu0 0
    %6767 = vmatprep.mubr.bf16.mxu0 0
    %6768 = vmatmul.mubr.bf16.gmra.mrb[0].mxu0 %v6724
    %v6769 = vpop.f32.mrb[0].mxu0
    %v6770 = vadd.f32 0.0, %v6769
    %v6771 = vpop.f32.mrb[0].mxu0
    %v6772 = vpop.f32.mrb[0].mxu0
    %v6773 = vadd.f32 0.0, %v6772
    %v6774 = vpop.f32.mrb[0].mxu0
    %6775 = vmatprep.mubr.bf16.mxu0 0
    %6776 = vmatmul.mubr.bf16.gmra.mrb[0].mxu0 %v6727
    %v6777 = vpop.f32.mrb[0].mxu0
    %v6778 = vadd.f32 0.0, %v6777
    %v6779 = vpop.f32.mrb[0].mxu0
    %v6780 = vpop.f32.mrb[0].mxu0
    %v6781 = vadd.f32 0.0, %v6780
    %v6782 = vpop.f32.mrb[0].mxu0
    %6783 = vmatprep.mubr.bf16.mxu0 0
    %6784 = vmatmul.mubr.bf16.gmra.mrb[0].mxu0 %v6730
    %v6785 = vpop.f32.mrb[0].mxu0
    %v6786 = vadd.f32 0.0, %v6785
    %v6787 = vpop.f32.mrb[0].mxu0
    %v6788 = vpop.f32.mrb[0].mxu0
    %v6789 = vadd.f32 0.0, %v6788
    %v6790 = vpop.f32.mrb[0].mxu0
    %6791 = vmatprep.mubr.bf16.mxu0 0
    %6792 = vmatmul.mubr.bf16.gmra.mrb[0].mxu0 %v6733
    %v6793 = vpop.f32.mrb[0].mxu0
    %v6794 = vadd.f32 0.0, %v6793
    %v6795 = vpop.f32.mrb[0].mxu0
    %v6796 = vpop.f32.mrb[0].mxu0
    %v6797 = vadd.f32 0.0, %v6796
    %v6798 = vpop.f32.mrb[0].mxu0
    %6799 = vdwg.mxu0
    %6808 = vrot.lane.b32.xlu0 %v6770, 64
    %v6809 = vpop.permute.xlu0 %6808
    %6810 = vrot.lane.b32.xlu0 %v6773, 64
    %v6811 = vpop.permute.xlu0 %6810
    %6812 = vrot.lane.b32.xlu0 %v6778, 64
    %v6813 = vpop.permute.xlu0 %6812
    %6814 = vrot.lane.b32.xlu0 %v6781, 64
    %v6815 = vpop.permute.xlu0 %6814
    %6816 = vrot.lane.b32.xlu0 %v6786, 64
    %v6817 = vpop.permute.xlu0 %6816
    %6818 = vrot.lane.b32.xlu0 %v6789, 64
    %v6819 = vpop.permute.xlu0 %6818
    %6820 = vrot.lane.b32.xlu0 %v6794, 64
    %v6821 = vpop.permute.xlu0 %6820
    %6822 = vrot.lane.b32.xlu0 %v6797, 64
    %v6823 = vpop.permute.xlu0 %6822
    %6832 = vst.msk [vmem:[#allocation2] sm:$0xff] %vm2655, %v6809
    %6833 = vst.msk [vmem:[#allocation2 + $0x8] sm:$0xff] %vm2655, %v6811
    %6834 = vst.msk [vmem:[#allocation2 + $0x10] sm:$0xff] %vm2655, %v6813
    %6835 = vst.msk [vmem:[#allocation2 + $0x18] sm:$0xff] %vm2655, %v6815
    %6836 = vst.msk [vmem:[#allocation2 + $0x20] sm:$0xff] %vm2655, %v6817
    %6837 = vst.msk [vmem:[#allocation2 + $0x28] sm:$0xff] %vm2655, %v6819
    %6838 = vst.msk [vmem:[#allocation2 + $0x30] sm:$0xff] %vm2655, %v6821
    %6839 = vst.msk [vmem:[#allocation2 + $0x38] sm:$0xff] %vm2655, %v6823
    %v6840 = vpack.c.bf16 %v6400, %v6398
    %v6841 = vpack.c.bf16 %v6404, %v6402
    %v6842 = vpack.c.bf16 %v6408, %v6406
    %v6843 = vpack.c.bf16 %v6412, %v6410
    %6844 = vrot.lane.b32.xlu0 %v6481, 32
    %v6845 = vpop.permute.xlu0 %6844
    %6846 = vrot.lane.b32.xlu0 %v6482, 32
    %v6847 = vpop.permute.xlu0 %6846
    %6848 = vrot.lane.b32.xlu0 %v6483, 32
    %v6849 = vpop.permute.xlu0 %6848
    %6850 = vrot.lane.b32.xlu0 %v6484, 32
    %v6851 = vpop.permute.xlu0 %6850
    %v6857 = vsel %vm1594, %v6840, 0
    %v6860 = vsel %vm1594, %v6841, 0
    %v6863 = vsel %vm1594, %v6842, 0
    %v6866 = vsel %vm1594, %v6843, 0
    %6868 = vmatprep.subr.bf16.mxu0 0
    %6869 = vmatpush1.bf16.msra.mxu0 %v6845
    %6870 = vmatprep.subr.bf16.mxu0 0
    %6871 = vmatpush1.bf16.msra.mxu0 %v6847
    %6872 = vmatprep.subr.bf16.mxu0 0
    %6873 = vmatpush1.bf16.msra.mxu0 %v6849
    %6874 = vmatprep.subr.bf16.mxu0 0
    %6875 = vmatpush1.bf16.msra.mxu0 %v6851
    %6876 = vmatprep.subr.bf16.mxu0 0
    %6877 = vmatpush1.bf16.msra.mxu0 0
    %6878 = vmatprep.subr.bf16.mxu0 0
    %6879 = vmatpush1.bf16.msra.mxu0 0
    %6880 = vmatprep.subr.bf16.mxu0 0
    %6881 = vmatpush1.bf16.msra.mxu0 0
    %6882 = vmatprep.subr.bf16.mxu0 0
    %6883 = vmatpush1.bf16.msra.mxu0 0
    %6884 = vmatprep.subr.bf16.mxu0 0
    %6885 = vmatpush1.bf16.msra.mxu0 0
    %6886 = vmatprep.subr.bf16.mxu0 0
    %6887 = vmatpush1.bf16.msra.mxu0 0
    %6888 = vmatprep.subr.bf16.mxu0 0
    %6889 = vmatpush1.bf16.msra.mxu0 0
    %6890 = vmatprep.subr.bf16.mxu0 0
    %6891 = vmatpush1.bf16.msra.mxu0 0
    %6892 = vmatprep.subr.bf16.mxu0 0
    %6893 = vmatpush1.bf16.msra.mxu0 0
    %6894 = vmatprep.subr.bf16.mxu0 0
    %6895 = vmatpush1.bf16.msra.mxu0 0
    %6896 = vmatprep.subr.bf16.mxu0 0
    %6897 = vmatpush1.bf16.msra.mxu0 0
    %6898 = vmatprep.subr.bf16.mxu0 0
    %6899 = vmatpush1.bf16.msra.mxu0 0
    %6900 = vmatprep.mubr.bf16.mxu0 0
    %6901 = vmatmul.mubr.bf16.gmra.mrb[0].mxu0 %v6857
    %v6902 = vpop.f32.mrb[0].mxu0
    %v6903 = vadd.f32 0.0, %v6902
    %v6904 = vpop.f32.mrb[0].mxu0
    %v6905 = vpop.f32.mrb[0].mxu0
    %v6906 = vadd.f32 0.0, %v6905
    %v6907 = vpop.f32.mrb[0].mxu0
    %6908 = vmatprep.mubr.bf16.mxu0 0
    %6909 = vmatmul.mubr.bf16.gmra.mrb[0].mxu0 %v6860
    %v6910 = vpop.f32.mrb[0].mxu0
    %v6911 = vadd.f32 0.0, %v6910
    %v6912 = vpop.f32.mrb[0].mxu0
    %v6913 = vpop.f32.mrb[0].mxu0
    %v6914 = vadd.f32 0.0, %v6913
    %v6915 = vpop.f32.mrb[0].mxu0
    %6916 = vmatprep.mubr.bf16.mxu0 0
    %6917 = vmatmul.mubr.bf16.gmra.mrb[0].mxu0 %v6863
    %v6918 = vpop.f32.mrb[0].mxu0
    %v6919 = vadd.f32 0.0, %v6918
    %v6920 = vpop.f32.mrb[0].mxu0
    %v6921 = vpop.f32.mrb[0].mxu0
    %v6922 = vadd.f32 0.0, %v6921
    %v6923 = vpop.f32.mrb[0].mxu0
    %6924 = vmatprep.mubr.bf16.mxu0 0
    %6925 = vmatmul.mubr.bf16.gmra.mrb[0].mxu0 %v6866
    %v6926 = vpop.f32.mrb[0].mxu0
    %v6927 = vadd.f32 0.0, %v6926
    %v6928 = vpop.f32.mrb[0].mxu0
    %v6929 = vpop.f32.mrb[0].mxu0
    %v6930 = vadd.f32 0.0, %v6929
    %v6931 = vpop.f32.mrb[0].mxu0
    %6932 = vdwg.mxu0
    %6941 = vrot.lane.b32.xlu0 %v6903, 96
    %v6942 = vpop.permute.xlu0 %6941
    %6943 = vrot.lane.b32.xlu0 %v6906, 96
    %v6944 = vpop.permute.xlu0 %6943
    %6945 = vrot.lane.b32.xlu0 %v6911, 96
    %v6946 = vpop.permute.xlu0 %6945
    %6947 = vrot.lane.b32.xlu0 %v6914, 96
    %v6948 = vpop.permute.xlu0 %6947
    %6949 = vrot.lane.b32.xlu0 %v6919, 96
    %v6950 = vpop.permute.xlu0 %6949
    %6951 = vrot.lane.b32.xlu0 %v6922, 96
    %v6952 = vpop.permute.xlu0 %6951
    %6953 = vrot.lane.b32.xlu0 %v6927, 96
    %v6954 = vpop.permute.xlu0 %6953
    %6955 = vrot.lane.b32.xlu0 %v6930, 96
    %v6956 = vpop.permute.xlu0 %6955
    %6965 = vst.msk [vmem:[#allocation2] sm:$0xff] %vm2789, %v6942
    %6966 = vst.msk [vmem:[#allocation2 + $0x8] sm:$0xff] %vm2789, %v6944
    %6967 = vst.msk [vmem:[#allocation2 + $0x10] sm:$0xff] %vm2789, %v6946
    %6968 = vst.msk [vmem:[#allocation2 + $0x18] sm:$0xff] %vm2789, %v6948
    %6969 = vst.msk [vmem:[#allocation2 + $0x20] sm:$0xff] %vm2789, %v6950
    %6970 = vst.msk [vmem:[#allocation2 + $0x28] sm:$0xff] %vm2789, %v6952
    %6971 = vst.msk [vmem:[#allocation2 + $0x30] sm:$0xff] %vm2789, %v6954
    %6972 = vst.msk [vmem:[#allocation2 + $0x38] sm:$0xff] %vm2789, %v6956
    %v6973 = vpack.c.bf16 %v6416, %v6414
    %v6974 = vpack.c.bf16 %v6420, %v6418
    %v6975 = vpack.c.bf16 %v6424, %v6422
    %v6976 = vpack.c.bf16 %v6428, %v6426
    %v6977 = vpack.c.bf16 %v4842, %v4839
    %v6978 = vpack.c.bf16 %v4850, %v4847
    %v6979 = vpack.c.bf16 %v4858, %v4855
    %v6980 = vpack.c.bf16 %v4866, %v4863
    %v6982 = vsel %vm1594, %v6973, 0
    %v6985 = vsel %vm1594, %v6974, 0
    %v6988 = vsel %vm1594, %v6975, 0
    %v6991 = vsel %vm1594, %v6976, 0
    %6993 = vmatprep.subr.bf16.mxu0 0
    %6994 = vmatpush1.bf16.msra.mxu0 %v6977
    %6995 = vmatprep.subr.bf16.mxu0 0
    %6996 = vmatpush1.bf16.msra.mxu0 %v6978
    %6997 = vmatprep.subr.bf16.mxu0 0
    %6998 = vmatpush1.bf16.msra.mxu0 %v6979
    %6999 = vmatprep.subr.bf16.mxu0 0
    %7000 = vmatpush1.bf16.msra.mxu0 %v6980
    %7001 = vmatprep.subr.bf16.mxu0 0
    %7002 = vmatpush1.bf16.msra.mxu0 0
    %7003 = vmatprep.subr.bf16.mxu0 0
    %7004 = vmatpush1.bf16.msra.mxu0 0
    %7005 = vmatprep.subr.bf16.mxu0 0
    %7006 = vmatpush1.bf16.msra.mxu0 0
    %7007 = vmatprep.subr.bf16.mxu0 0
    %7008 = vmatpush1.bf16.msra.mxu0 0
    %7009 = vmatprep.subr.bf16.mxu0 0
    %7010 = vmatpush1.bf16.msra.mxu0 0
    %7011 = vmatprep.subr.bf16.mxu0 0
    %7012 = vmatpush1.bf16.msra.mxu0 0
    %7013 = vmatprep.subr.bf16.mxu0 0
    %7014 = vmatpush1.bf16.msra.mxu0 0
    %7015 = vmatprep.subr.bf16.mxu0 0
    %7016 = vmatpush1.bf16.msra.mxu0 0
    %7017 = vmatprep.subr.bf16.mxu0 0
    %7018 = vmatpush1.bf16.msra.mxu0 0
    %7019 = vmatprep.subr.bf16.mxu0 0
    %7020 = vmatpush1.bf16.msra.mxu0 0
    %7021 = vmatprep.subr.bf16.mxu0 0
    %7022 = vmatpush1.bf16.msra.mxu0 0
    %7023 = vmatprep.subr.bf16.mxu0 0
    %7024 = vmatpush1.bf16.msra.mxu0 0
    %7025 = vmatprep.mubr.bf16.mxu0 0
    %7026 = vmatmul.mubr.bf16.gmra.mrb[0].mxu0 %v6982
    %v7027 = vpop.f32.mrb[0].mxu0
    %v7028 = vadd.f32 0.0, %v7027
    %v7029 = vpop.f32.mrb[0].mxu0
    %v7030 = vpop.f32.mrb[0].mxu0
    %v7031 = vadd.f32 0.0, %v7030
    %v7032 = vpop.f32.mrb[0].mxu0
    %7033 = vmatprep.mubr.bf16.mxu0 0
    %7034 = vmatmul.mubr.bf16.gmra.mrb[0].mxu0 %v6985
    %v7035 = vpop.f32.mrb[0].mxu0
    %v7036 = vadd.f32 0.0, %v7035
    %v7037 = vpop.f32.mrb[0].mxu0
    %v7038 = vpop.f32.mrb[0].mxu0
    %v7039 = vadd.f32 0.0, %v7038
    %v7040 = vpop.f32.mrb[0].mxu0
    %7041 = vmatprep.mubr.bf16.mxu0 0
    %7042 = vmatmul.mubr.bf16.gmra.mrb[0].mxu0 %v6988
    %v7043 = vpop.f32.mrb[0].mxu0
    %v7044 = vadd.f32 0.0, %v7043
    %v7045 = vpop.f32.mrb[0].mxu0
    %v7046 = vpop.f32.mrb[0].mxu0
    %v7047 = vadd.f32 0.0, %v7046
    %v7048 = vpop.f32.mrb[0].mxu0
    %7049 = vmatprep.mubr.bf16.mxu0 0
    %7050 = vmatmul.mubr.bf16.gmra.mrb[0].mxu0 %v6991
    %v7051 = vpop.f32.mrb[0].mxu0
    %v7052 = vadd.f32 0.0, %v7051
    %v7053 = vpop.f32.mrb[0].mxu0
    %v7054 = vpop.f32.mrb[0].mxu0
    %v7055 = vadd.f32 0.0, %v7054
    %v7056 = vpop.f32.mrb[0].mxu0
    %7057 = vdwg.mxu0
    %7058 = vst.msk [vmem:[#allocation2 + $0x40] sm:$0xff] %vm697, %v7028
    %7059 = vst.msk [vmem:[#allocation2 + $0x48] sm:$0xff] %vm697, %v7031
    %7060 = vst.msk [vmem:[#allocation2 + $0x50] sm:$0xff] %vm697, %v7036
    %7061 = vst.msk [vmem:[#allocation2 + $0x58] sm:$0xff] %vm697, %v7039
    %7062 = vst.msk [vmem:[#allocation2 + $0x60] sm:$0xff] %vm697, %v7044
    %7063 = vst.msk [vmem:[#allocation2 + $0x68] sm:$0xff] %vm697, %v7047
    %7064 = vst.msk [vmem:[#allocation2 + $0x70] sm:$0xff] %vm697, %v7052
    %7065 = vst.msk [vmem:[#allocation2 + $0x78] sm:$0xff] %vm697, %v7055
    %v7066 = vpack.c.bf16 %v6432, %v6430
    %v7067 = vpack.c.bf16 %v6436, %v6434
    %v7068 = vpack.c.bf16 %v6440, %v6438
    %v7069 = vpack.c.bf16 %v6444, %v6442
    %7074 = vrot.lane.b32.xlu0 %v6977, 96
    %v7075 = vpop.permute.xlu0 %7074
    %7076 = vrot.lane.b32.xlu0 %v6978, 96
    %v7077 = vpop.permute.xlu0 %7076
    %7078 = vrot.lane.b32.xlu0 %v6979, 96
    %v7079 = vpop.permute.xlu0 %7078
    %7080 = vrot.lane.b32.xlu0 %v6980, 96
    %v7081 = vpop.permute.xlu0 %7080
    %v7087 = vsel %vm1594, %v7066, 0
    %v7090 = vsel %vm1594, %v7067, 0
    %v7093 = vsel %vm1594, %v7068, 0
    %v7096 = vsel %vm1594, %v7069, 0
    %7098 = vmatprep.subr.bf16.mxu0 0
    %7099 = vmatpush1.bf16.msra.mxu0 %v7075
    %7100 = vmatprep.subr.bf16.mxu0 0
    %7101 = vmatpush1.bf16.msra.mxu0 %v7077
    %7102 = vmatprep.subr.bf16.mxu0 0
    %7103 = vmatpush1.bf16.msra.mxu0 %v7079
    %7104 = vmatprep.subr.bf16.mxu0 0
    %7105 = vmatpush1.bf16.msra.mxu0 %v7081
    %7106 = vmatprep.subr.bf16.mxu0 0
    %7107 = vmatpush1.bf16.msra.mxu0 0
    %7108 = vmatprep.subr.bf16.mxu0 0
    %7109 = vmatpush1.bf16.msra.mxu0 0
    %7110 = vmatprep.subr.bf16.mxu0 0
    %7111 = vmatpush1.bf16.msra.mxu0 0
    %7112 = vmatprep.subr.bf16.mxu0 0
    %7113 = vmatpush1.bf16.msra.mxu0 0
    %7114 = vmatprep.subr.bf16.mxu0 0
    %7115 = vmatpush1.bf16.msra.mxu0 0
    %7116 = vmatprep.subr.bf16.mxu0 0
    %7117 = vmatpush1.bf16.msra.mxu0 0
    %7118 = vmatprep.subr.bf16.mxu0 0
    %7119 = vmatpush1.bf16.msra.mxu0 0
    %7120 = vmatprep.subr.bf16.mxu0 0
    %7121 = vmatpush1.bf16.msra.mxu0 0
    %7122 = vmatprep.subr.bf16.mxu0 0
    %7123 = vmatpush1.bf16.msra.mxu0 0
    %7124 = vmatprep.subr.bf16.mxu0 0
    %7125 = vmatpush1.bf16.msra.mxu0 0
    %7126 = vmatprep.subr.bf16.mxu0 0
    %7127 = vmatpush1.bf16.msra.mxu0 0
    %7128 = vmatprep.subr.bf16.mxu0 0
    %7129 = vmatpush1.bf16.msra.mxu0 0
    %7130 = vmatprep.mubr.bf16.mxu0 0
    %7131 = vmatmul.mubr.bf16.gmra.mrb[0].mxu0 %v7087
    %v7132 = vpop.f32.mrb[0].mxu0
    %v7133 = vadd.f32 0.0, %v7132
    %v7134 = vpop.f32.mrb[0].mxu0
    %v7135 = vpop.f32.mrb[0].mxu0
    %v7136 = vadd.f32 0.0, %v7135
    %v7137 = vpop.f32.mrb[0].mxu0
    %7138 = vmatprep.mubr.bf16.mxu0 0
    %7139 = vmatmul.mubr.bf16.gmra.mrb[0].mxu0 %v7090
    %v7140 = vpop.f32.mrb[0].mxu0
    %v7141 = vadd.f32 0.0, %v7140
    %v7142 = vpop.f32.mrb[0].mxu0
    %v7143 = vpop.f32.mrb[0].mxu0
    %v7144 = vadd.f32 0.0, %v7143
    %v7145 = vpop.f32.mrb[0].mxu0
    %7146 = vmatprep.mubr.bf16.mxu0 0
    %7147 = vmatmul.mubr.bf16.gmra.mrb[0].mxu0 %v7093
    %v7148 = vpop.f32.mrb[0].mxu0
    %v7149 = vadd.f32 0.0, %v7148
    %v7150 = vpop.f32.mrb[0].mxu0
    %v7151 = vpop.f32.mrb[0].mxu0
    %v7152 = vadd.f32 0.0, %v7151
    %v7153 = vpop.f32.mrb[0].mxu0
    %7154 = vmatprep.mubr.bf16.mxu0 0
    %7155 = vmatmul.mubr.bf16.gmra.mrb[0].mxu0 %v7096
    %v7156 = vpop.f32.mrb[0].mxu0
    %v7157 = vadd.f32 0.0, %v7156
    %v7158 = vpop.f32.mrb[0].mxu0
    %v7159 = vpop.f32.mrb[0].mxu0
    %v7160 = vadd.f32 0.0, %v7159
    %v7161 = vpop.f32.mrb[0].mxu0
    %7162 = vdwg.mxu0
    %7171 = vrot.lane.b32.xlu0 %v7133, 32
    %v7172 = vpop.permute.xlu0 %7171
    %7173 = vrot.lane.b32.xlu0 %v7136, 32
    %v7174 = vpop.permute.xlu0 %7173
    %7175 = vrot.lane.b32.xlu0 %v7141, 32
    %v7176 = vpop.permute.xlu0 %7175
    %7177 = vrot.lane.b32.xlu0 %v7144, 32
    %v7178 = vpop.permute.xlu0 %7177
    %7179 = vrot.lane.b32.xlu0 %v7149, 32
    %v7180 = vpop.permute.xlu0 %7179
    %7181 = vrot.lane.b32.xlu0 %v7152, 32
    %v7182 = vpop.permute.xlu0 %7181
    %7183 = vrot.lane.b32.xlu0 %v7157, 32
    %v7184 = vpop.permute.xlu0 %7183
    %7185 = vrot.lane.b32.xlu0 %v7160, 32
    %v7186 = vpop.permute.xlu0 %7185
    %7195 = vst.msk [vmem:[#allocation2 + $0x40] sm:$0xff] %vm2521, %v7172
    %7196 = vst.msk [vmem:[#allocation2 + $0x48] sm:$0xff] %vm2521, %v7174
    %7197 = vst.msk [vmem:[#allocation2 + $0x50] sm:$0xff] %vm2521, %v7176
    %7198 = vst.msk [vmem:[#allocation2 + $0x58] sm:$0xff] %vm2521, %v7178
    %7199 = vst.msk [vmem:[#allocation2 + $0x60] sm:$0xff] %vm2521, %v7180
    %7200 = vst.msk [vmem:[#allocation2 + $0x68] sm:$0xff] %vm2521, %v7182
    %7201 = vst.msk [vmem:[#allocation2 + $0x70] sm:$0xff] %vm2521, %v7184
    %7202 = vst.msk [vmem:[#allocation2 + $0x78] sm:$0xff] %vm2521, %v7186
    %v7203 = vpack.c.bf16 %v6448, %v6446
    %v7204 = vpack.c.bf16 %v6452, %v6450
    %v7205 = vpack.c.bf16 %v6456, %v6454
    %v7206 = vpack.c.bf16 %v6460, %v6458
    %7207 = vrot.lane.b32.xlu0 %v6977, 64
    %v7208 = vpop.permute.xlu0 %7207
    %7209 = vrot.lane.b32.xlu0 %v6978, 64
    %v7210 = vpop.permute.xlu0 %7209
    %7211 = vrot.lane.b32.xlu0 %v6979, 64
    %v7212 = vpop.permute.xlu0 %7211
    %7213 = vrot.lane.b32.xlu0 %v6980, 64
    %v7214 = vpop.permute.xlu0 %7213
    %v7220 = vsel %vm1594, %v7203, 0
    %v7223 = vsel %vm1594, %v7204, 0
    %v7226 = vsel %vm1594, %v7205, 0
    %v7229 = vsel %vm1594, %v7206, 0
    %7231 = vmatprep.subr.bf16.mxu0 0
    %7232 = vmatpush1.bf16.msra.mxu0 %v7208
    %7233 = vmatprep.subr.bf16.mxu0 0
    %7234 = vmatpush1.bf16.msra.mxu0 %v7210
    %7235 = vmatprep.subr.bf16.mxu0 0
    %7236 = vmatpush1.bf16.msra.mxu0 %v7212
    %7237 = vmatprep.subr.bf16.mxu0 0
    %7238 = vmatpush1.bf16.msra.mxu0 %v7214
    %7239 = vmatprep.subr.bf16.mxu0 0
    %7240 = vmatpush1.bf16.msra.mxu0 0
    %7241 = vmatprep.subr.bf16.mxu0 0
    %7242 = vmatpush1.bf16.msra.mxu0 0
    %7243 = vmatprep.subr.bf16.mxu0 0
    %7244 = vmatpush1.bf16.msra.mxu0 0
    %7245 = vmatprep.subr.bf16.mxu0 0
    %7246 = vmatpush1.bf16.msra.mxu0 0
    %7247 = vmatprep.subr.bf16.mxu0 0
    %7248 = vmatpush1.bf16.msra.mxu0 0
    %7249 = vmatprep.subr.bf16.mxu0 0
    %7250 = vmatpush1.bf16.msra.mxu0 0
    %7251 = vmatprep.subr.bf16.mxu0 0
    %7252 = vmatpush1.bf16.msra.mxu0 0
    %7253 = vmatprep.subr.bf16.mxu0 0
    %7254 = vmatpush1.bf16.msra.mxu0 0
    %7255 = vmatprep.subr.bf16.mxu0 0
    %7256 = vmatpush1.bf16.msra.mxu0 0
    %7257 = vmatprep.subr.bf16.mxu0 0
    %7258 = vmatpush1.bf16.msra.mxu0 0
    %7259 = vmatprep.subr.bf16.mxu0 0
    %7260 = vmatpush1.bf16.msra.mxu0 0
    %7261 = vmatprep.subr.bf16.mxu0 0
    %7262 = vmatpush1.bf16.msra.mxu0 0
    %7263 = vmatprep.mubr.bf16.mxu0 0
    %7264 = vmatmul.mubr.bf16.gmra.mrb[0].mxu0 %v7220
    %v7265 = vpop.f32.mrb[0].mxu0
    %v7266 = vadd.f32 0.0, %v7265
    %v7267 = vpop.f32.mrb[0].mxu0
    %v7268 = vpop.f32.mrb[0].mxu0
    %v7269 = vadd.f32 0.0, %v7268
    %v7270 = vpop.f32.mrb[0].mxu0
    %7271 = vmatprep.mubr.bf16.mxu0 0
    %7272 = vmatmul.mubr.bf16.gmra.mrb[0].mxu0 %v7223
    %v7273 = vpop.f32.mrb[0].mxu0
    %v7274 = vadd.f32 0.0, %v7273
    %v7275 = vpop.f32.mrb[0].mxu0
    %v7276 = vpop.f32.mrb[0].mxu0
    %v7277 = vadd.f32 0.0, %v7276
    %v7278 = vpop.f32.mrb[0].mxu0
    %7279 = vmatprep.mubr.bf16.mxu0 0
    %7280 = vmatmul.mubr.bf16.gmra.mrb[0].mxu0 %v7226
    %v7281 = vpop.f32.mrb[0].mxu0
    %v7282 = vadd.f32 0.0, %v7281
    %v7283 = vpop.f32.mrb[0].mxu0
    %v7284 = vpop.f32.mrb[0].mxu0
    %v7285 = vadd.f32 0.0, %v7284
    %v7286 = vpop.f32.mrb[0].mxu0
    %7287 = vmatprep.mubr.bf16.mxu0 0
    %7288 = vmatmul.mubr.bf16.gmra.mrb[0].mxu0 %v7229
    %v7289 = vpop.f32.mrb[0].mxu0
    %v7290 = vadd.f32 0.0, %v7289
    %v7291 = vpop.f32.mrb[0].mxu0
    %v7292 = vpop.f32.mrb[0].mxu0
    %v7293 = vadd.f32 0.0, %v7292
    %v7294 = vpop.f32.mrb[0].mxu0
    %7295 = vdwg.mxu0
    %7304 = vrot.lane.b32.xlu0 %v7266, 64
    %v7305 = vpop.permute.xlu0 %7304
    %7306 = vrot.lane.b32.xlu0 %v7269, 64
    %v7307 = vpop.permute.xlu0 %7306
    %7308 = vrot.lane.b32.xlu0 %v7274, 64
    %v7309 = vpop.permute.xlu0 %7308
    %7310 = vrot.lane.b32.xlu0 %v7277, 64
    %v7311 = vpop.permute.xlu0 %7310
    %7312 = vrot.lane.b32.xlu0 %v7282, 64
    %v7313 = vpop.permute.xlu0 %7312
    %7314 = vrot.lane.b32.xlu0 %v7285, 64
    %v7315 = vpop.permute.xlu0 %7314
    %7316 = vrot.lane.b32.xlu0 %v7290, 64
    %v7317 = vpop.permute.xlu0 %7316
    %7318 = vrot.lane.b32.xlu0 %v7293, 64
    %v7319 = vpop.permute.xlu0 %7318
    %7328 = vst.msk [vmem:[#allocation2 + $0x40] sm:$0xff] %vm2655, %v7305
    %7329 = vst.msk [vmem:[#allocation2 + $0x48] sm:$0xff] %vm2655, %v7307
    %7330 = vst.msk [vmem:[#allocation2 + $0x50] sm:$0xff] %vm2655, %v7309
    %7331 = vst.msk [vmem:[#allocation2 + $0x58] sm:$0xff] %vm2655, %v7311
    %7332 = vst.msk [vmem:[#allocation2 + $0x60] sm:$0xff] %vm2655, %v7313
    %7333 = vst.msk [vmem:[#allocation2 + $0x68] sm:$0xff] %vm2655, %v7315
    %7334 = vst.msk [vmem:[#allocation2 + $0x70] sm:$0xff] %vm2655, %v7317
    %7335 = vst.msk [vmem:[#allocation2 + $0x78] sm:$0xff] %vm2655, %v7319
    %v7336 = vpack.c.bf16 %v6464, %v6462
    %v7337 = vpack.c.bf16 %v6468, %v6466
    %v7338 = vpack.c.bf16 %v6472, %v6470
    %v7339 = vpack.c.bf16 %v6476, %v6474
    %7340 = vrot.lane.b32.xlu0 %v6977, 32
    %v7341 = vpop.permute.xlu0 %7340
    %7342 = vrot.lane.b32.xlu0 %v6978, 32
    %v7343 = vpop.permute.xlu0 %7342
    %7344 = vrot.lane.b32.xlu0 %v6979, 32
    %v7345 = vpop.permute.xlu0 %7344
    %7346 = vrot.lane.b32.xlu0 %v6980, 32
    %v7347 = vpop.permute.xlu0 %7346
    %v7353 = vsel %vm1594, %v7336, 0
    %v7356 = vsel %vm1594, %v7337, 0
    %v7359 = vsel %vm1594, %v7338, 0
    %v7362 = vsel %vm1594, %v7339, 0
    %7364 = vmatprep.subr.bf16.mxu0 0
    %7365 = vmatpush1.bf16.msra.mxu0 %v7341
    %7366 = vmatprep.subr.bf16.mxu0 0
    %7367 = vmatpush1.bf16.msra.mxu0 %v7343
    %7368 = vmatprep.subr.bf16.mxu0 0
    %7369 = vmatpush1.bf16.msra.mxu0 %v7345
    %7370 = vmatprep.subr.bf16.mxu0 0
    %7371 = vmatpush1.bf16.msra.mxu0 %v7347
    %7372 = vmatprep.subr.bf16.mxu0 0
    %7373 = vmatpush1.bf16.msra.mxu0 0
    %7374 = vmatprep.subr.bf16.mxu0 0
    %7375 = vmatpush1.bf16.msra.mxu0 0
    %7376 = vmatprep.subr.bf16.mxu0 0
    %7377 = vmatpush1.bf16.msra.mxu0 0
    %7378 = vmatprep.subr.bf16.mxu0 0
    %7379 = vmatpush1.bf16.msra.mxu0 0
    %7380 = vmatprep.subr.bf16.mxu0 0
    %7381 = vmatpush1.bf16.msra.mxu0 0
    %7382 = vmatprep.subr.bf16.mxu0 0
    %7383 = vmatpush1.bf16.msra.mxu0 0
    %7384 = vmatprep.subr.bf16.mxu0 0
    %7385 = vmatpush1.bf16.msra.mxu0 0
    %7386 = vmatprep.subr.bf16.mxu0 0
    %7387 = vmatpush1.bf16.msra.mxu0 0
    %7388 = vmatprep.subr.bf16.mxu0 0
    %7389 = vmatpush1.bf16.msra.mxu0 0
    %7390 = vmatprep.subr.bf16.mxu0 0
    %7391 = vmatpush1.bf16.msra.mxu0 0
    %7392 = vmatprep.subr.bf16.mxu0 0
    %7393 = vmatpush1.bf16.msra.mxu0 0
    %7394 = vmatprep.subr.bf16.mxu0 0
    %7395 = vmatpush1.bf16.msra.mxu0 0
    %7396 = vmatprep.mubr.bf16.mxu0 0
    %7397 = vmatmul.mubr.bf16.gmra.mrb[0].mxu0 %v7353
    %v7398 = vpop.f32.mrb[0].mxu0
    %v7399 = vadd.f32 0.0, %v7398
    %v7400 = vpop.f32.mrb[0].mxu0
    %v7401 = vpop.f32.mrb[0].mxu0
    %v7402 = vadd.f32 0.0, %v7401
    %v7403 = vpop.f32.mrb[0].mxu0
    %7404 = vmatprep.mubr.bf16.mxu0 0
    %7405 = vmatmul.mubr.bf16.gmra.mrb[0].mxu0 %v7356
    %v7406 = vpop.f32.mrb[0].mxu0
    %v7407 = vadd.f32 0.0, %v7406
    %v7408 = vpop.f32.mrb[0].mxu0
    %v7409 = vpop.f32.mrb[0].mxu0
    %v7410 = vadd.f32 0.0, %v7409
    %v7411 = vpop.f32.mrb[0].mxu0
    %7412 = vmatprep.mubr.bf16.mxu0 0
    %7413 = vmatmul.mubr.bf16.gmra.mrb[0].mxu0 %v7359
    %v7414 = vpop.f32.mrb[0].mxu0
    %v7415 = vadd.f32 0.0, %v7414
    %v7416 = vpop.f32.mrb[0].mxu0
    %v7417 = vpop.f32.mrb[0].mxu0
    %v7418 = vadd.f32 0.0, %v7417
    %v7419 = vpop.f32.mrb[0].mxu0
    %7420 = vmatprep.mubr.bf16.mxu0 0
    %7421 = vmatmul.mubr.bf16.gmra.mrb[0].mxu0 %v7362
    %v7422 = vpop.f32.mrb[0].mxu0
    %v7423 = vadd.f32 0.0, %v7422
    %v7424 = vpop.f32.mrb[0].mxu0
    %v7425 = vpop.f32.mrb[0].mxu0
    %v7426 = vadd.f32 0.0, %v7425
    %v7427 = vpop.f32.mrb[0].mxu0
    %7428 = vdwg.mxu0
    %7437 = vrot.lane.b32.xlu0 %v7399, 96
    %v7438 = vpop.permute.xlu0 %7437
    %7439 = vrot.lane.b32.xlu0 %v7402, 96
    %v7440 = vpop.permute.xlu0 %7439
    %7441 = vrot.lane.b32.xlu0 %v7407, 96
    %v7442 = vpop.permute.xlu0 %7441
    %7443 = vrot.lane.b32.xlu0 %v7410, 96
    %v7444 = vpop.permute.xlu0 %7443
    %7445 = vrot.lane.b32.xlu0 %v7415, 96
    %v7446 = vpop.permute.xlu0 %7445
    %7447 = vrot.lane.b32.xlu0 %v7418, 96
    %v7448 = vpop.permute.xlu0 %7447
    %7449 = vrot.lane.b32.xlu0 %v7423, 96
    %v7450 = vpop.permute.xlu0 %7449
    %7451 = vrot.lane.b32.xlu0 %v7426, 96
    %v7452 = vpop.permute.xlu0 %7451
    %7461 = vst.msk [vmem:[#allocation2 + $0x40] sm:$0xff] %vm2789, %v7438
    %7462 = vst.msk [vmem:[#allocation2 + $0x48] sm:$0xff] %vm2789, %v7440
    %7463 = vst.msk [vmem:[#allocation2 + $0x50] sm:$0xff] %vm2789, %v7442
    %7464 = vst.msk [vmem:[#allocation2 + $0x58] sm:$0xff] %vm2789, %v7444
    %7465 = vst.msk [vmem:[#allocation2 + $0x60] sm:$0xff] %vm2789, %v7446
    %7466 = vst.msk [vmem:[#allocation2 + $0x68] sm:$0xff] %vm2789, %v7448
    %7467 = vst.msk [vmem:[#allocation2 + $0x70] sm:$0xff] %vm2789, %v7450
    %7468 = vst.msk [vmem:[#allocation2 + $0x78] sm:$0xff] %vm2789, %v7452
    %v7469 = vld [vmem:[#allocation2] sm:$0xff]
    %v7470 = vld [vmem:[#allocation2 + $0x8] sm:$0xff]
    %v7471 = vld [vmem:[#allocation2 + $0x10] sm:$0xff]
    %v7472 = vld [vmem:[#allocation2 + $0x18] sm:$0xff]
    %v7473 = vld [vmem:[#allocation2 + $0x20] sm:$0xff]
    %v7474 = vld [vmem:[#allocation2 + $0x28] sm:$0xff]
    %v7475 = vld [vmem:[#allocation2 + $0x30] sm:$0xff]
    %v7476 = vld [vmem:[#allocation2 + $0x38] sm:$0xff]
    %v7477 = vld [vmem:[#allocation2 + $0x40] sm:$0xff]
    %v7478 = vld [vmem:[#allocation2 + $0x48] sm:$0xff]
    %v7479 = vld [vmem:[#allocation2 + $0x50] sm:$0xff]
    %v7480 = vld [vmem:[#allocation2 + $0x58] sm:$0xff]
    %v7481 = vld [vmem:[#allocation2 + $0x60] sm:$0xff]
    %v7482 = vld [vmem:[#allocation2 + $0x68] sm:$0xff]
    %v7483 = vld [vmem:[#allocation2 + $0x70] sm:$0xff]
    %v7484 = vld [vmem:[#allocation2 + $0x78] sm:$0xff]
    %v7485 = vpack.c.bf16 %v7470, %v7469
    %v7486 = vpack.c.bf16 %v7472, %v7471
    %v7487 = vpack.c.bf16 %v7474, %v7473
    %v7488 = vpack.c.bf16 %v7476, %v7475
    %v7489 = vpack.c.bf16 %v7478, %v7477
    %v7490 = vpack.c.bf16 %v7480, %v7479
    %v7491 = vpack.c.bf16 %v7482, %v7481
    %v7492 = vpack.c.bf16 %v7484, %v7483
    %s7493 = scalar_lea.vmem [#allocation6], 64
    %v7494 = vld [vmem:[%s7493] sm:$0xf]
    %v7495 = vld [vmem:[%s7493 + $0x4] sm:$0xf]
    %v7496 = vld [vmem:[%s7493 + $0x8] sm:$0xf]
    %v7497 = vld [vmem:[%s7493 + $0xc] sm:$0xf]
    %v7498 = vld [vmem:[%s7493 + $0x10] sm:$0xf]
    %v7499 = vld [vmem:[%s7493 + $0x14] sm:$0xf]
    %v7500 = vld [vmem:[%s7493 + $0x18] sm:$0xf]
    %v7501 = vld [vmem:[%s7493 + $0x1c] sm:$0xf]
    %v7502 = vld [vmem:[%s7493 + $0x20] sm:$0xf]
    %v7503 = vld [vmem:[%s7493 + $0x24] sm:$0xf]
    %v7504 = vld [vmem:[%s7493 + $0x28] sm:$0xf]
    %v7505 = vld [vmem:[%s7493 + $0x2c] sm:$0xf]
    %v7506 = vld [vmem:[%s7493 + $0x30] sm:$0xf]
    %v7507 = vld [vmem:[%s7493 + $0x34] sm:$0xf]
    %v7508 = vld [vmem:[%s7493 + $0x38] sm:$0xf]
    %v7509 = vld [vmem:[%s7493 + $0x3c] sm:$0xf]
    %s7510 = scalar_lea.vmem %s6, 1
    %v7511 = vld [vmem:[%s7510] sm:$0x1]
    %v7513 = vlaneseq
    %v7514 = vshrl.u32 %v7513, 7
    %v7515 = vsub.s32 0, %v7514
    %v7516 = vrot.slane %v7511, %v7515
    %v7534 = vunpack.c.l.b16 %v7494
    %v7535 = vunpack.c.l.b16 %v7495
    %v7536 = vunpack.c.l.b16 %v7496
    %v7537 = vunpack.c.l.b16 %v7497
    %v7538 = vunpack.c.l.b16 %v7498
    %v7539 = vunpack.c.l.b16 %v7499
    %v7540 = vunpack.c.l.b16 %v7500
    %v7541 = vunpack.c.l.b16 %v7501
    %v7542 = vunpack.c.l.b16 %v7502
    %v7543 = vunpack.c.l.b16 %v7503
    %v7544 = vunpack.c.l.b16 %v7504
    %v7545 = vunpack.c.l.b16 %v7505
    %v7546 = vunpack.c.l.b16 %v7506
    %v7547 = vunpack.c.l.b16 %v7507
    %v7548 = vunpack.c.l.b16 %v7508
    %v7549 = vunpack.c.l.b16 %v7509
    %v7550 = vpack.c.b16 %v7535, %v7534
    %v7551 = vpack.c.b16 %v7537, %v7536
    %v7552 = vpack.c.b16 %v7539, %v7538
    %v7553 = vpack.c.b16 %v7541, %v7540
    %v7554 = vpack.c.b16 %v7543, %v7542
    %v7555 = vpack.c.b16 %v7545, %v7544
    %v7556 = vpack.c.b16 %v7547, %v7546
    %v7557 = vpack.c.b16 %v7549, %v7548
    %7566 = vmatprep.subr.bf16.mxu0 0
    %7567 = vmatpush1.bf16.msra.mxu0 %v7550
    %7568 = vmatprep.subr.bf16.mxu0 0
    %7569 = vmatpush1.bf16.msra.mxu0 %v7551
    %7570 = vmatprep.subr.bf16.mxu0 0
    %7571 = vmatpush1.bf16.msra.mxu0 %v7552
    %7572 = vmatprep.subr.bf16.mxu0 0
    %7573 = vmatpush1.bf16.msra.mxu0 %v7553
    %7574 = vmatprep.subr.bf16.mxu0 0
    %7575 = vmatpush1.bf16.msra.mxu0 %v7554
    %7576 = vmatprep.subr.bf16.mxu0 0
    %7577 = vmatpush1.bf16.msra.mxu0 %v7555
    %7578 = vmatprep.subr.bf16.mxu0 0
    %7579 = vmatpush1.bf16.msra.mxu0 %v7556
    %7580 = vmatprep.subr.bf16.mxu0 0
    %7581 = vmatpush1.bf16.msra.mxu0 %v7557
    %7582 = vmatprep.subr.bf16.mxu0 0
    %7583 = vmatpush1.bf16.msra.mxu0 0
    %7584 = vmatprep.subr.bf16.mxu0 0
    %7585 = vmatpush1.bf16.msra.mxu0 0
    %7586 = vmatprep.subr.bf16.mxu0 0
    %7587 = vmatpush1.bf16.msra.mxu0 0
    %7588 = vmatprep.subr.bf16.mxu0 0
    %7589 = vmatpush1.bf16.msra.mxu0 0
    %7590 = vmatprep.subr.bf16.mxu0 0
    %7591 = vmatpush1.bf16.msra.mxu0 0
    %7592 = vmatprep.subr.bf16.mxu0 0
    %7593 = vmatpush1.bf16.msra.mxu0 0
    %7594 = vmatprep.subr.bf16.mxu0 0
    %7595 = vmatpush1.bf16.msra.mxu0 0
    %7596 = vmatprep.subr.bf16.mxu0 0
    %7597 = vmatpush1.bf16.msra.mxu0 0
    %7598 = vmatprep.mubr.bf16.mxu0 0
    %7599 = vmatmul.mubr.bf16.gmra.mrb[0].mxu0 %v7485
    %v7600 = vpop.f32.mrb[0].mxu0
    %v7601 = vadd.f32 %v7516, %v7600
    %v7602 = vpop.f32.mrb[0].mxu0
    %v7603 = vpop.f32.mrb[0].mxu0
    %v7604 = vadd.f32 %v7516, %v7603
    %v7605 = vpop.f32.mrb[0].mxu0
    %7606 = vmatprep.mubr.bf16.mxu0 0
    %7607 = vmatmul.mubr.bf16.gmra.mrb[0].mxu0 %v7486
    %v7608 = vpop.f32.mrb[0].mxu0
    %v7609 = vadd.f32 %v7516, %v7608
    %v7610 = vpop.f32.mrb[0].mxu0
    %v7611 = vpop.f32.mrb[0].mxu0
    %v7612 = vadd.f32 %v7516, %v7611
    %v7613 = vpop.f32.mrb[0].mxu0
    %7614 = vmatprep.mubr.bf16.mxu0 0
    %7615 = vmatmul.mubr.bf16.gmra.mrb[0].mxu0 %v7487
    %v7616 = vpop.f32.mrb[0].mxu0
    %v7617 = vadd.f32 %v7516, %v7616
    %v7618 = vpop.f32.mrb[0].mxu0
    %v7619 = vpop.f32.mrb[0].mxu0
    %v7620 = vadd.f32 %v7516, %v7619
    %v7621 = vpop.f32.mrb[0].mxu0
    %7622 = vmatprep.mubr.bf16.mxu0 0
    %7623 = vmatmul.mubr.bf16.gmra.mrb[0].mxu0 %v7488
    %v7624 = vpop.f32.mrb[0].mxu0
    %v7625 = vadd.f32 %v7516, %v7624
    %v7626 = vpop.f32.mrb[0].mxu0
    %v7627 = vpop.f32.mrb[0].mxu0
    %v7628 = vadd.f32 %v7516, %v7627
    %v7629 = vpop.f32.mrb[0].mxu0
    %7630 = vmatprep.mubr.bf16.mxu0 0
    %7631 = vmatmul.mubr.bf16.gmra.mrb[0].mxu0 %v7489
    %v7632 = vpop.f32.mrb[0].mxu0
    %v7633 = vadd.f32 %v7516, %v7632
    %v7634 = vpop.f32.mrb[0].mxu0
    %v7635 = vpop.f32.mrb[0].mxu0
    %v7636 = vadd.f32 %v7516, %v7635
    %v7637 = vpop.f32.mrb[0].mxu0
    %7638 = vmatprep.mubr.bf16.mxu0 0
    %7639 = vmatmul.mubr.bf16.gmra.mrb[0].mxu0 %v7490
    %v7640 = vpop.f32.mrb[0].mxu0
    %v7641 = vadd.f32 %v7516, %v7640
    %v7642 = vpop.f32.mrb[0].mxu0
    %v7643 = vpop.f32.mrb[0].mxu0
    %v7644 = vadd.f32 %v7516, %v7643
    %v7645 = vpop.f32.mrb[0].mxu0
    %7646 = vmatprep.mubr.bf16.mxu0 0
    %7647 = vmatmul.mubr.bf16.gmra.mrb[0].mxu0 %v7491
    %v7648 = vpop.f32.mrb[0].mxu0
    %v7649 = vadd.f32 %v7516, %v7648
    %v7650 = vpop.f32.mrb[0].mxu0
    %v7651 = vpop.f32.mrb[0].mxu0
    %v7652 = vadd.f32 %v7516, %v7651
    %v7653 = vpop.f32.mrb[0].mxu0
    %7654 = vmatprep.mubr.bf16.mxu0 0
    %7655 = vmatmul.mubr.bf16.gmra.mrb[0].mxu0 %v7492
    %v7656 = vpop.f32.mrb[0].mxu0
    %v7657 = vadd.f32 %v7516, %v7656
    %v7658 = vpop.f32.mrb[0].mxu0
    %v7659 = vpop.f32.mrb[0].mxu0
    %v7660 = vadd.f32 %v7516, %v7659
    %v7661 = vpop.f32.mrb[0].mxu0
    %7662 = vdwg.mxu0
    %v7663 = vadd.f32 %v4456, %v7601
    %v7664 = vadd.f32 %v4457, %v7604
    %v7665 = vadd.f32 %v4458, %v7609
    %v7666 = vadd.f32 %v4459, %v7612
    %v7667 = vadd.f32 %v4460, %v7617
    %v7668 = vadd.f32 %v4461, %v7620
    %v7669 = vadd.f32 %v4462, %v7625
    %v7670 = vadd.f32 %v4463, %v7628
    %v7671 = vadd.f32 %v4464, %v7633
    %v7672 = vadd.f32 %v4465, %v7636
    %v7673 = vadd.f32 %v4466, %v7641
    %v7674 = vadd.f32 %v4467, %v7644
    %v7675 = vadd.f32 %v4468, %v7649
    %v7676 = vadd.f32 %v4469, %v7652
    %v7677 = vadd.f32 %v4470, %v7657
    %v7678 = vadd.f32 %v4471, %v7660
    %s7679 = scalar_lea.vmem %s7, 1
    %v7680 = vld [vmem:[%s7679] sm:$0x1]
    %s7681 = scalar_lea.vmem %s8, 1
    %v7682 = vld [vmem:[%s7681] sm:$0x1]
    %7683 = vadd.xlane.f32.xlu0 %v7663
    %v7684 = vpop.xlane.xlu0 %7683
    %7685 = vadd.xlane.f32.xlu0 %v7664
    %v7686 = vpop.xlane.xlu0 %7685
    %7687 = vadd.xlane.f32.xlu0 %v7665
    %v7688 = vpop.xlane.xlu0 %7687
    %7689 = vadd.xlane.f32.xlu0 %v7666
    %v7690 = vpop.xlane.xlu0 %7689
    %7691 = vadd.xlane.f32.xlu0 %v7667
    %v7692 = vpop.xlane.xlu0 %7691
    %7693 = vadd.xlane.f32.xlu0 %v7668
    %v7694 = vpop.xlane.xlu0 %7693
    %7695 = vadd.xlane.f32.xlu0 %v7669
    %v7696 = vpop.xlane.xlu0 %7695
    %7697 = vadd.xlane.f32.xlu0 %v7670
    %v7698 = vpop.xlane.xlu0 %7697
    %7699 = vadd.xlane.f32.xlu0 %v7671
    %v7700 = vpop.xlane.xlu0 %7699
    %7701 = vadd.xlane.f32.xlu0 %v7672
    %v7702 = vpop.xlane.xlu0 %7701
    %7703 = vadd.xlane.f32.xlu0 %v7673
    %v7704 = vpop.xlane.xlu0 %7703
    %7705 = vadd.xlane.f32.xlu0 %v7674
    %v7706 = vpop.xlane.xlu0 %7705
    %7707 = vadd.xlane.f32.xlu0 %v7675
    %v7708 = vpop.xlane.xlu0 %7707
    %7709 = vadd.xlane.f32.xlu0 %v7676
    %v7710 = vpop.xlane.xlu0 %7709
    %7711 = vadd.xlane.f32.xlu0 %v7677
    %v7712 = vpop.xlane.xlu0 %7711
    %7713 = vadd.xlane.f32.xlu0 %v7678
    %v7714 = vpop.xlane.xlu0 %7713
    %v7715 = vmul.f32 %v7684, %v3536
    %v7716 = vmul.f32 %v7686, %v3536
    %v7717 = vmul.f32 %v7688, %v3536
    %v7718 = vmul.f32 %v7690, %v3536
    %v7719 = vmul.f32 %v7692, %v3536
    %v7720 = vmul.f32 %v7694, %v3536
    %v7721 = vmul.f32 %v7696, %v3536
    %v7722 = vmul.f32 %v7698, %v3536
    %v7723 = vmul.f32 %v7700, %v3536
    %v7724 = vmul.f32 %v7702, %v3536
    %v7725 = vmul.f32 %v7704, %v3536
    %v7726 = vmul.f32 %v7706, %v3536
    %v7727 = vmul.f32 %v7708, %v3536
    %v7728 = vmul.f32 %v7710, %v3536
    %v7729 = vmul.f32 %v7712, %v3536
    %v7730 = vmul.f32 %v7714, %v3536
    %v7731 = vsub.f32 %v7663, %v7715
    %v7732 = vsub.f32 %v7664, %v7716
    %v7733 = vsub.f32 %v7665, %v7717
    %v7734 = vsub.f32 %v7666, %v7718
    %v7735 = vsub.f32 %v7667, %v7719
    %v7736 = vsub.f32 %v7668, %v7720
    %v7737 = vsub.f32 %v7669, %v7721
    %v7738 = vsub.f32 %v7670, %v7722
    %v7739 = vsub.f32 %v7671, %v7723
    %v7740 = vsub.f32 %v7672, %v7724
    %v7741 = vsub.f32 %v7673, %v7725
    %v7742 = vsub.f32 %v7674, %v7726
    %v7743 = vsub.f32 %v7675, %v7727
    %v7744 = vsub.f32 %v7676, %v7728
    %v7745 = vsub.f32 %v7677, %v7729
    %v7746 = vsub.f32 %v7678, %v7730
    %v7747 = vmul.f32 %v7731, %v7731
    %v7748 = vmul.f32 %v7732, %v7732
    %v7749 = vmul.f32 %v7733, %v7733
    %v7750 = vmul.f32 %v7734, %v7734
    %v7751 = vmul.f32 %v7735, %v7735
    %v7752 = vmul.f32 %v7736, %v7736
    %v7753 = vmul.f32 %v7737, %v7737
    %v7754 = vmul.f32 %v7738, %v7738
    %v7755 = vmul.f32 %v7739, %v7739
    %v7756 = vmul.f32 %v7740, %v7740
    %v7757 = vmul.f32 %v7741, %v7741
    %v7758 = vmul.f32 %v7742, %v7742
    %v7759 = vmul.f32 %v7743, %v7743
    %v7760 = vmul.f32 %v7744, %v7744
    %v7761 = vmul.f32 %v7745, %v7745
    %v7762 = vmul.f32 %v7746, %v7746
    %7763 = vadd.xlane.f32.xlu0 %v7747
    %v7764 = vpop.xlane.xlu0 %7763
    %7765 = vadd.xlane.f32.xlu0 %v7748
    %v7766 = vpop.xlane.xlu0 %7765
    %7767 = vadd.xlane.f32.xlu0 %v7749
    %v7768 = vpop.xlane.xlu0 %7767
    %7769 = vadd.xlane.f32.xlu0 %v7750
    %v7770 = vpop.xlane.xlu0 %7769
    %7771 = vadd.xlane.f32.xlu0 %v7751
    %v7772 = vpop.xlane.xlu0 %7771
    %7773 = vadd.xlane.f32.xlu0 %v7752
    %v7774 = vpop.xlane.xlu0 %7773
    %7775 = vadd.xlane.f32.xlu0 %v7753
    %v7776 = vpop.xlane.xlu0 %7775
    %7777 = vadd.xlane.f32.xlu0 %v7754
    %v7778 = vpop.xlane.xlu0 %7777
    %7779 = vadd.xlane.f32.xlu0 %v7755
    %v7780 = vpop.xlane.xlu0 %7779
    %7781 = vadd.xlane.f32.xlu0 %v7756
    %v7782 = vpop.xlane.xlu0 %7781
    %7783 = vadd.xlane.f32.xlu0 %v7757
    %v7784 = vpop.xlane.xlu0 %7783
    %7785 = vadd.xlane.f32.xlu0 %v7758
    %v7786 = vpop.xlane.xlu0 %7785
    %7787 = vadd.xlane.f32.xlu0 %v7759
    %v7788 = vpop.xlane.xlu0 %7787
    %7789 = vadd.xlane.f32.xlu0 %v7760
    %v7790 = vpop.xlane.xlu0 %7789
    %7791 = vadd.xlane.f32.xlu0 %v7761
    %v7792 = vpop.xlane.xlu0 %7791
    %7793 = vadd.xlane.f32.xlu0 %v7762
    %v7794 = vpop.xlane.xlu0 %7793
    %v7795 = vmul.f32 %v7764, %v3536
    %v7796 = vmul.f32 %v7766, %v3536
    %v7797 = vmul.f32 %v7768, %v3536
    %v7798 = vmul.f32 %v7770, %v3536
    %v7799 = vmul.f32 %v7772, %v3536
    %v7800 = vmul.f32 %v7774, %v3536
    %v7801 = vmul.f32 %v7776, %v3536
    %v7802 = vmul.f32 %v7778, %v3536
    %v7803 = vmul.f32 %v7780, %v3536
    %v7804 = vmul.f32 %v7782, %v3536
    %v7805 = vmul.f32 %v7784, %v3536
    %v7806 = vmul.f32 %v7786, %v3536
    %v7807 = vmul.f32 %v7788, %v3536
    %v7808 = vmul.f32 %v7790, %v3536
    %v7809 = vmul.f32 %v7792, %v3536
    %v7810 = vmul.f32 %v7794, %v3536
    %v7811 = vadd.f32 %v7795, 1e-05
    %v7812 = vadd.f32 %v7796, 1e-05
    %v7813 = vadd.f32 %v7797, 1e-05
    %v7814 = vadd.f32 %v7798, 1e-05
    %v7815 = vadd.f32 %v7799, 1e-05
    %v7816 = vadd.f32 %v7800, 1e-05
    %v7817 = vadd.f32 %v7801, 1e-05
    %v7818 = vadd.f32 %v7802, 1e-05
    %v7819 = vadd.f32 %v7803, 1e-05
    %v7820 = vadd.f32 %v7804, 1e-05
    %v7821 = vadd.f32 %v7805, 1e-05
    %v7822 = vadd.f32 %v7806, 1e-05
    %v7823 = vadd.f32 %v7807, 1e-05
    %v7824 = vadd.f32 %v7808, 1e-05
    %v7825 = vadd.f32 %v7809, 1e-05
    %v7826 = vadd.f32 %v7810, 1e-05
    %v7827 = vrsqrt.pop %v7811
    %v7828 = vrsqrt.pop %v7812
    %v7829 = vrsqrt.pop %v7813
    %v7830 = vrsqrt.pop %v7814
    %v7831 = vrsqrt.pop %v7815
    %v7832 = vrsqrt.pop %v7816
    %v7833 = vrsqrt.pop %v7817
    %v7834 = vrsqrt.pop %v7818
    %v7835 = vrsqrt.pop %v7819
    %v7836 = vrsqrt.pop %v7820
    %v7837 = vrsqrt.pop %v7821
    %v7838 = vrsqrt.pop %v7822
    %v7839 = vrsqrt.pop %v7823
    %v7840 = vrsqrt.pop %v7824
    %v7841 = vrsqrt.pop %v7825
    %v7842 = vrsqrt.pop %v7826
    %v7843 = vmul.f32 %v7731, %v7827
    %v7844 = vmul.f32 %v7732, %v7828
    %v7845 = vmul.f32 %v7733, %v7829
    %v7846 = vmul.f32 %v7734, %v7830
    %v7847 = vmul.f32 %v7735, %v7831
    %v7848 = vmul.f32 %v7736, %v7832
    %v7849 = vmul.f32 %v7737, %v7833
    %v7850 = vmul.f32 %v7738, %v7834
    %v7851 = vmul.f32 %v7739, %v7835
    %v7852 = vmul.f32 %v7740, %v7836
    %v7853 = vmul.f32 %v7741, %v7837
    %v7854 = vmul.f32 %v7742, %v7838
    %v7855 = vmul.f32 %v7743, %v7839
    %v7856 = vmul.f32 %v7744, %v7840
    %v7857 = vmul.f32 %v7745, %v7841
    %v7858 = vmul.f32 %v7746, %v7842
    %v7860 = vlaneseq
    %v7861 = vshrl.u32 %v7860, 7
    %v7862 = vsub.s32 0, %v7861
    %v7863 = vrot.slane %v7680, %v7862
    %v7865 = vmul.f32 %v7843, %v7863
    %v7866 = vmul.f32 %v7844, %v7863
    %v7867 = vmul.f32 %v7845, %v7863
    %v7868 = vmul.f32 %v7846, %v7863
    %v7869 = vmul.f32 %v7847, %v7863
    %v7870 = vmul.f32 %v7848, %v7863
    %v7871 = vmul.f32 %v7849, %v7863
    %v7872 = vmul.f32 %v7850, %v7863
    %v7873 = vmul.f32 %v7851, %v7863
    %v7874 = vmul.f32 %v7852, %v7863
    %v7875 = vmul.f32 %v7853, %v7863
    %v7876 = vmul.f32 %v7854, %v7863
    %v7877 = vmul.f32 %v7855, %v7863
    %v7878 = vmul.f32 %v7856, %v7863
    %v7879 = vmul.f32 %v7857, %v7863
    %v7880 = vmul.f32 %v7858, %v7863
    %v7882 = vlaneseq
    %v7883 = vshrl.u32 %v7882, 7
    %v7884 = vsub.s32 0, %v7883
    %v7885 = vrot.slane %v7682, %v7884
    %v7887 = vadd.f32 %v7865, %v7885
    %v7888 = vadd.f32 %v7866, %v7885
    %v7889 = vadd.f32 %v7867, %v7885
    %v7890 = vadd.f32 %v7868, %v7885
    %v7891 = vadd.f32 %v7869, %v7885
    %v7892 = vadd.f32 %v7870, %v7885
    %v7893 = vadd.f32 %v7871, %v7885
    %v7894 = vadd.f32 %v7872, %v7885
    %v7895 = vadd.f32 %v7873, %v7885
    %v7896 = vadd.f32 %v7874, %v7885
    %v7897 = vadd.f32 %v7875, %v7885
    %v7898 = vadd.f32 %v7876, %v7885
    %v7899 = vadd.f32 %v7877, %v7885
    %v7900 = vadd.f32 %v7878, %v7885
    %v7901 = vadd.f32 %v7879, %v7885
    %v7902 = vadd.f32 %v7880, %v7885
    %v7903 = vpack.c.bf16 %v7888, %v7887
    %v7904 = vpack.c.bf16 %v7890, %v7889
    %v7905 = vpack.c.bf16 %v7892, %v7891
    %v7906 = vpack.c.bf16 %v7894, %v7893
    %v7907 = vpack.c.bf16 %v7896, %v7895
    %v7908 = vpack.c.bf16 %v7898, %v7897
    %v7909 = vpack.c.bf16 %v7900, %v7899
    %v7910 = vpack.c.bf16 %v7902, %v7901
    %s7911 = scalar_lea.vmem [#allocation8], 128
    %v7912 = vld [vmem:[%s7911] sm:$0xff]
    %v7913 = vld [vmem:[%s7911 + $0x8] sm:$0xff]
    %v7914 = vld [vmem:[%s7911 + $0x10] sm:$0xff]
    %v7915 = vld [vmem:[%s7911 + $0x18] sm:$0xff]
    %v7916 = vld [vmem:[%s7911 + $0x20] sm:$0xff]
    %v7917 = vld [vmem:[%s7911 + $0x28] sm:$0xff]
    %v7918 = vld [vmem:[%s7911 + $0x30] sm:$0xff]
    %v7919 = vld [vmem:[%s7911 + $0x38] sm:$0xff]
    %v7920 = vld [vmem:[%s7911 + $0x40] sm:$0xff]
    %v7921 = vld [vmem:[%s7911 + $0x48] sm:$0xff]
    %v7922 = vld [vmem:[%s7911 + $0x50] sm:$0xff]
    %v7923 = vld [vmem:[%s7911 + $0x58] sm:$0xff]
    %v7924 = vld [vmem:[%s7911 + $0x60] sm:$0xff]
    %v7925 = vld [vmem:[%s7911 + $0x68] sm:$0xff]
    %v7926 = vld [vmem:[%s7911 + $0x70] sm:$0xff]
    %v7927 = vld [vmem:[%s7911 + $0x78] sm:$0xff]
    %s7928 = scalar_lea.vmem %s10, 2
    %v7929 = vld [vmem:[%s7928] sm:$0x3]
    %v7931 = vlaneseq
    %v7932 = vshrl.u32 %v7931, 7
    %v7933 = vsub.s32 0, %v7932
    %v7934 = vrot.slane %v7929, %v7933
    %v7935 = vlaneseq
    %v7936 = vshrl.u32 %v7935, 7
    %v7937 = vsub.s32 1, %v7936
    %v7938 = vrot.slane %v7929, %v7937
    %v7957 = vunpack.c.l.b16 %v7912
    %v7958 = vunpack.c.h.b16 %v7912
    %v7959 = vunpack.c.l.b16 %v7913
    %v7960 = vunpack.c.h.b16 %v7913
    %v7961 = vunpack.c.l.b16 %v7914
    %v7962 = vunpack.c.h.b16 %v7914
    %v7963 = vunpack.c.l.b16 %v7915
    %v7964 = vunpack.c.h.b16 %v7915
    %v7965 = vunpack.c.l.b16 %v7916
    %v7966 = vunpack.c.h.b16 %v7916
    %v7967 = vunpack.c.l.b16 %v7917
    %v7968 = vunpack.c.h.b16 %v7917
    %v7969 = vunpack.c.l.b16 %v7918
    %v7970 = vunpack.c.h.b16 %v7918
    %v7971 = vunpack.c.l.b16 %v7919
    %v7972 = vunpack.c.h.b16 %v7919
    %v7973 = vunpack.c.l.b16 %v7920
    %v7974 = vunpack.c.h.b16 %v7920
    %v7975 = vunpack.c.l.b16 %v7921
    %v7976 = vunpack.c.h.b16 %v7921
    %v7977 = vunpack.c.l.b16 %v7922
    %v7978 = vunpack.c.h.b16 %v7922
    %v7979 = vunpack.c.l.b16 %v7923
    %v7980 = vunpack.c.h.b16 %v7923
    %v7981 = vunpack.c.l.b16 %v7924
    %v7982 = vunpack.c.h.b16 %v7924
    %v7983 = vunpack.c.l.b16 %v7925
    %v7984 = vunpack.c.h.b16 %v7925
    %v7985 = vunpack.c.l.b16 %v7926
    %v7986 = vunpack.c.h.b16 %v7926
    %v7987 = vunpack.c.l.b16 %v7927
    %v7988 = vunpack.c.h.b16 %v7927
    %v7989 = vpack.c.b16 %v7959, %v7957
    %v7990 = vpack.c.b16 %v7960, %v7958
    %v7991 = vpack.c.b16 %v7963, %v7961
    %v7992 = vpack.c.b16 %v7964, %v7962
    %v7993 = vpack.c.b16 %v7967, %v7965
    %v7994 = vpack.c.b16 %v7968, %v7966
    %v7995 = vpack.c.b16 %v7971, %v7969
    %v7996 = vpack.c.b16 %v7972, %v7970
    %v7997 = vpack.c.b16 %v7975, %v7973
    %v7998 = vpack.c.b16 %v7976, %v7974
    %v7999 = vpack.c.b16 %v7979, %v7977
    %v8000 = vpack.c.b16 %v7980, %v7978
    %v8001 = vpack.c.b16 %v7983, %v7981
    %v8002 = vpack.c.b16 %v7984, %v7982
    %v8003 = vpack.c.b16 %v7987, %v7985
    %v8004 = vpack.c.b16 %v7988, %v7986
    %8021 = vmatprep.subr.bf16.mxu0 %v7990
    %8022 = vmatpush1.bf16.msra.mxu0 %v7989
    %8023 = vmatprep.subr.bf16.mxu0 %v7992
    %8024 = vmatpush1.bf16.msra.mxu0 %v7991
    %8025 = vmatprep.subr.bf16.mxu0 %v7994
    %8026 = vmatpush1.bf16.msra.mxu0 %v7993
    %8027 = vmatprep.subr.bf16.mxu0 %v7996
    %8028 = vmatpush1.bf16.msra.mxu0 %v7995
    %8029 = vmatprep.subr.bf16.mxu0 %v7998
    %8030 = vmatpush1.bf16.msra.mxu0 %v7997
    %8031 = vmatprep.subr.bf16.mxu0 %v8000
    %8032 = vmatpush1.bf16.msra.mxu0 %v7999
    %8033 = vmatprep.subr.bf16.mxu0 %v8002
    %8034 = vmatpush1.bf16.msra.mxu0 %v8001
    %8035 = vmatprep.subr.bf16.mxu0 %v8004
    %8036 = vmatpush1.bf16.msra.mxu0 %v8003
    %8037 = vmatprep.subr.bf16.mxu0 0
    %8038 = vmatpush1.bf16.msra.mxu0 0
    %8039 = vmatprep.subr.bf16.mxu0 0
    %8040 = vmatpush1.bf16.msra.mxu0 0
    %8041 = vmatprep.subr.bf16.mxu0 0
    %8042 = vmatpush1.bf16.msra.mxu0 0
    %8043 = vmatprep.subr.bf16.mxu0 0
    %8044 = vmatpush1.bf16.msra.mxu0 0
    %8045 = vmatprep.subr.bf16.mxu0 0
    %8046 = vmatpush1.bf16.msra.mxu0 0
    %8047 = vmatprep.subr.bf16.mxu0 0
    %8048 = vmatpush1.bf16.msra.mxu0 0
    %8049 = vmatprep.subr.bf16.mxu0 0
    %8050 = vmatpush1.bf16.msra.mxu0 0
    %8051 = vmatprep.subr.bf16.mxu0 0
    %8052 = vmatpush1.bf16.msra.mxu0 0
    %8053 = vmatprep.mubr.bf16.mxu0 0
    %8054 = vmatmul.mubr.bf16.gmra.mrb[0].mxu0 %v7903
    %v8055 = vpop.f32.mrb[0].mxu0
    %v8056 = vadd.f32 %v7934, %v8055
    %v8057 = vpop.f32.mrb[0].mxu0
    %v8058 = vadd.f32 %v7938, %v8057
    %v8059 = vpop.f32.mrb[0].mxu0
    %v8060 = vadd.f32 %v7934, %v8059
    %v8061 = vpop.f32.mrb[0].mxu0
    %v8062 = vadd.f32 %v7938, %v8061
    %8063 = vmatprep.mubr.bf16.mxu0 0
    %8064 = vmatmul.mubr.bf16.gmra.mrb[0].mxu0 %v7904
    %v8065 = vpop.f32.mrb[0].mxu0
    %v8066 = vadd.f32 %v7934, %v8065
    %v8067 = vpop.f32.mrb[0].mxu0
    %v8068 = vadd.f32 %v7938, %v8067
    %v8069 = vpop.f32.mrb[0].mxu0
    %v8070 = vadd.f32 %v7934, %v8069
    %v8071 = vpop.f32.mrb[0].mxu0
    %v8072 = vadd.f32 %v7938, %v8071
    %8073 = vmatprep.mubr.bf16.mxu0 0
    %8074 = vmatmul.mubr.bf16.gmra.mrb[0].mxu0 %v7905
    %v8075 = vpop.f32.mrb[0].mxu0
    %v8076 = vadd.f32 %v7934, %v8075
    %v8077 = vpop.f32.mrb[0].mxu0
    %v8078 = vadd.f32 %v7938, %v8077
    %v8079 = vpop.f32.mrb[0].mxu0
    %v8080 = vadd.f32 %v7934, %v8079
    %v8081 = vpop.f32.mrb[0].mxu0
    %v8082 = vadd.f32 %v7938, %v8081
    %8083 = vmatprep.mubr.bf16.mxu0 0
    %8084 = vmatmul.mubr.bf16.gmra.mrb[0].mxu0 %v7906
    %v8085 = vpop.f32.mrb[0].mxu0
    %v8086 = vadd.f32 %v7934, %v8085
    %v8087 = vpop.f32.mrb[0].mxu0
    %v8088 = vadd.f32 %v7938, %v8087
    %v8089 = vpop.f32.mrb[0].mxu0
    %v8090 = vadd.f32 %v7934, %v8089
    %v8091 = vpop.f32.mrb[0].mxu0
    %v8092 = vadd.f32 %v7938, %v8091
    %8093 = vmatprep.mubr.bf16.mxu0 0
    %8094 = vmatmul.mubr.bf16.gmra.mrb[0].mxu0 %v7907
    %v8095 = vpop.f32.mrb[0].mxu0
    %v8096 = vadd.f32 %v7934, %v8095
    %v8097 = vpop.f32.mrb[0].mxu0
    %v8098 = vadd.f32 %v7938, %v8097
    %v8099 = vpop.f32.mrb[0].mxu0
    %v8100 = vadd.f32 %v7934, %v8099
    %v8101 = vpop.f32.mrb[0].mxu0
    %v8102 = vadd.f32 %v7938, %v8101
    %8103 = vmatprep.mubr.bf16.mxu0 0
    %8104 = vmatmul.mubr.bf16.gmra.mrb[0].mxu0 %v7908
    %v8105 = vpop.f32.mrb[0].mxu0
    %v8106 = vadd.f32 %v7934, %v8105
    %v8107 = vpop.f32.mrb[0].mxu0
    %v8108 = vadd.f32 %v7938, %v8107
    %v8109 = vpop.f32.mrb[0].mxu0
    %v8110 = vadd.f32 %v7934, %v8109
    %v8111 = vpop.f32.mrb[0].mxu0
    %v8112 = vadd.f32 %v7938, %v8111
    %8113 = vmatprep.mubr.bf16.mxu0 0
    %8114 = vmatmul.mubr.bf16.gmra.mrb[0].mxu0 %v7909
    %v8115 = vpop.f32.mrb[0].mxu0
    %v8116 = vadd.f32 %v7934, %v8115
    %v8117 = vpop.f32.mrb[0].mxu0
    %v8118 = vadd.f32 %v7938, %v8117
    %v8119 = vpop.f32.mrb[0].mxu0
    %v8120 = vadd.f32 %v7934, %v8119
    %v8121 = vpop.f32.mrb[0].mxu0
    %v8122 = vadd.f32 %v7938, %v8121
    %8123 = vmatprep.mubr.bf16.mxu0 0
    %8124 = vmatmul.mubr.bf16.gmra.mrb[0].mxu0 %v7910
    %v8125 = vpop.f32.mrb[0].mxu0
    %v8126 = vadd.f32 %v7934, %v8125
    %v8127 = vpop.f32.mrb[0].mxu0
    %v8128 = vadd.f32 %v7938, %v8127
    %v8129 = vpop.f32.mrb[0].mxu0
    %v8130 = vadd.f32 %v7934, %v8129
    %v8131 = vpop.f32.mrb[0].mxu0
    %v8132 = vadd.f32 %v7938, %v8131
    %8133 = vdwg.mxu0
    %v8134 = vmax.f32 %v8056, 0.0
    %v8135 = vmax.f32 %v8058, 0.0
    %v8136 = vmax.f32 %v8060, 0.0
    %v8137 = vmax.f32 %v8062, 0.0
    %v8138 = vmax.f32 %v8066, 0.0
    %v8139 = vmax.f32 %v8068, 0.0
    %v8140 = vmax.f32 %v8070, 0.0
    %v8141 = vmax.f32 %v8072, 0.0
    %v8142 = vmax.f32 %v8076, 0.0
    %v8143 = vmax.f32 %v8078, 0.0
    %v8144 = vmax.f32 %v8080, 0.0
    %v8145 = vmax.f32 %v8082, 0.0
    %v8146 = vmax.f32 %v8086, 0.0
    %v8147 = vmax.f32 %v8088, 0.0
    %v8148 = vmax.f32 %v8090, 0.0
    %v8149 = vmax.f32 %v8092, 0.0
    %v8150 = vmax.f32 %v8096, 0.0
    %v8151 = vmax.f32 %v8098, 0.0
    %v8152 = vmax.f32 %v8100, 0.0
    %v8153 = vmax.f32 %v8102, 0.0
    %v8154 = vmax.f32 %v8106, 0.0
    %v8155 = vmax.f32 %v8108, 0.0
    %v8156 = vmax.f32 %v8110, 0.0
    %v8157 = vmax.f32 %v8112, 0.0
    %v8158 = vmax.f32 %v8116, 0.0
    %v8159 = vmax.f32 %v8118, 0.0
    %v8160 = vmax.f32 %v8120, 0.0
    %v8161 = vmax.f32 %v8122, 0.0
    %v8162 = vmax.f32 %v8126, 0.0
    %v8163 = vmax.f32 %v8128, 0.0
    %v8164 = vmax.f32 %v8130, 0.0
    %v8165 = vmax.f32 %v8132, 0.0
    %v8166 = vpack.c.bf16 %v8136, %v8134
    %v8167 = vpack.c.bf16 %v8137, %v8135
    %v8168 = vpack.c.bf16 %v8140, %v8138
    %v8169 = vpack.c.bf16 %v8141, %v8139
    %v8170 = vpack.c.bf16 %v8144, %v8142
    %v8171 = vpack.c.bf16 %v8145, %v8143
    %v8172 = vpack.c.bf16 %v8148, %v8146
    %v8173 = vpack.c.bf16 %v8149, %v8147
    %v8174 = vpack.c.bf16 %v8152, %v8150
    %v8175 = vpack.c.bf16 %v8153, %v8151
    %v8176 = vpack.c.bf16 %v8156, %v8154
    %v8177 = vpack.c.bf16 %v8157, %v8155
    %v8178 = vpack.c.bf16 %v8160, %v8158
    %v8179 = vpack.c.bf16 %v8161, %v8159
    %v8180 = vpack.c.bf16 %v8164, %v8162
    %v8181 = vpack.c.bf16 %v8165, %v8163
    %s8182 = scalar_lea.vmem [#allocation9], 128
    %v8183 = vld [vmem:[%s8182] sm:$0xf]
    %v8184 = vld [vmem:[%s8182 + $0x4] sm:$0xf]
    %v8185 = vld [vmem:[%s8182 + $0x8] sm:$0xf]
    %v8186 = vld [vmem:[%s8182 + $0xc] sm:$0xf]
    %v8187 = vld [vmem:[%s8182 + $0x10] sm:$0xf]
    %v8188 = vld [vmem:[%s8182 + $0x14] sm:$0xf]
    %v8189 = vld [vmem:[%s8182 + $0x18] sm:$0xf]
    %v8190 = vld [vmem:[%s8182 + $0x1c] sm:$0xf]
    %v8191 = vld [vmem:[%s8182 + $0x20] sm:$0xf]
    %v8192 = vld [vmem:[%s8182 + $0x24] sm:$0xf]
    %v8193 = vld [vmem:[%s8182 + $0x28] sm:$0xf]
    %v8194 = vld [vmem:[%s8182 + $0x2c] sm:$0xf]
    %v8195 = vld [vmem:[%s8182 + $0x30] sm:$0xf]
    %v8196 = vld [vmem:[%s8182 + $0x34] sm:$0xf]
    %v8197 = vld [vmem:[%s8182 + $0x38] sm:$0xf]
    %v8198 = vld [vmem:[%s8182 + $0x3c] sm:$0xf]
    %v8199 = vld [vmem:[%s8182 + $0x40] sm:$0xf]
    %v8200 = vld [vmem:[%s8182 + $0x44] sm:$0xf]
    %v8201 = vld [vmem:[%s8182 + $0x48] sm:$0xf]
    %v8202 = vld [vmem:[%s8182 + $0x4c] sm:$0xf]
    %v8203 = vld [vmem:[%s8182 + $0x50] sm:$0xf]
    %v8204 = vld [vmem:[%s8182 + $0x54] sm:$0xf]
    %v8205 = vld [vmem:[%s8182 + $0x58] sm:$0xf]
    %v8206 = vld [vmem:[%s8182 + $0x5c] sm:$0xf]
    %v8207 = vld [vmem:[%s8182 + $0x60] sm:$0xf]
    %v8208 = vld [vmem:[%s8182 + $0x64] sm:$0xf]
    %v8209 = vld [vmem:[%s8182 + $0x68] sm:$0xf]
    %v8210 = vld [vmem:[%s8182 + $0x6c] sm:$0xf]
    %v8211 = vld [vmem:[%s8182 + $0x70] sm:$0xf]
    %v8212 = vld [vmem:[%s8182 + $0x74] sm:$0xf]
    %v8213 = vld [vmem:[%s8182 + $0x78] sm:$0xf]
    %v8214 = vld [vmem:[%s8182 + $0x7c] sm:$0xf]
    %s8215 = scalar_lea.vmem %s12, 1
    %v8216 = vld [vmem:[%s8215] sm:$0x1]
    %v8218 = vlaneseq
    %v8219 = vshrl.u32 %v8218, 7
    %v8220 = vsub.s32 0, %v8219
    %v8221 = vrot.slane %v8216, %v8220
    %v8255 = vunpack.c.l.b16 %v8183
    %v8256 = vunpack.c.l.b16 %v8184
    %v8257 = vunpack.c.l.b16 %v8185
    %v8258 = vunpack.c.l.b16 %v8186
    %v8259 = vunpack.c.l.b16 %v8187
    %v8260 = vunpack.c.l.b16 %v8188
    %v8261 = vunpack.c.l.b16 %v8189
    %v8262 = vunpack.c.l.b16 %v8190
    %v8263 = vunpack.c.l.b16 %v8191
    %v8264 = vunpack.c.l.b16 %v8192
    %v8265 = vunpack.c.l.b16 %v8193
    %v8266 = vunpack.c.l.b16 %v8194
    %v8267 = vunpack.c.l.b16 %v8195
    %v8268 = vunpack.c.l.b16 %v8196
    %v8269 = vunpack.c.l.b16 %v8197
    %v8270 = vunpack.c.l.b16 %v8198
    %v8271 = vunpack.c.l.b16 %v8199
    %v8272 = vunpack.c.l.b16 %v8200
    %v8273 = vunpack.c.l.b16 %v8201
    %v8274 = vunpack.c.l.b16 %v8202
    %v8275 = vunpack.c.l.b16 %v8203
    %v8276 = vunpack.c.l.b16 %v8204
    %v8277 = vunpack.c.l.b16 %v8205
    %v8278 = vunpack.c.l.b16 %v8206
    %v8279 = vunpack.c.l.b16 %v8207
    %v8280 = vunpack.c.l.b16 %v8208
    %v8281 = vunpack.c.l.b16 %v8209
    %v8282 = vunpack.c.l.b16 %v8210
    %v8283 = vunpack.c.l.b16 %v8211
    %v8284 = vunpack.c.l.b16 %v8212
    %v8285 = vunpack.c.l.b16 %v8213
    %v8286 = vunpack.c.l.b16 %v8214
    %v8287 = vpack.c.b16 %v8256, %v8255
    %v8288 = vpack.c.b16 %v8258, %v8257
    %v8289 = vpack.c.b16 %v8260, %v8259
    %v8290 = vpack.c.b16 %v8262, %v8261
    %v8291 = vpack.c.b16 %v8264, %v8263
    %v8292 = vpack.c.b16 %v8266, %v8265
    %v8293 = vpack.c.b16 %v8268, %v8267
    %v8294 = vpack.c.b16 %v8270, %v8269
    %v8295 = vpack.c.b16 %v8272, %v8271
    %v8296 = vpack.c.b16 %v8274, %v8273
    %v8297 = vpack.c.b16 %v8276, %v8275
    %v8298 = vpack.c.b16 %v8278, %v8277
    %v8299 = vpack.c.b16 %v8280, %v8279
    %v8300 = vpack.c.b16 %v8282, %v8281
    %v8301 = vpack.c.b16 %v8284, %v8283
    %v8302 = vpack.c.b16 %v8286, %v8285
    %8319 = vmatprep.subr.bf16.mxu0 0
    %8320 = vmatpush1.bf16.msra.mxu0 %v8287
    %8321 = vmatprep.subr.bf16.mxu0 0
    %8322 = vmatpush1.bf16.msra.mxu0 %v8288
    %8323 = vmatprep.subr.bf16.mxu0 0
    %8324 = vmatpush1.bf16.msra.mxu0 %v8289
    %8325 = vmatprep.subr.bf16.mxu0 0
    %8326 = vmatpush1.bf16.msra.mxu0 %v8290
    %8327 = vmatprep.subr.bf16.mxu0 0
    %8328 = vmatpush1.bf16.msra.mxu0 %v8291
    %8329 = vmatprep.subr.bf16.mxu0 0
    %8330 = vmatpush1.bf16.msra.mxu0 %v8292
    %8331 = vmatprep.subr.bf16.mxu0 0
    %8332 = vmatpush1.bf16.msra.mxu0 %v8293
    %8333 = vmatprep.subr.bf16.mxu0 0
    %8334 = vmatpush1.bf16.msra.mxu0 %v8294
    %8335 = vmatprep.subr.bf16.mxu0 0
    %8336 = vmatpush1.bf16.msra.mxu0 %v8295
    %8337 = vmatprep.subr.bf16.mxu0 0
    %8338 = vmatpush1.bf16.msra.mxu0 %v8296
    %8339 = vmatprep.subr.bf16.mxu0 0
    %8340 = vmatpush1.bf16.msra.mxu0 %v8297
    %8341 = vmatprep.subr.bf16.mxu0 0
    %8342 = vmatpush1.bf16.msra.mxu0 %v8298
    %8343 = vmatprep.subr.bf16.mxu0 0
    %8344 = vmatpush1.bf16.msra.mxu0 %v8299
    %8345 = vmatprep.subr.bf16.mxu0 0
    %8346 = vmatpush1.bf16.msra.mxu0 %v8300
    %8347 = vmatprep.subr.bf16.mxu0 0
    %8348 = vmatpush1.bf16.msra.mxu0 %v8301
    %8349 = vmatprep.subr.bf16.mxu0 0
    %8350 = vmatpush1.bf16.msra.mxu0 %v8302
    %8351 = vmatprep.mubr.bf16.mxu0 %v8167
    %8352 = vmatmul.mubr.bf16.gmra.mrb[0].mxu0 %v8166
    %v8353 = vpop.f32.mrb[0].mxu0
    %v8354 = vadd.f32 %v8221, %v8353
    %v8355 = vpop.f32.mrb[0].mxu0
    %v8356 = vpop.f32.mrb[0].mxu0
    %v8357 = vadd.f32 %v8221, %v8356
    %v8358 = vpop.f32.mrb[0].mxu0
    %8359 = vmatprep.mubr.bf16.mxu0 %v8169
    %8360 = vmatmul.mubr.bf16.gmra.mrb[0].mxu0 %v8168
    %v8361 = vpop.f32.mrb[0].mxu0
    %v8362 = vadd.f32 %v8221, %v8361
    %v8363 = vpop.f32.mrb[0].mxu0
    %v8364 = vpop.f32.mrb[0].mxu0
    %v8365 = vadd.f32 %v8221, %v8364
    %v8366 = vpop.f32.mrb[0].mxu0
    %8367 = vmatprep.mubr.bf16.mxu0 %v8171
    %8368 = vmatmul.mubr.bf16.gmra.mrb[0].mxu0 %v8170
    %v8369 = vpop.f32.mrb[0].mxu0
    %v8370 = vadd.f32 %v8221, %v8369
    %v8371 = vpop.f32.mrb[0].mxu0
    %v8372 = vpop.f32.mrb[0].mxu0
    %v8373 = vadd.f32 %v8221, %v8372
    %v8374 = vpop.f32.mrb[0].mxu0
    %8375 = vmatprep.mubr.bf16.mxu0 %v8173
    %8376 = vmatmul.mubr.bf16.gmra.mrb[0].mxu0 %v8172
    %v8377 = vpop.f32.mrb[0].mxu0
    %v8378 = vadd.f32 %v8221, %v8377
    %v8379 = vpop.f32.mrb[0].mxu0
    %v8380 = vpop.f32.mrb[0].mxu0
    %v8381 = vadd.f32 %v8221, %v8380
    %v8382 = vpop.f32.mrb[0].mxu0
    %8383 = vmatprep.mubr.bf16.mxu0 %v8175
    %8384 = vmatmul.mubr.bf16.gmra.mrb[0].mxu0 %v8174
    %v8385 = vpop.f32.mrb[0].mxu0
    %v8386 = vadd.f32 %v8221, %v8385
    %v8387 = vpop.f32.mrb[0].mxu0
    %v8388 = vpop.f32.mrb[0].mxu0
    %v8389 = vadd.f32 %v8221, %v8388
    %v8390 = vpop.f32.mrb[0].mxu0
    %8391 = vmatprep.mubr.bf16.mxu0 %v8177
    %8392 = vmatmul.mubr.bf16.gmra.mrb[0].mxu0 %v8176
    %v8393 = vpop.f32.mrb[0].mxu0
    %v8394 = vadd.f32 %v8221, %v8393
    %v8395 = vpop.f32.mrb[0].mxu0
    %v8396 = vpop.f32.mrb[0].mxu0
    %v8397 = vadd.f32 %v8221, %v8396
    %v8398 = vpop.f32.mrb[0].mxu0
    %8399 = vmatprep.mubr.bf16.mxu0 %v8179
    %8400 = vmatmul.mubr.bf16.gmra.mrb[0].mxu0 %v8178
    %v8401 = vpop.f32.mrb[0].mxu0
    %v8402 = vadd.f32 %v8221, %v8401
    %v8403 = vpop.f32.mrb[0].mxu0
    %v8404 = vpop.f32.mrb[0].mxu0
    %v8405 = vadd.f32 %v8221, %v8404
    %v8406 = vpop.f32.mrb[0].mxu0
    %8407 = vmatprep.mubr.bf16.mxu0 %v8181
    %8408 = vmatmul.mubr.bf16.gmra.mrb[0].mxu0 %v8180
    %v8409 = vpop.f32.mrb[0].mxu0
    %v8410 = vadd.f32 %v8221, %v8409
    %v8411 = vpop.f32.mrb[0].mxu0
    %v8412 = vpop.f32.mrb[0].mxu0
    %v8413 = vadd.f32 %v8221, %v8412
    %v8414 = vpop.f32.mrb[0].mxu0
    %8415 = vdwg.mxu0
    %v8416 = vadd.f32 %v7887, %v8354
    %v8417 = vadd.f32 %v7888, %v8357
    %v8418 = vadd.f32 %v7889, %v8362
    %v8419 = vadd.f32 %v7890, %v8365
    %v8420 = vadd.f32 %v7891, %v8370
    %v8421 = vadd.f32 %v7892, %v8373
    %v8422 = vadd.f32 %v7893, %v8378
    %v8423 = vadd.f32 %v7894, %v8381
    %v8424 = vadd.f32 %v7895, %v8386
    %v8425 = vadd.f32 %v7896, %v8389
    %v8426 = vadd.f32 %v7897, %v8394
    %v8427 = vadd.f32 %v7898, %v8397
    %v8428 = vadd.f32 %v7899, %v8402
    %v8429 = vadd.f32 %v7900, %v8405
    %v8430 = vadd.f32 %v7901, %v8410
    %v8431 = vadd.f32 %v7902, %v8413
    %s8432 = scalar_lea.vmem %s13, 1
    %v8433 = vld [vmem:[%s8432] sm:$0x1]
    %s8434 = scalar_lea.vmem %s14, 1
    %v8435 = vld [vmem:[%s8434] sm:$0x1]
    %8436 = vadd.xlane.f32.xlu0 %v8416
    %v8437 = vpop.xlane.xlu0 %8436
    %8438 = vadd.xlane.f32.xlu0 %v8417
    %v8439 = vpop.xlane.xlu0 %8438
    %8440 = vadd.xlane.f32.xlu0 %v8418
    %v8441 = vpop.xlane.xlu0 %8440
    %8442 = vadd.xlane.f32.xlu0 %v8419
    %v8443 = vpop.xlane.xlu0 %8442
    %8444 = vadd.xlane.f32.xlu0 %v8420
    %v8445 = vpop.xlane.xlu0 %8444
    %8446 = vadd.xlane.f32.xlu0 %v8421
    %v8447 = vpop.xlane.xlu0 %8446
    %8448 = vadd.xlane.f32.xlu0 %v8422
    %v8449 = vpop.xlane.xlu0 %8448
    %8450 = vadd.xlane.f32.xlu0 %v8423
    %v8451 = vpop.xlane.xlu0 %8450
    %8452 = vadd.xlane.f32.xlu0 %v8424
    %v8453 = vpop.xlane.xlu0 %8452
    %8454 = vadd.xlane.f32.xlu0 %v8425
    %v8455 = vpop.xlane.xlu0 %8454
    %8456 = vadd.xlane.f32.xlu0 %v8426
    %v8457 = vpop.xlane.xlu0 %8456
    %8458 = vadd.xlane.f32.xlu0 %v8427
    %v8459 = vpop.xlane.xlu0 %8458
    %8460 = vadd.xlane.f32.xlu0 %v8428
    %v8461 = vpop.xlane.xlu0 %8460
    %8462 = vadd.xlane.f32.xlu0 %v8429
    %v8463 = vpop.xlane.xlu0 %8462
    %8464 = vadd.xlane.f32.xlu0 %v8430
    %v8465 = vpop.xlane.xlu0 %8464
    %8466 = vadd.xlane.f32.xlu0 %v8431
    %v8467 = vpop.xlane.xlu0 %8466
    %v8468 = vmul.f32 %v8437, %v3536
    %v8469 = vmul.f32 %v8439, %v3536
    %v8470 = vmul.f32 %v8441, %v3536
    %v8471 = vmul.f32 %v8443, %v3536
    %v8472 = vmul.f32 %v8445, %v3536
    %v8473 = vmul.f32 %v8447, %v3536
    %v8474 = vmul.f32 %v8449, %v3536
    %v8475 = vmul.f32 %v8451, %v3536
    %v8476 = vmul.f32 %v8453, %v3536
    %v8477 = vmul.f32 %v8455, %v3536
    %v8478 = vmul.f32 %v8457, %v3536
    %v8479 = vmul.f32 %v8459, %v3536
    %v8480 = vmul.f32 %v8461, %v3536
    %v8481 = vmul.f32 %v8463, %v3536
    %v8482 = vmul.f32 %v8465, %v3536
    %v8483 = vmul.f32 %v8467, %v3536
    %v8484 = vsub.f32 %v8416, %v8468
    %v8485 = vsub.f32 %v8417, %v8469
    %v8486 = vsub.f32 %v8418, %v8470
    %v8487 = vsub.f32 %v8419, %v8471
    %v8488 = vsub.f32 %v8420, %v8472
    %v8489 = vsub.f32 %v8421, %v8473
    %v8490 = vsub.f32 %v8422, %v8474
    %v8491 = vsub.f32 %v8423, %v8475
    %v8492 = vsub.f32 %v8424, %v8476
    %v8493 = vsub.f32 %v8425, %v8477
    %v8494 = vsub.f32 %v8426, %v8478
    %v8495 = vsub.f32 %v8427, %v8479
    %v8496 = vsub.f32 %v8428, %v8480
    %v8497 = vsub.f32 %v8429, %v8481
    %v8498 = vsub.f32 %v8430, %v8482
    %v8499 = vsub.f32 %v8431, %v8483
    %v8500 = vmul.f32 %v8484, %v8484
    %v8501 = vmul.f32 %v8485, %v8485
    %v8502 = vmul.f32 %v8486, %v8486
    %v8503 = vmul.f32 %v8487, %v8487
    %v8504 = vmul.f32 %v8488, %v8488
    %v8505 = vmul.f32 %v8489, %v8489
    %v8506 = vmul.f32 %v8490, %v8490
    %v8507 = vmul.f32 %v8491, %v8491
    %v8508 = vmul.f32 %v8492, %v8492
    %v8509 = vmul.f32 %v8493, %v8493
    %v8510 = vmul.f32 %v8494, %v8494
    %v8511 = vmul.f32 %v8495, %v8495
    %v8512 = vmul.f32 %v8496, %v8496
    %v8513 = vmul.f32 %v8497, %v8497
    %v8514 = vmul.f32 %v8498, %v8498
    %v8515 = vmul.f32 %v8499, %v8499
    %8516 = vadd.xlane.f32.xlu0 %v8500
    %v8517 = vpop.xlane.xlu0 %8516
    %8518 = vadd.xlane.f32.xlu0 %v8501
    %v8519 = vpop.xlane.xlu0 %8518
    %8520 = vadd.xlane.f32.xlu0 %v8502
    %v8521 = vpop.xlane.xlu0 %8520
    %8522 = vadd.xlane.f32.xlu0 %v8503
    %v8523 = vpop.xlane.xlu0 %8522
    %8524 = vadd.xlane.f32.xlu0 %v8504
    %v8525 = vpop.xlane.xlu0 %8524
    %8526 = vadd.xlane.f32.xlu0 %v8505
    %v8527 = vpop.xlane.xlu0 %8526
    %8528 = vadd.xlane.f32.xlu0 %v8506
    %v8529 = vpop.xlane.xlu0 %8528
    %8530 = vadd.xlane.f32.xlu0 %v8507
    %v8531 = vpop.xlane.xlu0 %8530
    %8532 = vadd.xlane.f32.xlu0 %v8508
    %v8533 = vpop.xlane.xlu0 %8532
    %8534 = vadd.xlane.f32.xlu0 %v8509
    %v8535 = vpop.xlane.xlu0 %8534
    %8536 = vadd.xlane.f32.xlu0 %v8510
    %v8537 = vpop.xlane.xlu0 %8536
    %8538 = vadd.xlane.f32.xlu0 %v8511
    %v8539 = vpop.xlane.xlu0 %8538
    %8540 = vadd.xlane.f32.xlu0 %v8512
    %v8541 = vpop.xlane.xlu0 %8540
    %8542 = vadd.xlane.f32.xlu0 %v8513
    %v8543 = vpop.xlane.xlu0 %8542
    %8544 = vadd.xlane.f32.xlu0 %v8514
    %v8545 = vpop.xlane.xlu0 %8544
    %8546 = vadd.xlane.f32.xlu0 %v8515
    %v8547 = vpop.xlane.xlu0 %8546
    %v8548 = vmul.f32 %v8517, %v3536
    %v8549 = vmul.f32 %v8519, %v3536
    %v8550 = vmul.f32 %v8521, %v3536
    %v8551 = vmul.f32 %v8523, %v3536
    %v8552 = vmul.f32 %v8525, %v3536
    %v8553 = vmul.f32 %v8527, %v3536
    %v8554 = vmul.f32 %v8529, %v3536
    %v8555 = vmul.f32 %v8531, %v3536
    %v8556 = vmul.f32 %v8533, %v3536
    %v8557 = vmul.f32 %v8535, %v3536
    %v8558 = vmul.f32 %v8537, %v3536
    %v8559 = vmul.f32 %v8539, %v3536
    %v8560 = vmul.f32 %v8541, %v3536
    %v8561 = vmul.f32 %v8543, %v3536
    %v8562 = vmul.f32 %v8545, %v3536
    %v8563 = vmul.f32 %v8547, %v3536
    %v8564 = vadd.f32 %v8548, 1e-05
    %v8565 = vadd.f32 %v8549, 1e-05
    %v8566 = vadd.f32 %v8550, 1e-05
    %v8567 = vadd.f32 %v8551, 1e-05
    %v8568 = vadd.f32 %v8552, 1e-05
    %v8569 = vadd.f32 %v8553, 1e-05
    %v8570 = vadd.f32 %v8554, 1e-05
    %v8571 = vadd.f32 %v8555, 1e-05
    %v8572 = vadd.f32 %v8556, 1e-05
    %v8573 = vadd.f32 %v8557, 1e-05
    %v8574 = vadd.f32 %v8558, 1e-05
    %v8575 = vadd.f32 %v8559, 1e-05
    %v8576 = vadd.f32 %v8560, 1e-05
    %v8577 = vadd.f32 %v8561, 1e-05
    %v8578 = vadd.f32 %v8562, 1e-05
    %v8579 = vadd.f32 %v8563, 1e-05
    %v8580 = vrsqrt.pop %v8564
    %v8581 = vrsqrt.pop %v8565
    %v8582 = vrsqrt.pop %v8566
    %v8583 = vrsqrt.pop %v8567
    %v8584 = vrsqrt.pop %v8568
    %v8585 = vrsqrt.pop %v8569
    %v8586 = vrsqrt.pop %v8570
    %v8587 = vrsqrt.pop %v8571
    %v8588 = vrsqrt.pop %v8572
    %v8589 = vrsqrt.pop %v8573
    %v8590 = vrsqrt.pop %v8574
    %v8591 = vrsqrt.pop %v8575
    %v8592 = vrsqrt.pop %v8576
    %v8593 = vrsqrt.pop %v8577
    %v8594 = vrsqrt.pop %v8578
    %v8595 = vrsqrt.pop %v8579
    %v8596 = vmul.f32 %v8484, %v8580
    %v8597 = vmul.f32 %v8485, %v8581
    %v8598 = vmul.f32 %v8486, %v8582
    %v8599 = vmul.f32 %v8487, %v8583
    %v8600 = vmul.f32 %v8488, %v8584
    %v8601 = vmul.f32 %v8489, %v8585
    %v8602 = vmul.f32 %v8490, %v8586
    %v8603 = vmul.f32 %v8491, %v8587
    %v8604 = vmul.f32 %v8492, %v8588
    %v8605 = vmul.f32 %v8493, %v8589
    %v8606 = vmul.f32 %v8494, %v8590
    %v8607 = vmul.f32 %v8495, %v8591
    %v8608 = vmul.f32 %v8496, %v8592
    %v8609 = vmul.f32 %v8497, %v8593
    %v8610 = vmul.f32 %v8498, %v8594
    %v8611 = vmul.f32 %v8499, %v8595
    %v8613 = vlaneseq
    %v8614 = vshrl.u32 %v8613, 7
    %v8615 = vsub.s32 0, %v8614
    %v8616 = vrot.slane %v8433, %v8615
    %v8618 = vmul.f32 %v8596, %v8616
    %v8619 = vmul.f32 %v8597, %v8616
    %v8620 = vmul.f32 %v8598, %v8616
    %v8621 = vmul.f32 %v8599, %v8616
    %v8622 = vmul.f32 %v8600, %v8616
    %v8623 = vmul.f32 %v8601, %v8616
    %v8624 = vmul.f32 %v8602, %v8616
    %v8625 = vmul.f32 %v8603, %v8616
    %v8626 = vmul.f32 %v8604, %v8616
    %v8627 = vmul.f32 %v8605, %v8616
    %v8628 = vmul.f32 %v8606, %v8616
    %v8629 = vmul.f32 %v8607, %v8616
    %v8630 = vmul.f32 %v8608, %v8616
    %v8631 = vmul.f32 %v8609, %v8616
    %v8632 = vmul.f32 %v8610, %v8616
    %v8633 = vmul.f32 %v8611, %v8616
    %v8635 = vlaneseq
    %v8636 = vshrl.u32 %v8635, 7
    %v8637 = vsub.s32 0, %v8636
    %v8638 = vrot.slane %v8435, %v8637
    %v8640 = vadd.f32 %v8618, %v8638
    %v8641 = vadd.f32 %v8619, %v8638
    %v8642 = vadd.f32 %v8620, %v8638
    %v8643 = vadd.f32 %v8621, %v8638
    %v8644 = vadd.f32 %v8622, %v8638
    %v8645 = vadd.f32 %v8623, %v8638
    %v8646 = vadd.f32 %v8624, %v8638
    %v8647 = vadd.f32 %v8625, %v8638
    %v8648 = vadd.f32 %v8626, %v8638
    %v8649 = vadd.f32 %v8627, %v8638
    %v8650 = vadd.f32 %v8628, %v8638
    %v8651 = vadd.f32 %v8629, %v8638
    %v8652 = vadd.f32 %v8630, %v8638
    %v8653 = vadd.f32 %v8631, %v8638
    %v8654 = vadd.f32 %v8632, %v8638
    %v8655 = vadd.f32 %v8633, %v8638
    %v8656 = vld [vmem:[#allocation11] sm:$0xff]
    %v8657 = vld [vmem:[#allocation11 + $0x8] sm:$0xff]
    %v8658 = vld [vmem:[#allocation11 + $0x10] sm:$0xff]
    %v8659 = vld [vmem:[#allocation11 + $0x18] sm:$0xff]
    %v8660 = vld [vmem:[#allocation11 + $0x20] sm:$0xff]
    %v8661 = vld [vmem:[#allocation11 + $0x28] sm:$0xff]
    %v8662 = vld [vmem:[#allocation11 + $0x30] sm:$0xff]
    %v8663 = vld [vmem:[#allocation11 + $0x38] sm:$0xff]
    %v8664 = vld [vmem:[#allocation11 + $0x40] sm:$0xff]
    %v8665 = vld [vmem:[#allocation11 + $0x48] sm:$0xff]
    %v8666 = vld [vmem:[#allocation11 + $0x50] sm:$0xff]
    %v8667 = vld [vmem:[#allocation11 + $0x58] sm:$0xff]
    %v8668 = vld [vmem:[#allocation11 + $0x60] sm:$0xff]
    %v8669 = vld [vmem:[#allocation11 + $0x68] sm:$0xff]
    %v8670 = vld [vmem:[#allocation11 + $0x70] sm:$0xff]
    %v8671 = vld [vmem:[#allocation11 + $0x78] sm:$0xff]
    %v8672 = vmul.f32 %v8640, %v8656
    %v8673 = vmul.f32 %v8641, %v8657
    %v8674 = vmul.f32 %v8642, %v8658
    %v8675 = vmul.f32 %v8643, %v8659
    %v8676 = vmul.f32 %v8644, %v8660
    %v8677 = vmul.f32 %v8645, %v8661
    %v8678 = vmul.f32 %v8646, %v8662
    %v8679 = vmul.f32 %v8647, %v8663
    %v8680 = vmul.f32 %v8648, %v8664
    %v8681 = vmul.f32 %v8649, %v8665
    %v8682 = vmul.f32 %v8650, %v8666
    %v8683 = vmul.f32 %v8651, %v8667
    %v8684 = vmul.f32 %v8652, %v8668
    %v8685 = vmul.f32 %v8653, %v8669
    %v8686 = vmul.f32 %v8654, %v8670
    %v8687 = vmul.f32 %v8655, %v8671
    %8688 = vadd.xlane.f32.xlu0 %v8672
    %v8689 = vpop.xlane.xlu0 %8688
    %8690 = vadd.xlane.f32.xlu0 %v8673
    %v8691 = vpop.xlane.xlu0 %8690
    %8692 = vadd.xlane.f32.xlu0 %v8674
    %v8693 = vpop.xlane.xlu0 %8692
    %8694 = vadd.xlane.f32.xlu0 %v8675
    %v8695 = vpop.xlane.xlu0 %8694
    %8696 = vadd.xlane.f32.xlu0 %v8676
    %v8697 = vpop.xlane.xlu0 %8696
    %8698 = vadd.xlane.f32.xlu0 %v8677
    %v8699 = vpop.xlane.xlu0 %8698
    %8700 = vadd.xlane.f32.xlu0 %v8678
    %v8701 = vpop.xlane.xlu0 %8700
    %8702 = vadd.xlane.f32.xlu0 %v8679
    %v8703 = vpop.xlane.xlu0 %8702
    %8704 = vadd.xlane.f32.xlu0 %v8680
    %v8705 = vpop.xlane.xlu0 %8704
    %8706 = vadd.xlane.f32.xlu0 %v8681
    %v8707 = vpop.xlane.xlu0 %8706
    %8708 = vadd.xlane.f32.xlu0 %v8682
    %v8709 = vpop.xlane.xlu0 %8708
    %8710 = vadd.xlane.f32.xlu0 %v8683
    %v8711 = vpop.xlane.xlu0 %8710
    %8712 = vadd.xlane.f32.xlu0 %v8684
    %v8713 = vpop.xlane.xlu0 %8712
    %8714 = vadd.xlane.f32.xlu0 %v8685
    %v8715 = vpop.xlane.xlu0 %8714
    %8716 = vadd.xlane.f32.xlu0 %v8686
    %v8717 = vpop.xlane.xlu0 %8716
    %8718 = vadd.xlane.f32.xlu0 %v8687
    %v8719 = vpop.xlane.xlu0 %8718
    %v8720 = vadd.f32 %v8689, %v8691
    %v8721 = vadd.f32 %v8720, %v8693
    %v8722 = vadd.f32 %v8721, %v8695
    %v8723 = vadd.f32 %v8722, %v8697
    %v8724 = vadd.f32 %v8723, %v8699
    %v8725 = vadd.f32 %v8724, %v8701
    %v8726 = vadd.f32 %v8725, %v8703
    %v8727 = vrot.slane %v8726, 4
    %v8728 = vadd.f32 %v8726, %v8727
    %v8729 = vrot.slane %v8728, 2
    %v8730 = vadd.f32 %v8728, %v8729
    %v8731 = vrot.slane %v8730, 1
    %v8732 = vadd.f32 %v8730, %v8731
    %v8733 = vadd.f32 %v8705, %v8707
    %v8734 = vadd.f32 %v8733, %v8709
    %v8735 = vadd.f32 %v8734, %v8711
    %v8736 = vadd.f32 %v8735, %v8713
    %v8737 = vadd.f32 %v8736, %v8715
    %v8738 = vadd.f32 %v8737, %v8717
    %v8739 = vadd.f32 %v8738, %v8719
    %v8740 = vrot.slane %v8739, 4
    %v8741 = vadd.f32 %v8739, %v8740
    %v8742 = vrot.slane %v8741, 2
    %v8743 = vadd.f32 %v8741, %v8742
    %v8744 = vrot.slane %v8743, 1
    %v8745 = vadd.f32 %v8743, %v8744
    %vm8746 = vcmask 1040384
    %v8747 = vsel %vm8746, %v8732, %v8745
    %v8748 = vld [vmem:[#allocation3] sm:$0x1]
    %v8750 = vlaneseq
    %v8751 = vshrl.u32 %v8750, 7
    %v8752 = vsub.s32 0, %v8751
    %v8753 = vrot.slane %v8748, %v8752
    %v8755 = vadd.f32 %v8747, %v8753
    %v8756 = vtanh.pop %v8755
    %vm8757 = vcmask 1024
    %8758 = vst.msk [vmem:[%s17] sm:$0x3] %vm8757, %v8756
    // Predicated region
    $region90: #{tpu_custom_call.1} parent=1 // pred_check
      _
    $region91: #{tpu_custom_call.1} parent=1 // pred_check_branch
      %8760 = sbr.rel (0) target = $region93
    $region92: #{tpu_custom_call.1} parent=1 // pred_region
      _
    $region93: #{tpu_custom_call.1} parent=1 // pred_fallthru
      _
    // Predicated region
    $region94: #{tpu_custom_call.1} parent=1 // pred_check
      _
    $region95: #{tpu_custom_call.1} parent=1 // pred_check_branch
      %8762 = sbr.rel (0) target = $region97
    $region96: #{tpu_custom_call.1} parent=1 // pred_region
      _
    $region97: #{tpu_custom_call.1} parent=1 // pred_fallthru
      _
    %8763 = vsyncpa [#allocation5], 1
    %8764 = vsyncpa [#allocation7], 1
    %8765 = vsyncpa [#allocation10], 1

</llo_original>
